<compile_context>
chip_gen: v7x
topology: tpu7x:2x2x1
jax: 0.10.0
libtpu: 0.0.40
codegen_flags: <defaults>
</compile_context>

<pallas_src>
import numpy as np
import jax
import jax.numpy as jnp
from jax import lax
from jax.experimental import pallas as pl
from jax.experimental.pallas import tpu as pltpu


CFG = dict(
    input_shape_world_state=(4, 16, 16),   # (C, H, W) after the .view(B, -1, H, W) collapse
    input_ego_location=1, input_ego_yaw=1, input_ego_speed=1,
    action_size=2, command_size=6, target_location_size=2,
    occupancy_size=None, hidden_size=32, layers=2, delta_target=True,
)
# TODO(synk): optional `occupancy` input path not implemented (occupancy_size=None here).


# ----------------------------------------------------------------------------- #
# Helpers
# ----------------------------------------------------------------------------- #
def _full_spec(shape):
    # whole-array block (single grid step); full-extent blocks bypass the (8,128) rule
    return pl.BlockSpec(shape, lambda i: (0,) * len(shape))


def _conv_selectors_np(hin, win, hout, wout):
    """Constant 0/1 selectors, shape (9, hin*win, hout*wout).  Column q=(oh,ow) of tap
    t=(kh,kw) selects input pixel (2*oh+kh-1, 2*ow+kw-1) of a 3x3/stride-2/pad-1 conv;
    all-zero column when the tap falls in the zero padding.  Pure numpy, trace-time only."""
    P, Q = hin * win, hout * wout
    sel = np.zeros((9, P, Q), np.float32)
    for kh in range(3):
        for kw in range(3):
            t = kh * 3 + kw
            for oh in range(hout):
                for ow in range(wout):
                    ih, iw = 2 * oh + kh - 1, 2 * ow + kw - 1
                    if 0 <= ih < hin and 0 <= iw < win:
                        sel[t, ih * win + iw, oh * wout + ow] = 1.0
    return sel


# ----------------------------------------------------------------------------- #
# Pallas kernel (whole forward in one call, one grid step)
# ----------------------------------------------------------------------------- #
def _make_policy_kernel(cfg, B):
    C0, H, W = cfg["input_shape_world_state"]
    L = cfg["layers"]
    hid = cfg["hidden_size"]
    C_last = hid                                     # Encoder2D last block outputs hidden_size channels
    Q_last = (H // 2 ** L) * (W // 2 ** L)

    def kernel(*refs):
        x_ref = refs[0]                              # (B*C0, H*W)   NCHW rows, HW flattened in lanes
        other_ref = refs[1]                          # (B, 12)       [loc, yaw, speed, command, target]
        conv_refs = refs[2:2 + 3 * L]                # per layer: sel (9,P,Q), wbd (9,B*Co,B*Ci), bias (B*Co,1)
        (fcw_ref, fcb_ref, w1o_ref, w1w_ref, b1_ref,
         w2_ref, b2_ref, w3_ref, b3_ref) = refs[2 + 3 * L:11 + 3 * L]
        o_ref = refs[11 + 3 * L]                     # (B, action_size)
        ws_scr = refs[12 + 3 * L]                    # VMEM scratch (B, hid)

        f32 = jnp.float32

        # ---- Encoder2D: L x [Conv2d(3x3, s=2, p=1) + ReLU]  (Dropout = identity in eval).
        # act is a single (B*C, Q) tile: per tap, one spatial-gather matmul (shared across
        # batch & channels) + one block-diagonal channel-mix matmul (batched over B).
        act = x_ref[...]
        for l in range(L):
            sel_ref, wbd_ref, cb_ref = conv_refs[3 * l:3 * l + 3]
            acc = None
            for t in range(9):
                g = jnp.dot(act, sel_ref[t], preferred_element_type=f32)      # (B*Cin, Qout)
                c = jnp.dot(wbd_ref[t], g, preferred_element_type=f32)        # (B*Cout, Qout)
                acc = c if acc is None else acc + c
            act = jnp.maximum(acc + cb_ref[...], 0.0)                          # bias + ReLU

        # ---- world_state_encoder_fc: NCHW flatten folded into the (hid, C_last, Q_last)
        # weight -> per-batch elementwise multiply + reduce (no reshapes/relayouts of act).
        fcw = fcw_ref[...]                                                     # (hid, C_last, Q_last)
        fcb = fcb_ref[...]                                                     # (1, hid)
        for b in range(B):
            ab = act[b * C_last:(b + 1) * C_last, :]                           # (C_last, Q_last), aligned slice
            t3 = ab[None, :, :] * fcw                                          # (hid, C_last, Q_last)
            r = jnp.sum(jnp.sum(t3, axis=2), axis=1)                           # (hid,)
            ws_scr[b:b + 1, :] = r[None, :] + fcb

        # ---- action decoder: Linear+ReLU, (Dropout), Linear+ReLU, Linear+Tanh.
        # delta_target and the torch concat are folded into the (already split) dec1 weights.
        ws = ws_scr[...]                                                       # (B, hid)
        other = other_ref[...]                                                 # (B, 12)
        h1 = (jnp.dot(other, w1o_ref[...], preferred_element_type=f32)
              + jnp.dot(ws, w1w_ref[...], preferred_element_type=f32)
              + b1_ref[...])
        h1 = jnp.maximum(h1, 0.0)
        h2 = jnp.maximum(jnp.dot(h1, w2_ref[...], preferred_element_type=f32) + b2_ref[...], 0.0)
        out = jnp.tanh(jnp.dot(h2, w3_ref[...], preferred_element_type=f32) + b3_ref[...])
        o_ref[...] = out.astype(o_ref.dtype)

    return kernel


# ----------------------------------------------------------------------------- #
# Params (torch layout) + forward wrapper (tiny, one-time weight prep per call)
# ----------------------------------------------------------------------------- #
def init_params(key, cfg):
    C, H, W = cfg["input_shape_world_state"]
    hid, L, A = cfg["hidden_size"], cfg["layers"], cfg["action_size"]
    other_dim = (2 * cfg["input_ego_location"] + cfg["input_ego_yaw"] + cfg["input_ego_speed"]
                 + cfg["command_size"] + cfg["target_location_size"])
    keys = iter(jax.random.split(key, 4 * L + 16))

    def unif(k, shape, fan_in):
        s = 1.0 / jnp.sqrt(fan_in)
        return jax.random.uniform(k, shape, jnp.float32, -s, s)

    params = {"conv": []}
    in_ch = C
    for i in range(L):
        out_ch = hid // (2 ** (L - 1 - i))
        w = unif(next(keys), (out_ch, in_ch, 3, 3), 9 * in_ch)     # torch OIHW
        b = unif(next(keys), (out_ch,), 9 * in_ch)
        params["conv"].append((w, b))
        in_ch = out_ch
    flat = in_ch * (H // 2 ** L) * (W // 2 ** L)
    params["fc_w"] = unif(next(keys), (hid, flat), flat)           # torch (out, in)
    params["fc_b"] = unif(next(keys), (hid,), flat)
    d = other_dim + hid
    params["dec1_w"] = unif(next(keys), (hid, d), d)
    params["dec1_b"] = unif(next(keys), (hid,), d)
    params["dec2_w"] = unif(next(keys), (hid, hid), hid)
    params["dec2_b"] = unif(next(keys), (hid,), hid)
    params["dec3_w"] = unif(next(keys), (A, hid), hid)
    params["dec3_b"] = unif(next(keys), (A,), hid)
    return params


def policy_forward(params, ego_state, world_state, command, target_location, cfg=CFG):
    C0, H, W = cfg["input_shape_world_state"]
    L, hid, A = cfg["layers"], cfg["hidden_size"], cfg["action_size"]
    B = world_state.shape[0]
    f32 = jnp.float32
    other_dim = (2 * cfg["input_ego_location"] + cfg["input_ego_yaw"] + cfg["input_ego_speed"]
                 + cfg["command_size"] + cfg["target_location_size"])
    n_loc = 2 * cfg["input_ego_location"]
    d_tgt = cfg["target_location_size"]

    # .view(B, -1, H, W) + NCHW flatten of (H, W): a single free row-major reshape.
    x = world_state.reshape(B * C0, H * W).astype(f32)
    # Raw "other" inputs; delta_target is folded into the dec1 weight below.
    other = jnp.concatenate([ego_state["location"], ego_state["yaw"], ego_state["speed"],
                             command, target_location], axis=1).astype(f32)

    eyeB = jnp.eye(B, dtype=f32)
    args = [x, other]
    hin, win = H, W
    for (w, b) in params["conv"]:
        oc, ic = w.shape[0], w.shape[1]
        hout, wout = hin // 2, win // 2
        sel = jnp.asarray(_conv_selectors_np(hin, win, hout, wout))        # constant (9, P, Q)
        w9 = jnp.transpose(w, (2, 3, 0, 1)).reshape(9, oc, ic)             # per-tap (Cout, Cin)
        # block-diagonal (over batch) channel-mix weights, exact elementwise construction
        wbd = (eyeB[None, :, None, :, None] * w9[:, None, :, None, :]).reshape(9, B * oc, B * ic)
        cb = jnp.tile(b.reshape(oc, 1), (B, 1))                            # (B*Cout, 1)
        args += [sel, wbd, cb]
        hin, win = hout, wout

    C_last = params["conv"][-1][0].shape[0]
    Q_last = hin * win
    fcw3 = params["fc_w"].reshape(hid, C_last, Q_last)                     # NCHW flatten folded in
    fcb = params["fc_b"].reshape(1, hid)

    d1 = params["dec1_w"]                                                  # (hid, other_dim + hid)
    w1_oth = d1[:, :other_dim]
    if cfg["delta_target"]:
        # (tgt - loc) @ Wtgt == tgt @ Wtgt - loc @ Wtgt  ->  fold into the loc columns.
        w1_oth = w1_oth.at[:, :n_loc].add(-d1[:, other_dim - d_tgt:other_dim])
    args += [fcw3, fcb,
             w1_oth.T, d1[:, other_dim:].T, params["dec1_b"].reshape(1, hid),
             params["dec2_w"].T, params["dec2_b"].reshape(1, hid),
             params["dec3_w"].T, params["dec3_b"].reshape(1, A)]

    kernel = _make_policy_kernel(cfg, B)
    return pl.pallas_call(
        kernel,
        out_shape=jax.ShapeDtypeStruct((B, A), f32),
        grid=(1,),
        in_specs=[_full_spec(a.shape) for a in args],
        out_specs=_full_spec((B, A)),
        scratch_shapes=[pltpu.VMEM((B, hid), f32)],
    )(*args)


# ----------------------------------------------------------------------------- #
# Pure-JAX reference (original torch math, torch-layout params) for cross-check
# ----------------------------------------------------------------------------- #
def reference_forward(params, ego_state, world_state, command, target_location, cfg=CFG):
    hp = lax.Precision.HIGHEST
    B = world_state.shape[0]
    H, W = world_state.shape[-2], world_state.shape[-1]
    x = world_state.reshape(B, -1, H, W)                                   # NCHW
    for (w, b) in params["conv"]:
        x = lax.conv_general_dilated(x, w, (2, 2), ((1, 1), (1, 1)),
                                     dimension_numbers=("NCHW", "OIHW", "NCHW"),
                                     precision=hp)
        x = jnp.maximum(x + b.reshape(1, -1, 1, 1), 0.0)
    flat = x.reshape(B, -1)                                                # torch NCHW flatten
    ws = jnp.dot(flat, params["fc_w"].T, precision=hp) + params["fc_b"]
    tl = target_location - ego_state["location"] if cfg["delta_target"] else target_location
    fused = jnp.concatenate([ego_state["location"], ego_state["yaw"], ego_state["speed"],
                             command, tl, ws], axis=1)
    h1 = jnp.maximum(jnp.dot(fused, params["dec1_w"].T, precision=hp) + params["dec1_b"], 0.0)
    h2 = jnp.maximum(jnp.dot(h1, params["dec2_w"].T, precision=hp) + params["dec2_b"], 0.0)
    return jnp.tanh(jnp.dot(h2, params["dec3_w"].T, precision=hp) + params["dec3_b"])


if __name__ == "__main__":
    key = jax.random.PRNGKey(0)
    kp, k1, k2, k3, k4, k5, k6 = jax.random.split(key, 7)
    params = init_params(kp, CFG)

    B = 2
    # world_state passed as (B, 2, 2, 16, 16); forward collapses it to (B, 4, 16, 16)
    world_state = jax.random.normal(k1, (B, 2, 2, 16, 16), jnp.float32)
    ego_state = {
        "location": jax.random.normal(k2, (B, 2), jnp.float32),
        "yaw": jax.random.normal(k3, (B, 1), jnp.float32),
        "speed": jax.random.normal(k4, (B, 1), jnp.float32),
    }
    command = jax.random.normal(k5, (B, CFG["command_size"]), jnp.float32)
    target_location = jax.random.normal(k6, (B, CFG["target_location_size"]), jnp.float32)

    fwd = jax.jit(policy_forward)
    action = jax.block_until_ready(
        fwd(params, ego_state, world_state, command, target_location))

    ref = reference_forward(params, ego_state, world_state, command, target_location)
    assert action.shape == (B, CFG["action_size"])
    err = float(jnp.max(jnp.abs(action - ref)))
    assert err < 2e-4, f"mismatch vs JAX reference, max abs err = {err}"
    print("KERNEL_OK")
</pallas_src>

<mosaic_0001>
module attributes {stable_mosaic.version = 11 : i64} {
  func.func @kernel(%arg0: i32, %arg1: memref<8x256xf32, #tpu.memory_space<vmem>>, %arg2: memref<2x12xf32, #tpu.memory_space<vmem>>, %arg3: memref<9x256x64xf32, #tpu.memory_space<vmem>>, %arg4: memref<9x32x8xf32, #tpu.memory_space<vmem>>, %arg5: memref<32x1xf32, #tpu.memory_space<vmem>>, %arg6: memref<9x64x16xf32, #tpu.memory_space<vmem>>, %arg7: memref<9x64x32xf32, #tpu.memory_space<vmem>>, %arg8: memref<64x1xf32, #tpu.memory_space<vmem>>, %arg9: memref<32x32x16xf32, #tpu.memory_space<vmem>>, %arg10: memref<1x32xf32, #tpu.memory_space<vmem>>, %arg11: memref<12x32xf32, #tpu.memory_space<vmem>>, %arg12: memref<32x32xf32, #tpu.memory_space<vmem>>, %arg13: memref<1x32xf32, #tpu.memory_space<vmem>>, %arg14: memref<32x32xf32, #tpu.memory_space<vmem>>, %arg15: memref<1x32xf32, #tpu.memory_space<vmem>>, %arg16: memref<32x2xf32, #tpu.memory_space<vmem>>, %arg17: memref<1x2xf32, #tpu.memory_space<vmem>>, %arg18: memref<2x2xf32, #tpu.memory_space<vmem>>, %arg19: memref<2x32xf32, #tpu.memory_space<vmem>>) attributes {dimension_semantics = [#tpu.dimension_semantics<arbitrary>], iteration_bounds = array<i64: 1>, scalar_prefetch = 0 : i64, scratch_operands = 1 : i64, tpu.core_type = #tpu.core_type<tc>, window_params = [{pipeline_mode = #tpu.pipeline_mode<synchronous>, transform_indices = @transform_0, window_bounds = array<i64: 8, 256>}, {pipeline_mode = #tpu.pipeline_mode<synchronous>, transform_indices = @transform_1, window_bounds = array<i64: 2, 12>}, {pipeline_mode = #tpu.pipeline_mode<synchronous>, transform_indices = @transform_2, window_bounds = array<i64: 9, 256, 64>}, {pipeline_mode = #tpu.pipeline_mode<synchronous>, transform_indices = @transform_3, window_bounds = array<i64: 9, 32, 8>}, {pipeline_mode = #tpu.pipeline_mode<synchronous>, transform_indices = @transform_4, window_bounds = array<i64: 32, 1>}, {pipeline_mode = #tpu.pipeline_mode<synchronous>, transform_indices = @transform_5, window_bounds = array<i64: 9, 64, 16>}, {pipeline_mode = #tpu.pipeline_mode<synchronous>, transform_indices = @transform_6, window_bounds = array<i64: 9, 64, 32>}, {pipeline_mode = #tpu.pipeline_mode<synchronous>, transform_indices = @transform_7, window_bounds = array<i64: 64, 1>}, {pipeline_mode = #tpu.pipeline_mode<synchronous>, transform_indices = @transform_8, window_bounds = array<i64: 32, 32, 16>}, {pipeline_mode = #tpu.pipeline_mode<synchronous>, transform_indices = @transform_9, window_bounds = array<i64: 1, 32>}, {pipeline_mode = #tpu.pipeline_mode<synchronous>, transform_indices = @transform_10, window_bounds = array<i64: 12, 32>}, {pipeline_mode = #tpu.pipeline_mode<synchronous>, transform_indices = @transform_11, window_bounds = array<i64: 32, 32>}, {pipeline_mode = #tpu.pipeline_mode<synchronous>, transform_indices = @transform_12, window_bounds = array<i64: 1, 32>}, {pipeline_mode = #tpu.pipeline_mode<synchronous>, transform_indices = @transform_13, window_bounds = array<i64: 32, 32>}, {pipeline_mode = #tpu.pipeline_mode<synchronous>, transform_indices = @transform_14, window_bounds = array<i64: 1, 32>}, {pipeline_mode = #tpu.pipeline_mode<synchronous>, transform_indices = @transform_15, window_bounds = array<i64: 32, 2>}, {pipeline_mode = #tpu.pipeline_mode<synchronous>, transform_indices = @transform_16, window_bounds = array<i64: 1, 2>}, {pipeline_mode = #tpu.pipeline_mode<synchronous>, transform_indices = @transform_17, window_bounds = array<i64: 2, 2>}]} {
    %c0 = arith.constant 0 : index
    %c0_0 = arith.constant 0 : index
    %0 = vector.load %arg1[%c0, %c0_0] : memref<8x256xf32, #tpu.memory_space<vmem>>, vector<8x256xf32>
    %c0_1 = arith.constant 0 : index
    %c0_2 = arith.constant 0 : index
    %c0_3 = arith.constant 0 : index
    %1 = vector.load %arg3[%c0_1, %c0_2, %c0_3] : memref<9x256x64xf32, #tpu.memory_space<vmem>>, vector<1x256x64xf32>
    %2 = vector.shape_cast %1 : vector<1x256x64xf32> to vector<256x64xf32>
    %cst = arith.constant dense<0.000000e+00> : vector<8x64xf32>
    %3 = tpu.matmul %0, %2, %cst {dimension_numbers = #tpu.dot_dimension_numbers<[1], [0], [0], [1], [0, 0, 1, 1], [], []>} : vector<8x256xf32>, vector<256x64xf32>, vector<8x64xf32> -> vector<8x64xf32>
    %c0_4 = arith.constant 0 : index
    %c0_5 = arith.constant 0 : index
    %c0_6 = arith.constant 0 : index
    %4 = vector.load %arg4[%c0_4, %c0_5, %c0_6] : memref<9x32x8xf32, #tpu.memory_space<vmem>>, vector<1x32x8xf32>
    %5 = vector.shape_cast %4 : vector<1x32x8xf32> to vector<32x8xf32>
    %cst_7 = arith.constant dense<0.000000e+00> : vector<32x64xf32>
    %6 = tpu.matmul %5, %3, %cst_7 {dimension_numbers = #tpu.dot_dimension_numbers<[1], [0], [0], [1], [0, 0, 1, 1], [], []>} : vector<32x8xf32>, vector<8x64xf32>, vector<32x64xf32> -> vector<32x64xf32>
    %c1 = arith.constant 1 : index
    %c0_8 = arith.constant 0 : index
    %c0_9 = arith.constant 0 : index
    %7 = vector.load %arg3[%c1, %c0_8, %c0_9] : memref<9x256x64xf32, #tpu.memory_space<vmem>>, vector<1x256x64xf32>
    %8 = vector.shape_cast %7 : vector<1x256x64xf32> to vector<256x64xf32>
    %cst_10 = arith.constant dense<0.000000e+00> : vector<8x64xf32>
    %9 = tpu.matmul %0, %8, %cst_10 {dimension_numbers = #tpu.dot_dimension_numbers<[1], [0], [0], [1], [0, 0, 1, 1], [], []>} : vector<8x256xf32>, vector<256x64xf32>, vector<8x64xf32> -> vector<8x64xf32>
    %c1_11 = arith.constant 1 : index
    %c0_12 = arith.constant 0 : index
    %c0_13 = arith.constant 0 : index
    %10 = vector.load %arg4[%c1_11, %c0_12, %c0_13] : memref<9x32x8xf32, #tpu.memory_space<vmem>>, vector<1x32x8xf32>
    %11 = vector.shape_cast %10 : vector<1x32x8xf32> to vector<32x8xf32>
    %cst_14 = arith.constant dense<0.000000e+00> : vector<32x64xf32>
    %12 = tpu.matmul %11, %9, %cst_14 {dimension_numbers = #tpu.dot_dimension_numbers<[1], [0], [0], [1], [0, 0, 1, 1], [], []>} : vector<32x8xf32>, vector<8x64xf32>, vector<32x64xf32> -> vector<32x64xf32>
    %13 = arith.addf %6, %12 : vector<32x64xf32>
    %c2 = arith.constant 2 : index
    %c0_15 = arith.constant 0 : index
    %c0_16 = arith.constant 0 : index
    %14 = vector.load %arg3[%c2, %c0_15, %c0_16] : memref<9x256x64xf32, #tpu.memory_space<vmem>>, vector<1x256x64xf32>
    %15 = vector.shape_cast %14 : vector<1x256x64xf32> to vector<256x64xf32>
    %cst_17 = arith.constant dense<0.000000e+00> : vector<8x64xf32>
    %16 = tpu.matmul %0, %15, %cst_17 {dimension_numbers = #tpu.dot_dimension_numbers<[1], [0], [0], [1], [0, 0, 1, 1], [], []>} : vector<8x256xf32>, vector<256x64xf32>, vector<8x64xf32> -> vector<8x64xf32>
    %c2_18 = arith.constant 2 : index
    %c0_19 = arith.constant 0 : index
    %c0_20 = arith.constant 0 : index
    %17 = vector.load %arg4[%c2_18, %c0_19, %c0_20] : memref<9x32x8xf32, #tpu.memory_space<vmem>>, vector<1x32x8xf32>
    %18 = vector.shape_cast %17 : vector<1x32x8xf32> to vector<32x8xf32>
    %cst_21 = arith.constant dense<0.000000e+00> : vector<32x64xf32>
    %19 = tpu.matmul %18, %16, %cst_21 {dimension_numbers = #tpu.dot_dimension_numbers<[1], [0], [0], [1], [0, 0, 1, 1], [], []>} : vector<32x8xf32>, vector<8x64xf32>, vector<32x64xf32> -> vector<32x64xf32>
    %20 = arith.addf %13, %19 : vector<32x64xf32>
    %c3 = arith.constant 3 : index
    %c0_22 = arith.constant 0 : index
    %c0_23 = arith.constant 0 : index
    %21 = vector.load %arg3[%c3, %c0_22, %c0_23] : memref<9x256x64xf32, #tpu.memory_space<vmem>>, vector<1x256x64xf32>
    %22 = vector.shape_cast %21 : vector<1x256x64xf32> to vector<256x64xf32>
    %cst_24 = arith.constant dense<0.000000e+00> : vector<8x64xf32>
    %23 = tpu.matmul %0, %22, %cst_24 {dimension_numbers = #tpu.dot_dimension_numbers<[1], [0], [0], [1], [0, 0, 1, 1], [], []>} : vector<8x256xf32>, vector<256x64xf32>, vector<8x64xf32> -> vector<8x64xf32>
    %c3_25 = arith.constant 3 : index
    %c0_26 = arith.constant 0 : index
    %c0_27 = arith.constant 0 : index
    %24 = vector.load %arg4[%c3_25, %c0_26, %c0_27] : memref<9x32x8xf32, #tpu.memory_space<vmem>>, vector<1x32x8xf32>
    %25 = vector.shape_cast %24 : vector<1x32x8xf32> to vector<32x8xf32>
    %cst_28 = arith.constant dense<0.000000e+00> : vector<32x64xf32>
    %26 = tpu.matmul %25, %23, %cst_28 {dimension_numbers = #tpu.dot_dimension_numbers<[1], [0], [0], [1], [0, 0, 1, 1], [], []>} : vector<32x8xf32>, vector<8x64xf32>, vector<32x64xf32> -> vector<32x64xf32>
    %27 = arith.addf %20, %26 : vector<32x64xf32>
    %c4 = arith.constant 4 : index
    %c0_29 = arith.constant 0 : index
    %c0_30 = arith.constant 0 : index
    %28 = vector.load %arg3[%c4, %c0_29, %c0_30] : memref<9x256x64xf32, #tpu.memory_space<vmem>>, vector<1x256x64xf32>
    %29 = vector.shape_cast %28 : vector<1x256x64xf32> to vector<256x64xf32>
    %cst_31 = arith.constant dense<0.000000e+00> : vector<8x64xf32>
    %30 = tpu.matmul %0, %29, %cst_31 {dimension_numbers = #tpu.dot_dimension_numbers<[1], [0], [0], [1], [0, 0, 1, 1], [], []>} : vector<8x256xf32>, vector<256x64xf32>, vector<8x64xf32> -> vector<8x64xf32>
    %c4_32 = arith.constant 4 : index
    %c0_33 = arith.constant 0 : index
    %c0_34 = arith.constant 0 : index
    %31 = vector.load %arg4[%c4_32, %c0_33, %c0_34] : memref<9x32x8xf32, #tpu.memory_space<vmem>>, vector<1x32x8xf32>
    %32 = vector.shape_cast %31 : vector<1x32x8xf32> to vector<32x8xf32>
    %cst_35 = arith.constant dense<0.000000e+00> : vector<32x64xf32>
    %33 = tpu.matmul %32, %30, %cst_35 {dimension_numbers = #tpu.dot_dimension_numbers<[1], [0], [0], [1], [0, 0, 1, 1], [], []>} : vector<32x8xf32>, vector<8x64xf32>, vector<32x64xf32> -> vector<32x64xf32>
    %34 = arith.addf %27, %33 : vector<32x64xf32>
    %c5 = arith.constant 5 : index
    %c0_36 = arith.constant 0 : index
    %c0_37 = arith.constant 0 : index
    %35 = vector.load %arg3[%c5, %c0_36, %c0_37] : memref<9x256x64xf32, #tpu.memory_space<vmem>>, vector<1x256x64xf32>
    %36 = vector.shape_cast %35 : vector<1x256x64xf32> to vector<256x64xf32>
    %cst_38 = arith.constant dense<0.000000e+00> : vector<8x64xf32>
    %37 = tpu.matmul %0, %36, %cst_38 {dimension_numbers = #tpu.dot_dimension_numbers<[1], [0], [0], [1], [0, 0, 1, 1], [], []>} : vector<8x256xf32>, vector<256x64xf32>, vector<8x64xf32> -> vector<8x64xf32>
    %c5_39 = arith.constant 5 : index
    %c0_40 = arith.constant 0 : index
    %c0_41 = arith.constant 0 : index
    %38 = vector.load %arg4[%c5_39, %c0_40, %c0_41] : memref<9x32x8xf32, #tpu.memory_space<vmem>>, vector<1x32x8xf32>
    %39 = vector.shape_cast %38 : vector<1x32x8xf32> to vector<32x8xf32>
    %cst_42 = arith.constant dense<0.000000e+00> : vector<32x64xf32>
    %40 = tpu.matmul %39, %37, %cst_42 {dimension_numbers = #tpu.dot_dimension_numbers<[1], [0], [0], [1], [0, 0, 1, 1], [], []>} : vector<32x8xf32>, vector<8x64xf32>, vector<32x64xf32> -> vector<32x64xf32>
    %41 = arith.addf %34, %40 : vector<32x64xf32>
    %c6 = arith.constant 6 : index
    %c0_43 = arith.constant 0 : index
    %c0_44 = arith.constant 0 : index
    %42 = vector.load %arg3[%c6, %c0_43, %c0_44] : memref<9x256x64xf32, #tpu.memory_space<vmem>>, vector<1x256x64xf32>
    %43 = vector.shape_cast %42 : vector<1x256x64xf32> to vector<256x64xf32>
    %cst_45 = arith.constant dense<0.000000e+00> : vector<8x64xf32>
    %44 = tpu.matmul %0, %43, %cst_45 {dimension_numbers = #tpu.dot_dimension_numbers<[1], [0], [0], [1], [0, 0, 1, 1], [], []>} : vector<8x256xf32>, vector<256x64xf32>, vector<8x64xf32> -> vector<8x64xf32>
    %c6_46 = arith.constant 6 : index
    %c0_47 = arith.constant 0 : index
    %c0_48 = arith.constant 0 : index
    %45 = vector.load %arg4[%c6_46, %c0_47, %c0_48] : memref<9x32x8xf32, #tpu.memory_space<vmem>>, vector<1x32x8xf32>
    %46 = vector.shape_cast %45 : vector<1x32x8xf32> to vector<32x8xf32>
    %cst_49 = arith.constant dense<0.000000e+00> : vector<32x64xf32>
    %47 = tpu.matmul %46, %44, %cst_49 {dimension_numbers = #tpu.dot_dimension_numbers<[1], [0], [0], [1], [0, 0, 1, 1], [], []>} : vector<32x8xf32>, vector<8x64xf32>, vector<32x64xf32> -> vector<32x64xf32>
    %48 = arith.addf %41, %47 : vector<32x64xf32>
    %c7 = arith.constant 7 : index
    %c0_50 = arith.constant 0 : index
    %c0_51 = arith.constant 0 : index
    %49 = vector.load %arg3[%c7, %c0_50, %c0_51] : memref<9x256x64xf32, #tpu.memory_space<vmem>>, vector<1x256x64xf32>
    %50 = vector.shape_cast %49 : vector<1x256x64xf32> to vector<256x64xf32>
    %cst_52 = arith.constant dense<0.000000e+00> : vector<8x64xf32>
    %51 = tpu.matmul %0, %50, %cst_52 {dimension_numbers = #tpu.dot_dimension_numbers<[1], [0], [0], [1], [0, 0, 1, 1], [], []>} : vector<8x256xf32>, vector<256x64xf32>, vector<8x64xf32> -> vector<8x64xf32>
    %c7_53 = arith.constant 7 : index
    %c0_54 = arith.constant 0 : index
    %c0_55 = arith.constant 0 : index
    %52 = vector.load %arg4[%c7_53, %c0_54, %c0_55] : memref<9x32x8xf32, #tpu.memory_space<vmem>>, vector<1x32x8xf32>
    %53 = vector.shape_cast %52 : vector<1x32x8xf32> to vector<32x8xf32>
    %cst_56 = arith.constant dense<0.000000e+00> : vector<32x64xf32>
    %54 = tpu.matmul %53, %51, %cst_56 {dimension_numbers = #tpu.dot_dimension_numbers<[1], [0], [0], [1], [0, 0, 1, 1], [], []>} : vector<32x8xf32>, vector<8x64xf32>, vector<32x64xf32> -> vector<32x64xf32>
    %55 = arith.addf %48, %54 : vector<32x64xf32>
    %c8 = arith.constant 8 : index
    %c0_57 = arith.constant 0 : index
    %c0_58 = arith.constant 0 : index
    %56 = vector.load %arg3[%c8, %c0_57, %c0_58] : memref<9x256x64xf32, #tpu.memory_space<vmem>>, vector<1x256x64xf32>
    %57 = vector.shape_cast %56 : vector<1x256x64xf32> to vector<256x64xf32>
    %cst_59 = arith.constant dense<0.000000e+00> : vector<8x64xf32>
    %58 = tpu.matmul %0, %57, %cst_59 {dimension_numbers = #tpu.dot_dimension_numbers<[1], [0], [0], [1], [0, 0, 1, 1], [], []>} : vector<8x256xf32>, vector<256x64xf32>, vector<8x64xf32> -> vector<8x64xf32>
    %c8_60 = arith.constant 8 : index
    %c0_61 = arith.constant 0 : index
    %c0_62 = arith.constant 0 : index
    %59 = vector.load %arg4[%c8_60, %c0_61, %c0_62] : memref<9x32x8xf32, #tpu.memory_space<vmem>>, vector<1x32x8xf32>
    %60 = vector.shape_cast %59 : vector<1x32x8xf32> to vector<32x8xf32>
    %cst_63 = arith.constant dense<0.000000e+00> : vector<32x64xf32>
    %61 = tpu.matmul %60, %58, %cst_63 {dimension_numbers = #tpu.dot_dimension_numbers<[1], [0], [0], [1], [0, 0, 1, 1], [], []>} : vector<32x8xf32>, vector<8x64xf32>, vector<32x64xf32> -> vector<32x64xf32>
    %62 = arith.addf %55, %61 : vector<32x64xf32>
    %c0_64 = arith.constant 0 : index
    %c0_65 = arith.constant 0 : index
    %63 = vector.load %arg5[%c0_64, %c0_65] : memref<32x1xf32, #tpu.memory_space<vmem>>, vector<32x1xf32>
    %64 = vector.broadcast %63 : vector<32x1xf32> to vector<32x64xf32>
    %65 = arith.addf %62, %64 : vector<32x64xf32>
    %cst_66 = arith.constant 0.000000e+00 : f32
    %66 = vector.broadcast %cst_66 : f32 to vector<32x64xf32>
    %67 = arith.maximumf %65, %66 : vector<32x64xf32>
    %c0_67 = arith.constant 0 : index
    %c0_68 = arith.constant 0 : index
    %c0_69 = arith.constant 0 : index
    %68 = vector.load %arg6[%c0_67, %c0_68, %c0_69] : memref<9x64x16xf32, #tpu.memory_space<vmem>>, vector<1x64x16xf32>
    %69 = vector.shape_cast %68 : vector<1x64x16xf32> to vector<64x16xf32>
    %cst_70 = arith.constant dense<0.000000e+00> : vector<32x16xf32>
    %70 = tpu.matmul %67, %69, %cst_70 {dimension_numbers = #tpu.dot_dimension_numbers<[1], [0], [0], [1], [0, 0, 1, 1], [], []>} : vector<32x64xf32>, vector<64x16xf32>, vector<32x16xf32> -> vector<32x16xf32>
    %c0_71 = arith.constant 0 : index
    %c0_72 = arith.constant 0 : index
    %c0_73 = arith.constant 0 : index
    %71 = vector.load %arg7[%c0_71, %c0_72, %c0_73] : memref<9x64x32xf32, #tpu.memory_space<vmem>>, vector<1x64x32xf32>
    %72 = vector.shape_cast %71 : vector<1x64x32xf32> to vector<64x32xf32>
    %cst_74 = arith.constant dense<0.000000e+00> : vector<64x16xf32>
    %73 = tpu.matmul %72, %70, %cst_74 {dimension_numbers = #tpu.dot_dimension_numbers<[1], [0], [0], [1], [0, 0, 1, 1], [], []>} : vector<64x32xf32>, vector<32x16xf32>, vector<64x16xf32> -> vector<64x16xf32>
    %c1_75 = arith.constant 1 : index
    %c0_76 = arith.constant 0 : index
    %c0_77 = arith.constant 0 : index
    %74 = vector.load %arg6[%c1_75, %c0_76, %c0_77] : memref<9x64x16xf32, #tpu.memory_space<vmem>>, vector<1x64x16xf32>
    %75 = vector.shape_cast %74 : vector<1x64x16xf32> to vector<64x16xf32>
    %cst_78 = arith.constant dense<0.000000e+00> : vector<32x16xf32>
    %76 = tpu.matmul %67, %75, %cst_78 {dimension_numbers = #tpu.dot_dimension_numbers<[1], [0], [0], [1], [0, 0, 1, 1], [], []>} : vector<32x64xf32>, vector<64x16xf32>, vector<32x16xf32> -> vector<32x16xf32>
    %c1_79 = arith.constant 1 : index
    %c0_80 = arith.constant 0 : index
    %c0_81 = arith.constant 0 : index
    %77 = vector.load %arg7[%c1_79, %c0_80, %c0_81] : memref<9x64x32xf32, #tpu.memory_space<vmem>>, vector<1x64x32xf32>
    %78 = vector.shape_cast %77 : vector<1x64x32xf32> to vector<64x32xf32>
    %cst_82 = arith.constant dense<0.000000e+00> : vector<64x16xf32>
    %79 = tpu.matmul %78, %76, %cst_82 {dimension_numbers = #tpu.dot_dimension_numbers<[1], [0], [0], [1], [0, 0, 1, 1], [], []>} : vector<64x32xf32>, vector<32x16xf32>, vector<64x16xf32> -> vector<64x16xf32>
    %80 = arith.addf %73, %79 : vector<64x16xf32>
    %c2_83 = arith.constant 2 : index
    %c0_84 = arith.constant 0 : index
    %c0_85 = arith.constant 0 : index
    %81 = vector.load %arg6[%c2_83, %c0_84, %c0_85] : memref<9x64x16xf32, #tpu.memory_space<vmem>>, vector<1x64x16xf32>
    %82 = vector.shape_cast %81 : vector<1x64x16xf32> to vector<64x16xf32>
    %cst_86 = arith.constant dense<0.000000e+00> : vector<32x16xf32>
    %83 = tpu.matmul %67, %82, %cst_86 {dimension_numbers = #tpu.dot_dimension_numbers<[1], [0], [0], [1], [0, 0, 1, 1], [], []>} : vector<32x64xf32>, vector<64x16xf32>, vector<32x16xf32> -> vector<32x16xf32>
    %c2_87 = arith.constant 2 : index
    %c0_88 = arith.constant 0 : index
    %c0_89 = arith.constant 0 : index
    %84 = vector.load %arg7[%c2_87, %c0_88, %c0_89] : memref<9x64x32xf32, #tpu.memory_space<vmem>>, vector<1x64x32xf32>
    %85 = vector.shape_cast %84 : vector<1x64x32xf32> to vector<64x32xf32>
    %cst_90 = arith.constant dense<0.000000e+00> : vector<64x16xf32>
    %86 = tpu.matmul %85, %83, %cst_90 {dimension_numbers = #tpu.dot_dimension_numbers<[1], [0], [0], [1], [0, 0, 1, 1], [], []>} : vector<64x32xf32>, vector<32x16xf32>, vector<64x16xf32> -> vector<64x16xf32>
    %87 = arith.addf %80, %86 : vector<64x16xf32>
    %c3_91 = arith.constant 3 : index
    %c0_92 = arith.constant 0 : index
    %c0_93 = arith.constant 0 : index
    %88 = vector.load %arg6[%c3_91, %c0_92, %c0_93] : memref<9x64x16xf32, #tpu.memory_space<vmem>>, vector<1x64x16xf32>
    %89 = vector.shape_cast %88 : vector<1x64x16xf32> to vector<64x16xf32>
    %cst_94 = arith.constant dense<0.000000e+00> : vector<32x16xf32>
    %90 = tpu.matmul %67, %89, %cst_94 {dimension_numbers = #tpu.dot_dimension_numbers<[1], [0], [0], [1], [0, 0, 1, 1], [], []>} : vector<32x64xf32>, vector<64x16xf32>, vector<32x16xf32> -> vector<32x16xf32>
    %c3_95 = arith.constant 3 : index
    %c0_96 = arith.constant 0 : index
    %c0_97 = arith.constant 0 : index
    %91 = vector.load %arg7[%c3_95, %c0_96, %c0_97] : memref<9x64x32xf32, #tpu.memory_space<vmem>>, vector<1x64x32xf32>
    %92 = vector.shape_cast %91 : vector<1x64x32xf32> to vector<64x32xf32>
    %cst_98 = arith.constant dense<0.000000e+00> : vector<64x16xf32>
    %93 = tpu.matmul %92, %90, %cst_98 {dimension_numbers = #tpu.dot_dimension_numbers<[1], [0], [0], [1], [0, 0, 1, 1], [], []>} : vector<64x32xf32>, vector<32x16xf32>, vector<64x16xf32> -> vector<64x16xf32>
    %94 = arith.addf %87, %93 : vector<64x16xf32>
    %c4_99 = arith.constant 4 : index
    %c0_100 = arith.constant 0 : index
    %c0_101 = arith.constant 0 : index
    %95 = vector.load %arg6[%c4_99, %c0_100, %c0_101] : memref<9x64x16xf32, #tpu.memory_space<vmem>>, vector<1x64x16xf32>
    %96 = vector.shape_cast %95 : vector<1x64x16xf32> to vector<64x16xf32>
    %cst_102 = arith.constant dense<0.000000e+00> : vector<32x16xf32>
    %97 = tpu.matmul %67, %96, %cst_102 {dimension_numbers = #tpu.dot_dimension_numbers<[1], [0], [0], [1], [0, 0, 1, 1], [], []>} : vector<32x64xf32>, vector<64x16xf32>, vector<32x16xf32> -> vector<32x16xf32>
    %c4_103 = arith.constant 4 : index
    %c0_104 = arith.constant 0 : index
    %c0_105 = arith.constant 0 : index
    %98 = vector.load %arg7[%c4_103, %c0_104, %c0_105] : memref<9x64x32xf32, #tpu.memory_space<vmem>>, vector<1x64x32xf32>
    %99 = vector.shape_cast %98 : vector<1x64x32xf32> to vector<64x32xf32>
    %cst_106 = arith.constant dense<0.000000e+00> : vector<64x16xf32>
    %100 = tpu.matmul %99, %97, %cst_106 {dimension_numbers = #tpu.dot_dimension_numbers<[1], [0], [0], [1], [0, 0, 1, 1], [], []>} : vector<64x32xf32>, vector<32x16xf32>, vector<64x16xf32> -> vector<64x16xf32>
    %101 = arith.addf %94, %100 : vector<64x16xf32>
    %c5_107 = arith.constant 5 : index
    %c0_108 = arith.constant 0 : index
    %c0_109 = arith.constant 0 : index
    %102 = vector.load %arg6[%c5_107, %c0_108, %c0_109] : memref<9x64x16xf32, #tpu.memory_space<vmem>>, vector<1x64x16xf32>
    %103 = vector.shape_cast %102 : vector<1x64x16xf32> to vector<64x16xf32>
    %cst_110 = arith.constant dense<0.000000e+00> : vector<32x16xf32>
    %104 = tpu.matmul %67, %103, %cst_110 {dimension_numbers = #tpu.dot_dimension_numbers<[1], [0], [0], [1], [0, 0, 1, 1], [], []>} : vector<32x64xf32>, vector<64x16xf32>, vector<32x16xf32> -> vector<32x16xf32>
    %c5_111 = arith.constant 5 : index
    %c0_112 = arith.constant 0 : index
    %c0_113 = arith.constant 0 : index
    %105 = vector.load %arg7[%c5_111, %c0_112, %c0_113] : memref<9x64x32xf32, #tpu.memory_space<vmem>>, vector<1x64x32xf32>
    %106 = vector.shape_cast %105 : vector<1x64x32xf32> to vector<64x32xf32>
    %cst_114 = arith.constant dense<0.000000e+00> : vector<64x16xf32>
    %107 = tpu.matmul %106, %104, %cst_114 {dimension_numbers = #tpu.dot_dimension_numbers<[1], [0], [0], [1], [0, 0, 1, 1], [], []>} : vector<64x32xf32>, vector<32x16xf32>, vector<64x16xf32> -> vector<64x16xf32>
    %108 = arith.addf %101, %107 : vector<64x16xf32>
    %c6_115 = arith.constant 6 : index
    %c0_116 = arith.constant 0 : index
    %c0_117 = arith.constant 0 : index
    %109 = vector.load %arg6[%c6_115, %c0_116, %c0_117] : memref<9x64x16xf32, #tpu.memory_space<vmem>>, vector<1x64x16xf32>
    %110 = vector.shape_cast %109 : vector<1x64x16xf32> to vector<64x16xf32>
    %cst_118 = arith.constant dense<0.000000e+00> : vector<32x16xf32>
    %111 = tpu.matmul %67, %110, %cst_118 {dimension_numbers = #tpu.dot_dimension_numbers<[1], [0], [0], [1], [0, 0, 1, 1], [], []>} : vector<32x64xf32>, vector<64x16xf32>, vector<32x16xf32> -> vector<32x16xf32>
    %c6_119 = arith.constant 6 : index
    %c0_120 = arith.constant 0 : index
    %c0_121 = arith.constant 0 : index
    %112 = vector.load %arg7[%c6_119, %c0_120, %c0_121] : memref<9x64x32xf32, #tpu.memory_space<vmem>>, vector<1x64x32xf32>
    %113 = vector.shape_cast %112 : vector<1x64x32xf32> to vector<64x32xf32>
    %cst_122 = arith.constant dense<0.000000e+00> : vector<64x16xf32>
    %114 = tpu.matmul %113, %111, %cst_122 {dimension_numbers = #tpu.dot_dimension_numbers<[1], [0], [0], [1], [0, 0, 1, 1], [], []>} : vector<64x32xf32>, vector<32x16xf32>, vector<64x16xf32> -> vector<64x16xf32>
    %115 = arith.addf %108, %114 : vector<64x16xf32>
    %c7_123 = arith.constant 7 : index
    %c0_124 = arith.constant 0 : index
    %c0_125 = arith.constant 0 : index
    %116 = vector.load %arg6[%c7_123, %c0_124, %c0_125] : memref<9x64x16xf32, #tpu.memory_space<vmem>>, vector<1x64x16xf32>
    %117 = vector.shape_cast %116 : vector<1x64x16xf32> to vector<64x16xf32>
    %cst_126 = arith.constant dense<0.000000e+00> : vector<32x16xf32>
    %118 = tpu.matmul %67, %117, %cst_126 {dimension_numbers = #tpu.dot_dimension_numbers<[1], [0], [0], [1], [0, 0, 1, 1], [], []>} : vector<32x64xf32>, vector<64x16xf32>, vector<32x16xf32> -> vector<32x16xf32>
    %c7_127 = arith.constant 7 : index
    %c0_128 = arith.constant 0 : index
    %c0_129 = arith.constant 0 : index
    %119 = vector.load %arg7[%c7_127, %c0_128, %c0_129] : memref<9x64x32xf32, #tpu.memory_space<vmem>>, vector<1x64x32xf32>
    %120 = vector.shape_cast %119 : vector<1x64x32xf32> to vector<64x32xf32>
    %cst_130 = arith.constant dense<0.000000e+00> : vector<64x16xf32>
    %121 = tpu.matmul %120, %118, %cst_130 {dimension_numbers = #tpu.dot_dimension_numbers<[1], [0], [0], [1], [0, 0, 1, 1], [], []>} : vector<64x32xf32>, vector<32x16xf32>, vector<64x16xf32> -> vector<64x16xf32>
    %122 = arith.addf %115, %121 : vector<64x16xf32>
    %c8_131 = arith.constant 8 : index
    %c0_132 = arith.constant 0 : index
    %c0_133 = arith.constant 0 : index
    %123 = vector.load %arg6[%c8_131, %c0_132, %c0_133] : memref<9x64x16xf32, #tpu.memory_space<vmem>>, vector<1x64x16xf32>
    %124 = vector.shape_cast %123 : vector<1x64x16xf32> to vector<64x16xf32>
    %cst_134 = arith.constant dense<0.000000e+00> : vector<32x16xf32>
    %125 = tpu.matmul %67, %124, %cst_134 {dimension_numbers = #tpu.dot_dimension_numbers<[1], [0], [0], [1], [0, 0, 1, 1], [], []>} : vector<32x64xf32>, vector<64x16xf32>, vector<32x16xf32> -> vector<32x16xf32>
    %c8_135 = arith.constant 8 : index
    %c0_136 = arith.constant 0 : index
    %c0_137 = arith.constant 0 : index
    %126 = vector.load %arg7[%c8_135, %c0_136, %c0_137] : memref<9x64x32xf32, #tpu.memory_space<vmem>>, vector<1x64x32xf32>
    %127 = vector.shape_cast %126 : vector<1x64x32xf32> to vector<64x32xf32>
    %cst_138 = arith.constant dense<0.000000e+00> : vector<64x16xf32>
    %128 = tpu.matmul %127, %125, %cst_138 {dimension_numbers = #tpu.dot_dimension_numbers<[1], [0], [0], [1], [0, 0, 1, 1], [], []>} : vector<64x32xf32>, vector<32x16xf32>, vector<64x16xf32> -> vector<64x16xf32>
    %129 = arith.addf %122, %128 : vector<64x16xf32>
    %c0_139 = arith.constant 0 : index
    %c0_140 = arith.constant 0 : index
    %130 = vector.load %arg8[%c0_139, %c0_140] : memref<64x1xf32, #tpu.memory_space<vmem>>, vector<64x1xf32>
    %131 = vector.broadcast %130 : vector<64x1xf32> to vector<64x16xf32>
    %132 = arith.addf %129, %131 : vector<64x16xf32>
    %cst_141 = arith.constant 0.000000e+00 : f32
    %133 = vector.broadcast %cst_141 : f32 to vector<64x16xf32>
    %134 = arith.maximumf %132, %133 : vector<64x16xf32>
    %c0_142 = arith.constant 0 : index
    %c0_143 = arith.constant 0 : index
    %c0_144 = arith.constant 0 : index
    %135 = vector.load %arg9[%c0_142, %c0_143, %c0_144] : memref<32x32x16xf32, #tpu.memory_space<vmem>>, vector<32x32x16xf32>
    %c0_145 = arith.constant 0 : index
    %c0_146 = arith.constant 0 : index
    %136 = vector.load %arg10[%c0_145, %c0_146] : memref<1x32xf32, #tpu.memory_space<vmem>>, vector<1x32xf32>
    %137 = vector.extract_strided_slice %134 {offsets = [0, 0], sizes = [32, 16], strides = [1, 1]} : vector<64x16xf32> to vector<32x16xf32>
    %138 = vector.shape_cast %137 : vector<32x16xf32> to vector<1x32x16xf32>
    %139 = vector.broadcast %138 : vector<1x32x16xf32> to vector<32x32x16xf32>
    %140 = arith.mulf %139, %135 : vector<32x32x16xf32>
    %cst_147 = arith.constant dense<0.000000e+00> : vector<32x32xf32>
    %141 = vector.multi_reduction <add>, %140, %cst_147 [2] : vector<32x32x16xf32> to vector<32x32xf32>
    %cst_148 = arith.constant dense<0.000000e+00> : vector<32xf32>
    %142 = vector.multi_reduction <add>, %141, %cst_148 [1] : vector<32x32xf32> to vector<32xf32>
    %143 = vector.shape_cast %142 : vector<32xf32> to vector<1x32xf32>
    %144 = arith.addf %143, %136 : vector<1x32xf32>
    %c0_149 = arith.constant 0 : index
    %c0_150 = arith.constant 0 : index
    %145 = vector.load %arg19[%c0_149, %c0_150] : memref<2x32xf32, #tpu.memory_space<vmem>>, vector<1x32xf32>
    tpu.vector_store %arg19[%c0_149, %c0_150], %144 {strides = array<i32>} : memref<2x32xf32, #tpu.memory_space<vmem>>, vector<1x32xf32>,
    %146 = vector.extract_strided_slice %134 {offsets = [32, 0], sizes = [32, 16], strides = [1, 1]} : vector<64x16xf32> to vector<32x16xf32>
    %147 = vector.shape_cast %146 : vector<32x16xf32> to vector<1x32x16xf32>
    %148 = vector.broadcast %147 : vector<1x32x16xf32> to vector<32x32x16xf32>
    %149 = arith.mulf %148, %135 : vector<32x32x16xf32>
    %cst_151 = arith.constant dense<0.000000e+00> : vector<32x32xf32>
    %150 = vector.multi_reduction <add>, %149, %cst_151 [2] : vector<32x32x16xf32> to vector<32x32xf32>
    %cst_152 = arith.constant dense<0.000000e+00> : vector<32xf32>
    %151 = vector.multi_reduction <add>, %150, %cst_152 [1] : vector<32x32xf32> to vector<32xf32>
    %152 = vector.shape_cast %151 : vector<32xf32> to vector<1x32xf32>
    %153 = arith.addf %152, %136 : vector<1x32xf32>
    %c1_153 = arith.constant 1 : index
    %c0_154 = arith.constant 0 : index
    %154 = vector.load %arg19[%c1_153, %c0_154] : memref<2x32xf32, #tpu.memory_space<vmem>>, vector<1x32xf32>
    tpu.vector_store %arg19[%c1_153, %c0_154], %153 {strides = array<i32>} : memref<2x32xf32, #tpu.memory_space<vmem>>, vector<1x32xf32>,
    %c0_155 = arith.constant 0 : index
    %c0_156 = arith.constant 0 : index
    %155 = vector.load %arg19[%c0_155, %c0_156] : memref<2x32xf32, #tpu.memory_space<vmem>>, vector<2x32xf32>
    %c0_157 = arith.constant 0 : index
    %c0_158 = arith.constant 0 : index
    %156 = vector.load %arg2[%c0_157, %c0_158] : memref<2x12xf32, #tpu.memory_space<vmem>>, vector<2x12xf32>
    %c0_159 = arith.constant 0 : index
    %c0_160 = arith.constant 0 : index
    %157 = vector.load %arg11[%c0_159, %c0_160] : memref<12x32xf32, #tpu.memory_space<vmem>>, vector<12x32xf32>
    %cst_161 = arith.constant dense<0.000000e+00> : vector<2x32xf32>
    %158 = tpu.matmul %156, %157, %cst_161 {dimension_numbers = #tpu.dot_dimension_numbers<[1], [0], [0], [1], [0, 0, 1, 1], [], []>} : vector<2x12xf32>, vector<12x32xf32>, vector<2x32xf32> -> vector<2x32xf32>
    %c0_162 = arith.constant 0 : index
    %c0_163 = arith.constant 0 : index
    %159 = vector.load %arg12[%c0_162, %c0_163] : memref<32x32xf32, #tpu.memory_space<vmem>>, vector<32x32xf32>
    %cst_164 = arith.constant dense<0.000000e+00> : vector<2x32xf32>
    %160 = tpu.matmul %155, %159, %cst_164 {dimension_numbers = #tpu.dot_dimension_numbers<[1], [0], [0], [1], [0, 0, 1, 1], [], []>} : vector<2x32xf32>, vector<32x32xf32>, vector<2x32xf32> -> vector<2x32xf32>
    %161 = arith.addf %158, %160 : vector<2x32xf32>
    %c0_165 = arith.constant 0 : index
    %c0_166 = arith.constant 0 : index
    %162 = vector.load %arg13[%c0_165, %c0_166] : memref<1x32xf32, #tpu.memory_space<vmem>>, vector<1x32xf32>
    %163 = vector.broadcast %162 : vector<1x32xf32> to vector<2x32xf32>
    %164 = arith.addf %161, %163 : vector<2x32xf32>
    %cst_167 = arith.constant 0.000000e+00 : f32
    %165 = vector.broadcast %cst_167 : f32 to vector<2x32xf32>
    %166 = arith.maximumf %164, %165 : vector<2x32xf32>
    %c0_168 = arith.constant 0 : index
    %c0_169 = arith.constant 0 : index
    %167 = vector.load %arg14[%c0_168, %c0_169] : memref<32x32xf32, #tpu.memory_space<vmem>>, vector<32x32xf32>
    %cst_170 = arith.constant dense<0.000000e+00> : vector<2x32xf32>
    %168 = tpu.matmul %166, %167, %cst_170 {dimension_numbers = #tpu.dot_dimension_numbers<[1], [0], [0], [1], [0, 0, 1, 1], [], []>} : vector<2x32xf32>, vector<32x32xf32>, vector<2x32xf32> -> vector<2x32xf32>
    %c0_171 = arith.constant 0 : index
    %c0_172 = arith.constant 0 : index
    %169 = vector.load %arg15[%c0_171, %c0_172] : memref<1x32xf32, #tpu.memory_space<vmem>>, vector<1x32xf32>
    %170 = vector.broadcast %169 : vector<1x32xf32> to vector<2x32xf32>
    %171 = arith.addf %168, %170 : vector<2x32xf32>
    %cst_173 = arith.constant 0.000000e+00 : f32
    %172 = vector.broadcast %cst_173 : f32 to vector<2x32xf32>
    %173 = arith.maximumf %171, %172 : vector<2x32xf32>
    %c0_174 = arith.constant 0 : index
    %c0_175 = arith.constant 0 : index
    %174 = vector.load %arg16[%c0_174, %c0_175] : memref<32x2xf32, #tpu.memory_space<vmem>>, vector<32x2xf32>
    %cst_176 = arith.constant dense<0.000000e+00> : vector<2x2xf32>
    %175 = tpu.matmul %173, %174, %cst_176 {dimension_numbers = #tpu.dot_dimension_numbers<[1], [0], [0], [1], [0, 0, 1, 1], [], []>} : vector<2x32xf32>, vector<32x2xf32>, vector<2x2xf32> -> vector<2x2xf32>
    %c0_177 = arith.constant 0 : index
    %c0_178 = arith.constant 0 : index
    %176 = vector.load %arg17[%c0_177, %c0_178] : memref<1x2xf32, #tpu.memory_space<vmem>>, vector<1x2xf32>
    %177 = vector.broadcast %176 : vector<1x2xf32> to vector<2x2xf32>
    %178 = arith.addf %175, %177 : vector<2x2xf32>
    %179 = math.tanh %178 : vector<2x2xf32>
    %c0_179 = arith.constant 0 : index
    %c0_180 = arith.constant 0 : index
    %180 = vector.load %arg18[%c0_179, %c0_180] : memref<2x2xf32, #tpu.memory_space<vmem>>, vector<2x2xf32>
    tpu.vector_store %arg18[%c0_179, %c0_180], %179 {strides = array<i32>} : memref<2x2xf32, #tpu.memory_space<vmem>>, vector<2x2xf32>,
    return
  }
  func.func @transform_0(%arg0: i32) -> (i32, i32) {
    %c0_i32 = arith.constant 0 : i32
    %c0_i32_0 = arith.constant 0 : i32
    %c0_i32_1 = arith.constant 0 : i32
    return %c0_i32, %c0_i32_0 : i32, i32
  }
  func.func @transform_1(%arg0: i32) -> (i32, i32) {
    %c0_i32 = arith.constant 0 : i32
    %c0_i32_0 = arith.constant 0 : i32
    %c0_i32_1 = arith.constant 0 : i32
    return %c0_i32, %c0_i32_0 : i32, i32
  }
  func.func @transform_2(%arg0: i32) -> (i32, i32, i32) {
    %c0_i32 = arith.constant 0 : i32
    %c0_i32_0 = arith.constant 0 : i32
    %c0_i32_1 = arith.constant 0 : i32
    %c0_i32_2 = arith.constant 0 : i32
    return %c0_i32, %c0_i32_0, %c0_i32_1 : i32, i32, i32
  }
  func.func @transform_3(%arg0: i32) -> (i32, i32, i32) {
    %c0_i32 = arith.constant 0 : i32
    %c0_i32_0 = arith.constant 0 : i32
    %c0_i32_1 = arith.constant 0 : i32
    %c0_i32_2 = arith.constant 0 : i32
    return %c0_i32, %c0_i32_0, %c0_i32_1 : i32, i32, i32
  }
  func.func @transform_4(%arg0: i32) -> (i32, i32) {
    %c0_i32 = arith.constant 0 : i32
    %c0_i32_0 = arith.constant 0 : i32
    %c0_i32_1 = arith.constant 0 : i32
    return %c0_i32, %c0_i32_0 : i32, i32
  }
  func.func @transform_5(%arg0: i32) -> (i32, i32, i32) {
    %c0_i32 = arith.constant 0 : i32
    %c0_i32_0 = arith.constant 0 : i32
    %c0_i32_1 = arith.constant 0 : i32
    %c0_i32_2 = arith.constant 0 : i32
    return %c0_i32, %c0_i32_0, %c0_i32_1 : i32, i32, i32
  }
  func.func @transform_6(%arg0: i32) -> (i32, i32, i32) {
    %c0_i32 = arith.constant 0 : i32
    %c0_i32_0 = arith.constant 0 : i32
    %c0_i32_1 = arith.constant 0 : i32
    %c0_i32_2 = arith.constant 0 : i32
    return %c0_i32, %c0_i32_0, %c0_i32_1 : i32, i32, i32
  }
  func.func @transform_7(%arg0: i32) -> (i32, i32) {
    %c0_i32 = arith.constant 0 : i32
    %c0_i32_0 = arith.constant 0 : i32
    %c0_i32_1 = arith.constant 0 : i32
    return %c0_i32, %c0_i32_0 : i32, i32
  }
  func.func @transform_8(%arg0: i32) -> (i32, i32, i32) {
    %c0_i32 = arith.constant 0 : i32
    %c0_i32_0 = arith.constant 0 : i32
    %c0_i32_1 = arith.constant 0 : i32
    %c0_i32_2 = arith.constant 0 : i32
    return %c0_i32, %c0_i32_0, %c0_i32_1 : i32, i32, i32
  }
  func.func @transform_9(%arg0: i32) -> (i32, i32) {
    %c0_i32 = arith.constant 0 : i32
    %c0_i32_0 = arith.constant 0 : i32
    %c0_i32_1 = arith.constant 0 : i32
    return %c0_i32, %c0_i32_0 : i32, i32
  }
  func.func @transform_10(%arg0: i32) -> (i32, i32) {
    %c0_i32 = arith.constant 0 : i32
    %c0_i32_0 = arith.constant 0 : i32
    %c0_i32_1 = arith.constant 0 : i32
    return %c0_i32, %c0_i32_0 : i32, i32
  }
  func.func @transform_11(%arg0: i32) -> (i32, i32) {
    %c0_i32 = arith.constant 0 : i32
    %c0_i32_0 = arith.constant 0 : i32
    %c0_i32_1 = arith.constant 0 : i32
    return %c0_i32, %c0_i32_0 : i32, i32
  }
  func.func @transform_12(%arg0: i32) -> (i32, i32) {
    %c0_i32 = arith.constant 0 : i32
    %c0_i32_0 = arith.constant 0 : i32
    %c0_i32_1 = arith.constant 0 : i32
    return %c0_i32, %c0_i32_0 : i32, i32
  }
  func.func @transform_13(%arg0: i32) -> (i32, i32) {
    %c0_i32 = arith.constant 0 : i32
    %c0_i32_0 = arith.constant 0 : i32
    %c0_i32_1 = arith.constant 0 : i32
    return %c0_i32, %c0_i32_0 : i32, i32
  }
  func.func @transform_14(%arg0: i32) -> (i32, i32) {
    %c0_i32 = arith.constant 0 : i32
    %c0_i32_0 = arith.constant 0 : i32
    %c0_i32_1 = arith.constant 0 : i32
    return %c0_i32, %c0_i32_0 : i32, i32
  }
  func.func @transform_15(%arg0: i32) -> (i32, i32) {
    %c0_i32 = arith.constant 0 : i32
    %c0_i32_0 = arith.constant 0 : i32
    %c0_i32_1 = arith.constant 0 : i32
    return %c0_i32, %c0_i32_0 : i32, i32
  }
  func.func @transform_16(%arg0: i32) -> (i32, i32) {
    %c0_i32 = arith.constant 0 : i32
    %c0_i32_0 = arith.constant 0 : i32
    %c0_i32_1 = arith.constant 0 : i32
    return %c0_i32, %c0_i32_0 : i32, i32
  }
  func.func @transform_17(%arg0: i32) -> (i32, i32) {
    %c0_i32 = arith.constant 0 : i32
    %c0_i32_0 = arith.constant 0 : i32
    %c0_i32_1 = arith.constant 0 : i32
    return %c0_i32, %c0_i32_0 : i32, i32
  }
}

</mosaic_0001>

<llo_original>
// kernel: policy_forward.1
$region0: #{policy_forward.1}
  #allocation0 [shape = 'u32[]', space=smem, size = 0x4, offset = 0x4, fixed_abs, tag = 'smem constant byte address 0x4 - core index']
  #allocation1 [shape = 'u32[144,128]{1,0:T(1,128)}', space=vmem, size = 0x12000, scoped, tag = 'internal scratch']
  #allocation2 [shape = 'f32[2,32]{1,0:T(2,128)}', space=vmem, size = 0x400, scoped, tag = 'scratch operand']
  %s0 = inlined_call_operand.vmem [shape: f32[8,256], index: 0, kind: input, shape index: {}]
  %s1 = inlined_call_operand.vmem [shape: f32[2,12], index: 1, kind: input, shape index: {}]
  %s2 = inlined_call_operand.vmem [shape: f32[9,256,64], index: 2, kind: input, shape index: {}]
  %s3 = inlined_call_operand.vmem [shape: f32[9,32,8], index: 3, kind: input, shape index: {}]
  %s4 = inlined_call_operand.vmem [shape: f32[32,1], index: 4, kind: input, shape index: {}]
  %s5 = inlined_call_operand.vmem [shape: f32[9,64,16], index: 5, kind: input, shape index: {}]
  %s6 = inlined_call_operand.vmem [shape: f32[9,64,32], index: 6, kind: input, shape index: {}]
  %s7 = inlined_call_operand.vmem [shape: f32[64,1], index: 7, kind: input, shape index: {}]
  %s8 = inlined_call_operand.vmem [shape: f32[32,32,16], index: 8, kind: input, shape index: {}]
  %s9 = inlined_call_operand.vmem [shape: f32[1,32], index: 9, kind: input, shape index: {}]
  %s10 = inlined_call_operand.vmem [shape: f32[12,32], index: 10, kind: input, shape index: {}]
  %s11 = inlined_call_operand.vmem [shape: f32[32,32], index: 11, kind: input, shape index: {}]
  %s12 = inlined_call_operand.vmem [shape: f32[1,32], index: 12, kind: input, shape index: {}]
  %s13 = inlined_call_operand.vmem [shape: f32[32,32], index: 13, kind: input, shape index: {}]
  %s14 = inlined_call_operand.vmem [shape: f32[1,32], index: 14, kind: input, shape index: {}]
  %s15 = inlined_call_operand.vmem [shape: f32[32,2], index: 15, kind: input, shape index: {}]
  %s16 = inlined_call_operand.vmem [shape: f32[1,2], index: 16, kind: input, shape index: {}]
  %s17 = inlined_call_operand.hbm [shape: f32[2,2], index: 17, kind: output, shape index: {}]
  %s18 = sld [smem:[#allocation0]]
  $region78: #{policy_forward.1} parent=0
    _
  %s20 = ssub.s32 1, %s18
  %s21 = scalar_select 0, %s20, %s18
  $region1: #{policy_forward.1} parent=0
    #allocation3 [shape = 'u8[1024]{0}', space=vmem, size = 0x400, scoped, tag = 'output window, operand 0, single buffered']
    #allocation4 [shape = 's32[1]{0}', space=sflag, size = 0x4, scoped, tag = 'scoped memory for policy_forward.1']
    %22 = vsyncpa [#allocation4], 0
    // Predicated region
    $region2: #{policy_forward.1} parent=1 // pred_check
      _
    $region3: #{policy_forward.1} parent=1 // pred_check_branch
      %24 = sbr.rel (0) target = $region5
    $region4: #{policy_forward.1} parent=1 // pred_region
      _
    $region5: #{policy_forward.1} parent=1 // pred_fallthru
      _
    // Predicated region
    $region6: #{policy_forward.1} parent=1 // pred_check
      _
    $region7: #{policy_forward.1} parent=1 // pred_check_branch
      %26 = sbr.rel (0) target = $region9
    $region8: #{policy_forward.1} parent=1 // pred_region
      _
    $region9: #{policy_forward.1} parent=1 // pred_fallthru
      _
    // Predicated region
    $region10: #{policy_forward.1} parent=1 // pred_check
      _
    $region11: #{policy_forward.1} parent=1 // pred_check_branch
      %28 = sbr.rel (0) target = $region13
    $region12: #{policy_forward.1} parent=1 // pred_region
      _
    $region13: #{policy_forward.1} parent=1 // pred_fallthru
      _
    // Predicated region
    $region14: #{policy_forward.1} parent=1 // pred_check
      _
    $region15: #{policy_forward.1} parent=1 // pred_check_branch
      %30 = sbr.rel (0) target = $region17
    $region16: #{policy_forward.1} parent=1 // pred_region
      _
    $region17: #{policy_forward.1} parent=1 // pred_fallthru
      _
    // Predicated region
    $region18: #{policy_forward.1} parent=1 // pred_check
      _
    $region19: #{policy_forward.1} parent=1 // pred_check_branch
      %32 = sbr.rel (0) target = $region21
    $region20: #{policy_forward.1} parent=1 // pred_region
      _
    $region21: #{policy_forward.1} parent=1 // pred_fallthru
      _
    // Predicated region
    $region22: #{policy_forward.1} parent=1 // pred_check
      _
    $region23: #{policy_forward.1} parent=1 // pred_check_branch
      %34 = sbr.rel (0) target = $region25
    $region24: #{policy_forward.1} parent=1 // pred_region
      _
    $region25: #{policy_forward.1} parent=1 // pred_fallthru
      _
    // Predicated region
    $region26: #{policy_forward.1} parent=1 // pred_check
      _
    $region27: #{policy_forward.1} parent=1 // pred_check_branch
      %36 = sbr.rel (0) target = $region29
    $region28: #{policy_forward.1} parent=1 // pred_region
      _
    $region29: #{policy_forward.1} parent=1 // pred_fallthru
      _
    // Predicated region
    $region30: #{policy_forward.1} parent=1 // pred_check
      _
    $region31: #{policy_forward.1} parent=1 // pred_check_branch
      %38 = sbr.rel (0) target = $region33
    $region32: #{policy_forward.1} parent=1 // pred_region
      _
    $region33: #{policy_forward.1} parent=1 // pred_fallthru
      _
    // Predicated region
    $region34: #{policy_forward.1} parent=1 // pred_check
      _
    $region35: #{policy_forward.1} parent=1 // pred_check_branch
      %40 = sbr.rel (0) target = $region37
    $region36: #{policy_forward.1} parent=1 // pred_region
      _
    $region37: #{policy_forward.1} parent=1 // pred_fallthru
      _
    // Predicated region
    $region38: #{policy_forward.1} parent=1 // pred_check
      _
    $region39: #{policy_forward.1} parent=1 // pred_check_branch
      %42 = sbr.rel (0) target = $region41
    $region40: #{policy_forward.1} parent=1 // pred_region
      _
    $region41: #{policy_forward.1} parent=1 // pred_fallthru
      _
    // Predicated region
    $region42: #{policy_forward.1} parent=1 // pred_check
      _
    $region43: #{policy_forward.1} parent=1 // pred_check_branch
      %44 = sbr.rel (0) target = $region45
    $region44: #{policy_forward.1} parent=1 // pred_region
      _
    $region45: #{policy_forward.1} parent=1 // pred_fallthru
      _
    // Predicated region
    $region46: #{policy_forward.1} parent=1 // pred_check
      _
    $region47: #{policy_forward.1} parent=1 // pred_check_branch
      %46 = sbr.rel (0) target = $region49
    $region48: #{policy_forward.1} parent=1 // pred_region
      _
    $region49: #{policy_forward.1} parent=1 // pred_fallthru
      _
    // Predicated region
    $region50: #{policy_forward.1} parent=1 // pred_check
      _
    $region51: #{policy_forward.1} parent=1 // pred_check_branch
      %48 = sbr.rel (0) target = $region53
    $region52: #{policy_forward.1} parent=1 // pred_region
      _
    $region53: #{policy_forward.1} parent=1 // pred_fallthru
      _
    // Predicated region
    $region54: #{policy_forward.1} parent=1 // pred_check
      _
    $region55: #{policy_forward.1} parent=1 // pred_check_branch
      %50 = sbr.rel (0) target = $region57
    $region56: #{policy_forward.1} parent=1 // pred_region
      _
    $region57: #{policy_forward.1} parent=1 // pred_fallthru
      _
    // Predicated region
    $region58: #{policy_forward.1} parent=1 // pred_check
      _
    $region59: #{policy_forward.1} parent=1 // pred_check_branch
      %52 = sbr.rel (0) target = $region61
    $region60: #{policy_forward.1} parent=1 // pred_region
      _
    $region61: #{policy_forward.1} parent=1 // pred_fallthru
      _
    // Predicated region
    $region62: #{policy_forward.1} parent=1 // pred_check
      _
    $region63: #{policy_forward.1} parent=1 // pred_check_branch
      %54 = sbr.rel (0) target = $region65
    $region64: #{policy_forward.1} parent=1 // pred_region
      _
    $region65: #{policy_forward.1} parent=1 // pred_fallthru
      _
    // Predicated region
    $region66: #{policy_forward.1} parent=1 // pred_check
      _
    $region67: #{policy_forward.1} parent=1 // pred_check_branch
      %56 = sbr.rel (0) target = $region69
    $region68: #{policy_forward.1} parent=1 // pred_region
      _
    $region69: #{policy_forward.1} parent=1 // pred_fallthru
      _
    %v57 = vld [vmem:[%s0] sm:$0xff]
    %v58 = vld [vmem:[%s0 + $0x8] sm:$0xff]
    %v59 = vld [vmem:[%s2] sm:$0xff]
    %v60 = vld [vmem:[%s2 + $0x8] sm:$0xff]
    %v61 = vld [vmem:[%s2 + $0x10] sm:$0xff]
    %v62 = vld [vmem:[%s2 + $0x18] sm:$0xff]
    %v63 = vld [vmem:[%s2 + $0x20] sm:$0xff]
    %v64 = vld [vmem:[%s2 + $0x28] sm:$0xff]
    %v65 = vld [vmem:[%s2 + $0x30] sm:$0xff]
    %v66 = vld [vmem:[%s2 + $0x38] sm:$0xff]
    %v67 = vld [vmem:[%s2 + $0x40] sm:$0xff]
    %v68 = vld [vmem:[%s2 + $0x48] sm:$0xff]
    %v69 = vld [vmem:[%s2 + $0x50] sm:$0xff]
    %v70 = vld [vmem:[%s2 + $0x58] sm:$0xff]
    %v71 = vld [vmem:[%s2 + $0x60] sm:$0xff]
    %v72 = vld [vmem:[%s2 + $0x68] sm:$0xff]
    %v73 = vld [vmem:[%s2 + $0x70] sm:$0xff]
    %v74 = vld [vmem:[%s2 + $0x78] sm:$0xff]
    %v75 = vld [vmem:[%s2 + $0x80] sm:$0xff]
    %v76 = vld [vmem:[%s2 + $0x88] sm:$0xff]
    %v77 = vld [vmem:[%s2 + $0x90] sm:$0xff]
    %v78 = vld [vmem:[%s2 + $0x98] sm:$0xff]
    %v79 = vld [vmem:[%s2 + $0xa0] sm:$0xff]
    %v80 = vld [vmem:[%s2 + $0xa8] sm:$0xff]
    %v81 = vld [vmem:[%s2 + $0xb0] sm:$0xff]
    %v82 = vld [vmem:[%s2 + $0xb8] sm:$0xff]
    %v83 = vld [vmem:[%s2 + $0xc0] sm:$0xff]
    %v84 = vld [vmem:[%s2 + $0xc8] sm:$0xff]
    %v85 = vld [vmem:[%s2 + $0xd0] sm:$0xff]
    %v86 = vld [vmem:[%s2 + $0xd8] sm:$0xff]
    %v87 = vld [vmem:[%s2 + $0xe0] sm:$0xff]
    %v88 = vld [vmem:[%s2 + $0xe8] sm:$0xff]
    %v89 = vld [vmem:[%s2 + $0xf0] sm:$0xff]
    %v90 = vld [vmem:[%s2 + $0xf8] sm:$0xff]
    %91 = vmatprep.subr.mxu0 0.0
    %92 = vmatpush1.msra.mxu0 %v59
    %93 = vmatprep.subr.mxu0 0.0
    %94 = vmatpush1.msra.mxu0 %v60
    %95 = vmatprep.subr.mxu0 0.0
    %96 = vmatpush1.msra.mxu0 %v61
    %97 = vmatprep.subr.mxu0 0.0
    %98 = vmatpush1.msra.mxu0 %v62
    %99 = vmatprep.subr.mxu0 0.0
    %100 = vmatpush1.msra.mxu0 %v63
    %101 = vmatprep.subr.mxu0 0.0
    %102 = vmatpush1.msra.mxu0 %v64
    %103 = vmatprep.subr.mxu0 0.0
    %104 = vmatpush1.msra.mxu0 %v65
    %105 = vmatprep.subr.mxu0 0.0
    %106 = vmatpush1.msra.mxu0 %v66
    %107 = vmatprep.subr.mxu0 0.0
    %108 = vmatpush1.msra.mxu0 %v67
    %109 = vmatprep.subr.mxu0 0.0
    %110 = vmatpush1.msra.mxu0 %v68
    %111 = vmatprep.subr.mxu0 0.0
    %112 = vmatpush1.msra.mxu0 %v69
    %113 = vmatprep.subr.mxu0 0.0
    %114 = vmatpush1.msra.mxu0 %v70
    %115 = vmatprep.subr.mxu0 0.0
    %116 = vmatpush1.msra.mxu0 %v71
    %117 = vmatprep.subr.mxu0 0.0
    %118 = vmatpush1.msra.mxu0 %v72
    %119 = vmatprep.subr.mxu0 0.0
    %120 = vmatpush1.msra.mxu0 %v73
    %121 = vmatprep.subr.mxu0 0.0
    %122 = vmatpush1.msra.mxu0 %v74
    %123 = vmatprep.subr.mxu0 0.0
    %124 = vmatpush1.msra.mxu0 %v75
    %125 = vmatprep.subr.mxu0 0.0
    %126 = vmatpush1.msra.mxu0 %v76
    %127 = vmatprep.subr.mxu0 0.0
    %128 = vmatpush1.msra.mxu0 %v77
    %129 = vmatprep.subr.mxu0 0.0
    %130 = vmatpush1.msra.mxu0 %v78
    %131 = vmatprep.subr.mxu0 0.0
    %132 = vmatpush1.msra.mxu0 %v79
    %133 = vmatprep.subr.mxu0 0.0
    %134 = vmatpush1.msra.mxu0 %v80
    %135 = vmatprep.subr.mxu0 0.0
    %136 = vmatpush1.msra.mxu0 %v81
    %137 = vmatprep.subr.mxu0 0.0
    %138 = vmatpush1.msra.mxu0 %v82
    %139 = vmatprep.subr.mxu0 0.0
    %140 = vmatpush1.msra.mxu0 %v83
    %141 = vmatprep.subr.mxu0 0.0
    %142 = vmatpush1.msra.mxu0 %v84
    %143 = vmatprep.subr.mxu0 0.0
    %144 = vmatpush1.msra.mxu0 %v85
    %145 = vmatprep.subr.mxu0 0.0
    %146 = vmatpush1.msra.mxu0 %v86
    %147 = vmatprep.subr.mxu0 0.0
    %148 = vmatpush1.msra.mxu0 %v87
    %149 = vmatprep.subr.mxu0 0.0
    %150 = vmatpush1.msra.mxu0 %v88
    %151 = vmatprep.subr.mxu0 0.0
    %152 = vmatpush1.msra.mxu0 %v89
    %153 = vmatprep.subr.mxu0 0.0
    %154 = vmatpush1.msra.mxu0 %v90
    %155 = vmatprep.mubr.f32.mxu0 %v58
    %156 = vmatmul.mubr.f32.gmra.mrb[0].mxu0 %v57
    %v157 = vpop.f32.mrb[0].mxu0
    %v158 = vadd.f32 0.0, %v157
    %v159 = vpop.f32.mrb[0].mxu0
    %160 = vdwg.mxu0
    %v161 = vld [vmem:[%s3] sm:$0xff]
    %v162 = vld [vmem:[%s3 + $0x8] sm:$0xff]
    %v163 = vld [vmem:[%s3 + $0x10] sm:$0xff]
    %v164 = vld [vmem:[%s3 + $0x18] sm:$0xff]
    %s165 = scalar_lea.vmem %s2, 256
    %v166 = vld [vmem:[%s165] sm:$0xff]
    %v167 = vld [vmem:[%s165 + $0x8] sm:$0xff]
    %v168 = vld [vmem:[%s165 + $0x10] sm:$0xff]
    %v169 = vld [vmem:[%s165 + $0x18] sm:$0xff]
    %v170 = vld [vmem:[%s165 + $0x20] sm:$0xff]
    %v171 = vld [vmem:[%s165 + $0x28] sm:$0xff]
    %v172 = vld [vmem:[%s165 + $0x30] sm:$0xff]
    %v173 = vld [vmem:[%s165 + $0x38] sm:$0xff]
    %v174 = vld [vmem:[%s165 + $0x40] sm:$0xff]
    %v175 = vld [vmem:[%s165 + $0x48] sm:$0xff]
    %v176 = vld [vmem:[%s165 + $0x50] sm:$0xff]
    %v177 = vld [vmem:[%s165 + $0x58] sm:$0xff]
    %v178 = vld [vmem:[%s165 + $0x60] sm:$0xff]
    %v179 = vld [vmem:[%s165 + $0x68] sm:$0xff]
    %v180 = vld [vmem:[%s165 + $0x70] sm:$0xff]
    %v181 = vld [vmem:[%s165 + $0x78] sm:$0xff]
    %v182 = vld [vmem:[%s165 + $0x80] sm:$0xff]
    %v183 = vld [vmem:[%s165 + $0x88] sm:$0xff]
    %v184 = vld [vmem:[%s165 + $0x90] sm:$0xff]
    %v185 = vld [vmem:[%s165 + $0x98] sm:$0xff]
    %v186 = vld [vmem:[%s165 + $0xa0] sm:$0xff]
    %v187 = vld [vmem:[%s165 + $0xa8] sm:$0xff]
    %v188 = vld [vmem:[%s165 + $0xb0] sm:$0xff]
    %v189 = vld [vmem:[%s165 + $0xb8] sm:$0xff]
    %v190 = vld [vmem:[%s165 + $0xc0] sm:$0xff]
    %v191 = vld [vmem:[%s165 + $0xc8] sm:$0xff]
    %v192 = vld [vmem:[%s165 + $0xd0] sm:$0xff]
    %v193 = vld [vmem:[%s165 + $0xd8] sm:$0xff]
    %v194 = vld [vmem:[%s165 + $0xe0] sm:$0xff]
    %v195 = vld [vmem:[%s165 + $0xe8] sm:$0xff]
    %v196 = vld [vmem:[%s165 + $0xf0] sm:$0xff]
    %v197 = vld [vmem:[%s165 + $0xf8] sm:$0xff]
    %198 = vmatprep.subr.mxu0 0.0
    %199 = vmatpush1.msra.mxu0 %v166
    %200 = vmatprep.subr.mxu0 0.0
    %201 = vmatpush1.msra.mxu0 %v167
    %202 = vmatprep.subr.mxu0 0.0
    %203 = vmatpush1.msra.mxu0 %v168
    %204 = vmatprep.subr.mxu0 0.0
    %205 = vmatpush1.msra.mxu0 %v169
    %206 = vmatprep.subr.mxu0 0.0
    %207 = vmatpush1.msra.mxu0 %v170
    %208 = vmatprep.subr.mxu0 0.0
    %209 = vmatpush1.msra.mxu0 %v171
    %210 = vmatprep.subr.mxu0 0.0
    %211 = vmatpush1.msra.mxu0 %v172
    %212 = vmatprep.subr.mxu0 0.0
    %213 = vmatpush1.msra.mxu0 %v173
    %214 = vmatprep.subr.mxu0 0.0
    %215 = vmatpush1.msra.mxu0 %v174
    %216 = vmatprep.subr.mxu0 0.0
    %217 = vmatpush1.msra.mxu0 %v175
    %218 = vmatprep.subr.mxu0 0.0
    %219 = vmatpush1.msra.mxu0 %v176
    %220 = vmatprep.subr.mxu0 0.0
    %221 = vmatpush1.msra.mxu0 %v177
    %222 = vmatprep.subr.mxu0 0.0
    %223 = vmatpush1.msra.mxu0 %v178
    %224 = vmatprep.subr.mxu0 0.0
    %225 = vmatpush1.msra.mxu0 %v179
    %226 = vmatprep.subr.mxu0 0.0
    %227 = vmatpush1.msra.mxu0 %v180
    %228 = vmatprep.subr.mxu0 0.0
    %229 = vmatpush1.msra.mxu0 %v181
    %230 = vmatprep.subr.mxu0 0.0
    %231 = vmatpush1.msra.mxu0 %v182
    %232 = vmatprep.subr.mxu0 0.0
    %233 = vmatpush1.msra.mxu0 %v183
    %234 = vmatprep.subr.mxu0 0.0
    %235 = vmatpush1.msra.mxu0 %v184
    %236 = vmatprep.subr.mxu0 0.0
    %237 = vmatpush1.msra.mxu0 %v185
    %238 = vmatprep.subr.mxu0 0.0
    %239 = vmatpush1.msra.mxu0 %v186
    %240 = vmatprep.subr.mxu0 0.0
    %241 = vmatpush1.msra.mxu0 %v187
    %242 = vmatprep.subr.mxu0 0.0
    %243 = vmatpush1.msra.mxu0 %v188
    %244 = vmatprep.subr.mxu0 0.0
    %245 = vmatpush1.msra.mxu0 %v189
    %246 = vmatprep.subr.mxu0 0.0
    %247 = vmatpush1.msra.mxu0 %v190
    %248 = vmatprep.subr.mxu0 0.0
    %249 = vmatpush1.msra.mxu0 %v191
    %250 = vmatprep.subr.mxu0 0.0
    %251 = vmatpush1.msra.mxu0 %v192
    %252 = vmatprep.subr.mxu0 0.0
    %253 = vmatpush1.msra.mxu0 %v193
    %254 = vmatprep.subr.mxu0 0.0
    %255 = vmatpush1.msra.mxu0 %v194
    %256 = vmatprep.subr.mxu0 0.0
    %257 = vmatpush1.msra.mxu0 %v195
    %258 = vmatprep.subr.mxu0 0.0
    %259 = vmatpush1.msra.mxu0 %v196
    %260 = vmatprep.subr.mxu0 0.0
    %261 = vmatpush1.msra.mxu0 %v197
    %262 = vmatprep.mubr.f32.mxu0 %v58
    %263 = vmatmul.mubr.f32.gmra.mrb[0].mxu0 %v57
    %v264 = vpop.f32.mrb[0].mxu0
    %v265 = vadd.f32 0.0, %v264
    %v266 = vpop.f32.mrb[0].mxu0
    %267 = vdwg.mxu0
    %s268 = scalar_lea.vmem %s3, 32
    %v269 = vld [vmem:[%s268] sm:$0xff]
    %v270 = vld [vmem:[%s268 + $0x8] sm:$0xff]
    %v271 = vld [vmem:[%s268 + $0x10] sm:$0xff]
    %v272 = vld [vmem:[%s268 + $0x18] sm:$0xff]
    %vm273 = vcmask 64512
    %v275 = vsel %vm273, %v269, 0
    %v278 = vsel %vm273, %v270, 0
    %v281 = vsel %vm273, %v271, 0
    %v284 = vsel %vm273, %v272, 0
    %286 = vmatprep.subr.mxu0 0.0
    %287 = vmatpush1.msra.mxu0 %v265
    %288 = vmatprep.subr.mxu0 0.0
    %289 = vmatpush1.msra.mxu0 0.0
    %290 = vmatprep.subr.mxu0 0.0
    %291 = vmatpush1.msra.mxu0 0.0
    %292 = vmatprep.subr.mxu0 0.0
    %293 = vmatpush1.msra.mxu0 0.0
    %294 = vmatprep.subr.mxu0 0.0
    %295 = vmatpush1.msra.mxu0 0.0
    %296 = vmatprep.subr.mxu0 0.0
    %297 = vmatpush1.msra.mxu0 0.0
    %298 = vmatprep.subr.mxu0 0.0
    %299 = vmatpush1.msra.mxu0 0.0
    %300 = vmatprep.subr.mxu0 0.0
    %301 = vmatpush1.msra.mxu0 0.0
    %302 = vmatprep.subr.mxu0 0.0
    %303 = vmatpush1.msra.mxu0 0.0
    %304 = vmatprep.subr.mxu0 0.0
    %305 = vmatpush1.msra.mxu0 0.0
    %306 = vmatprep.subr.mxu0 0.0
    %307 = vmatpush1.msra.mxu0 0.0
    %308 = vmatprep.subr.mxu0 0.0
    %309 = vmatpush1.msra.mxu0 0.0
    %310 = vmatprep.subr.mxu0 0.0
    %311 = vmatpush1.msra.mxu0 0.0
    %312 = vmatprep.subr.mxu0 0.0
    %313 = vmatpush1.msra.mxu0 0.0
    %314 = vmatprep.subr.mxu0 0.0
    %315 = vmatpush1.msra.mxu0 0.0
    %316 = vmatprep.subr.mxu0 0.0
    %317 = vmatpush1.msra.mxu0 0.0
    %318 = vmatprep.subr.mxu0 0.0
    %319 = vmatpush1.msra.mxu0 0.0
    %320 = vmatprep.subr.mxu0 0.0
    %321 = vmatpush1.msra.mxu0 0.0
    %322 = vmatprep.subr.mxu0 0.0
    %323 = vmatpush1.msra.mxu0 0.0
    %324 = vmatprep.subr.mxu0 0.0
    %325 = vmatpush1.msra.mxu0 0.0
    %326 = vmatprep.subr.mxu0 0.0
    %327 = vmatpush1.msra.mxu0 0.0
    %328 = vmatprep.subr.mxu0 0.0
    %329 = vmatpush1.msra.mxu0 0.0
    %330 = vmatprep.subr.mxu0 0.0
    %331 = vmatpush1.msra.mxu0 0.0
    %332 = vmatprep.subr.mxu0 0.0
    %333 = vmatpush1.msra.mxu0 0.0
    %334 = vmatprep.subr.mxu0 0.0
    %335 = vmatpush1.msra.mxu0 0.0
    %336 = vmatprep.subr.mxu0 0.0
    %337 = vmatpush1.msra.mxu0 0.0
    %338 = vmatprep.subr.mxu0 0.0
    %339 = vmatpush1.msra.mxu0 0.0
    %340 = vmatprep.subr.mxu0 0.0
    %341 = vmatpush1.msra.mxu0 0.0
    %342 = vmatprep.subr.mxu0 0.0
    %343 = vmatpush1.msra.mxu0 0.0
    %344 = vmatprep.subr.mxu0 0.0
    %345 = vmatpush1.msra.mxu0 0.0
    %346 = vmatprep.subr.mxu0 0.0
    %347 = vmatpush1.msra.mxu0 0.0
    %348 = vmatprep.subr.mxu0 0.0
    %349 = vmatpush1.msra.mxu0 0.0
    %350 = vmatprep.mubr.f32.mxu0 0.0
    %351 = vmatmul.mubr.f32.gmra.mrb[0].mxu0 %v275
    %v352 = vpop.f32.mrb[0].mxu0
    %v353 = vadd.f32 0.0, %v352
    %v354 = vpop.f32.mrb[0].mxu0
    %355 = vmatprep.mubr.f32.mxu0 0.0
    %356 = vmatmul.mubr.f32.gmra.mrb[0].mxu0 %v278
    %v357 = vpop.f32.mrb[0].mxu0
    %v358 = vadd.f32 0.0, %v357
    %v359 = vpop.f32.mrb[0].mxu0
    %360 = vmatprep.mubr.f32.mxu0 0.0
    %361 = vmatmul.mubr.f32.gmra.mrb[0].mxu0 %v281
    %v362 = vpop.f32.mrb[0].mxu0
    %v363 = vadd.f32 0.0, %v362
    %v364 = vpop.f32.mrb[0].mxu0
    %365 = vmatprep.mubr.f32.mxu0 0.0
    %366 = vmatmul.mubr.f32.gmra.mrb[0].mxu0 %v284
    %v367 = vpop.f32.mrb[0].mxu0
    %v368 = vadd.f32 0.0, %v367
    %v369 = vpop.f32.mrb[0].mxu0
    %370 = vdwg.mxu0
    %v372 = vsel %vm273, %v161, 0
    %v375 = vsel %vm273, %v162, 0
    %v378 = vsel %vm273, %v163, 0
    %v381 = vsel %vm273, %v164, 0
    %383 = vmatprep.subr.mxu0 0.0
    %384 = vmatpush1.msra.mxu0 %v158
    %385 = vmatprep.subr.mxu0 0.0
    %386 = vmatpush1.msra.mxu0 0.0
    %387 = vmatprep.subr.mxu0 0.0
    %388 = vmatpush1.msra.mxu0 0.0
    %389 = vmatprep.subr.mxu0 0.0
    %390 = vmatpush1.msra.mxu0 0.0
    %391 = vmatprep.subr.mxu0 0.0
    %392 = vmatpush1.msra.mxu0 0.0
    %393 = vmatprep.subr.mxu0 0.0
    %394 = vmatpush1.msra.mxu0 0.0
    %395 = vmatprep.subr.mxu0 0.0
    %396 = vmatpush1.msra.mxu0 0.0
    %397 = vmatprep.subr.mxu0 0.0
    %398 = vmatpush1.msra.mxu0 0.0
    %399 = vmatprep.subr.mxu0 0.0
    %400 = vmatpush1.msra.mxu0 0.0
    %401 = vmatprep.subr.mxu0 0.0
    %402 = vmatpush1.msra.mxu0 0.0
    %403 = vmatprep.subr.mxu0 0.0
    %404 = vmatpush1.msra.mxu0 0.0
    %405 = vmatprep.subr.mxu0 0.0
    %406 = vmatpush1.msra.mxu0 0.0
    %407 = vmatprep.subr.mxu0 0.0
    %408 = vmatpush1.msra.mxu0 0.0
    %409 = vmatprep.subr.mxu0 0.0
    %410 = vmatpush1.msra.mxu0 0.0
    %411 = vmatprep.subr.mxu0 0.0
    %412 = vmatpush1.msra.mxu0 0.0
    %413 = vmatprep.subr.mxu0 0.0
    %414 = vmatpush1.msra.mxu0 0.0
    %415 = vmatprep.subr.mxu0 0.0
    %416 = vmatpush1.msra.mxu0 0.0
    %417 = vmatprep.subr.mxu0 0.0
    %418 = vmatpush1.msra.mxu0 0.0
    %419 = vmatprep.subr.mxu0 0.0
    %420 = vmatpush1.msra.mxu0 0.0
    %421 = vmatprep.subr.mxu0 0.0
    %422 = vmatpush1.msra.mxu0 0.0
    %423 = vmatprep.subr.mxu0 0.0
    %424 = vmatpush1.msra.mxu0 0.0
    %425 = vmatprep.subr.mxu0 0.0
    %426 = vmatpush1.msra.mxu0 0.0
    %427 = vmatprep.subr.mxu0 0.0
    %428 = vmatpush1.msra.mxu0 0.0
    %429 = vmatprep.subr.mxu0 0.0
    %430 = vmatpush1.msra.mxu0 0.0
    %431 = vmatprep.subr.mxu0 0.0
    %432 = vmatpush1.msra.mxu0 0.0
    %433 = vmatprep.subr.mxu0 0.0
    %434 = vmatpush1.msra.mxu0 0.0
    %435 = vmatprep.subr.mxu0 0.0
    %436 = vmatpush1.msra.mxu0 0.0
    %437 = vmatprep.subr.mxu0 0.0
    %438 = vmatpush1.msra.mxu0 0.0
    %439 = vmatprep.subr.mxu0 0.0
    %440 = vmatpush1.msra.mxu0 0.0
    %441 = vmatprep.subr.mxu0 0.0
    %442 = vmatpush1.msra.mxu0 0.0
    %443 = vmatprep.subr.mxu0 0.0
    %444 = vmatpush1.msra.mxu0 0.0
    %445 = vmatprep.subr.mxu0 0.0
    %446 = vmatpush1.msra.mxu0 0.0
    %447 = vmatprep.mubr.f32.mxu0 0.0
    %448 = vmatmul.mubr.f32.gmra.mrb[0].mxu0 %v372
    %v449 = vpop.f32.mrb[0].mxu0
    %v450 = vadd.f32 %v353, %v449
    %v451 = vpop.f32.mrb[0].mxu0
    %452 = vmatprep.mubr.f32.mxu0 0.0
    %453 = vmatmul.mubr.f32.gmra.mrb[0].mxu0 %v375
    %v454 = vpop.f32.mrb[0].mxu0
    %v455 = vadd.f32 %v358, %v454
    %v456 = vpop.f32.mrb[0].mxu0
    %457 = vmatprep.mubr.f32.mxu0 0.0
    %458 = vmatmul.mubr.f32.gmra.mrb[0].mxu0 %v378
    %v459 = vpop.f32.mrb[0].mxu0
    %v460 = vadd.f32 %v363, %v459
    %v461 = vpop.f32.mrb[0].mxu0
    %462 = vmatprep.mubr.f32.mxu0 0.0
    %463 = vmatmul.mubr.f32.gmra.mrb[0].mxu0 %v381
    %v464 = vpop.f32.mrb[0].mxu0
    %v465 = vadd.f32 %v368, %v464
    %v466 = vpop.f32.mrb[0].mxu0
    %467 = vdwg.mxu0
    %s468 = scalar_lea.vmem %s2, 512
    %v469 = vld [vmem:[%s468] sm:$0xff]
    %v470 = vld [vmem:[%s468 + $0x8] sm:$0xff]
    %v471 = vld [vmem:[%s468 + $0x10] sm:$0xff]
    %v472 = vld [vmem:[%s468 + $0x18] sm:$0xff]
    %v473 = vld [vmem:[%s468 + $0x20] sm:$0xff]
    %v474 = vld [vmem:[%s468 + $0x28] sm:$0xff]
    %v475 = vld [vmem:[%s468 + $0x30] sm:$0xff]
    %v476 = vld [vmem:[%s468 + $0x38] sm:$0xff]
    %v477 = vld [vmem:[%s468 + $0x40] sm:$0xff]
    %v478 = vld [vmem:[%s468 + $0x48] sm:$0xff]
    %v479 = vld [vmem:[%s468 + $0x50] sm:$0xff]
    %v480 = vld [vmem:[%s468 + $0x58] sm:$0xff]
    %v481 = vld [vmem:[%s468 + $0x60] sm:$0xff]
    %v482 = vld [vmem:[%s468 + $0x68] sm:$0xff]
    %v483 = vld [vmem:[%s468 + $0x70] sm:$0xff]
    %v484 = vld [vmem:[%s468 + $0x78] sm:$0xff]
    %v485 = vld [vmem:[%s468 + $0x80] sm:$0xff]
    %v486 = vld [vmem:[%s468 + $0x88] sm:$0xff]
    %v487 = vld [vmem:[%s468 + $0x90] sm:$0xff]
    %v488 = vld [vmem:[%s468 + $0x98] sm:$0xff]
    %v489 = vld [vmem:[%s468 + $0xa0] sm:$0xff]
    %v490 = vld [vmem:[%s468 + $0xa8] sm:$0xff]
    %v491 = vld [vmem:[%s468 + $0xb0] sm:$0xff]
    %v492 = vld [vmem:[%s468 + $0xb8] sm:$0xff]
    %v493 = vld [vmem:[%s468 + $0xc0] sm:$0xff]
    %v494 = vld [vmem:[%s468 + $0xc8] sm:$0xff]
    %v495 = vld [vmem:[%s468 + $0xd0] sm:$0xff]
    %v496 = vld [vmem:[%s468 + $0xd8] sm:$0xff]
    %v497 = vld [vmem:[%s468 + $0xe0] sm:$0xff]
    %v498 = vld [vmem:[%s468 + $0xe8] sm:$0xff]
    %v499 = vld [vmem:[%s468 + $0xf0] sm:$0xff]
    %v500 = vld [vmem:[%s468 + $0xf8] sm:$0xff]
    %501 = vmatprep.subr.mxu0 0.0
    %502 = vmatpush1.msra.mxu0 %v469
    %503 = vmatprep.subr.mxu0 0.0
    %504 = vmatpush1.msra.mxu0 %v470
    %505 = vmatprep.subr.mxu0 0.0
    %506 = vmatpush1.msra.mxu0 %v471
    %507 = vmatprep.subr.mxu0 0.0
    %508 = vmatpush1.msra.mxu0 %v472
    %509 = vmatprep.subr.mxu0 0.0
    %510 = vmatpush1.msra.mxu0 %v473
    %511 = vmatprep.subr.mxu0 0.0
    %512 = vmatpush1.msra.mxu0 %v474
    %513 = vmatprep.subr.mxu0 0.0
    %514 = vmatpush1.msra.mxu0 %v475
    %515 = vmatprep.subr.mxu0 0.0
    %516 = vmatpush1.msra.mxu0 %v476
    %517 = vmatprep.subr.mxu0 0.0
    %518 = vmatpush1.msra.mxu0 %v477
    %519 = vmatprep.subr.mxu0 0.0
    %520 = vmatpush1.msra.mxu0 %v478
    %521 = vmatprep.subr.mxu0 0.0
    %522 = vmatpush1.msra.mxu0 %v479
    %523 = vmatprep.subr.mxu0 0.0
    %524 = vmatpush1.msra.mxu0 %v480
    %525 = vmatprep.subr.mxu0 0.0
    %526 = vmatpush1.msra.mxu0 %v481
    %527 = vmatprep.subr.mxu0 0.0
    %528 = vmatpush1.msra.mxu0 %v482
    %529 = vmatprep.subr.mxu0 0.0
    %530 = vmatpush1.msra.mxu0 %v483
    %531 = vmatprep.subr.mxu0 0.0
    %532 = vmatpush1.msra.mxu0 %v484
    %533 = vmatprep.subr.mxu0 0.0
    %534 = vmatpush1.msra.mxu0 %v485
    %535 = vmatprep.subr.mxu0 0.0
    %536 = vmatpush1.msra.mxu0 %v486
    %537 = vmatprep.subr.mxu0 0.0
    %538 = vmatpush1.msra.mxu0 %v487
    %539 = vmatprep.subr.mxu0 0.0
    %540 = vmatpush1.msra.mxu0 %v488
    %541 = vmatprep.subr.mxu0 0.0
    %542 = vmatpush1.msra.mxu0 %v489
    %543 = vmatprep.subr.mxu0 0.0
    %544 = vmatpush1.msra.mxu0 %v490
    %545 = vmatprep.subr.mxu0 0.0
    %546 = vmatpush1.msra.mxu0 %v491
    %547 = vmatprep.subr.mxu0 0.0
    %548 = vmatpush1.msra.mxu0 %v492
    %549 = vmatprep.subr.mxu0 0.0
    %550 = vmatpush1.msra.mxu0 %v493
    %551 = vmatprep.subr.mxu0 0.0
    %552 = vmatpush1.msra.mxu0 %v494
    %553 = vmatprep.subr.mxu0 0.0
    %554 = vmatpush1.msra.mxu0 %v495
    %555 = vmatprep.subr.mxu0 0.0
    %556 = vmatpush1.msra.mxu0 %v496
    %557 = vmatprep.subr.mxu0 0.0
    %558 = vmatpush1.msra.mxu0 %v497
    %559 = vmatprep.subr.mxu0 0.0
    %560 = vmatpush1.msra.mxu0 %v498
    %561 = vmatprep.subr.mxu0 0.0
    %562 = vmatpush1.msra.mxu0 %v499
    %563 = vmatprep.subr.mxu0 0.0
    %564 = vmatpush1.msra.mxu0 %v500
    %565 = vmatprep.mubr.f32.mxu0 %v58
    %566 = vmatmul.mubr.f32.gmra.mrb[0].mxu0 %v57
    %v567 = vpop.f32.mrb[0].mxu0
    %v568 = vadd.f32 0.0, %v567
    %v569 = vpop.f32.mrb[0].mxu0
    %570 = vdwg.mxu0
    %s571 = scalar_lea.vmem %s3, 64
    %v572 = vld [vmem:[%s571] sm:$0xff]
    %v573 = vld [vmem:[%s571 + $0x8] sm:$0xff]
    %v574 = vld [vmem:[%s571 + $0x10] sm:$0xff]
    %v575 = vld [vmem:[%s571 + $0x18] sm:$0xff]
    %v577 = vsel %vm273, %v572, 0
    %v580 = vsel %vm273, %v573, 0
    %v583 = vsel %vm273, %v574, 0
    %v586 = vsel %vm273, %v575, 0
    %588 = vmatprep.subr.mxu0 0.0
    %589 = vmatpush1.msra.mxu0 %v568
    %590 = vmatprep.subr.mxu0 0.0
    %591 = vmatpush1.msra.mxu0 0.0
    %592 = vmatprep.subr.mxu0 0.0
    %593 = vmatpush1.msra.mxu0 0.0
    %594 = vmatprep.subr.mxu0 0.0
    %595 = vmatpush1.msra.mxu0 0.0
    %596 = vmatprep.subr.mxu0 0.0
    %597 = vmatpush1.msra.mxu0 0.0
    %598 = vmatprep.subr.mxu0 0.0
    %599 = vmatpush1.msra.mxu0 0.0
    %600 = vmatprep.subr.mxu0 0.0
    %601 = vmatpush1.msra.mxu0 0.0
    %602 = vmatprep.subr.mxu0 0.0
    %603 = vmatpush1.msra.mxu0 0.0
    %604 = vmatprep.subr.mxu0 0.0
    %605 = vmatpush1.msra.mxu0 0.0
    %606 = vmatprep.subr.mxu0 0.0
    %607 = vmatpush1.msra.mxu0 0.0
    %608 = vmatprep.subr.mxu0 0.0
    %609 = vmatpush1.msra.mxu0 0.0
    %610 = vmatprep.subr.mxu0 0.0
    %611 = vmatpush1.msra.mxu0 0.0
    %612 = vmatprep.subr.mxu0 0.0
    %613 = vmatpush1.msra.mxu0 0.0
    %614 = vmatprep.subr.mxu0 0.0
    %615 = vmatpush1.msra.mxu0 0.0
    %616 = vmatprep.subr.mxu0 0.0
    %617 = vmatpush1.msra.mxu0 0.0
    %618 = vmatprep.subr.mxu0 0.0
    %619 = vmatpush1.msra.mxu0 0.0
    %620 = vmatprep.subr.mxu0 0.0
    %621 = vmatpush1.msra.mxu0 0.0
    %622 = vmatprep.subr.mxu0 0.0
    %623 = vmatpush1.msra.mxu0 0.0
    %624 = vmatprep.subr.mxu0 0.0
    %625 = vmatpush1.msra.mxu0 0.0
    %626 = vmatprep.subr.mxu0 0.0
    %627 = vmatpush1.msra.mxu0 0.0
    %628 = vmatprep.subr.mxu0 0.0
    %629 = vmatpush1.msra.mxu0 0.0
    %630 = vmatprep.subr.mxu0 0.0
    %631 = vmatpush1.msra.mxu0 0.0
    %632 = vmatprep.subr.mxu0 0.0
    %633 = vmatpush1.msra.mxu0 0.0
    %634 = vmatprep.subr.mxu0 0.0
    %635 = vmatpush1.msra.mxu0 0.0
    %636 = vmatprep.subr.mxu0 0.0
    %637 = vmatpush1.msra.mxu0 0.0
    %638 = vmatprep.subr.mxu0 0.0
    %639 = vmatpush1.msra.mxu0 0.0
    %640 = vmatprep.subr.mxu0 0.0
    %641 = vmatpush1.msra.mxu0 0.0
    %642 = vmatprep.subr.mxu0 0.0
    %643 = vmatpush1.msra.mxu0 0.0
    %644 = vmatprep.subr.mxu0 0.0
    %645 = vmatpush1.msra.mxu0 0.0
    %646 = vmatprep.subr.mxu0 0.0
    %647 = vmatpush1.msra.mxu0 0.0
    %648 = vmatprep.subr.mxu0 0.0
    %649 = vmatpush1.msra.mxu0 0.0
    %650 = vmatprep.subr.mxu0 0.0
    %651 = vmatpush1.msra.mxu0 0.0
    %652 = vmatprep.mubr.f32.mxu0 0.0
    %653 = vmatmul.mubr.f32.gmra.mrb[0].mxu0 %v577
    %v654 = vpop.f32.mrb[0].mxu0
    %v655 = vadd.f32 0.0, %v654
    %v656 = vpop.f32.mrb[0].mxu0
    %657 = vmatprep.mubr.f32.mxu0 0.0
    %658 = vmatmul.mubr.f32.gmra.mrb[0].mxu0 %v580
    %v659 = vpop.f32.mrb[0].mxu0
    %v660 = vadd.f32 0.0, %v659
    %v661 = vpop.f32.mrb[0].mxu0
    %662 = vmatprep.mubr.f32.mxu0 0.0
    %663 = vmatmul.mubr.f32.gmra.mrb[0].mxu0 %v583
    %v664 = vpop.f32.mrb[0].mxu0
    %v665 = vadd.f32 0.0, %v664
    %v666 = vpop.f32.mrb[0].mxu0
    %667 = vmatprep.mubr.f32.mxu0 0.0
    %668 = vmatmul.mubr.f32.gmra.mrb[0].mxu0 %v586
    %v669 = vpop.f32.mrb[0].mxu0
    %v670 = vadd.f32 0.0, %v669
    %v671 = vpop.f32.mrb[0].mxu0
    %672 = vdwg.mxu0
    %v673 = vadd.f32 %v450, %v655
    %v674 = vadd.f32 %v455, %v660
    %v675 = vadd.f32 %v460, %v665
    %v676 = vadd.f32 %v465, %v670
    %s677 = scalar_lea.vmem %s2, 768
    %v678 = vld [vmem:[%s677] sm:$0xff]
    %v679 = vld [vmem:[%s677 + $0x8] sm:$0xff]
    %v680 = vld [vmem:[%s677 + $0x10] sm:$0xff]
    %v681 = vld [vmem:[%s677 + $0x18] sm:$0xff]
    %v682 = vld [vmem:[%s677 + $0x20] sm:$0xff]
    %v683 = vld [vmem:[%s677 + $0x28] sm:$0xff]
    %v684 = vld [vmem:[%s677 + $0x30] sm:$0xff]
    %v685 = vld [vmem:[%s677 + $0x38] sm:$0xff]
    %v686 = vld [vmem:[%s677 + $0x40] sm:$0xff]
    %v687 = vld [vmem:[%s677 + $0x48] sm:$0xff]
    %v688 = vld [vmem:[%s677 + $0x50] sm:$0xff]
    %v689 = vld [vmem:[%s677 + $0x58] sm:$0xff]
    %v690 = vld [vmem:[%s677 + $0x60] sm:$0xff]
    %v691 = vld [vmem:[%s677 + $0x68] sm:$0xff]
    %v692 = vld [vmem:[%s677 + $0x70] sm:$0xff]
    %v693 = vld [vmem:[%s677 + $0x78] sm:$0xff]
    %v694 = vld [vmem:[%s677 + $0x80] sm:$0xff]
    %v695 = vld [vmem:[%s677 + $0x88] sm:$0xff]
    %v696 = vld [vmem:[%s677 + $0x90] sm:$0xff]
    %v697 = vld [vmem:[%s677 + $0x98] sm:$0xff]
    %v698 = vld [vmem:[%s677 + $0xa0] sm:$0xff]
    %v699 = vld [vmem:[%s677 + $0xa8] sm:$0xff]
    %v700 = vld [vmem:[%s677 + $0xb0] sm:$0xff]
    %v701 = vld [vmem:[%s677 + $0xb8] sm:$0xff]
    %v702 = vld [vmem:[%s677 + $0xc0] sm:$0xff]
    %v703 = vld [vmem:[%s677 + $0xc8] sm:$0xff]
    %v704 = vld [vmem:[%s677 + $0xd0] sm:$0xff]
    %v705 = vld [vmem:[%s677 + $0xd8] sm:$0xff]
    %v706 = vld [vmem:[%s677 + $0xe0] sm:$0xff]
    %v707 = vld [vmem:[%s677 + $0xe8] sm:$0xff]
    %v708 = vld [vmem:[%s677 + $0xf0] sm:$0xff]
    %v709 = vld [vmem:[%s677 + $0xf8] sm:$0xff]
    %710 = vmatprep.subr.mxu0 0.0
    %711 = vmatpush1.msra.mxu0 %v678
    %712 = vmatprep.subr.mxu0 0.0
    %713 = vmatpush1.msra.mxu0 %v679
    %714 = vmatprep.subr.mxu0 0.0
    %715 = vmatpush1.msra.mxu0 %v680
    %716 = vmatprep.subr.mxu0 0.0
    %717 = vmatpush1.msra.mxu0 %v681
    %718 = vmatprep.subr.mxu0 0.0
    %719 = vmatpush1.msra.mxu0 %v682
    %720 = vmatprep.subr.mxu0 0.0
    %721 = vmatpush1.msra.mxu0 %v683
    %722 = vmatprep.subr.mxu0 0.0
    %723 = vmatpush1.msra.mxu0 %v684
    %724 = vmatprep.subr.mxu0 0.0
    %725 = vmatpush1.msra.mxu0 %v685
    %726 = vmatprep.subr.mxu0 0.0
    %727 = vmatpush1.msra.mxu0 %v686
    %728 = vmatprep.subr.mxu0 0.0
    %729 = vmatpush1.msra.mxu0 %v687
    %730 = vmatprep.subr.mxu0 0.0
    %731 = vmatpush1.msra.mxu0 %v688
    %732 = vmatprep.subr.mxu0 0.0
    %733 = vmatpush1.msra.mxu0 %v689
    %734 = vmatprep.subr.mxu0 0.0
    %735 = vmatpush1.msra.mxu0 %v690
    %736 = vmatprep.subr.mxu0 0.0
    %737 = vmatpush1.msra.mxu0 %v691
    %738 = vmatprep.subr.mxu0 0.0
    %739 = vmatpush1.msra.mxu0 %v692
    %740 = vmatprep.subr.mxu0 0.0
    %741 = vmatpush1.msra.mxu0 %v693
    %742 = vmatprep.subr.mxu0 0.0
    %743 = vmatpush1.msra.mxu0 %v694
    %744 = vmatprep.subr.mxu0 0.0
    %745 = vmatpush1.msra.mxu0 %v695
    %746 = vmatprep.subr.mxu0 0.0
    %747 = vmatpush1.msra.mxu0 %v696
    %748 = vmatprep.subr.mxu0 0.0
    %749 = vmatpush1.msra.mxu0 %v697
    %750 = vmatprep.subr.mxu0 0.0
    %751 = vmatpush1.msra.mxu0 %v698
    %752 = vmatprep.subr.mxu0 0.0
    %753 = vmatpush1.msra.mxu0 %v699
    %754 = vmatprep.subr.mxu0 0.0
    %755 = vmatpush1.msra.mxu0 %v700
    %756 = vmatprep.subr.mxu0 0.0
    %757 = vmatpush1.msra.mxu0 %v701
    %758 = vmatprep.subr.mxu0 0.0
    %759 = vmatpush1.msra.mxu0 %v702
    %760 = vmatprep.subr.mxu0 0.0
    %761 = vmatpush1.msra.mxu0 %v703
    %762 = vmatprep.subr.mxu0 0.0
    %763 = vmatpush1.msra.mxu0 %v704
    %764 = vmatprep.subr.mxu0 0.0
    %765 = vmatpush1.msra.mxu0 %v705
    %766 = vmatprep.subr.mxu0 0.0
    %767 = vmatpush1.msra.mxu0 %v706
    %768 = vmatprep.subr.mxu0 0.0
    %769 = vmatpush1.msra.mxu0 %v707
    %770 = vmatprep.subr.mxu0 0.0
    %771 = vmatpush1.msra.mxu0 %v708
    %772 = vmatprep.subr.mxu0 0.0
    %773 = vmatpush1.msra.mxu0 %v709
    %774 = vmatprep.mubr.f32.mxu0 %v58
    %775 = vmatmul.mubr.f32.gmra.mrb[0].mxu0 %v57
    %v776 = vpop.f32.mrb[0].mxu0
    %v777 = vadd.f32 0.0, %v776
    %v778 = vpop.f32.mrb[0].mxu0
    %779 = vdwg.mxu0
    %s780 = scalar_lea.vmem %s3, 96
    %v781 = vld [vmem:[%s780] sm:$0xff]
    %v782 = vld [vmem:[%s780 + $0x8] sm:$0xff]
    %v783 = vld [vmem:[%s780 + $0x10] sm:$0xff]
    %v784 = vld [vmem:[%s780 + $0x18] sm:$0xff]
    %v786 = vsel %vm273, %v781, 0
    %v789 = vsel %vm273, %v782, 0
    %v792 = vsel %vm273, %v783, 0
    %v795 = vsel %vm273, %v784, 0
    %797 = vmatprep.subr.mxu0 0.0
    %798 = vmatpush1.msra.mxu0 %v777
    %799 = vmatprep.subr.mxu0 0.0
    %800 = vmatpush1.msra.mxu0 0.0
    %801 = vmatprep.subr.mxu0 0.0
    %802 = vmatpush1.msra.mxu0 0.0
    %803 = vmatprep.subr.mxu0 0.0
    %804 = vmatpush1.msra.mxu0 0.0
    %805 = vmatprep.subr.mxu0 0.0
    %806 = vmatpush1.msra.mxu0 0.0
    %807 = vmatprep.subr.mxu0 0.0
    %808 = vmatpush1.msra.mxu0 0.0
    %809 = vmatprep.subr.mxu0 0.0
    %810 = vmatpush1.msra.mxu0 0.0
    %811 = vmatprep.subr.mxu0 0.0
    %812 = vmatpush1.msra.mxu0 0.0
    %813 = vmatprep.subr.mxu0 0.0
    %814 = vmatpush1.msra.mxu0 0.0
    %815 = vmatprep.subr.mxu0 0.0
    %816 = vmatpush1.msra.mxu0 0.0
    %817 = vmatprep.subr.mxu0 0.0
    %818 = vmatpush1.msra.mxu0 0.0
    %819 = vmatprep.subr.mxu0 0.0
    %820 = vmatpush1.msra.mxu0 0.0
    %821 = vmatprep.subr.mxu0 0.0
    %822 = vmatpush1.msra.mxu0 0.0
    %823 = vmatprep.subr.mxu0 0.0
    %824 = vmatpush1.msra.mxu0 0.0
    %825 = vmatprep.subr.mxu0 0.0
    %826 = vmatpush1.msra.mxu0 0.0
    %827 = vmatprep.subr.mxu0 0.0
    %828 = vmatpush1.msra.mxu0 0.0
    %829 = vmatprep.subr.mxu0 0.0
    %830 = vmatpush1.msra.mxu0 0.0
    %831 = vmatprep.subr.mxu0 0.0
    %832 = vmatpush1.msra.mxu0 0.0
    %833 = vmatprep.subr.mxu0 0.0
    %834 = vmatpush1.msra.mxu0 0.0
    %835 = vmatprep.subr.mxu0 0.0
    %836 = vmatpush1.msra.mxu0 0.0
    %837 = vmatprep.subr.mxu0 0.0
    %838 = vmatpush1.msra.mxu0 0.0
    %839 = vmatprep.subr.mxu0 0.0
    %840 = vmatpush1.msra.mxu0 0.0
    %841 = vmatprep.subr.mxu0 0.0
    %842 = vmatpush1.msra.mxu0 0.0
    %843 = vmatprep.subr.mxu0 0.0
    %844 = vmatpush1.msra.mxu0 0.0
    %845 = vmatprep.subr.mxu0 0.0
    %846 = vmatpush1.msra.mxu0 0.0
    %847 = vmatprep.subr.mxu0 0.0
    %848 = vmatpush1.msra.mxu0 0.0
    %849 = vmatprep.subr.mxu0 0.0
    %850 = vmatpush1.msra.mxu0 0.0
    %851 = vmatprep.subr.mxu0 0.0
    %852 = vmatpush1.msra.mxu0 0.0
    %853 = vmatprep.subr.mxu0 0.0
    %854 = vmatpush1.msra.mxu0 0.0
    %855 = vmatprep.subr.mxu0 0.0
    %856 = vmatpush1.msra.mxu0 0.0
    %857 = vmatprep.subr.mxu0 0.0
    %858 = vmatpush1.msra.mxu0 0.0
    %859 = vmatprep.subr.mxu0 0.0
    %860 = vmatpush1.msra.mxu0 0.0
    %861 = vmatprep.mubr.f32.mxu0 0.0
    %862 = vmatmul.mubr.f32.gmra.mrb[0].mxu0 %v786
    %v863 = vpop.f32.mrb[0].mxu0
    %v864 = vadd.f32 0.0, %v863
    %v865 = vpop.f32.mrb[0].mxu0
    %866 = vmatprep.mubr.f32.mxu0 0.0
    %867 = vmatmul.mubr.f32.gmra.mrb[0].mxu0 %v789
    %v868 = vpop.f32.mrb[0].mxu0
    %v869 = vadd.f32 0.0, %v868
    %v870 = vpop.f32.mrb[0].mxu0
    %871 = vmatprep.mubr.f32.mxu0 0.0
    %872 = vmatmul.mubr.f32.gmra.mrb[0].mxu0 %v792
    %v873 = vpop.f32.mrb[0].mxu0
    %v874 = vadd.f32 0.0, %v873
    %v875 = vpop.f32.mrb[0].mxu0
    %876 = vmatprep.mubr.f32.mxu0 0.0
    %877 = vmatmul.mubr.f32.gmra.mrb[0].mxu0 %v795
    %v878 = vpop.f32.mrb[0].mxu0
    %v879 = vadd.f32 0.0, %v878
    %v880 = vpop.f32.mrb[0].mxu0
    %881 = vdwg.mxu0
    %v882 = vadd.f32 %v673, %v864
    %v883 = vadd.f32 %v674, %v869
    %v884 = vadd.f32 %v675, %v874
    %v885 = vadd.f32 %v676, %v879
    %s886 = scalar_lea.vmem %s2, 1024
    %v887 = vld [vmem:[%s886] sm:$0xff]
    %v888 = vld [vmem:[%s886 + $0x8] sm:$0xff]
    %v889 = vld [vmem:[%s886 + $0x10] sm:$0xff]
    %v890 = vld [vmem:[%s886 + $0x18] sm:$0xff]
    %v891 = vld [vmem:[%s886 + $0x20] sm:$0xff]
    %v892 = vld [vmem:[%s886 + $0x28] sm:$0xff]
    %v893 = vld [vmem:[%s886 + $0x30] sm:$0xff]
    %v894 = vld [vmem:[%s886 + $0x38] sm:$0xff]
    %v895 = vld [vmem:[%s886 + $0x40] sm:$0xff]
    %v896 = vld [vmem:[%s886 + $0x48] sm:$0xff]
    %v897 = vld [vmem:[%s886 + $0x50] sm:$0xff]
    %v898 = vld [vmem:[%s886 + $0x58] sm:$0xff]
    %v899 = vld [vmem:[%s886 + $0x60] sm:$0xff]
    %v900 = vld [vmem:[%s886 + $0x68] sm:$0xff]
    %v901 = vld [vmem:[%s886 + $0x70] sm:$0xff]
    %v902 = vld [vmem:[%s886 + $0x78] sm:$0xff]
    %v903 = vld [vmem:[%s886 + $0x80] sm:$0xff]
    %v904 = vld [vmem:[%s886 + $0x88] sm:$0xff]
    %v905 = vld [vmem:[%s886 + $0x90] sm:$0xff]
    %v906 = vld [vmem:[%s886 + $0x98] sm:$0xff]
    %v907 = vld [vmem:[%s886 + $0xa0] sm:$0xff]
    %v908 = vld [vmem:[%s886 + $0xa8] sm:$0xff]
    %v909 = vld [vmem:[%s886 + $0xb0] sm:$0xff]
    %v910 = vld [vmem:[%s886 + $0xb8] sm:$0xff]
    %v911 = vld [vmem:[%s886 + $0xc0] sm:$0xff]
    %v912 = vld [vmem:[%s886 + $0xc8] sm:$0xff]
    %v913 = vld [vmem:[%s886 + $0xd0] sm:$0xff]
    %v914 = vld [vmem:[%s886 + $0xd8] sm:$0xff]
    %v915 = vld [vmem:[%s886 + $0xe0] sm:$0xff]
    %v916 = vld [vmem:[%s886 + $0xe8] sm:$0xff]
    %v917 = vld [vmem:[%s886 + $0xf0] sm:$0xff]
    %v918 = vld [vmem:[%s886 + $0xf8] sm:$0xff]
    %919 = vmatprep.subr.mxu0 0.0
    %920 = vmatpush1.msra.mxu0 %v887
    %921 = vmatprep.subr.mxu0 0.0
    %922 = vmatpush1.msra.mxu0 %v888
    %923 = vmatprep.subr.mxu0 0.0
    %924 = vmatpush1.msra.mxu0 %v889
    %925 = vmatprep.subr.mxu0 0.0
    %926 = vmatpush1.msra.mxu0 %v890
    %927 = vmatprep.subr.mxu0 0.0
    %928 = vmatpush1.msra.mxu0 %v891
    %929 = vmatprep.subr.mxu0 0.0
    %930 = vmatpush1.msra.mxu0 %v892
    %931 = vmatprep.subr.mxu0 0.0
    %932 = vmatpush1.msra.mxu0 %v893
    %933 = vmatprep.subr.mxu0 0.0
    %934 = vmatpush1.msra.mxu0 %v894
    %935 = vmatprep.subr.mxu0 0.0
    %936 = vmatpush1.msra.mxu0 %v895
    %937 = vmatprep.subr.mxu0 0.0
    %938 = vmatpush1.msra.mxu0 %v896
    %939 = vmatprep.subr.mxu0 0.0
    %940 = vmatpush1.msra.mxu0 %v897
    %941 = vmatprep.subr.mxu0 0.0
    %942 = vmatpush1.msra.mxu0 %v898
    %943 = vmatprep.subr.mxu0 0.0
    %944 = vmatpush1.msra.mxu0 %v899
    %945 = vmatprep.subr.mxu0 0.0
    %946 = vmatpush1.msra.mxu0 %v900
    %947 = vmatprep.subr.mxu0 0.0
    %948 = vmatpush1.msra.mxu0 %v901
    %949 = vmatprep.subr.mxu0 0.0
    %950 = vmatpush1.msra.mxu0 %v902
    %951 = vmatprep.subr.mxu0 0.0
    %952 = vmatpush1.msra.mxu0 %v903
    %953 = vmatprep.subr.mxu0 0.0
    %954 = vmatpush1.msra.mxu0 %v904
    %955 = vmatprep.subr.mxu0 0.0
    %956 = vmatpush1.msra.mxu0 %v905
    %957 = vmatprep.subr.mxu0 0.0
    %958 = vmatpush1.msra.mxu0 %v906
    %959 = vmatprep.subr.mxu0 0.0
    %960 = vmatpush1.msra.mxu0 %v907
    %961 = vmatprep.subr.mxu0 0.0
    %962 = vmatpush1.msra.mxu0 %v908
    %963 = vmatprep.subr.mxu0 0.0
    %964 = vmatpush1.msra.mxu0 %v909
    %965 = vmatprep.subr.mxu0 0.0
    %966 = vmatpush1.msra.mxu0 %v910
    %967 = vmatprep.subr.mxu0 0.0
    %968 = vmatpush1.msra.mxu0 %v911
    %969 = vmatprep.subr.mxu0 0.0
    %970 = vmatpush1.msra.mxu0 %v912
    %971 = vmatprep.subr.mxu0 0.0
    %972 = vmatpush1.msra.mxu0 %v913
    %973 = vmatprep.subr.mxu0 0.0
    %974 = vmatpush1.msra.mxu0 %v914
    %975 = vmatprep.subr.mxu0 0.0
    %976 = vmatpush1.msra.mxu0 %v915
    %977 = vmatprep.subr.mxu0 0.0
    %978 = vmatpush1.msra.mxu0 %v916
    %979 = vmatprep.subr.mxu0 0.0
    %980 = vmatpush1.msra.mxu0 %v917
    %981 = vmatprep.subr.mxu0 0.0
    %982 = vmatpush1.msra.mxu0 %v918
    %983 = vmatprep.mubr.f32.mxu0 %v58
    %984 = vmatmul.mubr.f32.gmra.mrb[0].mxu0 %v57
    %v985 = vpop.f32.mrb[0].mxu0
    %v986 = vadd.f32 0.0, %v985
    %v987 = vpop.f32.mrb[0].mxu0
    %988 = vdwg.mxu0
    %s989 = scalar_lea.vmem %s3, 128
    %v990 = vld [vmem:[%s989] sm:$0xff]
    %v991 = vld [vmem:[%s989 + $0x8] sm:$0xff]
    %v992 = vld [vmem:[%s989 + $0x10] sm:$0xff]
    %v993 = vld [vmem:[%s989 + $0x18] sm:$0xff]
    %v995 = vsel %vm273, %v990, 0
    %v998 = vsel %vm273, %v991, 0
    %v1001 = vsel %vm273, %v992, 0
    %v1004 = vsel %vm273, %v993, 0
    %1006 = vmatprep.subr.mxu0 0.0
    %1007 = vmatpush1.msra.mxu0 %v986
    %1008 = vmatprep.subr.mxu0 0.0
    %1009 = vmatpush1.msra.mxu0 0.0
    %1010 = vmatprep.subr.mxu0 0.0
    %1011 = vmatpush1.msra.mxu0 0.0
    %1012 = vmatprep.subr.mxu0 0.0
    %1013 = vmatpush1.msra.mxu0 0.0
    %1014 = vmatprep.subr.mxu0 0.0
    %1015 = vmatpush1.msra.mxu0 0.0
    %1016 = vmatprep.subr.mxu0 0.0
    %1017 = vmatpush1.msra.mxu0 0.0
    %1018 = vmatprep.subr.mxu0 0.0
    %1019 = vmatpush1.msra.mxu0 0.0
    %1020 = vmatprep.subr.mxu0 0.0
    %1021 = vmatpush1.msra.mxu0 0.0
    %1022 = vmatprep.subr.mxu0 0.0
    %1023 = vmatpush1.msra.mxu0 0.0
    %1024 = vmatprep.subr.mxu0 0.0
    %1025 = vmatpush1.msra.mxu0 0.0
    %1026 = vmatprep.subr.mxu0 0.0
    %1027 = vmatpush1.msra.mxu0 0.0
    %1028 = vmatprep.subr.mxu0 0.0
    %1029 = vmatpush1.msra.mxu0 0.0
    %1030 = vmatprep.subr.mxu0 0.0
    %1031 = vmatpush1.msra.mxu0 0.0
    %1032 = vmatprep.subr.mxu0 0.0
    %1033 = vmatpush1.msra.mxu0 0.0
    %1034 = vmatprep.subr.mxu0 0.0
    %1035 = vmatpush1.msra.mxu0 0.0
    %1036 = vmatprep.subr.mxu0 0.0
    %1037 = vmatpush1.msra.mxu0 0.0
    %1038 = vmatprep.subr.mxu0 0.0
    %1039 = vmatpush1.msra.mxu0 0.0
    %1040 = vmatprep.subr.mxu0 0.0
    %1041 = vmatpush1.msra.mxu0 0.0
    %1042 = vmatprep.subr.mxu0 0.0
    %1043 = vmatpush1.msra.mxu0 0.0
    %1044 = vmatprep.subr.mxu0 0.0
    %1045 = vmatpush1.msra.mxu0 0.0
    %1046 = vmatprep.subr.mxu0 0.0
    %1047 = vmatpush1.msra.mxu0 0.0
    %1048 = vmatprep.subr.mxu0 0.0
    %1049 = vmatpush1.msra.mxu0 0.0
    %1050 = vmatprep.subr.mxu0 0.0
    %1051 = vmatpush1.msra.mxu0 0.0
    %1052 = vmatprep.subr.mxu0 0.0
    %1053 = vmatpush1.msra.mxu0 0.0
    %1054 = vmatprep.subr.mxu0 0.0
    %1055 = vmatpush1.msra.mxu0 0.0
    %1056 = vmatprep.subr.mxu0 0.0
    %1057 = vmatpush1.msra.mxu0 0.0
    %1058 = vmatprep.subr.mxu0 0.0
    %1059 = vmatpush1.msra.mxu0 0.0
    %1060 = vmatprep.subr.mxu0 0.0
    %1061 = vmatpush1.msra.mxu0 0.0
    %1062 = vmatprep.subr.mxu0 0.0
    %1063 = vmatpush1.msra.mxu0 0.0
    %1064 = vmatprep.subr.mxu0 0.0
    %1065 = vmatpush1.msra.mxu0 0.0
    %1066 = vmatprep.subr.mxu0 0.0
    %1067 = vmatpush1.msra.mxu0 0.0
    %1068 = vmatprep.subr.mxu0 0.0
    %1069 = vmatpush1.msra.mxu0 0.0
    %1070 = vmatprep.mubr.f32.mxu0 0.0
    %1071 = vmatmul.mubr.f32.gmra.mrb[0].mxu0 %v995
    %v1072 = vpop.f32.mrb[0].mxu0
    %v1073 = vadd.f32 0.0, %v1072
    %v1074 = vpop.f32.mrb[0].mxu0
    %1075 = vmatprep.mubr.f32.mxu0 0.0
    %1076 = vmatmul.mubr.f32.gmra.mrb[0].mxu0 %v998
    %v1077 = vpop.f32.mrb[0].mxu0
    %v1078 = vadd.f32 0.0, %v1077
    %v1079 = vpop.f32.mrb[0].mxu0
    %1080 = vmatprep.mubr.f32.mxu0 0.0
    %1081 = vmatmul.mubr.f32.gmra.mrb[0].mxu0 %v1001
    %v1082 = vpop.f32.mrb[0].mxu0
    %v1083 = vadd.f32 0.0, %v1082
    %v1084 = vpop.f32.mrb[0].mxu0
    %1085 = vmatprep.mubr.f32.mxu0 0.0
    %1086 = vmatmul.mubr.f32.gmra.mrb[0].mxu0 %v1004
    %v1087 = vpop.f32.mrb[0].mxu0
    %v1088 = vadd.f32 0.0, %v1087
    %v1089 = vpop.f32.mrb[0].mxu0
    %1090 = vdwg.mxu0
    %v1091 = vadd.f32 %v882, %v1073
    %v1092 = vadd.f32 %v883, %v1078
    %v1093 = vadd.f32 %v884, %v1083
    %v1094 = vadd.f32 %v885, %v1088
    %s1095 = scalar_lea.vmem %s2, 1280
    %v1096 = vld [vmem:[%s1095] sm:$0xff]
    %v1097 = vld [vmem:[%s1095 + $0x8] sm:$0xff]
    %v1098 = vld [vmem:[%s1095 + $0x10] sm:$0xff]
    %v1099 = vld [vmem:[%s1095 + $0x18] sm:$0xff]
    %v1100 = vld [vmem:[%s1095 + $0x20] sm:$0xff]
    %v1101 = vld [vmem:[%s1095 + $0x28] sm:$0xff]
    %v1102 = vld [vmem:[%s1095 + $0x30] sm:$0xff]
    %v1103 = vld [vmem:[%s1095 + $0x38] sm:$0xff]
    %v1104 = vld [vmem:[%s1095 + $0x40] sm:$0xff]
    %v1105 = vld [vmem:[%s1095 + $0x48] sm:$0xff]
    %v1106 = vld [vmem:[%s1095 + $0x50] sm:$0xff]
    %v1107 = vld [vmem:[%s1095 + $0x58] sm:$0xff]
    %v1108 = vld [vmem:[%s1095 + $0x60] sm:$0xff]
    %v1109 = vld [vmem:[%s1095 + $0x68] sm:$0xff]
    %v1110 = vld [vmem:[%s1095 + $0x70] sm:$0xff]
    %v1111 = vld [vmem:[%s1095 + $0x78] sm:$0xff]
    %v1112 = vld [vmem:[%s1095 + $0x80] sm:$0xff]
    %v1113 = vld [vmem:[%s1095 + $0x88] sm:$0xff]
    %v1114 = vld [vmem:[%s1095 + $0x90] sm:$0xff]
    %v1115 = vld [vmem:[%s1095 + $0x98] sm:$0xff]
    %v1116 = vld [vmem:[%s1095 + $0xa0] sm:$0xff]
    %v1117 = vld [vmem:[%s1095 + $0xa8] sm:$0xff]
    %v1118 = vld [vmem:[%s1095 + $0xb0] sm:$0xff]
    %v1119 = vld [vmem:[%s1095 + $0xb8] sm:$0xff]
    %v1120 = vld [vmem:[%s1095 + $0xc0] sm:$0xff]
    %v1121 = vld [vmem:[%s1095 + $0xc8] sm:$0xff]
    %v1122 = vld [vmem:[%s1095 + $0xd0] sm:$0xff]
    %v1123 = vld [vmem:[%s1095 + $0xd8] sm:$0xff]
    %v1124 = vld [vmem:[%s1095 + $0xe0] sm:$0xff]
    %v1125 = vld [vmem:[%s1095 + $0xe8] sm:$0xff]
    %v1126 = vld [vmem:[%s1095 + $0xf0] sm:$0xff]
    %v1127 = vld [vmem:[%s1095 + $0xf8] sm:$0xff]
    %1128 = vmatprep.subr.mxu0 0.0
    %1129 = vmatpush1.msra.mxu0 %v1096
    %1130 = vmatprep.subr.mxu0 0.0
    %1131 = vmatpush1.msra.mxu0 %v1097
    %1132 = vmatprep.subr.mxu0 0.0
    %1133 = vmatpush1.msra.mxu0 %v1098
    %1134 = vmatprep.subr.mxu0 0.0
    %1135 = vmatpush1.msra.mxu0 %v1099
    %1136 = vmatprep.subr.mxu0 0.0
    %1137 = vmatpush1.msra.mxu0 %v1100
    %1138 = vmatprep.subr.mxu0 0.0
    %1139 = vmatpush1.msra.mxu0 %v1101
    %1140 = vmatprep.subr.mxu0 0.0
    %1141 = vmatpush1.msra.mxu0 %v1102
    %1142 = vmatprep.subr.mxu0 0.0
    %1143 = vmatpush1.msra.mxu0 %v1103
    %1144 = vmatprep.subr.mxu0 0.0
    %1145 = vmatpush1.msra.mxu0 %v1104
    %1146 = vmatprep.subr.mxu0 0.0
    %1147 = vmatpush1.msra.mxu0 %v1105
    %1148 = vmatprep.subr.mxu0 0.0
    %1149 = vmatpush1.msra.mxu0 %v1106
    %1150 = vmatprep.subr.mxu0 0.0
    %1151 = vmatpush1.msra.mxu0 %v1107
    %1152 = vmatprep.subr.mxu0 0.0
    %1153 = vmatpush1.msra.mxu0 %v1108
    %1154 = vmatprep.subr.mxu0 0.0
    %1155 = vmatpush1.msra.mxu0 %v1109
    %1156 = vmatprep.subr.mxu0 0.0
    %1157 = vmatpush1.msra.mxu0 %v1110
    %1158 = vmatprep.subr.mxu0 0.0
    %1159 = vmatpush1.msra.mxu0 %v1111
    %1160 = vmatprep.subr.mxu0 0.0
    %1161 = vmatpush1.msra.mxu0 %v1112
    %1162 = vmatprep.subr.mxu0 0.0
    %1163 = vmatpush1.msra.mxu0 %v1113
    %1164 = vmatprep.subr.mxu0 0.0
    %1165 = vmatpush1.msra.mxu0 %v1114
    %1166 = vmatprep.subr.mxu0 0.0
    %1167 = vmatpush1.msra.mxu0 %v1115
    %1168 = vmatprep.subr.mxu0 0.0
    %1169 = vmatpush1.msra.mxu0 %v1116
    %1170 = vmatprep.subr.mxu0 0.0
    %1171 = vmatpush1.msra.mxu0 %v1117
    %1172 = vmatprep.subr.mxu0 0.0
    %1173 = vmatpush1.msra.mxu0 %v1118
    %1174 = vmatprep.subr.mxu0 0.0
    %1175 = vmatpush1.msra.mxu0 %v1119
    %1176 = vmatprep.subr.mxu0 0.0
    %1177 = vmatpush1.msra.mxu0 %v1120
    %1178 = vmatprep.subr.mxu0 0.0
    %1179 = vmatpush1.msra.mxu0 %v1121
    %1180 = vmatprep.subr.mxu0 0.0
    %1181 = vmatpush1.msra.mxu0 %v1122
    %1182 = vmatprep.subr.mxu0 0.0
    %1183 = vmatpush1.msra.mxu0 %v1123
    %1184 = vmatprep.subr.mxu0 0.0
    %1185 = vmatpush1.msra.mxu0 %v1124
    %1186 = vmatprep.subr.mxu0 0.0
    %1187 = vmatpush1.msra.mxu0 %v1125
    %1188 = vmatprep.subr.mxu0 0.0
    %1189 = vmatpush1.msra.mxu0 %v1126
    %1190 = vmatprep.subr.mxu0 0.0
    %1191 = vmatpush1.msra.mxu0 %v1127
    %1192 = vmatprep.mubr.f32.mxu0 %v58
    %1193 = vmatmul.mubr.f32.gmra.mrb[0].mxu0 %v57
    %v1194 = vpop.f32.mrb[0].mxu0
    %v1195 = vadd.f32 0.0, %v1194
    %v1196 = vpop.f32.mrb[0].mxu0
    %1197 = vdwg.mxu0
    %s1198 = scalar_lea.vmem %s3, 160
    %v1199 = vld [vmem:[%s1198] sm:$0xff]
    %v1200 = vld [vmem:[%s1198 + $0x8] sm:$0xff]
    %v1201 = vld [vmem:[%s1198 + $0x10] sm:$0xff]
    %v1202 = vld [vmem:[%s1198 + $0x18] sm:$0xff]
    %v1204 = vsel %vm273, %v1199, 0
    %v1207 = vsel %vm273, %v1200, 0
    %v1210 = vsel %vm273, %v1201, 0
    %v1213 = vsel %vm273, %v1202, 0
    %1215 = vmatprep.subr.mxu0 0.0
    %1216 = vmatpush1.msra.mxu0 %v1195
    %1217 = vmatprep.subr.mxu0 0.0
    %1218 = vmatpush1.msra.mxu0 0.0
    %1219 = vmatprep.subr.mxu0 0.0
    %1220 = vmatpush1.msra.mxu0 0.0
    %1221 = vmatprep.subr.mxu0 0.0
    %1222 = vmatpush1.msra.mxu0 0.0
    %1223 = vmatprep.subr.mxu0 0.0
    %1224 = vmatpush1.msra.mxu0 0.0
    %1225 = vmatprep.subr.mxu0 0.0
    %1226 = vmatpush1.msra.mxu0 0.0
    %1227 = vmatprep.subr.mxu0 0.0
    %1228 = vmatpush1.msra.mxu0 0.0
    %1229 = vmatprep.subr.mxu0 0.0
    %1230 = vmatpush1.msra.mxu0 0.0
    %1231 = vmatprep.subr.mxu0 0.0
    %1232 = vmatpush1.msra.mxu0 0.0
    %1233 = vmatprep.subr.mxu0 0.0
    %1234 = vmatpush1.msra.mxu0 0.0
    %1235 = vmatprep.subr.mxu0 0.0
    %1236 = vmatpush1.msra.mxu0 0.0
    %1237 = vmatprep.subr.mxu0 0.0
    %1238 = vmatpush1.msra.mxu0 0.0
    %1239 = vmatprep.subr.mxu0 0.0
    %1240 = vmatpush1.msra.mxu0 0.0
    %1241 = vmatprep.subr.mxu0 0.0
    %1242 = vmatpush1.msra.mxu0 0.0
    %1243 = vmatprep.subr.mxu0 0.0
    %1244 = vmatpush1.msra.mxu0 0.0
    %1245 = vmatprep.subr.mxu0 0.0
    %1246 = vmatpush1.msra.mxu0 0.0
    %1247 = vmatprep.subr.mxu0 0.0
    %1248 = vmatpush1.msra.mxu0 0.0
    %1249 = vmatprep.subr.mxu0 0.0
    %1250 = vmatpush1.msra.mxu0 0.0
    %1251 = vmatprep.subr.mxu0 0.0
    %1252 = vmatpush1.msra.mxu0 0.0
    %1253 = vmatprep.subr.mxu0 0.0
    %1254 = vmatpush1.msra.mxu0 0.0
    %1255 = vmatprep.subr.mxu0 0.0
    %1256 = vmatpush1.msra.mxu0 0.0
    %1257 = vmatprep.subr.mxu0 0.0
    %1258 = vmatpush1.msra.mxu0 0.0
    %1259 = vmatprep.subr.mxu0 0.0
    %1260 = vmatpush1.msra.mxu0 0.0
    %1261 = vmatprep.subr.mxu0 0.0
    %1262 = vmatpush1.msra.mxu0 0.0
    %1263 = vmatprep.subr.mxu0 0.0
    %1264 = vmatpush1.msra.mxu0 0.0
    %1265 = vmatprep.subr.mxu0 0.0
    %1266 = vmatpush1.msra.mxu0 0.0
    %1267 = vmatprep.subr.mxu0 0.0
    %1268 = vmatpush1.msra.mxu0 0.0
    %1269 = vmatprep.subr.mxu0 0.0
    %1270 = vmatpush1.msra.mxu0 0.0
    %1271 = vmatprep.subr.mxu0 0.0
    %1272 = vmatpush1.msra.mxu0 0.0
    %1273 = vmatprep.subr.mxu0 0.0
    %1274 = vmatpush1.msra.mxu0 0.0
    %1275 = vmatprep.subr.mxu0 0.0
    %1276 = vmatpush1.msra.mxu0 0.0
    %1277 = vmatprep.subr.mxu0 0.0
    %1278 = vmatpush1.msra.mxu0 0.0
    %1279 = vmatprep.mubr.f32.mxu0 0.0
    %1280 = vmatmul.mubr.f32.gmra.mrb[0].mxu0 %v1204
    %v1281 = vpop.f32.mrb[0].mxu0
    %v1282 = vadd.f32 0.0, %v1281
    %v1283 = vpop.f32.mrb[0].mxu0
    %1284 = vmatprep.mubr.f32.mxu0 0.0
    %1285 = vmatmul.mubr.f32.gmra.mrb[0].mxu0 %v1207
    %v1286 = vpop.f32.mrb[0].mxu0
    %v1287 = vadd.f32 0.0, %v1286
    %v1288 = vpop.f32.mrb[0].mxu0
    %1289 = vmatprep.mubr.f32.mxu0 0.0
    %1290 = vmatmul.mubr.f32.gmra.mrb[0].mxu0 %v1210
    %v1291 = vpop.f32.mrb[0].mxu0
    %v1292 = vadd.f32 0.0, %v1291
    %v1293 = vpop.f32.mrb[0].mxu0
    %1294 = vmatprep.mubr.f32.mxu0 0.0
    %1295 = vmatmul.mubr.f32.gmra.mrb[0].mxu0 %v1213
    %v1296 = vpop.f32.mrb[0].mxu0
    %v1297 = vadd.f32 0.0, %v1296
    %v1298 = vpop.f32.mrb[0].mxu0
    %1299 = vdwg.mxu0
    %v1300 = vadd.f32 %v1091, %v1282
    %v1301 = vadd.f32 %v1092, %v1287
    %v1302 = vadd.f32 %v1093, %v1292
    %v1303 = vadd.f32 %v1094, %v1297
    %s1304 = scalar_lea.vmem %s2, 1536
    %v1305 = vld [vmem:[%s1304] sm:$0xff]
    %v1306 = vld [vmem:[%s1304 + $0x8] sm:$0xff]
    %v1307 = vld [vmem:[%s1304 + $0x10] sm:$0xff]
    %v1308 = vld [vmem:[%s1304 + $0x18] sm:$0xff]
    %v1309 = vld [vmem:[%s1304 + $0x20] sm:$0xff]
    %v1310 = vld [vmem:[%s1304 + $0x28] sm:$0xff]
    %v1311 = vld [vmem:[%s1304 + $0x30] sm:$0xff]
    %v1312 = vld [vmem:[%s1304 + $0x38] sm:$0xff]
    %v1313 = vld [vmem:[%s1304 + $0x40] sm:$0xff]
    %v1314 = vld [vmem:[%s1304 + $0x48] sm:$0xff]
    %v1315 = vld [vmem:[%s1304 + $0x50] sm:$0xff]
    %v1316 = vld [vmem:[%s1304 + $0x58] sm:$0xff]
    %v1317 = vld [vmem:[%s1304 + $0x60] sm:$0xff]
    %v1318 = vld [vmem:[%s1304 + $0x68] sm:$0xff]
    %v1319 = vld [vmem:[%s1304 + $0x70] sm:$0xff]
    %v1320 = vld [vmem:[%s1304 + $0x78] sm:$0xff]
    %v1321 = vld [vmem:[%s1304 + $0x80] sm:$0xff]
    %v1322 = vld [vmem:[%s1304 + $0x88] sm:$0xff]
    %v1323 = vld [vmem:[%s1304 + $0x90] sm:$0xff]
    %v1324 = vld [vmem:[%s1304 + $0x98] sm:$0xff]
    %v1325 = vld [vmem:[%s1304 + $0xa0] sm:$0xff]
    %v1326 = vld [vmem:[%s1304 + $0xa8] sm:$0xff]
    %v1327 = vld [vmem:[%s1304 + $0xb0] sm:$0xff]
    %v1328 = vld [vmem:[%s1304 + $0xb8] sm:$0xff]
    %v1329 = vld [vmem:[%s1304 + $0xc0] sm:$0xff]
    %v1330 = vld [vmem:[%s1304 + $0xc8] sm:$0xff]
    %v1331 = vld [vmem:[%s1304 + $0xd0] sm:$0xff]
    %v1332 = vld [vmem:[%s1304 + $0xd8] sm:$0xff]
    %v1333 = vld [vmem:[%s1304 + $0xe0] sm:$0xff]
    %v1334 = vld [vmem:[%s1304 + $0xe8] sm:$0xff]
    %v1335 = vld [vmem:[%s1304 + $0xf0] sm:$0xff]
    %v1336 = vld [vmem:[%s1304 + $0xf8] sm:$0xff]
    %1337 = vmatprep.subr.mxu0 0.0
    %1338 = vmatpush1.msra.mxu0 %v1305
    %1339 = vmatprep.subr.mxu0 0.0
    %1340 = vmatpush1.msra.mxu0 %v1306
    %1341 = vmatprep.subr.mxu0 0.0
    %1342 = vmatpush1.msra.mxu0 %v1307
    %1343 = vmatprep.subr.mxu0 0.0
    %1344 = vmatpush1.msra.mxu0 %v1308
    %1345 = vmatprep.subr.mxu0 0.0
    %1346 = vmatpush1.msra.mxu0 %v1309
    %1347 = vmatprep.subr.mxu0 0.0
    %1348 = vmatpush1.msra.mxu0 %v1310
    %1349 = vmatprep.subr.mxu0 0.0
    %1350 = vmatpush1.msra.mxu0 %v1311
    %1351 = vmatprep.subr.mxu0 0.0
    %1352 = vmatpush1.msra.mxu0 %v1312
    %1353 = vmatprep.subr.mxu0 0.0
    %1354 = vmatpush1.msra.mxu0 %v1313
    %1355 = vmatprep.subr.mxu0 0.0
    %1356 = vmatpush1.msra.mxu0 %v1314
    %1357 = vmatprep.subr.mxu0 0.0
    %1358 = vmatpush1.msra.mxu0 %v1315
    %1359 = vmatprep.subr.mxu0 0.0
    %1360 = vmatpush1.msra.mxu0 %v1316
    %1361 = vmatprep.subr.mxu0 0.0
    %1362 = vmatpush1.msra.mxu0 %v1317
    %1363 = vmatprep.subr.mxu0 0.0
    %1364 = vmatpush1.msra.mxu0 %v1318
    %1365 = vmatprep.subr.mxu0 0.0
    %1366 = vmatpush1.msra.mxu0 %v1319
    %1367 = vmatprep.subr.mxu0 0.0
    %1368 = vmatpush1.msra.mxu0 %v1320
    %1369 = vmatprep.subr.mxu0 0.0
    %1370 = vmatpush1.msra.mxu0 %v1321
    %1371 = vmatprep.subr.mxu0 0.0
    %1372 = vmatpush1.msra.mxu0 %v1322
    %1373 = vmatprep.subr.mxu0 0.0
    %1374 = vmatpush1.msra.mxu0 %v1323
    %1375 = vmatprep.subr.mxu0 0.0
    %1376 = vmatpush1.msra.mxu0 %v1324
    %1377 = vmatprep.subr.mxu0 0.0
    %1378 = vmatpush1.msra.mxu0 %v1325
    %1379 = vmatprep.subr.mxu0 0.0
    %1380 = vmatpush1.msra.mxu0 %v1326
    %1381 = vmatprep.subr.mxu0 0.0
    %1382 = vmatpush1.msra.mxu0 %v1327
    %1383 = vmatprep.subr.mxu0 0.0
    %1384 = vmatpush1.msra.mxu0 %v1328
    %1385 = vmatprep.subr.mxu0 0.0
    %1386 = vmatpush1.msra.mxu0 %v1329
    %1387 = vmatprep.subr.mxu0 0.0
    %1388 = vmatpush1.msra.mxu0 %v1330
    %1389 = vmatprep.subr.mxu0 0.0
    %1390 = vmatpush1.msra.mxu0 %v1331
    %1391 = vmatprep.subr.mxu0 0.0
    %1392 = vmatpush1.msra.mxu0 %v1332
    %1393 = vmatprep.subr.mxu0 0.0
    %1394 = vmatpush1.msra.mxu0 %v1333
    %1395 = vmatprep.subr.mxu0 0.0
    %1396 = vmatpush1.msra.mxu0 %v1334
    %1397 = vmatprep.subr.mxu0 0.0
    %1398 = vmatpush1.msra.mxu0 %v1335
    %1399 = vmatprep.subr.mxu0 0.0
    %1400 = vmatpush1.msra.mxu0 %v1336
    %1401 = vmatprep.mubr.f32.mxu0 %v58
    %1402 = vmatmul.mubr.f32.gmra.mrb[0].mxu0 %v57
    %v1403 = vpop.f32.mrb[0].mxu0
    %v1404 = vadd.f32 0.0, %v1403
    %v1405 = vpop.f32.mrb[0].mxu0
    %1406 = vdwg.mxu0
    %s1407 = scalar_lea.vmem %s3, 192
    %v1408 = vld [vmem:[%s1407] sm:$0xff]
    %v1409 = vld [vmem:[%s1407 + $0x8] sm:$0xff]
    %v1410 = vld [vmem:[%s1407 + $0x10] sm:$0xff]
    %v1411 = vld [vmem:[%s1407 + $0x18] sm:$0xff]
    %v1413 = vsel %vm273, %v1408, 0
    %v1416 = vsel %vm273, %v1409, 0
    %v1419 = vsel %vm273, %v1410, 0
    %v1422 = vsel %vm273, %v1411, 0
    %1424 = vmatprep.subr.mxu0 0.0
    %1425 = vmatpush1.msra.mxu0 %v1404
    %1426 = vmatprep.subr.mxu0 0.0
    %1427 = vmatpush1.msra.mxu0 0.0
    %1428 = vmatprep.subr.mxu0 0.0
    %1429 = vmatpush1.msra.mxu0 0.0
    %1430 = vmatprep.subr.mxu0 0.0
    %1431 = vmatpush1.msra.mxu0 0.0
    %1432 = vmatprep.subr.mxu0 0.0
    %1433 = vmatpush1.msra.mxu0 0.0
    %1434 = vmatprep.subr.mxu0 0.0
    %1435 = vmatpush1.msra.mxu0 0.0
    %1436 = vmatprep.subr.mxu0 0.0
    %1437 = vmatpush1.msra.mxu0 0.0
    %1438 = vmatprep.subr.mxu0 0.0
    %1439 = vmatpush1.msra.mxu0 0.0
    %1440 = vmatprep.subr.mxu0 0.0
    %1441 = vmatpush1.msra.mxu0 0.0
    %1442 = vmatprep.subr.mxu0 0.0
    %1443 = vmatpush1.msra.mxu0 0.0
    %1444 = vmatprep.subr.mxu0 0.0
    %1445 = vmatpush1.msra.mxu0 0.0
    %1446 = vmatprep.subr.mxu0 0.0
    %1447 = vmatpush1.msra.mxu0 0.0
    %1448 = vmatprep.subr.mxu0 0.0
    %1449 = vmatpush1.msra.mxu0 0.0
    %1450 = vmatprep.subr.mxu0 0.0
    %1451 = vmatpush1.msra.mxu0 0.0
    %1452 = vmatprep.subr.mxu0 0.0
    %1453 = vmatpush1.msra.mxu0 0.0
    %1454 = vmatprep.subr.mxu0 0.0
    %1455 = vmatpush1.msra.mxu0 0.0
    %1456 = vmatprep.subr.mxu0 0.0
    %1457 = vmatpush1.msra.mxu0 0.0
    %1458 = vmatprep.subr.mxu0 0.0
    %1459 = vmatpush1.msra.mxu0 0.0
    %1460 = vmatprep.subr.mxu0 0.0
    %1461 = vmatpush1.msra.mxu0 0.0
    %1462 = vmatprep.subr.mxu0 0.0
    %1463 = vmatpush1.msra.mxu0 0.0
    %1464 = vmatprep.subr.mxu0 0.0
    %1465 = vmatpush1.msra.mxu0 0.0
    %1466 = vmatprep.subr.mxu0 0.0
    %1467 = vmatpush1.msra.mxu0 0.0
    %1468 = vmatprep.subr.mxu0 0.0
    %1469 = vmatpush1.msra.mxu0 0.0
    %1470 = vmatprep.subr.mxu0 0.0
    %1471 = vmatpush1.msra.mxu0 0.0
    %1472 = vmatprep.subr.mxu0 0.0
    %1473 = vmatpush1.msra.mxu0 0.0
    %1474 = vmatprep.subr.mxu0 0.0
    %1475 = vmatpush1.msra.mxu0 0.0
    %1476 = vmatprep.subr.mxu0 0.0
    %1477 = vmatpush1.msra.mxu0 0.0
    %1478 = vmatprep.subr.mxu0 0.0
    %1479 = vmatpush1.msra.mxu0 0.0
    %1480 = vmatprep.subr.mxu0 0.0
    %1481 = vmatpush1.msra.mxu0 0.0
    %1482 = vmatprep.subr.mxu0 0.0
    %1483 = vmatpush1.msra.mxu0 0.0
    %1484 = vmatprep.subr.mxu0 0.0
    %1485 = vmatpush1.msra.mxu0 0.0
    %1486 = vmatprep.subr.mxu0 0.0
    %1487 = vmatpush1.msra.mxu0 0.0
    %1488 = vmatprep.mubr.f32.mxu0 0.0
    %1489 = vmatmul.mubr.f32.gmra.mrb[0].mxu0 %v1413
    %v1490 = vpop.f32.mrb[0].mxu0
    %v1491 = vadd.f32 0.0, %v1490
    %v1492 = vpop.f32.mrb[0].mxu0
    %1493 = vmatprep.mubr.f32.mxu0 0.0
    %1494 = vmatmul.mubr.f32.gmra.mrb[0].mxu0 %v1416
    %v1495 = vpop.f32.mrb[0].mxu0
    %v1496 = vadd.f32 0.0, %v1495
    %v1497 = vpop.f32.mrb[0].mxu0
    %1498 = vmatprep.mubr.f32.mxu0 0.0
    %1499 = vmatmul.mubr.f32.gmra.mrb[0].mxu0 %v1419
    %v1500 = vpop.f32.mrb[0].mxu0
    %v1501 = vadd.f32 0.0, %v1500
    %v1502 = vpop.f32.mrb[0].mxu0
    %1503 = vmatprep.mubr.f32.mxu0 0.0
    %1504 = vmatmul.mubr.f32.gmra.mrb[0].mxu0 %v1422
    %v1505 = vpop.f32.mrb[0].mxu0
    %v1506 = vadd.f32 0.0, %v1505
    %v1507 = vpop.f32.mrb[0].mxu0
    %1508 = vdwg.mxu0
    %v1509 = vadd.f32 %v1300, %v1491
    %v1510 = vadd.f32 %v1301, %v1496
    %v1511 = vadd.f32 %v1302, %v1501
    %v1512 = vadd.f32 %v1303, %v1506
    %s1513 = scalar_lea.vmem %s2, 1792
    %v1514 = vld [vmem:[%s1513] sm:$0xff]
    %v1515 = vld [vmem:[%s1513 + $0x8] sm:$0xff]
    %v1516 = vld [vmem:[%s1513 + $0x10] sm:$0xff]
    %v1517 = vld [vmem:[%s1513 + $0x18] sm:$0xff]
    %v1518 = vld [vmem:[%s1513 + $0x20] sm:$0xff]
    %v1519 = vld [vmem:[%s1513 + $0x28] sm:$0xff]
    %v1520 = vld [vmem:[%s1513 + $0x30] sm:$0xff]
    %v1521 = vld [vmem:[%s1513 + $0x38] sm:$0xff]
    %v1522 = vld [vmem:[%s1513 + $0x40] sm:$0xff]
    %v1523 = vld [vmem:[%s1513 + $0x48] sm:$0xff]
    %v1524 = vld [vmem:[%s1513 + $0x50] sm:$0xff]
    %v1525 = vld [vmem:[%s1513 + $0x58] sm:$0xff]
    %v1526 = vld [vmem:[%s1513 + $0x60] sm:$0xff]
    %v1527 = vld [vmem:[%s1513 + $0x68] sm:$0xff]
    %v1528 = vld [vmem:[%s1513 + $0x70] sm:$0xff]
    %v1529 = vld [vmem:[%s1513 + $0x78] sm:$0xff]
    %v1530 = vld [vmem:[%s1513 + $0x80] sm:$0xff]
    %v1531 = vld [vmem:[%s1513 + $0x88] sm:$0xff]
    %v1532 = vld [vmem:[%s1513 + $0x90] sm:$0xff]
    %v1533 = vld [vmem:[%s1513 + $0x98] sm:$0xff]
    %v1534 = vld [vmem:[%s1513 + $0xa0] sm:$0xff]
    %v1535 = vld [vmem:[%s1513 + $0xa8] sm:$0xff]
    %v1536 = vld [vmem:[%s1513 + $0xb0] sm:$0xff]
    %v1537 = vld [vmem:[%s1513 + $0xb8] sm:$0xff]
    %v1538 = vld [vmem:[%s1513 + $0xc0] sm:$0xff]
    %v1539 = vld [vmem:[%s1513 + $0xc8] sm:$0xff]
    %v1540 = vld [vmem:[%s1513 + $0xd0] sm:$0xff]
    %v1541 = vld [vmem:[%s1513 + $0xd8] sm:$0xff]
    %v1542 = vld [vmem:[%s1513 + $0xe0] sm:$0xff]
    %v1543 = vld [vmem:[%s1513 + $0xe8] sm:$0xff]
    %v1544 = vld [vmem:[%s1513 + $0xf0] sm:$0xff]
    %v1545 = vld [vmem:[%s1513 + $0xf8] sm:$0xff]
    %1546 = vmatprep.subr.mxu0 0.0
    %1547 = vmatpush1.msra.mxu0 %v1514
    %1548 = vmatprep.subr.mxu0 0.0
    %1549 = vmatpush1.msra.mxu0 %v1515
    %1550 = vmatprep.subr.mxu0 0.0
    %1551 = vmatpush1.msra.mxu0 %v1516
    %1552 = vmatprep.subr.mxu0 0.0
    %1553 = vmatpush1.msra.mxu0 %v1517
    %1554 = vmatprep.subr.mxu0 0.0
    %1555 = vmatpush1.msra.mxu0 %v1518
    %1556 = vmatprep.subr.mxu0 0.0
    %1557 = vmatpush1.msra.mxu0 %v1519
    %1558 = vmatprep.subr.mxu0 0.0
    %1559 = vmatpush1.msra.mxu0 %v1520
    %1560 = vmatprep.subr.mxu0 0.0
    %1561 = vmatpush1.msra.mxu0 %v1521
    %1562 = vmatprep.subr.mxu0 0.0
    %1563 = vmatpush1.msra.mxu0 %v1522
    %1564 = vmatprep.subr.mxu0 0.0
    %1565 = vmatpush1.msra.mxu0 %v1523
    %1566 = vmatprep.subr.mxu0 0.0
    %1567 = vmatpush1.msra.mxu0 %v1524
    %1568 = vmatprep.subr.mxu0 0.0
    %1569 = vmatpush1.msra.mxu0 %v1525
    %1570 = vmatprep.subr.mxu0 0.0
    %1571 = vmatpush1.msra.mxu0 %v1526
    %1572 = vmatprep.subr.mxu0 0.0
    %1573 = vmatpush1.msra.mxu0 %v1527
    %1574 = vmatprep.subr.mxu0 0.0
    %1575 = vmatpush1.msra.mxu0 %v1528
    %1576 = vmatprep.subr.mxu0 0.0
    %1577 = vmatpush1.msra.mxu0 %v1529
    %1578 = vmatprep.subr.mxu0 0.0
    %1579 = vmatpush1.msra.mxu0 %v1530
    %1580 = vmatprep.subr.mxu0 0.0
    %1581 = vmatpush1.msra.mxu0 %v1531
    %1582 = vmatprep.subr.mxu0 0.0
    %1583 = vmatpush1.msra.mxu0 %v1532
    %1584 = vmatprep.subr.mxu0 0.0
    %1585 = vmatpush1.msra.mxu0 %v1533
    %1586 = vmatprep.subr.mxu0 0.0
    %1587 = vmatpush1.msra.mxu0 %v1534
    %1588 = vmatprep.subr.mxu0 0.0
    %1589 = vmatpush1.msra.mxu0 %v1535
    %1590 = vmatprep.subr.mxu0 0.0
    %1591 = vmatpush1.msra.mxu0 %v1536
    %1592 = vmatprep.subr.mxu0 0.0
    %1593 = vmatpush1.msra.mxu0 %v1537
    %1594 = vmatprep.subr.mxu0 0.0
    %1595 = vmatpush1.msra.mxu0 %v1538
    %1596 = vmatprep.subr.mxu0 0.0
    %1597 = vmatpush1.msra.mxu0 %v1539
    %1598 = vmatprep.subr.mxu0 0.0
    %1599 = vmatpush1.msra.mxu0 %v1540
    %1600 = vmatprep.subr.mxu0 0.0
    %1601 = vmatpush1.msra.mxu0 %v1541
    %1602 = vmatprep.subr.mxu0 0.0
    %1603 = vmatpush1.msra.mxu0 %v1542
    %1604 = vmatprep.subr.mxu0 0.0
    %1605 = vmatpush1.msra.mxu0 %v1543
    %1606 = vmatprep.subr.mxu0 0.0
    %1607 = vmatpush1.msra.mxu0 %v1544
    %1608 = vmatprep.subr.mxu0 0.0
    %1609 = vmatpush1.msra.mxu0 %v1545
    %1610 = vmatprep.mubr.f32.mxu0 %v58
    %1611 = vmatmul.mubr.f32.gmra.mrb[0].mxu0 %v57
    %v1612 = vpop.f32.mrb[0].mxu0
    %v1613 = vadd.f32 0.0, %v1612
    %v1614 = vpop.f32.mrb[0].mxu0
    %1615 = vdwg.mxu0
    %s1616 = scalar_lea.vmem %s3, 224
    %v1617 = vld [vmem:[%s1616] sm:$0xff]
    %v1618 = vld [vmem:[%s1616 + $0x8] sm:$0xff]
    %v1619 = vld [vmem:[%s1616 + $0x10] sm:$0xff]
    %v1620 = vld [vmem:[%s1616 + $0x18] sm:$0xff]
    %v1622 = vsel %vm273, %v1617, 0
    %v1625 = vsel %vm273, %v1618, 0
    %v1628 = vsel %vm273, %v1619, 0
    %v1631 = vsel %vm273, %v1620, 0
    %1633 = vmatprep.subr.mxu0 0.0
    %1634 = vmatpush1.msra.mxu0 %v1613
    %1635 = vmatprep.subr.mxu0 0.0
    %1636 = vmatpush1.msra.mxu0 0.0
    %1637 = vmatprep.subr.mxu0 0.0
    %1638 = vmatpush1.msra.mxu0 0.0
    %1639 = vmatprep.subr.mxu0 0.0
    %1640 = vmatpush1.msra.mxu0 0.0
    %1641 = vmatprep.subr.mxu0 0.0
    %1642 = vmatpush1.msra.mxu0 0.0
    %1643 = vmatprep.subr.mxu0 0.0
    %1644 = vmatpush1.msra.mxu0 0.0
    %1645 = vmatprep.subr.mxu0 0.0
    %1646 = vmatpush1.msra.mxu0 0.0
    %1647 = vmatprep.subr.mxu0 0.0
    %1648 = vmatpush1.msra.mxu0 0.0
    %1649 = vmatprep.subr.mxu0 0.0
    %1650 = vmatpush1.msra.mxu0 0.0
    %1651 = vmatprep.subr.mxu0 0.0
    %1652 = vmatpush1.msra.mxu0 0.0
    %1653 = vmatprep.subr.mxu0 0.0
    %1654 = vmatpush1.msra.mxu0 0.0
    %1655 = vmatprep.subr.mxu0 0.0
    %1656 = vmatpush1.msra.mxu0 0.0
    %1657 = vmatprep.subr.mxu0 0.0
    %1658 = vmatpush1.msra.mxu0 0.0
    %1659 = vmatprep.subr.mxu0 0.0
    %1660 = vmatpush1.msra.mxu0 0.0
    %1661 = vmatprep.subr.mxu0 0.0
    %1662 = vmatpush1.msra.mxu0 0.0
    %1663 = vmatprep.subr.mxu0 0.0
    %1664 = vmatpush1.msra.mxu0 0.0
    %1665 = vmatprep.subr.mxu0 0.0
    %1666 = vmatpush1.msra.mxu0 0.0
    %1667 = vmatprep.subr.mxu0 0.0
    %1668 = vmatpush1.msra.mxu0 0.0
    %1669 = vmatprep.subr.mxu0 0.0
    %1670 = vmatpush1.msra.mxu0 0.0
    %1671 = vmatprep.subr.mxu0 0.0
    %1672 = vmatpush1.msra.mxu0 0.0
    %1673 = vmatprep.subr.mxu0 0.0
    %1674 = vmatpush1.msra.mxu0 0.0
    %1675 = vmatprep.subr.mxu0 0.0
    %1676 = vmatpush1.msra.mxu0 0.0
    %1677 = vmatprep.subr.mxu0 0.0
    %1678 = vmatpush1.msra.mxu0 0.0
    %1679 = vmatprep.subr.mxu0 0.0
    %1680 = vmatpush1.msra.mxu0 0.0
    %1681 = vmatprep.subr.mxu0 0.0
    %1682 = vmatpush1.msra.mxu0 0.0
    %1683 = vmatprep.subr.mxu0 0.0
    %1684 = vmatpush1.msra.mxu0 0.0
    %1685 = vmatprep.subr.mxu0 0.0
    %1686 = vmatpush1.msra.mxu0 0.0
    %1687 = vmatprep.subr.mxu0 0.0
    %1688 = vmatpush1.msra.mxu0 0.0
    %1689 = vmatprep.subr.mxu0 0.0
    %1690 = vmatpush1.msra.mxu0 0.0
    %1691 = vmatprep.subr.mxu0 0.0
    %1692 = vmatpush1.msra.mxu0 0.0
    %1693 = vmatprep.subr.mxu0 0.0
    %1694 = vmatpush1.msra.mxu0 0.0
    %1695 = vmatprep.subr.mxu0 0.0
    %1696 = vmatpush1.msra.mxu0 0.0
    %1697 = vmatprep.mubr.f32.mxu0 0.0
    %1698 = vmatmul.mubr.f32.gmra.mrb[0].mxu0 %v1622
    %v1699 = vpop.f32.mrb[0].mxu0
    %v1700 = vadd.f32 0.0, %v1699
    %v1701 = vpop.f32.mrb[0].mxu0
    %1702 = vmatprep.mubr.f32.mxu0 0.0
    %1703 = vmatmul.mubr.f32.gmra.mrb[0].mxu0 %v1625
    %v1704 = vpop.f32.mrb[0].mxu0
    %v1705 = vadd.f32 0.0, %v1704
    %v1706 = vpop.f32.mrb[0].mxu0
    %1707 = vmatprep.mubr.f32.mxu0 0.0
    %1708 = vmatmul.mubr.f32.gmra.mrb[0].mxu0 %v1628
    %v1709 = vpop.f32.mrb[0].mxu0
    %v1710 = vadd.f32 0.0, %v1709
    %v1711 = vpop.f32.mrb[0].mxu0
    %1712 = vmatprep.mubr.f32.mxu0 0.0
    %1713 = vmatmul.mubr.f32.gmra.mrb[0].mxu0 %v1631
    %v1714 = vpop.f32.mrb[0].mxu0
    %v1715 = vadd.f32 0.0, %v1714
    %v1716 = vpop.f32.mrb[0].mxu0
    %1717 = vdwg.mxu0
    %v1718 = vadd.f32 %v1509, %v1700
    %v1719 = vadd.f32 %v1510, %v1705
    %v1720 = vadd.f32 %v1511, %v1710
    %v1721 = vadd.f32 %v1512, %v1715
    %s1722 = scalar_lea.vmem %s2, 2048
    %v1723 = vld [vmem:[%s1722] sm:$0xff]
    %v1724 = vld [vmem:[%s1722 + $0x8] sm:$0xff]
    %v1725 = vld [vmem:[%s1722 + $0x10] sm:$0xff]
    %v1726 = vld [vmem:[%s1722 + $0x18] sm:$0xff]
    %v1727 = vld [vmem:[%s1722 + $0x20] sm:$0xff]
    %v1728 = vld [vmem:[%s1722 + $0x28] sm:$0xff]
    %v1729 = vld [vmem:[%s1722 + $0x30] sm:$0xff]
    %v1730 = vld [vmem:[%s1722 + $0x38] sm:$0xff]
    %v1731 = vld [vmem:[%s1722 + $0x40] sm:$0xff]
    %v1732 = vld [vmem:[%s1722 + $0x48] sm:$0xff]
    %v1733 = vld [vmem:[%s1722 + $0x50] sm:$0xff]
    %v1734 = vld [vmem:[%s1722 + $0x58] sm:$0xff]
    %v1735 = vld [vmem:[%s1722 + $0x60] sm:$0xff]
    %v1736 = vld [vmem:[%s1722 + $0x68] sm:$0xff]
    %v1737 = vld [vmem:[%s1722 + $0x70] sm:$0xff]
    %v1738 = vld [vmem:[%s1722 + $0x78] sm:$0xff]
    %v1739 = vld [vmem:[%s1722 + $0x80] sm:$0xff]
    %v1740 = vld [vmem:[%s1722 + $0x88] sm:$0xff]
    %v1741 = vld [vmem:[%s1722 + $0x90] sm:$0xff]
    %v1742 = vld [vmem:[%s1722 + $0x98] sm:$0xff]
    %v1743 = vld [vmem:[%s1722 + $0xa0] sm:$0xff]
    %v1744 = vld [vmem:[%s1722 + $0xa8] sm:$0xff]
    %v1745 = vld [vmem:[%s1722 + $0xb0] sm:$0xff]
    %v1746 = vld [vmem:[%s1722 + $0xb8] sm:$0xff]
    %v1747 = vld [vmem:[%s1722 + $0xc0] sm:$0xff]
    %v1748 = vld [vmem:[%s1722 + $0xc8] sm:$0xff]
    %v1749 = vld [vmem:[%s1722 + $0xd0] sm:$0xff]
    %v1750 = vld [vmem:[%s1722 + $0xd8] sm:$0xff]
    %v1751 = vld [vmem:[%s1722 + $0xe0] sm:$0xff]
    %v1752 = vld [vmem:[%s1722 + $0xe8] sm:$0xff]
    %v1753 = vld [vmem:[%s1722 + $0xf0] sm:$0xff]
    %v1754 = vld [vmem:[%s1722 + $0xf8] sm:$0xff]
    %1755 = vmatprep.subr.mxu0 0.0
    %1756 = vmatpush1.msra.mxu0 %v1723
    %1757 = vmatprep.subr.mxu0 0.0
    %1758 = vmatpush1.msra.mxu0 %v1724
    %1759 = vmatprep.subr.mxu0 0.0
    %1760 = vmatpush1.msra.mxu0 %v1725
    %1761 = vmatprep.subr.mxu0 0.0
    %1762 = vmatpush1.msra.mxu0 %v1726
    %1763 = vmatprep.subr.mxu0 0.0
    %1764 = vmatpush1.msra.mxu0 %v1727
    %1765 = vmatprep.subr.mxu0 0.0
    %1766 = vmatpush1.msra.mxu0 %v1728
    %1767 = vmatprep.subr.mxu0 0.0
    %1768 = vmatpush1.msra.mxu0 %v1729
    %1769 = vmatprep.subr.mxu0 0.0
    %1770 = vmatpush1.msra.mxu0 %v1730
    %1771 = vmatprep.subr.mxu0 0.0
    %1772 = vmatpush1.msra.mxu0 %v1731
    %1773 = vmatprep.subr.mxu0 0.0
    %1774 = vmatpush1.msra.mxu0 %v1732
    %1775 = vmatprep.subr.mxu0 0.0
    %1776 = vmatpush1.msra.mxu0 %v1733
    %1777 = vmatprep.subr.mxu0 0.0
    %1778 = vmatpush1.msra.mxu0 %v1734
    %1779 = vmatprep.subr.mxu0 0.0
    %1780 = vmatpush1.msra.mxu0 %v1735
    %1781 = vmatprep.subr.mxu0 0.0
    %1782 = vmatpush1.msra.mxu0 %v1736
    %1783 = vmatprep.subr.mxu0 0.0
    %1784 = vmatpush1.msra.mxu0 %v1737
    %1785 = vmatprep.subr.mxu0 0.0
    %1786 = vmatpush1.msra.mxu0 %v1738
    %1787 = vmatprep.subr.mxu0 0.0
    %1788 = vmatpush1.msra.mxu0 %v1739
    %1789 = vmatprep.subr.mxu0 0.0
    %1790 = vmatpush1.msra.mxu0 %v1740
    %1791 = vmatprep.subr.mxu0 0.0
    %1792 = vmatpush1.msra.mxu0 %v1741
    %1793 = vmatprep.subr.mxu0 0.0
    %1794 = vmatpush1.msra.mxu0 %v1742
    %1795 = vmatprep.subr.mxu0 0.0
    %1796 = vmatpush1.msra.mxu0 %v1743
    %1797 = vmatprep.subr.mxu0 0.0
    %1798 = vmatpush1.msra.mxu0 %v1744
    %1799 = vmatprep.subr.mxu0 0.0
    %1800 = vmatpush1.msra.mxu0 %v1745
    %1801 = vmatprep.subr.mxu0 0.0
    %1802 = vmatpush1.msra.mxu0 %v1746
    %1803 = vmatprep.subr.mxu0 0.0
    %1804 = vmatpush1.msra.mxu0 %v1747
    %1805 = vmatprep.subr.mxu0 0.0
    %1806 = vmatpush1.msra.mxu0 %v1748
    %1807 = vmatprep.subr.mxu0 0.0
    %1808 = vmatpush1.msra.mxu0 %v1749
    %1809 = vmatprep.subr.mxu0 0.0
    %1810 = vmatpush1.msra.mxu0 %v1750
    %1811 = vmatprep.subr.mxu0 0.0
    %1812 = vmatpush1.msra.mxu0 %v1751
    %1813 = vmatprep.subr.mxu0 0.0
    %1814 = vmatpush1.msra.mxu0 %v1752
    %1815 = vmatprep.subr.mxu0 0.0
    %1816 = vmatpush1.msra.mxu0 %v1753
    %1817 = vmatprep.subr.mxu0 0.0
    %1818 = vmatpush1.msra.mxu0 %v1754
    %1819 = vmatprep.mubr.f32.mxu0 %v58
    %1820 = vmatmul.mubr.f32.gmra.mrb[0].mxu0 %v57
    %v1821 = vpop.f32.mrb[0].mxu0
    %v1822 = vadd.f32 0.0, %v1821
    %v1823 = vpop.f32.mrb[0].mxu0
    %1824 = vdwg.mxu0
    %s1825 = scalar_lea.vmem %s3, 256
    %v1826 = vld [vmem:[%s1825] sm:$0xff]
    %v1827 = vld [vmem:[%s1825 + $0x8] sm:$0xff]
    %v1828 = vld [vmem:[%s1825 + $0x10] sm:$0xff]
    %v1829 = vld [vmem:[%s1825 + $0x18] sm:$0xff]
    %v1831 = vsel %vm273, %v1826, 0
    %v1834 = vsel %vm273, %v1827, 0
    %v1837 = vsel %vm273, %v1828, 0
    %v1840 = vsel %vm273, %v1829, 0
    %1842 = vmatprep.subr.mxu0 0.0
    %1843 = vmatpush1.msra.mxu0 %v1822
    %1844 = vmatprep.subr.mxu0 0.0
    %1845 = vmatpush1.msra.mxu0 0.0
    %1846 = vmatprep.subr.mxu0 0.0
    %1847 = vmatpush1.msra.mxu0 0.0
    %1848 = vmatprep.subr.mxu0 0.0
    %1849 = vmatpush1.msra.mxu0 0.0
    %1850 = vmatprep.subr.mxu0 0.0
    %1851 = vmatpush1.msra.mxu0 0.0
    %1852 = vmatprep.subr.mxu0 0.0
    %1853 = vmatpush1.msra.mxu0 0.0
    %1854 = vmatprep.subr.mxu0 0.0
    %1855 = vmatpush1.msra.mxu0 0.0
    %1856 = vmatprep.subr.mxu0 0.0
    %1857 = vmatpush1.msra.mxu0 0.0
    %1858 = vmatprep.subr.mxu0 0.0
    %1859 = vmatpush1.msra.mxu0 0.0
    %1860 = vmatprep.subr.mxu0 0.0
    %1861 = vmatpush1.msra.mxu0 0.0
    %1862 = vmatprep.subr.mxu0 0.0
    %1863 = vmatpush1.msra.mxu0 0.0
    %1864 = vmatprep.subr.mxu0 0.0
    %1865 = vmatpush1.msra.mxu0 0.0
    %1866 = vmatprep.subr.mxu0 0.0
    %1867 = vmatpush1.msra.mxu0 0.0
    %1868 = vmatprep.subr.mxu0 0.0
    %1869 = vmatpush1.msra.mxu0 0.0
    %1870 = vmatprep.subr.mxu0 0.0
    %1871 = vmatpush1.msra.mxu0 0.0
    %1872 = vmatprep.subr.mxu0 0.0
    %1873 = vmatpush1.msra.mxu0 0.0
    %1874 = vmatprep.subr.mxu0 0.0
    %1875 = vmatpush1.msra.mxu0 0.0
    %1876 = vmatprep.subr.mxu0 0.0
    %1877 = vmatpush1.msra.mxu0 0.0
    %1878 = vmatprep.subr.mxu0 0.0
    %1879 = vmatpush1.msra.mxu0 0.0
    %1880 = vmatprep.subr.mxu0 0.0
    %1881 = vmatpush1.msra.mxu0 0.0
    %1882 = vmatprep.subr.mxu0 0.0
    %1883 = vmatpush1.msra.mxu0 0.0
    %1884 = vmatprep.subr.mxu0 0.0
    %1885 = vmatpush1.msra.mxu0 0.0
    %1886 = vmatprep.subr.mxu0 0.0
    %1887 = vmatpush1.msra.mxu0 0.0
    %1888 = vmatprep.subr.mxu0 0.0
    %1889 = vmatpush1.msra.mxu0 0.0
    %1890 = vmatprep.subr.mxu0 0.0
    %1891 = vmatpush1.msra.mxu0 0.0
    %1892 = vmatprep.subr.mxu0 0.0
    %1893 = vmatpush1.msra.mxu0 0.0
    %1894 = vmatprep.subr.mxu0 0.0
    %1895 = vmatpush1.msra.mxu0 0.0
    %1896 = vmatprep.subr.mxu0 0.0
    %1897 = vmatpush1.msra.mxu0 0.0
    %1898 = vmatprep.subr.mxu0 0.0
    %1899 = vmatpush1.msra.mxu0 0.0
    %1900 = vmatprep.subr.mxu0 0.0
    %1901 = vmatpush1.msra.mxu0 0.0
    %1902 = vmatprep.subr.mxu0 0.0
    %1903 = vmatpush1.msra.mxu0 0.0
    %1904 = vmatprep.subr.mxu0 0.0
    %1905 = vmatpush1.msra.mxu0 0.0
    %1906 = vmatprep.mubr.f32.mxu0 0.0
    %1907 = vmatmul.mubr.f32.gmra.mrb[0].mxu0 %v1831
    %v1908 = vpop.f32.mrb[0].mxu0
    %v1909 = vadd.f32 0.0, %v1908
    %v1910 = vpop.f32.mrb[0].mxu0
    %1911 = vmatprep.mubr.f32.mxu0 0.0
    %1912 = vmatmul.mubr.f32.gmra.mrb[0].mxu0 %v1834
    %v1913 = vpop.f32.mrb[0].mxu0
    %v1914 = vadd.f32 0.0, %v1913
    %v1915 = vpop.f32.mrb[0].mxu0
    %1916 = vmatprep.mubr.f32.mxu0 0.0
    %1917 = vmatmul.mubr.f32.gmra.mrb[0].mxu0 %v1837
    %v1918 = vpop.f32.mrb[0].mxu0
    %v1919 = vadd.f32 0.0, %v1918
    %v1920 = vpop.f32.mrb[0].mxu0
    %1921 = vmatprep.mubr.f32.mxu0 0.0
    %1922 = vmatmul.mubr.f32.gmra.mrb[0].mxu0 %v1840
    %v1923 = vpop.f32.mrb[0].mxu0
    %v1924 = vadd.f32 0.0, %v1923
    %v1925 = vpop.f32.mrb[0].mxu0
    %1926 = vdwg.mxu0
    %v1927 = vadd.f32 %v1718, %v1909
    %v1928 = vadd.f32 %v1719, %v1914
    %v1929 = vadd.f32 %v1720, %v1919
    %v1930 = vadd.f32 %v1721, %v1924
    %v1931 = vld [vmem:[%s4] sm:$0xff]
    %v1932 = vld [vmem:[%s4 + $0x8] sm:$0xff]
    %v1933 = vld [vmem:[%s4 + $0x10] sm:$0xff]
    %v1934 = vld [vmem:[%s4 + $0x18] sm:$0xff]
    %1936 = vset.pattern.permute.xlu0 0
    %1937 = vperm.xlu0 %1936, %v1931
    %v1938 = vpop.permute.xlu0 %1937
    %1941 = vset.pattern.permute.xlu0 0
    %1942 = vperm.xlu0 %1941, %v1932
    %v1943 = vpop.permute.xlu0 %1942
    %1946 = vset.pattern.permute.xlu0 0
    %1947 = vperm.xlu0 %1946, %v1933
    %v1948 = vpop.permute.xlu0 %1947
    %1951 = vset.pattern.permute.xlu0 0
    %1952 = vperm.xlu0 %1951, %v1934
    %v1953 = vpop.permute.xlu0 %1952
    %v1955 = vadd.f32 %v1927, %v1938
    %v1956 = vadd.f32 %v1928, %v1943
    %v1957 = vadd.f32 %v1929, %v1948
    %v1958 = vadd.f32 %v1930, %v1953
    %v1959 = vmax.f32 %v1955, 0.0
    %v1960 = vmax.f32 %v1956, 0.0
    %v1961 = vmax.f32 %v1957, 0.0
    %v1962 = vmax.f32 %v1958, 0.0
    %v1963 = vld [vmem:[%s5] sm:$0xff]
    %v1964 = vld [vmem:[%s5 + $0x8] sm:$0xff]
    %v1965 = vld [vmem:[%s5 + $0x10] sm:$0xff]
    %v1966 = vld [vmem:[%s5 + $0x18] sm:$0xff]
    %v1967 = vld [vmem:[%s5 + $0x20] sm:$0xff]
    %v1968 = vld [vmem:[%s5 + $0x28] sm:$0xff]
    %v1969 = vld [vmem:[%s5 + $0x30] sm:$0xff]
    %v1970 = vld [vmem:[%s5 + $0x38] sm:$0xff]
    %vm1971 = vcmask 523264
    %v1973 = vsel %vm1971, %v1959, 0
    %v1976 = vsel %vm1971, %v1960, 0
    %v1979 = vsel %vm1971, %v1961, 0
    %v1982 = vsel %vm1971, %v1962, 0
    %1984 = vmatprep.subr.mxu0 0.0
    %1985 = vmatpush1.msra.mxu0 %v1963
    %1986 = vmatprep.subr.mxu0 0.0
    %1987 = vmatpush1.msra.mxu0 %v1964
    %1988 = vmatprep.subr.mxu0 0.0
    %1989 = vmatpush1.msra.mxu0 %v1965
    %1990 = vmatprep.subr.mxu0 0.0
    %1991 = vmatpush1.msra.mxu0 %v1966
    %1992 = vmatprep.subr.mxu0 0.0
    %1993 = vmatpush1.msra.mxu0 %v1967
    %1994 = vmatprep.subr.mxu0 0.0
    %1995 = vmatpush1.msra.mxu0 %v1968
    %1996 = vmatprep.subr.mxu0 0.0
    %1997 = vmatpush1.msra.mxu0 %v1969
    %1998 = vmatprep.subr.mxu0 0.0
    %1999 = vmatpush1.msra.mxu0 %v1970
    %2000 = vmatprep.subr.mxu0 0.0
    %2001 = vmatpush1.msra.mxu0 0.0
    %2002 = vmatprep.subr.mxu0 0.0
    %2003 = vmatpush1.msra.mxu0 0.0
    %2004 = vmatprep.subr.mxu0 0.0
    %2005 = vmatpush1.msra.mxu0 0.0
    %2006 = vmatprep.subr.mxu0 0.0
    %2007 = vmatpush1.msra.mxu0 0.0
    %2008 = vmatprep.subr.mxu0 0.0
    %2009 = vmatpush1.msra.mxu0 0.0
    %2010 = vmatprep.subr.mxu0 0.0
    %2011 = vmatpush1.msra.mxu0 0.0
    %2012 = vmatprep.subr.mxu0 0.0
    %2013 = vmatpush1.msra.mxu0 0.0
    %2014 = vmatprep.subr.mxu0 0.0
    %2015 = vmatpush1.msra.mxu0 0.0
    %2016 = vmatprep.subr.mxu0 0.0
    %2017 = vmatpush1.msra.mxu0 0.0
    %2018 = vmatprep.subr.mxu0 0.0
    %2019 = vmatpush1.msra.mxu0 0.0
    %2020 = vmatprep.subr.mxu0 0.0
    %2021 = vmatpush1.msra.mxu0 0.0
    %2022 = vmatprep.subr.mxu0 0.0
    %2023 = vmatpush1.msra.mxu0 0.0
    %2024 = vmatprep.subr.mxu0 0.0
    %2025 = vmatpush1.msra.mxu0 0.0
    %2026 = vmatprep.subr.mxu0 0.0
    %2027 = vmatpush1.msra.mxu0 0.0
    %2028 = vmatprep.subr.mxu0 0.0
    %2029 = vmatpush1.msra.mxu0 0.0
    %2030 = vmatprep.subr.mxu0 0.0
    %2031 = vmatpush1.msra.mxu0 0.0
    %2032 = vmatprep.subr.mxu0 0.0
    %2033 = vmatpush1.msra.mxu0 0.0
    %2034 = vmatprep.subr.mxu0 0.0
    %2035 = vmatpush1.msra.mxu0 0.0
    %2036 = vmatprep.subr.mxu0 0.0
    %2037 = vmatpush1.msra.mxu0 0.0
    %2038 = vmatprep.subr.mxu0 0.0
    %2039 = vmatpush1.msra.mxu0 0.0
    %2040 = vmatprep.subr.mxu0 0.0
    %2041 = vmatpush1.msra.mxu0 0.0
    %2042 = vmatprep.subr.mxu0 0.0
    %2043 = vmatpush1.msra.mxu0 0.0
    %2044 = vmatprep.subr.mxu0 0.0
    %2045 = vmatpush1.msra.mxu0 0.0
    %2046 = vmatprep.subr.mxu0 0.0
    %2047 = vmatpush1.msra.mxu0 0.0
    %2048 = vmatprep.mubr.f32.mxu0 0.0
    %2049 = vmatmul.mubr.f32.gmra.mrb[0].mxu0 %v1973
    %v2050 = vpop.f32.mrb[0].mxu0
    %v2051 = vadd.f32 0.0, %v2050
    %v2052 = vpop.f32.mrb[0].mxu0
    %2053 = vmatprep.mubr.f32.mxu0 0.0
    %2054 = vmatmul.mubr.f32.gmra.mrb[0].mxu0 %v1976
    %v2055 = vpop.f32.mrb[0].mxu0
    %v2056 = vadd.f32 0.0, %v2055
    %v2057 = vpop.f32.mrb[0].mxu0
    %2058 = vmatprep.mubr.f32.mxu0 0.0
    %2059 = vmatmul.mubr.f32.gmra.mrb[0].mxu0 %v1979
    %v2060 = vpop.f32.mrb[0].mxu0
    %v2061 = vadd.f32 0.0, %v2060
    %v2062 = vpop.f32.mrb[0].mxu0
    %2063 = vmatprep.mubr.f32.mxu0 0.0
    %2064 = vmatmul.mubr.f32.gmra.mrb[0].mxu0 %v1982
    %v2065 = vpop.f32.mrb[0].mxu0
    %v2066 = vadd.f32 0.0, %v2065
    %v2067 = vpop.f32.mrb[0].mxu0
    %2068 = vdwg.mxu0
    %v2069 = vld [vmem:[%s6] sm:$0xff]
    %v2070 = vld [vmem:[%s6 + $0x8] sm:$0xff]
    %v2071 = vld [vmem:[%s6 + $0x10] sm:$0xff]
    %v2072 = vld [vmem:[%s6 + $0x18] sm:$0xff]
    %v2073 = vld [vmem:[%s6 + $0x20] sm:$0xff]
    %v2074 = vld [vmem:[%s6 + $0x28] sm:$0xff]
    %v2075 = vld [vmem:[%s6 + $0x30] sm:$0xff]
    %v2076 = vld [vmem:[%s6 + $0x38] sm:$0xff]
    %s2077 = scalar_lea.vmem %s5, 64
    %v2078 = vld [vmem:[%s2077] sm:$0xff]
    %v2079 = vld [vmem:[%s2077 + $0x8] sm:$0xff]
    %v2080 = vld [vmem:[%s2077 + $0x10] sm:$0xff]
    %v2081 = vld [vmem:[%s2077 + $0x18] sm:$0xff]
    %v2082 = vld [vmem:[%s2077 + $0x20] sm:$0xff]
    %v2083 = vld [vmem:[%s2077 + $0x28] sm:$0xff]
    %v2084 = vld [vmem:[%s2077 + $0x30] sm:$0xff]
    %v2085 = vld [vmem:[%s2077 + $0x38] sm:$0xff]
    %2086 = vmatprep.subr.mxu0 0.0
    %2087 = vmatpush1.msra.mxu0 %v2078
    %2088 = vmatprep.subr.mxu0 0.0
    %2089 = vmatpush1.msra.mxu0 %v2079
    %2090 = vmatprep.subr.mxu0 0.0
    %2091 = vmatpush1.msra.mxu0 %v2080
    %2092 = vmatprep.subr.mxu0 0.0
    %2093 = vmatpush1.msra.mxu0 %v2081
    %2094 = vmatprep.subr.mxu0 0.0
    %2095 = vmatpush1.msra.mxu0 %v2082
    %2096 = vmatprep.subr.mxu0 0.0
    %2097 = vmatpush1.msra.mxu0 %v2083
    %2098 = vmatprep.subr.mxu0 0.0
    %2099 = vmatpush1.msra.mxu0 %v2084
    %2100 = vmatprep.subr.mxu0 0.0
    %2101 = vmatpush1.msra.mxu0 %v2085
    %2102 = vmatprep.subr.mxu0 0.0
    %2103 = vmatpush1.msra.mxu0 0.0
    %2104 = vmatprep.subr.mxu0 0.0
    %2105 = vmatpush1.msra.mxu0 0.0
    %2106 = vmatprep.subr.mxu0 0.0
    %2107 = vmatpush1.msra.mxu0 0.0
    %2108 = vmatprep.subr.mxu0 0.0
    %2109 = vmatpush1.msra.mxu0 0.0
    %2110 = vmatprep.subr.mxu0 0.0
    %2111 = vmatpush1.msra.mxu0 0.0
    %2112 = vmatprep.subr.mxu0 0.0
    %2113 = vmatpush1.msra.mxu0 0.0
    %2114 = vmatprep.subr.mxu0 0.0
    %2115 = vmatpush1.msra.mxu0 0.0
    %2116 = vmatprep.subr.mxu0 0.0
    %2117 = vmatpush1.msra.mxu0 0.0
    %2118 = vmatprep.subr.mxu0 0.0
    %2119 = vmatpush1.msra.mxu0 0.0
    %2120 = vmatprep.subr.mxu0 0.0
    %2121 = vmatpush1.msra.mxu0 0.0
    %2122 = vmatprep.subr.mxu0 0.0
    %2123 = vmatpush1.msra.mxu0 0.0
    %2124 = vmatprep.subr.mxu0 0.0
    %2125 = vmatpush1.msra.mxu0 0.0
    %2126 = vmatprep.subr.mxu0 0.0
    %2127 = vmatpush1.msra.mxu0 0.0
    %2128 = vmatprep.subr.mxu0 0.0
    %2129 = vmatpush1.msra.mxu0 0.0
    %2130 = vmatprep.subr.mxu0 0.0
    %2131 = vmatpush1.msra.mxu0 0.0
    %2132 = vmatprep.subr.mxu0 0.0
    %2133 = vmatpush1.msra.mxu0 0.0
    %2134 = vmatprep.subr.mxu0 0.0
    %2135 = vmatpush1.msra.mxu0 0.0
    %2136 = vmatprep.subr.mxu0 0.0
    %2137 = vmatpush1.msra.mxu0 0.0
    %2138 = vmatprep.subr.mxu0 0.0
    %2139 = vmatpush1.msra.mxu0 0.0
    %2140 = vmatprep.subr.mxu0 0.0
    %2141 = vmatpush1.msra.mxu0 0.0
    %2142 = vmatprep.subr.mxu0 0.0
    %2143 = vmatpush1.msra.mxu0 0.0
    %2144 = vmatprep.subr.mxu0 0.0
    %2145 = vmatpush1.msra.mxu0 0.0
    %2146 = vmatprep.subr.mxu0 0.0
    %2147 = vmatpush1.msra.mxu0 0.0
    %2148 = vmatprep.subr.mxu0 0.0
    %2149 = vmatpush1.msra.mxu0 0.0
    %2150 = vmatprep.mubr.f32.mxu0 0.0
    %2151 = vmatmul.mubr.f32.gmra.mrb[0].mxu0 %v1973
    %v2152 = vpop.f32.mrb[0].mxu0
    %v2153 = vadd.f32 0.0, %v2152
    %v2154 = vpop.f32.mrb[0].mxu0
    %2155 = vmatprep.mubr.f32.mxu0 0.0
    %2156 = vmatmul.mubr.f32.gmra.mrb[0].mxu0 %v1976
    %v2157 = vpop.f32.mrb[0].mxu0
    %v2158 = vadd.f32 0.0, %v2157
    %v2159 = vpop.f32.mrb[0].mxu0
    %2160 = vmatprep.mubr.f32.mxu0 0.0
    %2161 = vmatmul.mubr.f32.gmra.mrb[0].mxu0 %v1979
    %v2162 = vpop.f32.mrb[0].mxu0
    %v2163 = vadd.f32 0.0, %v2162
    %v2164 = vpop.f32.mrb[0].mxu0
    %2165 = vmatprep.mubr.f32.mxu0 0.0
    %2166 = vmatmul.mubr.f32.gmra.mrb[0].mxu0 %v1982
    %v2167 = vpop.f32.mrb[0].mxu0
    %v2168 = vadd.f32 0.0, %v2167
    %v2169 = vpop.f32.mrb[0].mxu0
    %2170 = vdwg.mxu0
    %s2171 = scalar_lea.vmem %s6, 64
    %v2172 = vld [vmem:[%s2171] sm:$0xff]
    %v2173 = vld [vmem:[%s2171 + $0x8] sm:$0xff]
    %v2174 = vld [vmem:[%s2171 + $0x10] sm:$0xff]
    %v2175 = vld [vmem:[%s2171 + $0x18] sm:$0xff]
    %v2176 = vld [vmem:[%s2171 + $0x20] sm:$0xff]
    %v2177 = vld [vmem:[%s2171 + $0x28] sm:$0xff]
    %v2178 = vld [vmem:[%s2171 + $0x30] sm:$0xff]
    %v2179 = vld [vmem:[%s2171 + $0x38] sm:$0xff]
    %vm2180 = vcmask 261120
    %v2182 = vsel %vm2180, %v2172, 0
    %v2185 = vsel %vm2180, %v2173, 0
    %v2188 = vsel %vm2180, %v2174, 0
    %v2191 = vsel %vm2180, %v2175, 0
    %v2194 = vsel %vm2180, %v2176, 0
    %v2197 = vsel %vm2180, %v2177, 0
    %v2200 = vsel %vm2180, %v2178, 0
    %v2203 = vsel %vm2180, %v2179, 0
    %2205 = vmatprep.subr.mxu0 0.0
    %2206 = vmatpush1.msra.mxu0 %v2153
    %2207 = vmatprep.subr.mxu0 0.0
    %2208 = vmatpush1.msra.mxu0 %v2158
    %2209 = vmatprep.subr.mxu0 0.0
    %2210 = vmatpush1.msra.mxu0 %v2163
    %2211 = vmatprep.subr.mxu0 0.0
    %2212 = vmatpush1.msra.mxu0 %v2168
    %2213 = vmatprep.subr.mxu0 0.0
    %2214 = vmatpush1.msra.mxu0 0.0
    %2215 = vmatprep.subr.mxu0 0.0
    %2216 = vmatpush1.msra.mxu0 0.0
    %2217 = vmatprep.subr.mxu0 0.0
    %2218 = vmatpush1.msra.mxu0 0.0
    %2219 = vmatprep.subr.mxu0 0.0
    %2220 = vmatpush1.msra.mxu0 0.0
    %2221 = vmatprep.subr.mxu0 0.0
    %2222 = vmatpush1.msra.mxu0 0.0
    %2223 = vmatprep.subr.mxu0 0.0
    %2224 = vmatpush1.msra.mxu0 0.0
    %2225 = vmatprep.subr.mxu0 0.0
    %2226 = vmatpush1.msra.mxu0 0.0
    %2227 = vmatprep.subr.mxu0 0.0
    %2228 = vmatpush1.msra.mxu0 0.0
    %2229 = vmatprep.subr.mxu0 0.0
    %2230 = vmatpush1.msra.mxu0 0.0
    %2231 = vmatprep.subr.mxu0 0.0
    %2232 = vmatpush1.msra.mxu0 0.0
    %2233 = vmatprep.subr.mxu0 0.0
    %2234 = vmatpush1.msra.mxu0 0.0
    %2235 = vmatprep.subr.mxu0 0.0
    %2236 = vmatpush1.msra.mxu0 0.0
    %2237 = vmatprep.subr.mxu0 0.0
    %2238 = vmatpush1.msra.mxu0 0.0
    %2239 = vmatprep.subr.mxu0 0.0
    %2240 = vmatpush1.msra.mxu0 0.0
    %2241 = vmatprep.subr.mxu0 0.0
    %2242 = vmatpush1.msra.mxu0 0.0
    %2243 = vmatprep.subr.mxu0 0.0
    %2244 = vmatpush1.msra.mxu0 0.0
    %2245 = vmatprep.subr.mxu0 0.0
    %2246 = vmatpush1.msra.mxu0 0.0
    %2247 = vmatprep.subr.mxu0 0.0
    %2248 = vmatpush1.msra.mxu0 0.0
    %2249 = vmatprep.subr.mxu0 0.0
    %2250 = vmatpush1.msra.mxu0 0.0
    %2251 = vmatprep.subr.mxu0 0.0
    %2252 = vmatpush1.msra.mxu0 0.0
    %2253 = vmatprep.subr.mxu0 0.0
    %2254 = vmatpush1.msra.mxu0 0.0
    %2255 = vmatprep.subr.mxu0 0.0
    %2256 = vmatpush1.msra.mxu0 0.0
    %2257 = vmatprep.subr.mxu0 0.0
    %2258 = vmatpush1.msra.mxu0 0.0
    %2259 = vmatprep.subr.mxu0 0.0
    %2260 = vmatpush1.msra.mxu0 0.0
    %2261 = vmatprep.subr.mxu0 0.0
    %2262 = vmatpush1.msra.mxu0 0.0
    %2263 = vmatprep.subr.mxu0 0.0
    %2264 = vmatpush1.msra.mxu0 0.0
    %2265 = vmatprep.subr.mxu0 0.0
    %2266 = vmatpush1.msra.mxu0 0.0
    %2267 = vmatprep.subr.mxu0 0.0
    %2268 = vmatpush1.msra.mxu0 0.0
    %2269 = vmatprep.mubr.f32.mxu0 0.0
    %2270 = vmatmul.mubr.f32.gmra.mrb[0].mxu0 %v2182
    %v2271 = vpop.f32.mrb[0].mxu0
    %v2272 = vadd.f32 0.0, %v2271
    %v2273 = vpop.f32.mrb[0].mxu0
    %2274 = vmatprep.mubr.f32.mxu0 0.0
    %2275 = vmatmul.mubr.f32.gmra.mrb[0].mxu0 %v2185
    %v2276 = vpop.f32.mrb[0].mxu0
    %v2277 = vadd.f32 0.0, %v2276
    %v2278 = vpop.f32.mrb[0].mxu0
    %2279 = vmatprep.mubr.f32.mxu0 0.0
    %2280 = vmatmul.mubr.f32.gmra.mrb[0].mxu0 %v2188
    %v2281 = vpop.f32.mrb[0].mxu0
    %v2282 = vadd.f32 0.0, %v2281
    %v2283 = vpop.f32.mrb[0].mxu0
    %2284 = vmatprep.mubr.f32.mxu0 0.0
    %2285 = vmatmul.mubr.f32.gmra.mrb[0].mxu0 %v2191
    %v2286 = vpop.f32.mrb[0].mxu0
    %v2287 = vadd.f32 0.0, %v2286
    %v2288 = vpop.f32.mrb[0].mxu0
    %2289 = vmatprep.mubr.f32.mxu0 0.0
    %2290 = vmatmul.mubr.f32.gmra.mrb[0].mxu0 %v2194
    %v2291 = vpop.f32.mrb[0].mxu0
    %v2292 = vadd.f32 0.0, %v2291
    %v2293 = vpop.f32.mrb[0].mxu0
    %2294 = vmatprep.mubr.f32.mxu0 0.0
    %2295 = vmatmul.mubr.f32.gmra.mrb[0].mxu0 %v2197
    %v2296 = vpop.f32.mrb[0].mxu0
    %v2297 = vadd.f32 0.0, %v2296
    %v2298 = vpop.f32.mrb[0].mxu0
    %2299 = vmatprep.mubr.f32.mxu0 0.0
    %2300 = vmatmul.mubr.f32.gmra.mrb[0].mxu0 %v2200
    %v2301 = vpop.f32.mrb[0].mxu0
    %v2302 = vadd.f32 0.0, %v2301
    %v2303 = vpop.f32.mrb[0].mxu0
    %2304 = vmatprep.mubr.f32.mxu0 0.0
    %2305 = vmatmul.mubr.f32.gmra.mrb[0].mxu0 %v2203
    %v2306 = vpop.f32.mrb[0].mxu0
    %v2307 = vadd.f32 0.0, %v2306
    %v2308 = vpop.f32.mrb[0].mxu0
    %2309 = vdwg.mxu0
    %v2311 = vsel %vm2180, %v2069, 0
    %v2314 = vsel %vm2180, %v2070, 0
    %v2317 = vsel %vm2180, %v2071, 0
    %v2320 = vsel %vm2180, %v2072, 0
    %v2323 = vsel %vm2180, %v2073, 0
    %v2326 = vsel %vm2180, %v2074, 0
    %v2329 = vsel %vm2180, %v2075, 0
    %v2332 = vsel %vm2180, %v2076, 0
    %2334 = vmatprep.subr.mxu0 0.0
    %2335 = vmatpush1.msra.mxu0 %v2051
    %2336 = vmatprep.subr.mxu0 0.0
    %2337 = vmatpush1.msra.mxu0 %v2056
    %2338 = vmatprep.subr.mxu0 0.0
    %2339 = vmatpush1.msra.mxu0 %v2061
    %2340 = vmatprep.subr.mxu0 0.0
    %2341 = vmatpush1.msra.mxu0 %v2066
    %2342 = vmatprep.subr.mxu0 0.0
    %2343 = vmatpush1.msra.mxu0 0.0
    %2344 = vmatprep.subr.mxu0 0.0
    %2345 = vmatpush1.msra.mxu0 0.0
    %2346 = vmatprep.subr.mxu0 0.0
    %2347 = vmatpush1.msra.mxu0 0.0
    %2348 = vmatprep.subr.mxu0 0.0
    %2349 = vmatpush1.msra.mxu0 0.0
    %2350 = vmatprep.subr.mxu0 0.0
    %2351 = vmatpush1.msra.mxu0 0.0
    %2352 = vmatprep.subr.mxu0 0.0
    %2353 = vmatpush1.msra.mxu0 0.0
    %2354 = vmatprep.subr.mxu0 0.0
    %2355 = vmatpush1.msra.mxu0 0.0
    %2356 = vmatprep.subr.mxu0 0.0
    %2357 = vmatpush1.msra.mxu0 0.0
    %2358 = vmatprep.subr.mxu0 0.0
    %2359 = vmatpush1.msra.mxu0 0.0
    %2360 = vmatprep.subr.mxu0 0.0
    %2361 = vmatpush1.msra.mxu0 0.0
    %2362 = vmatprep.subr.mxu0 0.0
    %2363 = vmatpush1.msra.mxu0 0.0
    %2364 = vmatprep.subr.mxu0 0.0
    %2365 = vmatpush1.msra.mxu0 0.0
    %2366 = vmatprep.subr.mxu0 0.0
    %2367 = vmatpush1.msra.mxu0 0.0
    %2368 = vmatprep.subr.mxu0 0.0
    %2369 = vmatpush1.msra.mxu0 0.0
    %2370 = vmatprep.subr.mxu0 0.0
    %2371 = vmatpush1.msra.mxu0 0.0
    %2372 = vmatprep.subr.mxu0 0.0
    %2373 = vmatpush1.msra.mxu0 0.0
    %2374 = vmatprep.subr.mxu0 0.0
    %2375 = vmatpush1.msra.mxu0 0.0
    %2376 = vmatprep.subr.mxu0 0.0
    %2377 = vmatpush1.msra.mxu0 0.0
    %2378 = vmatprep.subr.mxu0 0.0
    %2379 = vmatpush1.msra.mxu0 0.0
    %2380 = vmatprep.subr.mxu0 0.0
    %2381 = vmatpush1.msra.mxu0 0.0
    %2382 = vmatprep.subr.mxu0 0.0
    %2383 = vmatpush1.msra.mxu0 0.0
    %2384 = vmatprep.subr.mxu0 0.0
    %2385 = vmatpush1.msra.mxu0 0.0
    %2386 = vmatprep.subr.mxu0 0.0
    %2387 = vmatpush1.msra.mxu0 0.0
    %2388 = vmatprep.subr.mxu0 0.0
    %2389 = vmatpush1.msra.mxu0 0.0
    %2390 = vmatprep.subr.mxu0 0.0
    %2391 = vmatpush1.msra.mxu0 0.0
    %2392 = vmatprep.subr.mxu0 0.0
    %2393 = vmatpush1.msra.mxu0 0.0
    %2394 = vmatprep.subr.mxu0 0.0
    %2395 = vmatpush1.msra.mxu0 0.0
    %2396 = vmatprep.subr.mxu0 0.0
    %2397 = vmatpush1.msra.mxu0 0.0
    %2398 = vmatprep.mubr.f32.mxu0 0.0
    %2399 = vmatmul.mubr.f32.gmra.mrb[0].mxu0 %v2311
    %v2400 = vpop.f32.mrb[0].mxu0
    %v2401 = vadd.f32 %v2272, %v2400
    %v2402 = vpop.f32.mrb[0].mxu0
    %2403 = vmatprep.mubr.f32.mxu0 0.0
    %2404 = vmatmul.mubr.f32.gmra.mrb[0].mxu0 %v2314
    %v2405 = vpop.f32.mrb[0].mxu0
    %v2406 = vadd.f32 %v2277, %v2405
    %v2407 = vpop.f32.mrb[0].mxu0
    %2408 = vmatprep.mubr.f32.mxu0 0.0
    %2409 = vmatmul.mubr.f32.gmra.mrb[0].mxu0 %v2317
    %v2410 = vpop.f32.mrb[0].mxu0
    %v2411 = vadd.f32 %v2282, %v2410
    %v2412 = vpop.f32.mrb[0].mxu0
    %2413 = vmatprep.mubr.f32.mxu0 0.0
    %2414 = vmatmul.mubr.f32.gmra.mrb[0].mxu0 %v2320
    %v2415 = vpop.f32.mrb[0].mxu0
    %v2416 = vadd.f32 %v2287, %v2415
    %v2417 = vpop.f32.mrb[0].mxu0
    %2418 = vmatprep.mubr.f32.mxu0 0.0
    %2419 = vmatmul.mubr.f32.gmra.mrb[0].mxu0 %v2323
    %v2420 = vpop.f32.mrb[0].mxu0
    %v2421 = vadd.f32 %v2292, %v2420
    %v2422 = vpop.f32.mrb[0].mxu0
    %2423 = vmatprep.mubr.f32.mxu0 0.0
    %2424 = vmatmul.mubr.f32.gmra.mrb[0].mxu0 %v2326
    %v2425 = vpop.f32.mrb[0].mxu0
    %v2426 = vadd.f32 %v2297, %v2425
    %v2427 = vpop.f32.mrb[0].mxu0
    %2428 = vmatprep.mubr.f32.mxu0 0.0
    %2429 = vmatmul.mubr.f32.gmra.mrb[0].mxu0 %v2329
    %v2430 = vpop.f32.mrb[0].mxu0
    %v2431 = vadd.f32 %v2302, %v2430
    %v2432 = vpop.f32.mrb[0].mxu0
    %2433 = vmatprep.mubr.f32.mxu0 0.0
    %2434 = vmatmul.mubr.f32.gmra.mrb[0].mxu0 %v2332
    %v2435 = vpop.f32.mrb[0].mxu0
    %v2436 = vadd.f32 %v2307, %v2435
    %v2437 = vpop.f32.mrb[0].mxu0
    %2438 = vdwg.mxu0
    %s2439 = scalar_lea.vmem %s5, 128
    %v2440 = vld [vmem:[%s2439] sm:$0xff]
    %v2441 = vld [vmem:[%s2439 + $0x8] sm:$0xff]
    %v2442 = vld [vmem:[%s2439 + $0x10] sm:$0xff]
    %v2443 = vld [vmem:[%s2439 + $0x18] sm:$0xff]
    %v2444 = vld [vmem:[%s2439 + $0x20] sm:$0xff]
    %v2445 = vld [vmem:[%s2439 + $0x28] sm:$0xff]
    %v2446 = vld [vmem:[%s2439 + $0x30] sm:$0xff]
    %v2447 = vld [vmem:[%s2439 + $0x38] sm:$0xff]
    %2448 = vmatprep.subr.mxu0 0.0
    %2449 = vmatpush1.msra.mxu0 %v2440
    %2450 = vmatprep.subr.mxu0 0.0
    %2451 = vmatpush1.msra.mxu0 %v2441
    %2452 = vmatprep.subr.mxu0 0.0
    %2453 = vmatpush1.msra.mxu0 %v2442
    %2454 = vmatprep.subr.mxu0 0.0
    %2455 = vmatpush1.msra.mxu0 %v2443
    %2456 = vmatprep.subr.mxu0 0.0
    %2457 = vmatpush1.msra.mxu0 %v2444
    %2458 = vmatprep.subr.mxu0 0.0
    %2459 = vmatpush1.msra.mxu0 %v2445
    %2460 = vmatprep.subr.mxu0 0.0
    %2461 = vmatpush1.msra.mxu0 %v2446
    %2462 = vmatprep.subr.mxu0 0.0
    %2463 = vmatpush1.msra.mxu0 %v2447
    %2464 = vmatprep.subr.mxu0 0.0
    %2465 = vmatpush1.msra.mxu0 0.0
    %2466 = vmatprep.subr.mxu0 0.0
    %2467 = vmatpush1.msra.mxu0 0.0
    %2468 = vmatprep.subr.mxu0 0.0
    %2469 = vmatpush1.msra.mxu0 0.0
    %2470 = vmatprep.subr.mxu0 0.0
    %2471 = vmatpush1.msra.mxu0 0.0
    %2472 = vmatprep.subr.mxu0 0.0
    %2473 = vmatpush1.msra.mxu0 0.0
    %2474 = vmatprep.subr.mxu0 0.0
    %2475 = vmatpush1.msra.mxu0 0.0
    %2476 = vmatprep.subr.mxu0 0.0
    %2477 = vmatpush1.msra.mxu0 0.0
    %2478 = vmatprep.subr.mxu0 0.0
    %2479 = vmatpush1.msra.mxu0 0.0
    %2480 = vmatprep.subr.mxu0 0.0
    %2481 = vmatpush1.msra.mxu0 0.0
    %2482 = vmatprep.subr.mxu0 0.0
    %2483 = vmatpush1.msra.mxu0 0.0
    %2484 = vmatprep.subr.mxu0 0.0
    %2485 = vmatpush1.msra.mxu0 0.0
    %2486 = vmatprep.subr.mxu0 0.0
    %2487 = vmatpush1.msra.mxu0 0.0
    %2488 = vmatprep.subr.mxu0 0.0
    %2489 = vmatpush1.msra.mxu0 0.0
    %2490 = vmatprep.subr.mxu0 0.0
    %2491 = vmatpush1.msra.mxu0 0.0
    %2492 = vmatprep.subr.mxu0 0.0
    %2493 = vmatpush1.msra.mxu0 0.0
    %2494 = vmatprep.subr.mxu0 0.0
    %2495 = vmatpush1.msra.mxu0 0.0
    %2496 = vmatprep.subr.mxu0 0.0
    %2497 = vmatpush1.msra.mxu0 0.0
    %2498 = vmatprep.subr.mxu0 0.0
    %2499 = vmatpush1.msra.mxu0 0.0
    %2500 = vmatprep.subr.mxu0 0.0
    %2501 = vmatpush1.msra.mxu0 0.0
    %2502 = vmatprep.subr.mxu0 0.0
    %2503 = vmatpush1.msra.mxu0 0.0
    %2504 = vmatprep.subr.mxu0 0.0
    %2505 = vmatpush1.msra.mxu0 0.0
    %2506 = vmatprep.subr.mxu0 0.0
    %2507 = vmatpush1.msra.mxu0 0.0
    %2508 = vmatprep.subr.mxu0 0.0
    %2509 = vmatpush1.msra.mxu0 0.0
    %2510 = vmatprep.subr.mxu0 0.0
    %2511 = vmatpush1.msra.mxu0 0.0
    %2512 = vmatprep.mubr.f32.mxu0 0.0
    %2513 = vmatmul.mubr.f32.gmra.mrb[0].mxu0 %v1973
    %v2514 = vpop.f32.mrb[0].mxu0
    %v2515 = vadd.f32 0.0, %v2514
    %v2516 = vpop.f32.mrb[0].mxu0
    %2517 = vmatprep.mubr.f32.mxu0 0.0
    %2518 = vmatmul.mubr.f32.gmra.mrb[0].mxu0 %v1976
    %v2519 = vpop.f32.mrb[0].mxu0
    %v2520 = vadd.f32 0.0, %v2519
    %v2521 = vpop.f32.mrb[0].mxu0
    %2522 = vmatprep.mubr.f32.mxu0 0.0
    %2523 = vmatmul.mubr.f32.gmra.mrb[0].mxu0 %v1979
    %v2524 = vpop.f32.mrb[0].mxu0
    %v2525 = vadd.f32 0.0, %v2524
    %v2526 = vpop.f32.mrb[0].mxu0
    %2527 = vmatprep.mubr.f32.mxu0 0.0
    %2528 = vmatmul.mubr.f32.gmra.mrb[0].mxu0 %v1982
    %v2529 = vpop.f32.mrb[0].mxu0
    %v2530 = vadd.f32 0.0, %v2529
    %v2531 = vpop.f32.mrb[0].mxu0
    %2532 = vdwg.mxu0
    %s2533 = scalar_lea.vmem %s6, 128
    %v2534 = vld [vmem:[%s2533] sm:$0xff]
    %v2535 = vld [vmem:[%s2533 + $0x8] sm:$0xff]
    %v2536 = vld [vmem:[%s2533 + $0x10] sm:$0xff]
    %v2537 = vld [vmem:[%s2533 + $0x18] sm:$0xff]
    %v2538 = vld [vmem:[%s2533 + $0x20] sm:$0xff]
    %v2539 = vld [vmem:[%s2533 + $0x28] sm:$0xff]
    %v2540 = vld [vmem:[%s2533 + $0x30] sm:$0xff]
    %v2541 = vld [vmem:[%s2533 + $0x38] sm:$0xff]
    %v2543 = vsel %vm2180, %v2534, 0
    %v2546 = vsel %vm2180, %v2535, 0
    %v2549 = vsel %vm2180, %v2536, 0
    %v2552 = vsel %vm2180, %v2537, 0
    %v2555 = vsel %vm2180, %v2538, 0
    %v2558 = vsel %vm2180, %v2539, 0
    %v2561 = vsel %vm2180, %v2540, 0
    %v2564 = vsel %vm2180, %v2541, 0
    %2566 = vmatprep.subr.mxu0 0.0
    %2567 = vmatpush1.msra.mxu0 %v2515
    %2568 = vmatprep.subr.mxu0 0.0
    %2569 = vmatpush1.msra.mxu0 %v2520
    %2570 = vmatprep.subr.mxu0 0.0
    %2571 = vmatpush1.msra.mxu0 %v2525
    %2572 = vmatprep.subr.mxu0 0.0
    %2573 = vmatpush1.msra.mxu0 %v2530
    %2574 = vmatprep.subr.mxu0 0.0
    %2575 = vmatpush1.msra.mxu0 0.0
    %2576 = vmatprep.subr.mxu0 0.0
    %2577 = vmatpush1.msra.mxu0 0.0
    %2578 = vmatprep.subr.mxu0 0.0
    %2579 = vmatpush1.msra.mxu0 0.0
    %2580 = vmatprep.subr.mxu0 0.0
    %2581 = vmatpush1.msra.mxu0 0.0
    %2582 = vmatprep.subr.mxu0 0.0
    %2583 = vmatpush1.msra.mxu0 0.0
    %2584 = vmatprep.subr.mxu0 0.0
    %2585 = vmatpush1.msra.mxu0 0.0
    %2586 = vmatprep.subr.mxu0 0.0
    %2587 = vmatpush1.msra.mxu0 0.0
    %2588 = vmatprep.subr.mxu0 0.0
    %2589 = vmatpush1.msra.mxu0 0.0
    %2590 = vmatprep.subr.mxu0 0.0
    %2591 = vmatpush1.msra.mxu0 0.0
    %2592 = vmatprep.subr.mxu0 0.0
    %2593 = vmatpush1.msra.mxu0 0.0
    %2594 = vmatprep.subr.mxu0 0.0
    %2595 = vmatpush1.msra.mxu0 0.0
    %2596 = vmatprep.subr.mxu0 0.0
    %2597 = vmatpush1.msra.mxu0 0.0
    %2598 = vmatprep.subr.mxu0 0.0
    %2599 = vmatpush1.msra.mxu0 0.0
    %2600 = vmatprep.subr.mxu0 0.0
    %2601 = vmatpush1.msra.mxu0 0.0
    %2602 = vmatprep.subr.mxu0 0.0
    %2603 = vmatpush1.msra.mxu0 0.0
    %2604 = vmatprep.subr.mxu0 0.0
    %2605 = vmatpush1.msra.mxu0 0.0
    %2606 = vmatprep.subr.mxu0 0.0
    %2607 = vmatpush1.msra.mxu0 0.0
    %2608 = vmatprep.subr.mxu0 0.0
    %2609 = vmatpush1.msra.mxu0 0.0
    %2610 = vmatprep.subr.mxu0 0.0
    %2611 = vmatpush1.msra.mxu0 0.0
    %2612 = vmatprep.subr.mxu0 0.0
    %2613 = vmatpush1.msra.mxu0 0.0
    %2614 = vmatprep.subr.mxu0 0.0
    %2615 = vmatpush1.msra.mxu0 0.0
    %2616 = vmatprep.subr.mxu0 0.0
    %2617 = vmatpush1.msra.mxu0 0.0
    %2618 = vmatprep.subr.mxu0 0.0
    %2619 = vmatpush1.msra.mxu0 0.0
    %2620 = vmatprep.subr.mxu0 0.0
    %2621 = vmatpush1.msra.mxu0 0.0
    %2622 = vmatprep.subr.mxu0 0.0
    %2623 = vmatpush1.msra.mxu0 0.0
    %2624 = vmatprep.subr.mxu0 0.0
    %2625 = vmatpush1.msra.mxu0 0.0
    %2626 = vmatprep.subr.mxu0 0.0
    %2627 = vmatpush1.msra.mxu0 0.0
    %2628 = vmatprep.subr.mxu0 0.0
    %2629 = vmatpush1.msra.mxu0 0.0
    %2630 = vmatprep.mubr.f32.mxu0 0.0
    %2631 = vmatmul.mubr.f32.gmra.mrb[0].mxu0 %v2543
    %v2632 = vpop.f32.mrb[0].mxu0
    %v2633 = vadd.f32 0.0, %v2632
    %v2634 = vpop.f32.mrb[0].mxu0
    %2635 = vmatprep.mubr.f32.mxu0 0.0
    %2636 = vmatmul.mubr.f32.gmra.mrb[0].mxu0 %v2546
    %v2637 = vpop.f32.mrb[0].mxu0
    %v2638 = vadd.f32 0.0, %v2637
    %v2639 = vpop.f32.mrb[0].mxu0
    %2640 = vmatprep.mubr.f32.mxu0 0.0
    %2641 = vmatmul.mubr.f32.gmra.mrb[0].mxu0 %v2549
    %v2642 = vpop.f32.mrb[0].mxu0
    %v2643 = vadd.f32 0.0, %v2642
    %v2644 = vpop.f32.mrb[0].mxu0
    %2645 = vmatprep.mubr.f32.mxu0 0.0
    %2646 = vmatmul.mubr.f32.gmra.mrb[0].mxu0 %v2552
    %v2647 = vpop.f32.mrb[0].mxu0
    %v2648 = vadd.f32 0.0, %v2647
    %v2649 = vpop.f32.mrb[0].mxu0
    %2650 = vmatprep.mubr.f32.mxu0 0.0
    %2651 = vmatmul.mubr.f32.gmra.mrb[0].mxu0 %v2555
    %v2652 = vpop.f32.mrb[0].mxu0
    %v2653 = vadd.f32 0.0, %v2652
    %v2654 = vpop.f32.mrb[0].mxu0
    %2655 = vmatprep.mubr.f32.mxu0 0.0
    %2656 = vmatmul.mubr.f32.gmra.mrb[0].mxu0 %v2558
    %v2657 = vpop.f32.mrb[0].mxu0
    %v2658 = vadd.f32 0.0, %v2657
    %v2659 = vpop.f32.mrb[0].mxu0
    %2660 = vmatprep.mubr.f32.mxu0 0.0
    %2661 = vmatmul.mubr.f32.gmra.mrb[0].mxu0 %v2561
    %v2662 = vpop.f32.mrb[0].mxu0
    %v2663 = vadd.f32 0.0, %v2662
    %v2664 = vpop.f32.mrb[0].mxu0
    %2665 = vmatprep.mubr.f32.mxu0 0.0
    %2666 = vmatmul.mubr.f32.gmra.mrb[0].mxu0 %v2564
    %v2667 = vpop.f32.mrb[0].mxu0
    %v2668 = vadd.f32 0.0, %v2667
    %v2669 = vpop.f32.mrb[0].mxu0
    %2670 = vdwg.mxu0
    %v2671 = vadd.f32 %v2401, %v2633
    %v2672 = vadd.f32 %v2406, %v2638
    %v2673 = vadd.f32 %v2411, %v2643
    %v2674 = vadd.f32 %v2416, %v2648
    %v2675 = vadd.f32 %v2421, %v2653
    %v2676 = vadd.f32 %v2426, %v2658
    %v2677 = vadd.f32 %v2431, %v2663
    %v2678 = vadd.f32 %v2436, %v2668
    %s2679 = scalar_lea.vmem %s5, 192
    %v2680 = vld [vmem:[%s2679] sm:$0xff]
    %v2681 = vld [vmem:[%s2679 + $0x8] sm:$0xff]
    %v2682 = vld [vmem:[%s2679 + $0x10] sm:$0xff]
    %v2683 = vld [vmem:[%s2679 + $0x18] sm:$0xff]
    %v2684 = vld [vmem:[%s2679 + $0x20] sm:$0xff]
    %v2685 = vld [vmem:[%s2679 + $0x28] sm:$0xff]
    %v2686 = vld [vmem:[%s2679 + $0x30] sm:$0xff]
    %v2687 = vld [vmem:[%s2679 + $0x38] sm:$0xff]
    %2688 = vmatprep.subr.mxu0 0.0
    %2689 = vmatpush1.msra.mxu0 %v2680
    %2690 = vmatprep.subr.mxu0 0.0
    %2691 = vmatpush1.msra.mxu0 %v2681
    %2692 = vmatprep.subr.mxu0 0.0
    %2693 = vmatpush1.msra.mxu0 %v2682
    %2694 = vmatprep.subr.mxu0 0.0
    %2695 = vmatpush1.msra.mxu0 %v2683
    %2696 = vmatprep.subr.mxu0 0.0
    %2697 = vmatpush1.msra.mxu0 %v2684
    %2698 = vmatprep.subr.mxu0 0.0
    %2699 = vmatpush1.msra.mxu0 %v2685
    %2700 = vmatprep.subr.mxu0 0.0
    %2701 = vmatpush1.msra.mxu0 %v2686
    %2702 = vmatprep.subr.mxu0 0.0
    %2703 = vmatpush1.msra.mxu0 %v2687
    %2704 = vmatprep.subr.mxu0 0.0
    %2705 = vmatpush1.msra.mxu0 0.0
    %2706 = vmatprep.subr.mxu0 0.0
    %2707 = vmatpush1.msra.mxu0 0.0
    %2708 = vmatprep.subr.mxu0 0.0
    %2709 = vmatpush1.msra.mxu0 0.0
    %2710 = vmatprep.subr.mxu0 0.0
    %2711 = vmatpush1.msra.mxu0 0.0
    %2712 = vmatprep.subr.mxu0 0.0
    %2713 = vmatpush1.msra.mxu0 0.0
    %2714 = vmatprep.subr.mxu0 0.0
    %2715 = vmatpush1.msra.mxu0 0.0
    %2716 = vmatprep.subr.mxu0 0.0
    %2717 = vmatpush1.msra.mxu0 0.0
    %2718 = vmatprep.subr.mxu0 0.0
    %2719 = vmatpush1.msra.mxu0 0.0
    %2720 = vmatprep.subr.mxu0 0.0
    %2721 = vmatpush1.msra.mxu0 0.0
    %2722 = vmatprep.subr.mxu0 0.0
    %2723 = vmatpush1.msra.mxu0 0.0
    %2724 = vmatprep.subr.mxu0 0.0
    %2725 = vmatpush1.msra.mxu0 0.0
    %2726 = vmatprep.subr.mxu0 0.0
    %2727 = vmatpush1.msra.mxu0 0.0
    %2728 = vmatprep.subr.mxu0 0.0
    %2729 = vmatpush1.msra.mxu0 0.0
    %2730 = vmatprep.subr.mxu0 0.0
    %2731 = vmatpush1.msra.mxu0 0.0
    %2732 = vmatprep.subr.mxu0 0.0
    %2733 = vmatpush1.msra.mxu0 0.0
    %2734 = vmatprep.subr.mxu0 0.0
    %2735 = vmatpush1.msra.mxu0 0.0
    %2736 = vmatprep.subr.mxu0 0.0
    %2737 = vmatpush1.msra.mxu0 0.0
    %2738 = vmatprep.subr.mxu0 0.0
    %2739 = vmatpush1.msra.mxu0 0.0
    %2740 = vmatprep.subr.mxu0 0.0
    %2741 = vmatpush1.msra.mxu0 0.0
    %2742 = vmatprep.subr.mxu0 0.0
    %2743 = vmatpush1.msra.mxu0 0.0
    %2744 = vmatprep.subr.mxu0 0.0
    %2745 = vmatpush1.msra.mxu0 0.0
    %2746 = vmatprep.subr.mxu0 0.0
    %2747 = vmatpush1.msra.mxu0 0.0
    %2748 = vmatprep.subr.mxu0 0.0
    %2749 = vmatpush1.msra.mxu0 0.0
    %2750 = vmatprep.subr.mxu0 0.0
    %2751 = vmatpush1.msra.mxu0 0.0
    %2752 = vmatprep.mubr.f32.mxu0 0.0
    %2753 = vmatmul.mubr.f32.gmra.mrb[0].mxu0 %v1973
    %v2754 = vpop.f32.mrb[0].mxu0
    %v2755 = vadd.f32 0.0, %v2754
    %v2756 = vpop.f32.mrb[0].mxu0
    %2757 = vmatprep.mubr.f32.mxu0 0.0
    %2758 = vmatmul.mubr.f32.gmra.mrb[0].mxu0 %v1976
    %v2759 = vpop.f32.mrb[0].mxu0
    %v2760 = vadd.f32 0.0, %v2759
    %v2761 = vpop.f32.mrb[0].mxu0
    %2762 = vmatprep.mubr.f32.mxu0 0.0
    %2763 = vmatmul.mubr.f32.gmra.mrb[0].mxu0 %v1979
    %v2764 = vpop.f32.mrb[0].mxu0
    %v2765 = vadd.f32 0.0, %v2764
    %v2766 = vpop.f32.mrb[0].mxu0
    %2767 = vmatprep.mubr.f32.mxu0 0.0
    %2768 = vmatmul.mubr.f32.gmra.mrb[0].mxu0 %v1982
    %v2769 = vpop.f32.mrb[0].mxu0
    %v2770 = vadd.f32 0.0, %v2769
    %v2771 = vpop.f32.mrb[0].mxu0
    %2772 = vdwg.mxu0
    %s2773 = scalar_lea.vmem %s6, 192
    %v2774 = vld [vmem:[%s2773] sm:$0xff]
    %v2775 = vld [vmem:[%s2773 + $0x8] sm:$0xff]
    %v2776 = vld [vmem:[%s2773 + $0x10] sm:$0xff]
    %v2777 = vld [vmem:[%s2773 + $0x18] sm:$0xff]
    %v2778 = vld [vmem:[%s2773 + $0x20] sm:$0xff]
    %v2779 = vld [vmem:[%s2773 + $0x28] sm:$0xff]
    %v2780 = vld [vmem:[%s2773 + $0x30] sm:$0xff]
    %v2781 = vld [vmem:[%s2773 + $0x38] sm:$0xff]
    %v2783 = vsel %vm2180, %v2774, 0
    %v2786 = vsel %vm2180, %v2775, 0
    %v2789 = vsel %vm2180, %v2776, 0
    %v2792 = vsel %vm2180, %v2777, 0
    %v2795 = vsel %vm2180, %v2778, 0
    %v2798 = vsel %vm2180, %v2779, 0
    %v2801 = vsel %vm2180, %v2780, 0
    %v2804 = vsel %vm2180, %v2781, 0
    %2806 = vmatprep.subr.mxu0 0.0
    %2807 = vmatpush1.msra.mxu0 %v2755
    %2808 = vmatprep.subr.mxu0 0.0
    %2809 = vmatpush1.msra.mxu0 %v2760
    %2810 = vmatprep.subr.mxu0 0.0
    %2811 = vmatpush1.msra.mxu0 %v2765
    %2812 = vmatprep.subr.mxu0 0.0
    %2813 = vmatpush1.msra.mxu0 %v2770
    %2814 = vmatprep.subr.mxu0 0.0
    %2815 = vmatpush1.msra.mxu0 0.0
    %2816 = vmatprep.subr.mxu0 0.0
    %2817 = vmatpush1.msra.mxu0 0.0
    %2818 = vmatprep.subr.mxu0 0.0
    %2819 = vmatpush1.msra.mxu0 0.0
    %2820 = vmatprep.subr.mxu0 0.0
    %2821 = vmatpush1.msra.mxu0 0.0
    %2822 = vmatprep.subr.mxu0 0.0
    %2823 = vmatpush1.msra.mxu0 0.0
    %2824 = vmatprep.subr.mxu0 0.0
    %2825 = vmatpush1.msra.mxu0 0.0
    %2826 = vmatprep.subr.mxu0 0.0
    %2827 = vmatpush1.msra.mxu0 0.0
    %2828 = vmatprep.subr.mxu0 0.0
    %2829 = vmatpush1.msra.mxu0 0.0
    %2830 = vmatprep.subr.mxu0 0.0
    %2831 = vmatpush1.msra.mxu0 0.0
    %2832 = vmatprep.subr.mxu0 0.0
    %2833 = vmatpush1.msra.mxu0 0.0
    %2834 = vmatprep.subr.mxu0 0.0
    %2835 = vmatpush1.msra.mxu0 0.0
    %2836 = vmatprep.subr.mxu0 0.0
    %2837 = vmatpush1.msra.mxu0 0.0
    %2838 = vmatprep.subr.mxu0 0.0
    %2839 = vmatpush1.msra.mxu0 0.0
    %2840 = vmatprep.subr.mxu0 0.0
    %2841 = vmatpush1.msra.mxu0 0.0
    %2842 = vmatprep.subr.mxu0 0.0
    %2843 = vmatpush1.msra.mxu0 0.0
    %2844 = vmatprep.subr.mxu0 0.0
    %2845 = vmatpush1.msra.mxu0 0.0
    %2846 = vmatprep.subr.mxu0 0.0
    %2847 = vmatpush1.msra.mxu0 0.0
    %2848 = vmatprep.subr.mxu0 0.0
    %2849 = vmatpush1.msra.mxu0 0.0
    %2850 = vmatprep.subr.mxu0 0.0
    %2851 = vmatpush1.msra.mxu0 0.0
    %2852 = vmatprep.subr.mxu0 0.0
    %2853 = vmatpush1.msra.mxu0 0.0
    %2854 = vmatprep.subr.mxu0 0.0
    %2855 = vmatpush1.msra.mxu0 0.0
    %2856 = vmatprep.subr.mxu0 0.0
    %2857 = vmatpush1.msra.mxu0 0.0
    %2858 = vmatprep.subr.mxu0 0.0
    %2859 = vmatpush1.msra.mxu0 0.0
    %2860 = vmatprep.subr.mxu0 0.0
    %2861 = vmatpush1.msra.mxu0 0.0
    %2862 = vmatprep.subr.mxu0 0.0
    %2863 = vmatpush1.msra.mxu0 0.0
    %2864 = vmatprep.subr.mxu0 0.0
    %2865 = vmatpush1.msra.mxu0 0.0
    %2866 = vmatprep.subr.mxu0 0.0
    %2867 = vmatpush1.msra.mxu0 0.0
    %2868 = vmatprep.subr.mxu0 0.0
    %2869 = vmatpush1.msra.mxu0 0.0
    %2870 = vmatprep.mubr.f32.mxu0 0.0
    %2871 = vmatmul.mubr.f32.gmra.mrb[0].mxu0 %v2783
    %v2872 = vpop.f32.mrb[0].mxu0
    %v2873 = vadd.f32 0.0, %v2872
    %v2874 = vpop.f32.mrb[0].mxu0
    %2875 = vmatprep.mubr.f32.mxu0 0.0
    %2876 = vmatmul.mubr.f32.gmra.mrb[0].mxu0 %v2786
    %v2877 = vpop.f32.mrb[0].mxu0
    %v2878 = vadd.f32 0.0, %v2877
    %v2879 = vpop.f32.mrb[0].mxu0
    %2880 = vmatprep.mubr.f32.mxu0 0.0
    %2881 = vmatmul.mubr.f32.gmra.mrb[0].mxu0 %v2789
    %v2882 = vpop.f32.mrb[0].mxu0
    %v2883 = vadd.f32 0.0, %v2882
    %v2884 = vpop.f32.mrb[0].mxu0
    %2885 = vmatprep.mubr.f32.mxu0 0.0
    %2886 = vmatmul.mubr.f32.gmra.mrb[0].mxu0 %v2792
    %v2887 = vpop.f32.mrb[0].mxu0
    %v2888 = vadd.f32 0.0, %v2887
    %v2889 = vpop.f32.mrb[0].mxu0
    %2890 = vmatprep.mubr.f32.mxu0 0.0
    %2891 = vmatmul.mubr.f32.gmra.mrb[0].mxu0 %v2795
    %v2892 = vpop.f32.mrb[0].mxu0
    %v2893 = vadd.f32 0.0, %v2892
    %v2894 = vpop.f32.mrb[0].mxu0
    %2895 = vmatprep.mubr.f32.mxu0 0.0
    %2896 = vmatmul.mubr.f32.gmra.mrb[0].mxu0 %v2798
    %v2897 = vpop.f32.mrb[0].mxu0
    %v2898 = vadd.f32 0.0, %v2897
    %v2899 = vpop.f32.mrb[0].mxu0
    %2900 = vmatprep.mubr.f32.mxu0 0.0
    %2901 = vmatmul.mubr.f32.gmra.mrb[0].mxu0 %v2801
    %v2902 = vpop.f32.mrb[0].mxu0
    %v2903 = vadd.f32 0.0, %v2902
    %v2904 = vpop.f32.mrb[0].mxu0
    %2905 = vmatprep.mubr.f32.mxu0 0.0
    %2906 = vmatmul.mubr.f32.gmra.mrb[0].mxu0 %v2804
    %v2907 = vpop.f32.mrb[0].mxu0
    %v2908 = vadd.f32 0.0, %v2907
    %v2909 = vpop.f32.mrb[0].mxu0
    %2910 = vdwg.mxu0
    %v2911 = vadd.f32 %v2671, %v2873
    %v2912 = vadd.f32 %v2672, %v2878
    %v2913 = vadd.f32 %v2673, %v2883
    %v2914 = vadd.f32 %v2674, %v2888
    %v2915 = vadd.f32 %v2675, %v2893
    %v2916 = vadd.f32 %v2676, %v2898
    %v2917 = vadd.f32 %v2677, %v2903
    %v2918 = vadd.f32 %v2678, %v2908
    %s2919 = scalar_lea.vmem %s5, 256
    %v2920 = vld [vmem:[%s2919] sm:$0xff]
    %v2921 = vld [vmem:[%s2919 + $0x8] sm:$0xff]
    %v2922 = vld [vmem:[%s2919 + $0x10] sm:$0xff]
    %v2923 = vld [vmem:[%s2919 + $0x18] sm:$0xff]
    %v2924 = vld [vmem:[%s2919 + $0x20] sm:$0xff]
    %v2925 = vld [vmem:[%s2919 + $0x28] sm:$0xff]
    %v2926 = vld [vmem:[%s2919 + $0x30] sm:$0xff]
    %v2927 = vld [vmem:[%s2919 + $0x38] sm:$0xff]
    %2928 = vmatprep.subr.mxu0 0.0
    %2929 = vmatpush1.msra.mxu0 %v2920
    %2930 = vmatprep.subr.mxu0 0.0
    %2931 = vmatpush1.msra.mxu0 %v2921
    %2932 = vmatprep.subr.mxu0 0.0
    %2933 = vmatpush1.msra.mxu0 %v2922
    %2934 = vmatprep.subr.mxu0 0.0
    %2935 = vmatpush1.msra.mxu0 %v2923
    %2936 = vmatprep.subr.mxu0 0.0
    %2937 = vmatpush1.msra.mxu0 %v2924
    %2938 = vmatprep.subr.mxu0 0.0
    %2939 = vmatpush1.msra.mxu0 %v2925
    %2940 = vmatprep.subr.mxu0 0.0
    %2941 = vmatpush1.msra.mxu0 %v2926
    %2942 = vmatprep.subr.mxu0 0.0
    %2943 = vmatpush1.msra.mxu0 %v2927
    %2944 = vmatprep.subr.mxu0 0.0
    %2945 = vmatpush1.msra.mxu0 0.0
    %2946 = vmatprep.subr.mxu0 0.0
    %2947 = vmatpush1.msra.mxu0 0.0
    %2948 = vmatprep.subr.mxu0 0.0
    %2949 = vmatpush1.msra.mxu0 0.0
    %2950 = vmatprep.subr.mxu0 0.0
    %2951 = vmatpush1.msra.mxu0 0.0
    %2952 = vmatprep.subr.mxu0 0.0
    %2953 = vmatpush1.msra.mxu0 0.0
    %2954 = vmatprep.subr.mxu0 0.0
    %2955 = vmatpush1.msra.mxu0 0.0
    %2956 = vmatprep.subr.mxu0 0.0
    %2957 = vmatpush1.msra.mxu0 0.0
    %2958 = vmatprep.subr.mxu0 0.0
    %2959 = vmatpush1.msra.mxu0 0.0
    %2960 = vmatprep.subr.mxu0 0.0
    %2961 = vmatpush1.msra.mxu0 0.0
    %2962 = vmatprep.subr.mxu0 0.0
    %2963 = vmatpush1.msra.mxu0 0.0
    %2964 = vmatprep.subr.mxu0 0.0
    %2965 = vmatpush1.msra.mxu0 0.0
    %2966 = vmatprep.subr.mxu0 0.0
    %2967 = vmatpush1.msra.mxu0 0.0
    %2968 = vmatprep.subr.mxu0 0.0
    %2969 = vmatpush1.msra.mxu0 0.0
    %2970 = vmatprep.subr.mxu0 0.0
    %2971 = vmatpush1.msra.mxu0 0.0
    %2972 = vmatprep.subr.mxu0 0.0
    %2973 = vmatpush1.msra.mxu0 0.0
    %2974 = vmatprep.subr.mxu0 0.0
    %2975 = vmatpush1.msra.mxu0 0.0
    %2976 = vmatprep.subr.mxu0 0.0
    %2977 = vmatpush1.msra.mxu0 0.0
    %2978 = vmatprep.subr.mxu0 0.0
    %2979 = vmatpush1.msra.mxu0 0.0
    %2980 = vmatprep.subr.mxu0 0.0
    %2981 = vmatpush1.msra.mxu0 0.0
    %2982 = vmatprep.subr.mxu0 0.0
    %2983 = vmatpush1.msra.mxu0 0.0
    %2984 = vmatprep.subr.mxu0 0.0
    %2985 = vmatpush1.msra.mxu0 0.0
    %2986 = vmatprep.subr.mxu0 0.0
    %2987 = vmatpush1.msra.mxu0 0.0
    %2988 = vmatprep.subr.mxu0 0.0
    %2989 = vmatpush1.msra.mxu0 0.0
    %2990 = vmatprep.subr.mxu0 0.0
    %2991 = vmatpush1.msra.mxu0 0.0
    %2992 = vmatprep.mubr.f32.mxu0 0.0
    %2993 = vmatmul.mubr.f32.gmra.mrb[0].mxu0 %v1973
    %v2994 = vpop.f32.mrb[0].mxu0
    %v2995 = vadd.f32 0.0, %v2994
    %v2996 = vpop.f32.mrb[0].mxu0
    %2997 = vmatprep.mubr.f32.mxu0 0.0
    %2998 = vmatmul.mubr.f32.gmra.mrb[0].mxu0 %v1976
    %v2999 = vpop.f32.mrb[0].mxu0
    %v3000 = vadd.f32 0.0, %v2999
    %v3001 = vpop.f32.mrb[0].mxu0
    %3002 = vmatprep.mubr.f32.mxu0 0.0
    %3003 = vmatmul.mubr.f32.gmra.mrb[0].mxu0 %v1979
    %v3004 = vpop.f32.mrb[0].mxu0
    %v3005 = vadd.f32 0.0, %v3004
    %v3006 = vpop.f32.mrb[0].mxu0
    %3007 = vmatprep.mubr.f32.mxu0 0.0
    %3008 = vmatmul.mubr.f32.gmra.mrb[0].mxu0 %v1982
    %v3009 = vpop.f32.mrb[0].mxu0
    %v3010 = vadd.f32 0.0, %v3009
    %v3011 = vpop.f32.mrb[0].mxu0
    %3012 = vdwg.mxu0
    %s3013 = scalar_lea.vmem %s6, 256
    %v3014 = vld [vmem:[%s3013] sm:$0xff]
    %v3015 = vld [vmem:[%s3013 + $0x8] sm:$0xff]
    %v3016 = vld [vmem:[%s3013 + $0x10] sm:$0xff]
    %v3017 = vld [vmem:[%s3013 + $0x18] sm:$0xff]
    %v3018 = vld [vmem:[%s3013 + $0x20] sm:$0xff]
    %v3019 = vld [vmem:[%s3013 + $0x28] sm:$0xff]
    %v3020 = vld [vmem:[%s3013 + $0x30] sm:$0xff]
    %v3021 = vld [vmem:[%s3013 + $0x38] sm:$0xff]
    %v3023 = vsel %vm2180, %v3014, 0
    %v3026 = vsel %vm2180, %v3015, 0
    %v3029 = vsel %vm2180, %v3016, 0
    %v3032 = vsel %vm2180, %v3017, 0
    %v3035 = vsel %vm2180, %v3018, 0
    %v3038 = vsel %vm2180, %v3019, 0
    %v3041 = vsel %vm2180, %v3020, 0
    %v3044 = vsel %vm2180, %v3021, 0
    %3046 = vmatprep.subr.mxu0 0.0
    %3047 = vmatpush1.msra.mxu0 %v2995
    %3048 = vmatprep.subr.mxu0 0.0
    %3049 = vmatpush1.msra.mxu0 %v3000
    %3050 = vmatprep.subr.mxu0 0.0
    %3051 = vmatpush1.msra.mxu0 %v3005
    %3052 = vmatprep.subr.mxu0 0.0
    %3053 = vmatpush1.msra.mxu0 %v3010
    %3054 = vmatprep.subr.mxu0 0.0
    %3055 = vmatpush1.msra.mxu0 0.0
    %3056 = vmatprep.subr.mxu0 0.0
    %3057 = vmatpush1.msra.mxu0 0.0
    %3058 = vmatprep.subr.mxu0 0.0
    %3059 = vmatpush1.msra.mxu0 0.0
    %3060 = vmatprep.subr.mxu0 0.0
    %3061 = vmatpush1.msra.mxu0 0.0
    %3062 = vmatprep.subr.mxu0 0.0
    %3063 = vmatpush1.msra.mxu0 0.0
    %3064 = vmatprep.subr.mxu0 0.0
    %3065 = vmatpush1.msra.mxu0 0.0
    %3066 = vmatprep.subr.mxu0 0.0
    %3067 = vmatpush1.msra.mxu0 0.0
    %3068 = vmatprep.subr.mxu0 0.0
    %3069 = vmatpush1.msra.mxu0 0.0
    %3070 = vmatprep.subr.mxu0 0.0
    %3071 = vmatpush1.msra.mxu0 0.0
    %3072 = vmatprep.subr.mxu0 0.0
    %3073 = vmatpush1.msra.mxu0 0.0
    %3074 = vmatprep.subr.mxu0 0.0
    %3075 = vmatpush1.msra.mxu0 0.0
    %3076 = vmatprep.subr.mxu0 0.0
    %3077 = vmatpush1.msra.mxu0 0.0
    %3078 = vmatprep.subr.mxu0 0.0
    %3079 = vmatpush1.msra.mxu0 0.0
    %3080 = vmatprep.subr.mxu0 0.0
    %3081 = vmatpush1.msra.mxu0 0.0
    %3082 = vmatprep.subr.mxu0 0.0
    %3083 = vmatpush1.msra.mxu0 0.0
    %3084 = vmatprep.subr.mxu0 0.0
    %3085 = vmatpush1.msra.mxu0 0.0
    %3086 = vmatprep.subr.mxu0 0.0
    %3087 = vmatpush1.msra.mxu0 0.0
    %3088 = vmatprep.subr.mxu0 0.0
    %3089 = vmatpush1.msra.mxu0 0.0
    %3090 = vmatprep.subr.mxu0 0.0
    %3091 = vmatpush1.msra.mxu0 0.0
    %3092 = vmatprep.subr.mxu0 0.0
    %3093 = vmatpush1.msra.mxu0 0.0
    %3094 = vmatprep.subr.mxu0 0.0
    %3095 = vmatpush1.msra.mxu0 0.0
    %3096 = vmatprep.subr.mxu0 0.0
    %3097 = vmatpush1.msra.mxu0 0.0
    %3098 = vmatprep.subr.mxu0 0.0
    %3099 = vmatpush1.msra.mxu0 0.0
    %3100 = vmatprep.subr.mxu0 0.0
    %3101 = vmatpush1.msra.mxu0 0.0
    %3102 = vmatprep.subr.mxu0 0.0
    %3103 = vmatpush1.msra.mxu0 0.0
    %3104 = vmatprep.subr.mxu0 0.0
    %3105 = vmatpush1.msra.mxu0 0.0
    %3106 = vmatprep.subr.mxu0 0.0
    %3107 = vmatpush1.msra.mxu0 0.0
    %3108 = vmatprep.subr.mxu0 0.0
    %3109 = vmatpush1.msra.mxu0 0.0
    %3110 = vmatprep.mubr.f32.mxu0 0.0
    %3111 = vmatmul.mubr.f32.gmra.mrb[0].mxu0 %v3023
    %v3112 = vpop.f32.mrb[0].mxu0
    %v3113 = vadd.f32 0.0, %v3112
    %v3114 = vpop.f32.mrb[0].mxu0
    %3115 = vmatprep.mubr.f32.mxu0 0.0
    %3116 = vmatmul.mubr.f32.gmra.mrb[0].mxu0 %v3026
    %v3117 = vpop.f32.mrb[0].mxu0
    %v3118 = vadd.f32 0.0, %v3117
    %v3119 = vpop.f32.mrb[0].mxu0
    %3120 = vmatprep.mubr.f32.mxu0 0.0
    %3121 = vmatmul.mubr.f32.gmra.mrb[0].mxu0 %v3029
    %v3122 = vpop.f32.mrb[0].mxu0
    %v3123 = vadd.f32 0.0, %v3122
    %v3124 = vpop.f32.mrb[0].mxu0
    %3125 = vmatprep.mubr.f32.mxu0 0.0
    %3126 = vmatmul.mubr.f32.gmra.mrb[0].mxu0 %v3032
    %v3127 = vpop.f32.mrb[0].mxu0
    %v3128 = vadd.f32 0.0, %v3127
    %v3129 = vpop.f32.mrb[0].mxu0
    %3130 = vmatprep.mubr.f32.mxu0 0.0
    %3131 = vmatmul.mubr.f32.gmra.mrb[0].mxu0 %v3035
    %v3132 = vpop.f32.mrb[0].mxu0
    %v3133 = vadd.f32 0.0, %v3132
    %v3134 = vpop.f32.mrb[0].mxu0
    %3135 = vmatprep.mubr.f32.mxu0 0.0
    %3136 = vmatmul.mubr.f32.gmra.mrb[0].mxu0 %v3038
    %v3137 = vpop.f32.mrb[0].mxu0
    %v3138 = vadd.f32 0.0, %v3137
    %v3139 = vpop.f32.mrb[0].mxu0
    %3140 = vmatprep.mubr.f32.mxu0 0.0
    %3141 = vmatmul.mubr.f32.gmra.mrb[0].mxu0 %v3041
    %v3142 = vpop.f32.mrb[0].mxu0
    %v3143 = vadd.f32 0.0, %v3142
    %v3144 = vpop.f32.mrb[0].mxu0
    %3145 = vmatprep.mubr.f32.mxu0 0.0
    %3146 = vmatmul.mubr.f32.gmra.mrb[0].mxu0 %v3044
    %v3147 = vpop.f32.mrb[0].mxu0
    %v3148 = vadd.f32 0.0, %v3147
    %v3149 = vpop.f32.mrb[0].mxu0
    %3150 = vdwg.mxu0
    %v3151 = vadd.f32 %v2911, %v3113
    %v3152 = vadd.f32 %v2912, %v3118
    %v3153 = vadd.f32 %v2913, %v3123
    %v3154 = vadd.f32 %v2914, %v3128
    %v3155 = vadd.f32 %v2915, %v3133
    %v3156 = vadd.f32 %v2916, %v3138
    %v3157 = vadd.f32 %v2917, %v3143
    %v3158 = vadd.f32 %v2918, %v3148
    %s3159 = scalar_lea.vmem %s5, 320
    %v3160 = vld [vmem:[%s3159] sm:$0xff]
    %v3161 = vld [vmem:[%s3159 + $0x8] sm:$0xff]
    %v3162 = vld [vmem:[%s3159 + $0x10] sm:$0xff]
    %v3163 = vld [vmem:[%s3159 + $0x18] sm:$0xff]
    %v3164 = vld [vmem:[%s3159 + $0x20] sm:$0xff]
    %v3165 = vld [vmem:[%s3159 + $0x28] sm:$0xff]
    %v3166 = vld [vmem:[%s3159 + $0x30] sm:$0xff]
    %v3167 = vld [vmem:[%s3159 + $0x38] sm:$0xff]
    %3168 = vmatprep.subr.mxu0 0.0
    %3169 = vmatpush1.msra.mxu0 %v3160
    %3170 = vmatprep.subr.mxu0 0.0
    %3171 = vmatpush1.msra.mxu0 %v3161
    %3172 = vmatprep.subr.mxu0 0.0
    %3173 = vmatpush1.msra.mxu0 %v3162
    %3174 = vmatprep.subr.mxu0 0.0
    %3175 = vmatpush1.msra.mxu0 %v3163
    %3176 = vmatprep.subr.mxu0 0.0
    %3177 = vmatpush1.msra.mxu0 %v3164
    %3178 = vmatprep.subr.mxu0 0.0
    %3179 = vmatpush1.msra.mxu0 %v3165
    %3180 = vmatprep.subr.mxu0 0.0
    %3181 = vmatpush1.msra.mxu0 %v3166
    %3182 = vmatprep.subr.mxu0 0.0
    %3183 = vmatpush1.msra.mxu0 %v3167
    %3184 = vmatprep.subr.mxu0 0.0
    %3185 = vmatpush1.msra.mxu0 0.0
    %3186 = vmatprep.subr.mxu0 0.0
    %3187 = vmatpush1.msra.mxu0 0.0
    %3188 = vmatprep.subr.mxu0 0.0
    %3189 = vmatpush1.msra.mxu0 0.0
    %3190 = vmatprep.subr.mxu0 0.0
    %3191 = vmatpush1.msra.mxu0 0.0
    %3192 = vmatprep.subr.mxu0 0.0
    %3193 = vmatpush1.msra.mxu0 0.0
    %3194 = vmatprep.subr.mxu0 0.0
    %3195 = vmatpush1.msra.mxu0 0.0
    %3196 = vmatprep.subr.mxu0 0.0
    %3197 = vmatpush1.msra.mxu0 0.0
    %3198 = vmatprep.subr.mxu0 0.0
    %3199 = vmatpush1.msra.mxu0 0.0
    %3200 = vmatprep.subr.mxu0 0.0
    %3201 = vmatpush1.msra.mxu0 0.0
    %3202 = vmatprep.subr.mxu0 0.0
    %3203 = vmatpush1.msra.mxu0 0.0
    %3204 = vmatprep.subr.mxu0 0.0
    %3205 = vmatpush1.msra.mxu0 0.0
    %3206 = vmatprep.subr.mxu0 0.0
    %3207 = vmatpush1.msra.mxu0 0.0
    %3208 = vmatprep.subr.mxu0 0.0
    %3209 = vmatpush1.msra.mxu0 0.0
    %3210 = vmatprep.subr.mxu0 0.0
    %3211 = vmatpush1.msra.mxu0 0.0
    %3212 = vmatprep.subr.mxu0 0.0
    %3213 = vmatpush1.msra.mxu0 0.0
    %3214 = vmatprep.subr.mxu0 0.0
    %3215 = vmatpush1.msra.mxu0 0.0
    %3216 = vmatprep.subr.mxu0 0.0
    %3217 = vmatpush1.msra.mxu0 0.0
    %3218 = vmatprep.subr.mxu0 0.0
    %3219 = vmatpush1.msra.mxu0 0.0
    %3220 = vmatprep.subr.mxu0 0.0
    %3221 = vmatpush1.msra.mxu0 0.0
    %3222 = vmatprep.subr.mxu0 0.0
    %3223 = vmatpush1.msra.mxu0 0.0
    %3224 = vmatprep.subr.mxu0 0.0
    %3225 = vmatpush1.msra.mxu0 0.0
    %3226 = vmatprep.subr.mxu0 0.0
    %3227 = vmatpush1.msra.mxu0 0.0
    %3228 = vmatprep.subr.mxu0 0.0
    %3229 = vmatpush1.msra.mxu0 0.0
    %3230 = vmatprep.subr.mxu0 0.0
    %3231 = vmatpush1.msra.mxu0 0.0
    %3232 = vmatprep.mubr.f32.mxu0 0.0
    %3233 = vmatmul.mubr.f32.gmra.mrb[0].mxu0 %v1973
    %v3234 = vpop.f32.mrb[0].mxu0
    %v3235 = vadd.f32 0.0, %v3234
    %v3236 = vpop.f32.mrb[0].mxu0
    %3237 = vmatprep.mubr.f32.mxu0 0.0
    %3238 = vmatmul.mubr.f32.gmra.mrb[0].mxu0 %v1976
    %v3239 = vpop.f32.mrb[0].mxu0
    %v3240 = vadd.f32 0.0, %v3239
    %v3241 = vpop.f32.mrb[0].mxu0
    %3242 = vmatprep.mubr.f32.mxu0 0.0
    %3243 = vmatmul.mubr.f32.gmra.mrb[0].mxu0 %v1979
    %v3244 = vpop.f32.mrb[0].mxu0
    %v3245 = vadd.f32 0.0, %v3244
    %v3246 = vpop.f32.mrb[0].mxu0
    %3247 = vmatprep.mubr.f32.mxu0 0.0
    %3248 = vmatmul.mubr.f32.gmra.mrb[0].mxu0 %v1982
    %v3249 = vpop.f32.mrb[0].mxu0
    %v3250 = vadd.f32 0.0, %v3249
    %v3251 = vpop.f32.mrb[0].mxu0
    %3252 = vdwg.mxu0
    %s3253 = scalar_lea.vmem %s6, 320
    %v3254 = vld [vmem:[%s3253] sm:$0xff]
    %v3255 = vld [vmem:[%s3253 + $0x8] sm:$0xff]
    %v3256 = vld [vmem:[%s3253 + $0x10] sm:$0xff]
    %v3257 = vld [vmem:[%s3253 + $0x18] sm:$0xff]
    %v3258 = vld [vmem:[%s3253 + $0x20] sm:$0xff]
    %v3259 = vld [vmem:[%s3253 + $0x28] sm:$0xff]
    %v3260 = vld [vmem:[%s3253 + $0x30] sm:$0xff]
    %v3261 = vld [vmem:[%s3253 + $0x38] sm:$0xff]
    %v3263 = vsel %vm2180, %v3254, 0
    %v3266 = vsel %vm2180, %v3255, 0
    %v3269 = vsel %vm2180, %v3256, 0
    %v3272 = vsel %vm2180, %v3257, 0
    %v3275 = vsel %vm2180, %v3258, 0
    %v3278 = vsel %vm2180, %v3259, 0
    %v3281 = vsel %vm2180, %v3260, 0
    %v3284 = vsel %vm2180, %v3261, 0
    %3286 = vmatprep.subr.mxu0 0.0
    %3287 = vmatpush1.msra.mxu0 %v3235
    %3288 = vmatprep.subr.mxu0 0.0
    %3289 = vmatpush1.msra.mxu0 %v3240
    %3290 = vmatprep.subr.mxu0 0.0
    %3291 = vmatpush1.msra.mxu0 %v3245
    %3292 = vmatprep.subr.mxu0 0.0
    %3293 = vmatpush1.msra.mxu0 %v3250
    %3294 = vmatprep.subr.mxu0 0.0
    %3295 = vmatpush1.msra.mxu0 0.0
    %3296 = vmatprep.subr.mxu0 0.0
    %3297 = vmatpush1.msra.mxu0 0.0
    %3298 = vmatprep.subr.mxu0 0.0
    %3299 = vmatpush1.msra.mxu0 0.0
    %3300 = vmatprep.subr.mxu0 0.0
    %3301 = vmatpush1.msra.mxu0 0.0
    %3302 = vmatprep.subr.mxu0 0.0
    %3303 = vmatpush1.msra.mxu0 0.0
    %3304 = vmatprep.subr.mxu0 0.0
    %3305 = vmatpush1.msra.mxu0 0.0
    %3306 = vmatprep.subr.mxu0 0.0
    %3307 = vmatpush1.msra.mxu0 0.0
    %3308 = vmatprep.subr.mxu0 0.0
    %3309 = vmatpush1.msra.mxu0 0.0
    %3310 = vmatprep.subr.mxu0 0.0
    %3311 = vmatpush1.msra.mxu0 0.0
    %3312 = vmatprep.subr.mxu0 0.0
    %3313 = vmatpush1.msra.mxu0 0.0
    %3314 = vmatprep.subr.mxu0 0.0
    %3315 = vmatpush1.msra.mxu0 0.0
    %3316 = vmatprep.subr.mxu0 0.0
    %3317 = vmatpush1.msra.mxu0 0.0
    %3318 = vmatprep.subr.mxu0 0.0
    %3319 = vmatpush1.msra.mxu0 0.0
    %3320 = vmatprep.subr.mxu0 0.0
    %3321 = vmatpush1.msra.mxu0 0.0
    %3322 = vmatprep.subr.mxu0 0.0
    %3323 = vmatpush1.msra.mxu0 0.0
    %3324 = vmatprep.subr.mxu0 0.0
    %3325 = vmatpush1.msra.mxu0 0.0
    %3326 = vmatprep.subr.mxu0 0.0
    %3327 = vmatpush1.msra.mxu0 0.0
    %3328 = vmatprep.subr.mxu0 0.0
    %3329 = vmatpush1.msra.mxu0 0.0
    %3330 = vmatprep.subr.mxu0 0.0
    %3331 = vmatpush1.msra.mxu0 0.0
    %3332 = vmatprep.subr.mxu0 0.0
    %3333 = vmatpush1.msra.mxu0 0.0
    %3334 = vmatprep.subr.mxu0 0.0
    %3335 = vmatpush1.msra.mxu0 0.0
    %3336 = vmatprep.subr.mxu0 0.0
    %3337 = vmatpush1.msra.mxu0 0.0
    %3338 = vmatprep.subr.mxu0 0.0
    %3339 = vmatpush1.msra.mxu0 0.0
    %3340 = vmatprep.subr.mxu0 0.0
    %3341 = vmatpush1.msra.mxu0 0.0
    %3342 = vmatprep.subr.mxu0 0.0
    %3343 = vmatpush1.msra.mxu0 0.0
    %3344 = vmatprep.subr.mxu0 0.0
    %3345 = vmatpush1.msra.mxu0 0.0
    %3346 = vmatprep.subr.mxu0 0.0
    %3347 = vmatpush1.msra.mxu0 0.0
    %3348 = vmatprep.subr.mxu0 0.0
    %3349 = vmatpush1.msra.mxu0 0.0
    %3350 = vmatprep.mubr.f32.mxu0 0.0
    %3351 = vmatmul.mubr.f32.gmra.mrb[0].mxu0 %v3263
    %v3352 = vpop.f32.mrb[0].mxu0
    %v3353 = vadd.f32 0.0, %v3352
    %v3354 = vpop.f32.mrb[0].mxu0
    %3355 = vmatprep.mubr.f32.mxu0 0.0
    %3356 = vmatmul.mubr.f32.gmra.mrb[0].mxu0 %v3266
    %v3357 = vpop.f32.mrb[0].mxu0
    %v3358 = vadd.f32 0.0, %v3357
    %v3359 = vpop.f32.mrb[0].mxu0
    %3360 = vmatprep.mubr.f32.mxu0 0.0
    %3361 = vmatmul.mubr.f32.gmra.mrb[0].mxu0 %v3269
    %v3362 = vpop.f32.mrb[0].mxu0
    %v3363 = vadd.f32 0.0, %v3362
    %v3364 = vpop.f32.mrb[0].mxu0
    %3365 = vmatprep.mubr.f32.mxu0 0.0
    %3366 = vmatmul.mubr.f32.gmra.mrb[0].mxu0 %v3272
    %v3367 = vpop.f32.mrb[0].mxu0
    %v3368 = vadd.f32 0.0, %v3367
    %v3369 = vpop.f32.mrb[0].mxu0
    %3370 = vmatprep.mubr.f32.mxu0 0.0
    %3371 = vmatmul.mubr.f32.gmra.mrb[0].mxu0 %v3275
    %v3372 = vpop.f32.mrb[0].mxu0
    %v3373 = vadd.f32 0.0, %v3372
    %v3374 = vpop.f32.mrb[0].mxu0
    %3375 = vmatprep.mubr.f32.mxu0 0.0
    %3376 = vmatmul.mubr.f32.gmra.mrb[0].mxu0 %v3278
    %v3377 = vpop.f32.mrb[0].mxu0
    %v3378 = vadd.f32 0.0, %v3377
    %v3379 = vpop.f32.mrb[0].mxu0
    %3380 = vmatprep.mubr.f32.mxu0 0.0
    %3381 = vmatmul.mubr.f32.gmra.mrb[0].mxu0 %v3281
    %v3382 = vpop.f32.mrb[0].mxu0
    %v3383 = vadd.f32 0.0, %v3382
    %v3384 = vpop.f32.mrb[0].mxu0
    %3385 = vmatprep.mubr.f32.mxu0 0.0
    %3386 = vmatmul.mubr.f32.gmra.mrb[0].mxu0 %v3284
    %v3387 = vpop.f32.mrb[0].mxu0
    %v3388 = vadd.f32 0.0, %v3387
    %v3389 = vpop.f32.mrb[0].mxu0
    %3390 = vdwg.mxu0
    %v3391 = vadd.f32 %v3151, %v3353
    %v3392 = vadd.f32 %v3152, %v3358
    %v3393 = vadd.f32 %v3153, %v3363
    %v3394 = vadd.f32 %v3154, %v3368
    %v3395 = vadd.f32 %v3155, %v3373
    %v3396 = vadd.f32 %v3156, %v3378
    %v3397 = vadd.f32 %v3157, %v3383
    %v3398 = vadd.f32 %v3158, %v3388
    %s3399 = scalar_lea.vmem %s5, 384
    %v3400 = vld [vmem:[%s3399] sm:$0xff]
    %v3401 = vld [vmem:[%s3399 + $0x8] sm:$0xff]
    %v3402 = vld [vmem:[%s3399 + $0x10] sm:$0xff]
    %v3403 = vld [vmem:[%s3399 + $0x18] sm:$0xff]
    %v3404 = vld [vmem:[%s3399 + $0x20] sm:$0xff]
    %v3405 = vld [vmem:[%s3399 + $0x28] sm:$0xff]
    %v3406 = vld [vmem:[%s3399 + $0x30] sm:$0xff]
    %v3407 = vld [vmem:[%s3399 + $0x38] sm:$0xff]
    %3408 = vmatprep.subr.mxu0 0.0
    %3409 = vmatpush1.msra.mxu0 %v3400
    %3410 = vmatprep.subr.mxu0 0.0
    %3411 = vmatpush1.msra.mxu0 %v3401
    %3412 = vmatprep.subr.mxu0 0.0
    %3413 = vmatpush1.msra.mxu0 %v3402
    %3414 = vmatprep.subr.mxu0 0.0
    %3415 = vmatpush1.msra.mxu0 %v3403
    %3416 = vmatprep.subr.mxu0 0.0
    %3417 = vmatpush1.msra.mxu0 %v3404
    %3418 = vmatprep.subr.mxu0 0.0
    %3419 = vmatpush1.msra.mxu0 %v3405
    %3420 = vmatprep.subr.mxu0 0.0
    %3421 = vmatpush1.msra.mxu0 %v3406
    %3422 = vmatprep.subr.mxu0 0.0
    %3423 = vmatpush1.msra.mxu0 %v3407
    %3424 = vmatprep.subr.mxu0 0.0
    %3425 = vmatpush1.msra.mxu0 0.0
    %3426 = vmatprep.subr.mxu0 0.0
    %3427 = vmatpush1.msra.mxu0 0.0
    %3428 = vmatprep.subr.mxu0 0.0
    %3429 = vmatpush1.msra.mxu0 0.0
    %3430 = vmatprep.subr.mxu0 0.0
    %3431 = vmatpush1.msra.mxu0 0.0
    %3432 = vmatprep.subr.mxu0 0.0
    %3433 = vmatpush1.msra.mxu0 0.0
    %3434 = vmatprep.subr.mxu0 0.0
    %3435 = vmatpush1.msra.mxu0 0.0
    %3436 = vmatprep.subr.mxu0 0.0
    %3437 = vmatpush1.msra.mxu0 0.0
    %3438 = vmatprep.subr.mxu0 0.0
    %3439 = vmatpush1.msra.mxu0 0.0
    %3440 = vmatprep.subr.mxu0 0.0
    %3441 = vmatpush1.msra.mxu0 0.0
    %3442 = vmatprep.subr.mxu0 0.0
    %3443 = vmatpush1.msra.mxu0 0.0
    %3444 = vmatprep.subr.mxu0 0.0
    %3445 = vmatpush1.msra.mxu0 0.0
    %3446 = vmatprep.subr.mxu0 0.0
    %3447 = vmatpush1.msra.mxu0 0.0
    %3448 = vmatprep.subr.mxu0 0.0
    %3449 = vmatpush1.msra.mxu0 0.0
    %3450 = vmatprep.subr.mxu0 0.0
    %3451 = vmatpush1.msra.mxu0 0.0
    %3452 = vmatprep.subr.mxu0 0.0
    %3453 = vmatpush1.msra.mxu0 0.0
    %3454 = vmatprep.subr.mxu0 0.0
    %3455 = vmatpush1.msra.mxu0 0.0
    %3456 = vmatprep.subr.mxu0 0.0
    %3457 = vmatpush1.msra.mxu0 0.0
    %3458 = vmatprep.subr.mxu0 0.0
    %3459 = vmatpush1.msra.mxu0 0.0
    %3460 = vmatprep.subr.mxu0 0.0
    %3461 = vmatpush1.msra.mxu0 0.0
    %3462 = vmatprep.subr.mxu0 0.0
    %3463 = vmatpush1.msra.mxu0 0.0
    %3464 = vmatprep.subr.mxu0 0.0
    %3465 = vmatpush1.msra.mxu0 0.0
    %3466 = vmatprep.subr.mxu0 0.0
    %3467 = vmatpush1.msra.mxu0 0.0
    %3468 = vmatprep.subr.mxu0 0.0
    %3469 = vmatpush1.msra.mxu0 0.0
    %3470 = vmatprep.subr.mxu0 0.0
    %3471 = vmatpush1.msra.mxu0 0.0
    %3472 = vmatprep.mubr.f32.mxu0 0.0
    %3473 = vmatmul.mubr.f32.gmra.mrb[0].mxu0 %v1973
    %v3474 = vpop.f32.mrb[0].mxu0
    %v3475 = vadd.f32 0.0, %v3474
    %v3476 = vpop.f32.mrb[0].mxu0
    %3477 = vmatprep.mubr.f32.mxu0 0.0
    %3478 = vmatmul.mubr.f32.gmra.mrb[0].mxu0 %v1976
    %v3479 = vpop.f32.mrb[0].mxu0
    %v3480 = vadd.f32 0.0, %v3479
    %v3481 = vpop.f32.mrb[0].mxu0
    %3482 = vmatprep.mubr.f32.mxu0 0.0
    %3483 = vmatmul.mubr.f32.gmra.mrb[0].mxu0 %v1979
    %v3484 = vpop.f32.mrb[0].mxu0
    %v3485 = vadd.f32 0.0, %v3484
    %v3486 = vpop.f32.mrb[0].mxu0
    %3487 = vmatprep.mubr.f32.mxu0 0.0
    %3488 = vmatmul.mubr.f32.gmra.mrb[0].mxu0 %v1982
    %v3489 = vpop.f32.mrb[0].mxu0
    %v3490 = vadd.f32 0.0, %v3489
    %v3491 = vpop.f32.mrb[0].mxu0
    %3492 = vdwg.mxu0
    %s3493 = scalar_lea.vmem %s6, 384
    %v3494 = vld [vmem:[%s3493] sm:$0xff]
    %v3495 = vld [vmem:[%s3493 + $0x8] sm:$0xff]
    %v3496 = vld [vmem:[%s3493 + $0x10] sm:$0xff]
    %v3497 = vld [vmem:[%s3493 + $0x18] sm:$0xff]
    %v3498 = vld [vmem:[%s3493 + $0x20] sm:$0xff]
    %v3499 = vld [vmem:[%s3493 + $0x28] sm:$0xff]
    %v3500 = vld [vmem:[%s3493 + $0x30] sm:$0xff]
    %v3501 = vld [vmem:[%s3493 + $0x38] sm:$0xff]
    %v3503 = vsel %vm2180, %v3494, 0
    %v3506 = vsel %vm2180, %v3495, 0
    %v3509 = vsel %vm2180, %v3496, 0
    %v3512 = vsel %vm2180, %v3497, 0
    %v3515 = vsel %vm2180, %v3498, 0
    %v3518 = vsel %vm2180, %v3499, 0
    %v3521 = vsel %vm2180, %v3500, 0
    %v3524 = vsel %vm2180, %v3501, 0
    %3526 = vmatprep.subr.mxu0 0.0
    %3527 = vmatpush1.msra.mxu0 %v3475
    %3528 = vmatprep.subr.mxu0 0.0
    %3529 = vmatpush1.msra.mxu0 %v3480
    %3530 = vmatprep.subr.mxu0 0.0
    %3531 = vmatpush1.msra.mxu0 %v3485
    %3532 = vmatprep.subr.mxu0 0.0
    %3533 = vmatpush1.msra.mxu0 %v3490
    %3534 = vmatprep.subr.mxu0 0.0
    %3535 = vmatpush1.msra.mxu0 0.0
    %3536 = vmatprep.subr.mxu0 0.0
    %3537 = vmatpush1.msra.mxu0 0.0
    %3538 = vmatprep.subr.mxu0 0.0
    %3539 = vmatpush1.msra.mxu0 0.0
    %3540 = vmatprep.subr.mxu0 0.0
    %3541 = vmatpush1.msra.mxu0 0.0
    %3542 = vmatprep.subr.mxu0 0.0
    %3543 = vmatpush1.msra.mxu0 0.0
    %3544 = vmatprep.subr.mxu0 0.0
    %3545 = vmatpush1.msra.mxu0 0.0
    %3546 = vmatprep.subr.mxu0 0.0
    %3547 = vmatpush1.msra.mxu0 0.0
    %3548 = vmatprep.subr.mxu0 0.0
    %3549 = vmatpush1.msra.mxu0 0.0
    %3550 = vmatprep.subr.mxu0 0.0
    %3551 = vmatpush1.msra.mxu0 0.0
    %3552 = vmatprep.subr.mxu0 0.0
    %3553 = vmatpush1.msra.mxu0 0.0
    %3554 = vmatprep.subr.mxu0 0.0
    %3555 = vmatpush1.msra.mxu0 0.0
    %3556 = vmatprep.subr.mxu0 0.0
    %3557 = vmatpush1.msra.mxu0 0.0
    %3558 = vmatprep.subr.mxu0 0.0
    %3559 = vmatpush1.msra.mxu0 0.0
    %3560 = vmatprep.subr.mxu0 0.0
    %3561 = vmatpush1.msra.mxu0 0.0
    %3562 = vmatprep.subr.mxu0 0.0
    %3563 = vmatpush1.msra.mxu0 0.0
    %3564 = vmatprep.subr.mxu0 0.0
    %3565 = vmatpush1.msra.mxu0 0.0
    %3566 = vmatprep.subr.mxu0 0.0
    %3567 = vmatpush1.msra.mxu0 0.0
    %3568 = vmatprep.subr.mxu0 0.0
    %3569 = vmatpush1.msra.mxu0 0.0
    %3570 = vmatprep.subr.mxu0 0.0
    %3571 = vmatpush1.msra.mxu0 0.0
    %3572 = vmatprep.subr.mxu0 0.0
    %3573 = vmatpush1.msra.mxu0 0.0
    %3574 = vmatprep.subr.mxu0 0.0
    %3575 = vmatpush1.msra.mxu0 0.0
    %3576 = vmatprep.subr.mxu0 0.0
    %3577 = vmatpush1.msra.mxu0 0.0
    %3578 = vmatprep.subr.mxu0 0.0
    %3579 = vmatpush1.msra.mxu0 0.0
    %3580 = vmatprep.subr.mxu0 0.0
    %3581 = vmatpush1.msra.mxu0 0.0
    %3582 = vmatprep.subr.mxu0 0.0
    %3583 = vmatpush1.msra.mxu0 0.0
    %3584 = vmatprep.subr.mxu0 0.0
    %3585 = vmatpush1.msra.mxu0 0.0
    %3586 = vmatprep.subr.mxu0 0.0
    %3587 = vmatpush1.msra.mxu0 0.0
    %3588 = vmatprep.subr.mxu0 0.0
    %3589 = vmatpush1.msra.mxu0 0.0
    %3590 = vmatprep.mubr.f32.mxu0 0.0
    %3591 = vmatmul.mubr.f32.gmra.mrb[0].mxu0 %v3503
    %v3592 = vpop.f32.mrb[0].mxu0
    %v3593 = vadd.f32 0.0, %v3592
    %v3594 = vpop.f32.mrb[0].mxu0
    %3595 = vmatprep.mubr.f32.mxu0 0.0
    %3596 = vmatmul.mubr.f32.gmra.mrb[0].mxu0 %v3506
    %v3597 = vpop.f32.mrb[0].mxu0
    %v3598 = vadd.f32 0.0, %v3597
    %v3599 = vpop.f32.mrb[0].mxu0
    %3600 = vmatprep.mubr.f32.mxu0 0.0
    %3601 = vmatmul.mubr.f32.gmra.mrb[0].mxu0 %v3509
    %v3602 = vpop.f32.mrb[0].mxu0
    %v3603 = vadd.f32 0.0, %v3602
    %v3604 = vpop.f32.mrb[0].mxu0
    %3605 = vmatprep.mubr.f32.mxu0 0.0
    %3606 = vmatmul.mubr.f32.gmra.mrb[0].mxu0 %v3512
    %v3607 = vpop.f32.mrb[0].mxu0
    %v3608 = vadd.f32 0.0, %v3607
    %v3609 = vpop.f32.mrb[0].mxu0
    %3610 = vmatprep.mubr.f32.mxu0 0.0
    %3611 = vmatmul.mubr.f32.gmra.mrb[0].mxu0 %v3515
    %v3612 = vpop.f32.mrb[0].mxu0
    %v3613 = vadd.f32 0.0, %v3612
    %v3614 = vpop.f32.mrb[0].mxu0
    %3615 = vmatprep.mubr.f32.mxu0 0.0
    %3616 = vmatmul.mubr.f32.gmra.mrb[0].mxu0 %v3518
    %v3617 = vpop.f32.mrb[0].mxu0
    %v3618 = vadd.f32 0.0, %v3617
    %v3619 = vpop.f32.mrb[0].mxu0
    %3620 = vmatprep.mubr.f32.mxu0 0.0
    %3621 = vmatmul.mubr.f32.gmra.mrb[0].mxu0 %v3521
    %v3622 = vpop.f32.mrb[0].mxu0
    %v3623 = vadd.f32 0.0, %v3622
    %v3624 = vpop.f32.mrb[0].mxu0
    %3625 = vmatprep.mubr.f32.mxu0 0.0
    %3626 = vmatmul.mubr.f32.gmra.mrb[0].mxu0 %v3524
    %v3627 = vpop.f32.mrb[0].mxu0
    %v3628 = vadd.f32 0.0, %v3627
    %v3629 = vpop.f32.mrb[0].mxu0
    %3630 = vdwg.mxu0
    %v3631 = vadd.f32 %v3391, %v3593
    %v3632 = vadd.f32 %v3392, %v3598
    %v3633 = vadd.f32 %v3393, %v3603
    %v3634 = vadd.f32 %v3394, %v3608
    %v3635 = vadd.f32 %v3395, %v3613
    %v3636 = vadd.f32 %v3396, %v3618
    %v3637 = vadd.f32 %v3397, %v3623
    %v3638 = vadd.f32 %v3398, %v3628
    %s3639 = scalar_lea.vmem %s5, 448
    %v3640 = vld [vmem:[%s3639] sm:$0xff]
    %v3641 = vld [vmem:[%s3639 + $0x8] sm:$0xff]
    %v3642 = vld [vmem:[%s3639 + $0x10] sm:$0xff]
    %v3643 = vld [vmem:[%s3639 + $0x18] sm:$0xff]
    %v3644 = vld [vmem:[%s3639 + $0x20] sm:$0xff]
    %v3645 = vld [vmem:[%s3639 + $0x28] sm:$0xff]
    %v3646 = vld [vmem:[%s3639 + $0x30] sm:$0xff]
    %v3647 = vld [vmem:[%s3639 + $0x38] sm:$0xff]
    %3648 = vmatprep.subr.mxu0 0.0
    %3649 = vmatpush1.msra.mxu0 %v3640
    %3650 = vmatprep.subr.mxu0 0.0
    %3651 = vmatpush1.msra.mxu0 %v3641
    %3652 = vmatprep.subr.mxu0 0.0
    %3653 = vmatpush1.msra.mxu0 %v3642
    %3654 = vmatprep.subr.mxu0 0.0
    %3655 = vmatpush1.msra.mxu0 %v3643
    %3656 = vmatprep.subr.mxu0 0.0
    %3657 = vmatpush1.msra.mxu0 %v3644
    %3658 = vmatprep.subr.mxu0 0.0
    %3659 = vmatpush1.msra.mxu0 %v3645
    %3660 = vmatprep.subr.mxu0 0.0
    %3661 = vmatpush1.msra.mxu0 %v3646
    %3662 = vmatprep.subr.mxu0 0.0
    %3663 = vmatpush1.msra.mxu0 %v3647
    %3664 = vmatprep.subr.mxu0 0.0
    %3665 = vmatpush1.msra.mxu0 0.0
    %3666 = vmatprep.subr.mxu0 0.0
    %3667 = vmatpush1.msra.mxu0 0.0
    %3668 = vmatprep.subr.mxu0 0.0
    %3669 = vmatpush1.msra.mxu0 0.0
    %3670 = vmatprep.subr.mxu0 0.0
    %3671 = vmatpush1.msra.mxu0 0.0
    %3672 = vmatprep.subr.mxu0 0.0
    %3673 = vmatpush1.msra.mxu0 0.0
    %3674 = vmatprep.subr.mxu0 0.0
    %3675 = vmatpush1.msra.mxu0 0.0
    %3676 = vmatprep.subr.mxu0 0.0
    %3677 = vmatpush1.msra.mxu0 0.0
    %3678 = vmatprep.subr.mxu0 0.0
    %3679 = vmatpush1.msra.mxu0 0.0
    %3680 = vmatprep.subr.mxu0 0.0
    %3681 = vmatpush1.msra.mxu0 0.0
    %3682 = vmatprep.subr.mxu0 0.0
    %3683 = vmatpush1.msra.mxu0 0.0
    %3684 = vmatprep.subr.mxu0 0.0
    %3685 = vmatpush1.msra.mxu0 0.0
    %3686 = vmatprep.subr.mxu0 0.0
    %3687 = vmatpush1.msra.mxu0 0.0
    %3688 = vmatprep.subr.mxu0 0.0
    %3689 = vmatpush1.msra.mxu0 0.0
    %3690 = vmatprep.subr.mxu0 0.0
    %3691 = vmatpush1.msra.mxu0 0.0
    %3692 = vmatprep.subr.mxu0 0.0
    %3693 = vmatpush1.msra.mxu0 0.0
    %3694 = vmatprep.subr.mxu0 0.0
    %3695 = vmatpush1.msra.mxu0 0.0
    %3696 = vmatprep.subr.mxu0 0.0
    %3697 = vmatpush1.msra.mxu0 0.0
    %3698 = vmatprep.subr.mxu0 0.0
    %3699 = vmatpush1.msra.mxu0 0.0
    %3700 = vmatprep.subr.mxu0 0.0
    %3701 = vmatpush1.msra.mxu0 0.0
    %3702 = vmatprep.subr.mxu0 0.0
    %3703 = vmatpush1.msra.mxu0 0.0
    %3704 = vmatprep.subr.mxu0 0.0
    %3705 = vmatpush1.msra.mxu0 0.0
    %3706 = vmatprep.subr.mxu0 0.0
    %3707 = vmatpush1.msra.mxu0 0.0
    %3708 = vmatprep.subr.mxu0 0.0
    %3709 = vmatpush1.msra.mxu0 0.0
    %3710 = vmatprep.subr.mxu0 0.0
    %3711 = vmatpush1.msra.mxu0 0.0
    %3712 = vmatprep.mubr.f32.mxu0 0.0
    %3713 = vmatmul.mubr.f32.gmra.mrb[0].mxu0 %v1973
    %v3714 = vpop.f32.mrb[0].mxu0
    %v3715 = vadd.f32 0.0, %v3714
    %v3716 = vpop.f32.mrb[0].mxu0
    %3717 = vmatprep.mubr.f32.mxu0 0.0
    %3718 = vmatmul.mubr.f32.gmra.mrb[0].mxu0 %v1976
    %v3719 = vpop.f32.mrb[0].mxu0
    %v3720 = vadd.f32 0.0, %v3719
    %v3721 = vpop.f32.mrb[0].mxu0
    %3722 = vmatprep.mubr.f32.mxu0 0.0
    %3723 = vmatmul.mubr.f32.gmra.mrb[0].mxu0 %v1979
    %v3724 = vpop.f32.mrb[0].mxu0
    %v3725 = vadd.f32 0.0, %v3724
    %v3726 = vpop.f32.mrb[0].mxu0
    %3727 = vmatprep.mubr.f32.mxu0 0.0
    %3728 = vmatmul.mubr.f32.gmra.mrb[0].mxu0 %v1982
    %v3729 = vpop.f32.mrb[0].mxu0
    %v3730 = vadd.f32 0.0, %v3729
    %v3731 = vpop.f32.mrb[0].mxu0
    %3732 = vdwg.mxu0
    %s3733 = scalar_lea.vmem %s6, 448
    %v3734 = vld [vmem:[%s3733] sm:$0xff]
    %v3735 = vld [vmem:[%s3733 + $0x8] sm:$0xff]
    %v3736 = vld [vmem:[%s3733 + $0x10] sm:$0xff]
    %v3737 = vld [vmem:[%s3733 + $0x18] sm:$0xff]
    %v3738 = vld [vmem:[%s3733 + $0x20] sm:$0xff]
    %v3739 = vld [vmem:[%s3733 + $0x28] sm:$0xff]
    %v3740 = vld [vmem:[%s3733 + $0x30] sm:$0xff]
    %v3741 = vld [vmem:[%s3733 + $0x38] sm:$0xff]
    %v3743 = vsel %vm2180, %v3734, 0
    %v3746 = vsel %vm2180, %v3735, 0
    %v3749 = vsel %vm2180, %v3736, 0
    %v3752 = vsel %vm2180, %v3737, 0
    %v3755 = vsel %vm2180, %v3738, 0
    %v3758 = vsel %vm2180, %v3739, 0
    %v3761 = vsel %vm2180, %v3740, 0
    %v3764 = vsel %vm2180, %v3741, 0
    %3766 = vmatprep.subr.mxu0 0.0
    %3767 = vmatpush1.msra.mxu0 %v3715
    %3768 = vmatprep.subr.mxu0 0.0
    %3769 = vmatpush1.msra.mxu0 %v3720
    %3770 = vmatprep.subr.mxu0 0.0
    %3771 = vmatpush1.msra.mxu0 %v3725
    %3772 = vmatprep.subr.mxu0 0.0
    %3773 = vmatpush1.msra.mxu0 %v3730
    %3774 = vmatprep.subr.mxu0 0.0
    %3775 = vmatpush1.msra.mxu0 0.0
    %3776 = vmatprep.subr.mxu0 0.0
    %3777 = vmatpush1.msra.mxu0 0.0
    %3778 = vmatprep.subr.mxu0 0.0
    %3779 = vmatpush1.msra.mxu0 0.0
    %3780 = vmatprep.subr.mxu0 0.0
    %3781 = vmatpush1.msra.mxu0 0.0
    %3782 = vmatprep.subr.mxu0 0.0
    %3783 = vmatpush1.msra.mxu0 0.0
    %3784 = vmatprep.subr.mxu0 0.0
    %3785 = vmatpush1.msra.mxu0 0.0
    %3786 = vmatprep.subr.mxu0 0.0
    %3787 = vmatpush1.msra.mxu0 0.0
    %3788 = vmatprep.subr.mxu0 0.0
    %3789 = vmatpush1.msra.mxu0 0.0
    %3790 = vmatprep.subr.mxu0 0.0
    %3791 = vmatpush1.msra.mxu0 0.0
    %3792 = vmatprep.subr.mxu0 0.0
    %3793 = vmatpush1.msra.mxu0 0.0
    %3794 = vmatprep.subr.mxu0 0.0
    %3795 = vmatpush1.msra.mxu0 0.0
    %3796 = vmatprep.subr.mxu0 0.0
    %3797 = vmatpush1.msra.mxu0 0.0
    %3798 = vmatprep.subr.mxu0 0.0
    %3799 = vmatpush1.msra.mxu0 0.0
    %3800 = vmatprep.subr.mxu0 0.0
    %3801 = vmatpush1.msra.mxu0 0.0
    %3802 = vmatprep.subr.mxu0 0.0
    %3803 = vmatpush1.msra.mxu0 0.0
    %3804 = vmatprep.subr.mxu0 0.0
    %3805 = vmatpush1.msra.mxu0 0.0
    %3806 = vmatprep.subr.mxu0 0.0
    %3807 = vmatpush1.msra.mxu0 0.0
    %3808 = vmatprep.subr.mxu0 0.0
    %3809 = vmatpush1.msra.mxu0 0.0
    %3810 = vmatprep.subr.mxu0 0.0
    %3811 = vmatpush1.msra.mxu0 0.0
    %3812 = vmatprep.subr.mxu0 0.0
    %3813 = vmatpush1.msra.mxu0 0.0
    %3814 = vmatprep.subr.mxu0 0.0
    %3815 = vmatpush1.msra.mxu0 0.0
    %3816 = vmatprep.subr.mxu0 0.0
    %3817 = vmatpush1.msra.mxu0 0.0
    %3818 = vmatprep.subr.mxu0 0.0
    %3819 = vmatpush1.msra.mxu0 0.0
    %3820 = vmatprep.subr.mxu0 0.0
    %3821 = vmatpush1.msra.mxu0 0.0
    %3822 = vmatprep.subr.mxu0 0.0
    %3823 = vmatpush1.msra.mxu0 0.0
    %3824 = vmatprep.subr.mxu0 0.0
    %3825 = vmatpush1.msra.mxu0 0.0
    %3826 = vmatprep.subr.mxu0 0.0
    %3827 = vmatpush1.msra.mxu0 0.0
    %3828 = vmatprep.subr.mxu0 0.0
    %3829 = vmatpush1.msra.mxu0 0.0
    %3830 = vmatprep.mubr.f32.mxu0 0.0
    %3831 = vmatmul.mubr.f32.gmra.mrb[0].mxu0 %v3743
    %v3832 = vpop.f32.mrb[0].mxu0
    %v3833 = vadd.f32 0.0, %v3832
    %v3834 = vpop.f32.mrb[0].mxu0
    %3835 = vmatprep.mubr.f32.mxu0 0.0
    %3836 = vmatmul.mubr.f32.gmra.mrb[0].mxu0 %v3746
    %v3837 = vpop.f32.mrb[0].mxu0
    %v3838 = vadd.f32 0.0, %v3837
    %v3839 = vpop.f32.mrb[0].mxu0
    %3840 = vmatprep.mubr.f32.mxu0 0.0
    %3841 = vmatmul.mubr.f32.gmra.mrb[0].mxu0 %v3749
    %v3842 = vpop.f32.mrb[0].mxu0
    %v3843 = vadd.f32 0.0, %v3842
    %v3844 = vpop.f32.mrb[0].mxu0
    %3845 = vmatprep.mubr.f32.mxu0 0.0
    %3846 = vmatmul.mubr.f32.gmra.mrb[0].mxu0 %v3752
    %v3847 = vpop.f32.mrb[0].mxu0
    %v3848 = vadd.f32 0.0, %v3847
    %v3849 = vpop.f32.mrb[0].mxu0
    %3850 = vmatprep.mubr.f32.mxu0 0.0
    %3851 = vmatmul.mubr.f32.gmra.mrb[0].mxu0 %v3755
    %v3852 = vpop.f32.mrb[0].mxu0
    %v3853 = vadd.f32 0.0, %v3852
    %v3854 = vpop.f32.mrb[0].mxu0
    %3855 = vmatprep.mubr.f32.mxu0 0.0
    %3856 = vmatmul.mubr.f32.gmra.mrb[0].mxu0 %v3758
    %v3857 = vpop.f32.mrb[0].mxu0
    %v3858 = vadd.f32 0.0, %v3857
    %v3859 = vpop.f32.mrb[0].mxu0
    %3860 = vmatprep.mubr.f32.mxu0 0.0
    %3861 = vmatmul.mubr.f32.gmra.mrb[0].mxu0 %v3761
    %v3862 = vpop.f32.mrb[0].mxu0
    %v3863 = vadd.f32 0.0, %v3862
    %v3864 = vpop.f32.mrb[0].mxu0
    %3865 = vmatprep.mubr.f32.mxu0 0.0
    %3866 = vmatmul.mubr.f32.gmra.mrb[0].mxu0 %v3764
    %v3867 = vpop.f32.mrb[0].mxu0
    %v3868 = vadd.f32 0.0, %v3867
    %v3869 = vpop.f32.mrb[0].mxu0
    %3870 = vdwg.mxu0
    %v3871 = vadd.f32 %v3631, %v3833
    %v3872 = vadd.f32 %v3632, %v3838
    %v3873 = vadd.f32 %v3633, %v3843
    %v3874 = vadd.f32 %v3634, %v3848
    %v3875 = vadd.f32 %v3635, %v3853
    %v3876 = vadd.f32 %v3636, %v3858
    %v3877 = vadd.f32 %v3637, %v3863
    %v3878 = vadd.f32 %v3638, %v3868
    %s3879 = scalar_lea.vmem %s5, 512
    %v3880 = vld [vmem:[%s3879] sm:$0xff]
    %v3881 = vld [vmem:[%s3879 + $0x8] sm:$0xff]
    %v3882 = vld [vmem:[%s3879 + $0x10] sm:$0xff]
    %v3883 = vld [vmem:[%s3879 + $0x18] sm:$0xff]
    %v3884 = vld [vmem:[%s3879 + $0x20] sm:$0xff]
    %v3885 = vld [vmem:[%s3879 + $0x28] sm:$0xff]
    %v3886 = vld [vmem:[%s3879 + $0x30] sm:$0xff]
    %v3887 = vld [vmem:[%s3879 + $0x38] sm:$0xff]
    %3888 = vmatprep.subr.mxu0 0.0
    %3889 = vmatpush1.msra.mxu0 %v3880
    %3890 = vmatprep.subr.mxu0 0.0
    %3891 = vmatpush1.msra.mxu0 %v3881
    %3892 = vmatprep.subr.mxu0 0.0
    %3893 = vmatpush1.msra.mxu0 %v3882
    %3894 = vmatprep.subr.mxu0 0.0
    %3895 = vmatpush1.msra.mxu0 %v3883
    %3896 = vmatprep.subr.mxu0 0.0
    %3897 = vmatpush1.msra.mxu0 %v3884
    %3898 = vmatprep.subr.mxu0 0.0
    %3899 = vmatpush1.msra.mxu0 %v3885
    %3900 = vmatprep.subr.mxu0 0.0
    %3901 = vmatpush1.msra.mxu0 %v3886
    %3902 = vmatprep.subr.mxu0 0.0
    %3903 = vmatpush1.msra.mxu0 %v3887
    %3904 = vmatprep.subr.mxu0 0.0
    %3905 = vmatpush1.msra.mxu0 0.0
    %3906 = vmatprep.subr.mxu0 0.0
    %3907 = vmatpush1.msra.mxu0 0.0
    %3908 = vmatprep.subr.mxu0 0.0
    %3909 = vmatpush1.msra.mxu0 0.0
    %3910 = vmatprep.subr.mxu0 0.0
    %3911 = vmatpush1.msra.mxu0 0.0
    %3912 = vmatprep.subr.mxu0 0.0
    %3913 = vmatpush1.msra.mxu0 0.0
    %3914 = vmatprep.subr.mxu0 0.0
    %3915 = vmatpush1.msra.mxu0 0.0
    %3916 = vmatprep.subr.mxu0 0.0
    %3917 = vmatpush1.msra.mxu0 0.0
    %3918 = vmatprep.subr.mxu0 0.0
    %3919 = vmatpush1.msra.mxu0 0.0
    %3920 = vmatprep.subr.mxu0 0.0
    %3921 = vmatpush1.msra.mxu0 0.0
    %3922 = vmatprep.subr.mxu0 0.0
    %3923 = vmatpush1.msra.mxu0 0.0
    %3924 = vmatprep.subr.mxu0 0.0
    %3925 = vmatpush1.msra.mxu0 0.0
    %3926 = vmatprep.subr.mxu0 0.0
    %3927 = vmatpush1.msra.mxu0 0.0
    %3928 = vmatprep.subr.mxu0 0.0
    %3929 = vmatpush1.msra.mxu0 0.0
    %3930 = vmatprep.subr.mxu0 0.0
    %3931 = vmatpush1.msra.mxu0 0.0
    %3932 = vmatprep.subr.mxu0 0.0
    %3933 = vmatpush1.msra.mxu0 0.0
    %3934 = vmatprep.subr.mxu0 0.0
    %3935 = vmatpush1.msra.mxu0 0.0
    %3936 = vmatprep.subr.mxu0 0.0
    %3937 = vmatpush1.msra.mxu0 0.0
    %3938 = vmatprep.subr.mxu0 0.0
    %3939 = vmatpush1.msra.mxu0 0.0
    %3940 = vmatprep.subr.mxu0 0.0
    %3941 = vmatpush1.msra.mxu0 0.0
    %3942 = vmatprep.subr.mxu0 0.0
    %3943 = vmatpush1.msra.mxu0 0.0
    %3944 = vmatprep.subr.mxu0 0.0
    %3945 = vmatpush1.msra.mxu0 0.0
    %3946 = vmatprep.subr.mxu0 0.0
    %3947 = vmatpush1.msra.mxu0 0.0
    %3948 = vmatprep.subr.mxu0 0.0
    %3949 = vmatpush1.msra.mxu0 0.0
    %3950 = vmatprep.subr.mxu0 0.0
    %3951 = vmatpush1.msra.mxu0 0.0
    %3952 = vmatprep.mubr.f32.mxu0 0.0
    %3953 = vmatmul.mubr.f32.gmra.mrb[0].mxu0 %v1973
    %v3954 = vpop.f32.mrb[0].mxu0
    %v3955 = vadd.f32 0.0, %v3954
    %v3956 = vpop.f32.mrb[0].mxu0
    %3957 = vmatprep.mubr.f32.mxu0 0.0
    %3958 = vmatmul.mubr.f32.gmra.mrb[0].mxu0 %v1976
    %v3959 = vpop.f32.mrb[0].mxu0
    %v3960 = vadd.f32 0.0, %v3959
    %v3961 = vpop.f32.mrb[0].mxu0
    %3962 = vmatprep.mubr.f32.mxu0 0.0
    %3963 = vmatmul.mubr.f32.gmra.mrb[0].mxu0 %v1979
    %v3964 = vpop.f32.mrb[0].mxu0
    %v3965 = vadd.f32 0.0, %v3964
    %v3966 = vpop.f32.mrb[0].mxu0
    %3967 = vmatprep.mubr.f32.mxu0 0.0
    %3968 = vmatmul.mubr.f32.gmra.mrb[0].mxu0 %v1982
    %v3969 = vpop.f32.mrb[0].mxu0
    %v3970 = vadd.f32 0.0, %v3969
    %v3971 = vpop.f32.mrb[0].mxu0
    %3972 = vdwg.mxu0
    %s3973 = scalar_lea.vmem %s6, 512
    %v3974 = vld [vmem:[%s3973] sm:$0xff]
    %v3975 = vld [vmem:[%s3973 + $0x8] sm:$0xff]
    %v3976 = vld [vmem:[%s3973 + $0x10] sm:$0xff]
    %v3977 = vld [vmem:[%s3973 + $0x18] sm:$0xff]
    %v3978 = vld [vmem:[%s3973 + $0x20] sm:$0xff]
    %v3979 = vld [vmem:[%s3973 + $0x28] sm:$0xff]
    %v3980 = vld [vmem:[%s3973 + $0x30] sm:$0xff]
    %v3981 = vld [vmem:[%s3973 + $0x38] sm:$0xff]
    %v3983 = vsel %vm2180, %v3974, 0
    %v3986 = vsel %vm2180, %v3975, 0
    %v3989 = vsel %vm2180, %v3976, 0
    %v3992 = vsel %vm2180, %v3977, 0
    %v3995 = vsel %vm2180, %v3978, 0
    %v3998 = vsel %vm2180, %v3979, 0
    %v4001 = vsel %vm2180, %v3980, 0
    %v4004 = vsel %vm2180, %v3981, 0
    %4006 = vmatprep.subr.mxu0 0.0
    %4007 = vmatpush1.msra.mxu0 %v3955
    %4008 = vmatprep.subr.mxu0 0.0
    %4009 = vmatpush1.msra.mxu0 %v3960
    %4010 = vmatprep.subr.mxu0 0.0
    %4011 = vmatpush1.msra.mxu0 %v3965
    %4012 = vmatprep.subr.mxu0 0.0
    %4013 = vmatpush1.msra.mxu0 %v3970
    %4014 = vmatprep.subr.mxu0 0.0
    %4015 = vmatpush1.msra.mxu0 0.0
    %4016 = vmatprep.subr.mxu0 0.0
    %4017 = vmatpush1.msra.mxu0 0.0
    %4018 = vmatprep.subr.mxu0 0.0
    %4019 = vmatpush1.msra.mxu0 0.0
    %4020 = vmatprep.subr.mxu0 0.0
    %4021 = vmatpush1.msra.mxu0 0.0
    %4022 = vmatprep.subr.mxu0 0.0
    %4023 = vmatpush1.msra.mxu0 0.0
    %4024 = vmatprep.subr.mxu0 0.0
    %4025 = vmatpush1.msra.mxu0 0.0
    %4026 = vmatprep.subr.mxu0 0.0
    %4027 = vmatpush1.msra.mxu0 0.0
    %4028 = vmatprep.subr.mxu0 0.0
    %4029 = vmatpush1.msra.mxu0 0.0
    %4030 = vmatprep.subr.mxu0 0.0
    %4031 = vmatpush1.msra.mxu0 0.0
    %4032 = vmatprep.subr.mxu0 0.0
    %4033 = vmatpush1.msra.mxu0 0.0
    %4034 = vmatprep.subr.mxu0 0.0
    %4035 = vmatpush1.msra.mxu0 0.0
    %4036 = vmatprep.subr.mxu0 0.0
    %4037 = vmatpush1.msra.mxu0 0.0
    %4038 = vmatprep.subr.mxu0 0.0
    %4039 = vmatpush1.msra.mxu0 0.0
    %4040 = vmatprep.subr.mxu0 0.0
    %4041 = vmatpush1.msra.mxu0 0.0
    %4042 = vmatprep.subr.mxu0 0.0
    %4043 = vmatpush1.msra.mxu0 0.0
    %4044 = vmatprep.subr.mxu0 0.0
    %4045 = vmatpush1.msra.mxu0 0.0
    %4046 = vmatprep.subr.mxu0 0.0
    %4047 = vmatpush1.msra.mxu0 0.0
    %4048 = vmatprep.subr.mxu0 0.0
    %4049 = vmatpush1.msra.mxu0 0.0
    %4050 = vmatprep.subr.mxu0 0.0
    %4051 = vmatpush1.msra.mxu0 0.0
    %4052 = vmatprep.subr.mxu0 0.0
    %4053 = vmatpush1.msra.mxu0 0.0
    %4054 = vmatprep.subr.mxu0 0.0
    %4055 = vmatpush1.msra.mxu0 0.0
    %4056 = vmatprep.subr.mxu0 0.0
    %4057 = vmatpush1.msra.mxu0 0.0
    %4058 = vmatprep.subr.mxu0 0.0
    %4059 = vmatpush1.msra.mxu0 0.0
    %4060 = vmatprep.subr.mxu0 0.0
    %4061 = vmatpush1.msra.mxu0 0.0
    %4062 = vmatprep.subr.mxu0 0.0
    %4063 = vmatpush1.msra.mxu0 0.0
    %4064 = vmatprep.subr.mxu0 0.0
    %4065 = vmatpush1.msra.mxu0 0.0
    %4066 = vmatprep.subr.mxu0 0.0
    %4067 = vmatpush1.msra.mxu0 0.0
    %4068 = vmatprep.subr.mxu0 0.0
    %4069 = vmatpush1.msra.mxu0 0.0
    %4070 = vmatprep.mubr.f32.mxu0 0.0
    %4071 = vmatmul.mubr.f32.gmra.mrb[0].mxu0 %v3983
    %v4072 = vpop.f32.mrb[0].mxu0
    %v4073 = vadd.f32 0.0, %v4072
    %v4074 = vpop.f32.mrb[0].mxu0
    %4075 = vmatprep.mubr.f32.mxu0 0.0
    %4076 = vmatmul.mubr.f32.gmra.mrb[0].mxu0 %v3986
    %v4077 = vpop.f32.mrb[0].mxu0
    %v4078 = vadd.f32 0.0, %v4077
    %v4079 = vpop.f32.mrb[0].mxu0
    %4080 = vmatprep.mubr.f32.mxu0 0.0
    %4081 = vmatmul.mubr.f32.gmra.mrb[0].mxu0 %v3989
    %v4082 = vpop.f32.mrb[0].mxu0
    %v4083 = vadd.f32 0.0, %v4082
    %v4084 = vpop.f32.mrb[0].mxu0
    %4085 = vmatprep.mubr.f32.mxu0 0.0
    %4086 = vmatmul.mubr.f32.gmra.mrb[0].mxu0 %v3992
    %v4087 = vpop.f32.mrb[0].mxu0
    %v4088 = vadd.f32 0.0, %v4087
    %v4089 = vpop.f32.mrb[0].mxu0
    %4090 = vmatprep.mubr.f32.mxu0 0.0
    %4091 = vmatmul.mubr.f32.gmra.mrb[0].mxu0 %v3995
    %v4092 = vpop.f32.mrb[0].mxu0
    %v4093 = vadd.f32 0.0, %v4092
    %v4094 = vpop.f32.mrb[0].mxu0
    %4095 = vmatprep.mubr.f32.mxu0 0.0
    %4096 = vmatmul.mubr.f32.gmra.mrb[0].mxu0 %v3998
    %v4097 = vpop.f32.mrb[0].mxu0
    %v4098 = vadd.f32 0.0, %v4097
    %v4099 = vpop.f32.mrb[0].mxu0
    %4100 = vmatprep.mubr.f32.mxu0 0.0
    %4101 = vmatmul.mubr.f32.gmra.mrb[0].mxu0 %v4001
    %v4102 = vpop.f32.mrb[0].mxu0
    %v4103 = vadd.f32 0.0, %v4102
    %v4104 = vpop.f32.mrb[0].mxu0
    %4105 = vmatprep.mubr.f32.mxu0 0.0
    %4106 = vmatmul.mubr.f32.gmra.mrb[0].mxu0 %v4004
    %v4107 = vpop.f32.mrb[0].mxu0
    %v4108 = vadd.f32 0.0, %v4107
    %v4109 = vpop.f32.mrb[0].mxu0
    %4110 = vdwg.mxu0
    %v4111 = vadd.f32 %v3871, %v4073
    %v4112 = vadd.f32 %v3872, %v4078
    %v4113 = vadd.f32 %v3873, %v4083
    %v4114 = vadd.f32 %v3874, %v4088
    %v4115 = vadd.f32 %v3875, %v4093
    %v4116 = vadd.f32 %v3876, %v4098
    %v4117 = vadd.f32 %v3877, %v4103
    %v4118 = vadd.f32 %v3878, %v4108
    %v4119 = vld [vmem:[%s7] sm:$0xff]
    %v4120 = vld [vmem:[%s7 + $0x8] sm:$0xff]
    %v4121 = vld [vmem:[%s7 + $0x10] sm:$0xff]
    %v4122 = vld [vmem:[%s7 + $0x18] sm:$0xff]
    %v4123 = vld [vmem:[%s7 + $0x20] sm:$0xff]
    %v4124 = vld [vmem:[%s7 + $0x28] sm:$0xff]
    %v4125 = vld [vmem:[%s7 + $0x30] sm:$0xff]
    %v4126 = vld [vmem:[%s7 + $0x38] sm:$0xff]
    %4128 = vset.pattern.permute.xlu0 0
    %4129 = vperm.xlu0 %4128, %v4119
    %v4130 = vpop.permute.xlu0 %4129
    %4133 = vset.pattern.permute.xlu0 0
    %4134 = vperm.xlu0 %4133, %v4120
    %v4135 = vpop.permute.xlu0 %4134
    %4138 = vset.pattern.permute.xlu0 0
    %4139 = vperm.xlu0 %4138, %v4121
    %v4140 = vpop.permute.xlu0 %4139
    %4143 = vset.pattern.permute.xlu0 0
    %4144 = vperm.xlu0 %4143, %v4122
    %v4145 = vpop.permute.xlu0 %4144
    %4148 = vset.pattern.permute.xlu0 0
    %4149 = vperm.xlu0 %4148, %v4123
    %v4150 = vpop.permute.xlu0 %4149
    %4153 = vset.pattern.permute.xlu0 0
    %4154 = vperm.xlu0 %4153, %v4124
    %v4155 = vpop.permute.xlu0 %4154
    %4158 = vset.pattern.permute.xlu0 0
    %4159 = vperm.xlu0 %4158, %v4125
    %v4160 = vpop.permute.xlu0 %4159
    %4163 = vset.pattern.permute.xlu0 0
    %4164 = vperm.xlu0 %4163, %v4126
    %v4165 = vpop.permute.xlu0 %4164
    %v4167 = vadd.f32 %v4111, %v4130
    %v4168 = vadd.f32 %v4112, %v4135
    %v4169 = vadd.f32 %v4113, %v4140
    %v4170 = vadd.f32 %v4114, %v4145
    %v4171 = vadd.f32 %v4115, %v4150
    %v4172 = vadd.f32 %v4116, %v4155
    %v4173 = vadd.f32 %v4117, %v4160
    %v4174 = vadd.f32 %v4118, %v4165
    %v4175 = vmax.f32 %v4167, 0.0
    %v4176 = vmax.f32 %v4168, 0.0
    %v4177 = vmax.f32 %v4169, 0.0
    %v4178 = vmax.f32 %v4170, 0.0
    %v4179 = vmax.f32 %v4171, 0.0
    %v4180 = vmax.f32 %v4172, 0.0
    %v4181 = vmax.f32 %v4173, 0.0
    %v4182 = vmax.f32 %v4174, 0.0
    %v4183 = vld [vmem:[%s8] sm:$0xff]
    %v4184 = vld [vmem:[%s8 + $0x8] sm:$0xff]
    %v4185 = vld [vmem:[%s8 + $0x10] sm:$0xff]
    %v4186 = vld [vmem:[%s8 + $0x18] sm:$0xff]
    %v4187 = vld [vmem:[%s8 + $0x20] sm:$0xff]
    %v4188 = vld [vmem:[%s8 + $0x28] sm:$0xff]
    %v4189 = vld [vmem:[%s8 + $0x30] sm:$0xff]
    %v4190 = vld [vmem:[%s8 + $0x38] sm:$0xff]
    %v4191 = vld [vmem:[%s8 + $0x40] sm:$0xff]
    %v4192 = vld [vmem:[%s8 + $0x48] sm:$0xff]
    %v4193 = vld [vmem:[%s8 + $0x50] sm:$0xff]
    %v4194 = vld [vmem:[%s8 + $0x58] sm:$0xff]
    %v4195 = vld [vmem:[%s8 + $0x60] sm:$0xff]
    %v4196 = vld [vmem:[%s8 + $0x68] sm:$0xff]
    %v4197 = vld [vmem:[%s8 + $0x70] sm:$0xff]
    %v4198 = vld [vmem:[%s8 + $0x78] sm:$0xff]
    %v4199 = vld [vmem:[%s8 + $0x80] sm:$0xff]
    %v4200 = vld [vmem:[%s8 + $0x88] sm:$0xff]
    %v4201 = vld [vmem:[%s8 + $0x90] sm:$0xff]
    %v4202 = vld [vmem:[%s8 + $0x98] sm:$0xff]
    %v4203 = vld [vmem:[%s8 + $0xa0] sm:$0xff]
    %v4204 = vld [vmem:[%s8 + $0xa8] sm:$0xff]
    %v4205 = vld [vmem:[%s8 + $0xb0] sm:$0xff]
    %v4206 = vld [vmem:[%s8 + $0xb8] sm:$0xff]
    %v4207 = vld [vmem:[%s8 + $0xc0] sm:$0xff]
    %v4208 = vld [vmem:[%s8 + $0xc8] sm:$0xff]
    %v4209 = vld [vmem:[%s8 + $0xd0] sm:$0xff]
    %v4210 = vld [vmem:[%s8 + $0xd8] sm:$0xff]
    %v4211 = vld [vmem:[%s8 + $0xe0] sm:$0xff]
    %v4212 = vld [vmem:[%s8 + $0xe8] sm:$0xff]
    %v4213 = vld [vmem:[%s8 + $0xf0] sm:$0xff]
    %v4214 = vld [vmem:[%s8 + $0xf8] sm:$0xff]
    %v4215 = vld [vmem:[%s8 + $0x100] sm:$0xff]
    %v4216 = vld [vmem:[%s8 + $0x108] sm:$0xff]
    %v4217 = vld [vmem:[%s8 + $0x110] sm:$0xff]
    %v4218 = vld [vmem:[%s8 + $0x118] sm:$0xff]
    %v4219 = vld [vmem:[%s8 + $0x120] sm:$0xff]
    %v4220 = vld [vmem:[%s8 + $0x128] sm:$0xff]
    %v4221 = vld [vmem:[%s8 + $0x130] sm:$0xff]
    %v4222 = vld [vmem:[%s8 + $0x138] sm:$0xff]
    %v4223 = vld [vmem:[%s8 + $0x140] sm:$0xff]
    %v4224 = vld [vmem:[%s8 + $0x148] sm:$0xff]
    %v4225 = vld [vmem:[%s8 + $0x150] sm:$0xff]
    %v4226 = vld [vmem:[%s8 + $0x158] sm:$0xff]
    %v4227 = vld [vmem:[%s8 + $0x160] sm:$0xff]
    %v4228 = vld [vmem:[%s8 + $0x168] sm:$0xff]
    %v4229 = vld [vmem:[%s8 + $0x170] sm:$0xff]
    %v4230 = vld [vmem:[%s8 + $0x178] sm:$0xff]
    %v4231 = vld [vmem:[%s8 + $0x180] sm:$0xff]
    %v4232 = vld [vmem:[%s8 + $0x188] sm:$0xff]
    %v4233 = vld [vmem:[%s8 + $0x190] sm:$0xff]
    %v4234 = vld [vmem:[%s8 + $0x198] sm:$0xff]
    %v4235 = vld [vmem:[%s8 + $0x1a0] sm:$0xff]
    %v4236 = vld [vmem:[%s8 + $0x1a8] sm:$0xff]
    %v4237 = vld [vmem:[%s8 + $0x1b0] sm:$0xff]
    %v4238 = vld [vmem:[%s8 + $0x1b8] sm:$0xff]
    %v4239 = vld [vmem:[%s8 + $0x1c0] sm:$0xff]
    %v4240 = vld [vmem:[%s8 + $0x1c8] sm:$0xff]
    %v4241 = vld [vmem:[%s8 + $0x1d0] sm:$0xff]
    %v4242 = vld [vmem:[%s8 + $0x1d8] sm:$0xff]
    %v4243 = vld [vmem:[%s8 + $0x1e0] sm:$0xff]
    %v4244 = vld [vmem:[%s8 + $0x1e8] sm:$0xff]
    %v4245 = vld [vmem:[%s8 + $0x1f0] sm:$0xff]
    %v4246 = vld [vmem:[%s8 + $0x1f8] sm:$0xff]
    %v4247 = vld [vmem:[%s8 + $0x200] sm:$0xff]
    %v4248 = vld [vmem:[%s8 + $0x208] sm:$0xff]
    %v4249 = vld [vmem:[%s8 + $0x210] sm:$0xff]
    %v4250 = vld [vmem:[%s8 + $0x218] sm:$0xff]
    %v4251 = vld [vmem:[%s8 + $0x220] sm:$0xff]
    %v4252 = vld [vmem:[%s8 + $0x228] sm:$0xff]
    %v4253 = vld [vmem:[%s8 + $0x230] sm:$0xff]
    %v4254 = vld [vmem:[%s8 + $0x238] sm:$0xff]
    %v4255 = vld [vmem:[%s8 + $0x240] sm:$0xff]
    %v4256 = vld [vmem:[%s8 + $0x248] sm:$0xff]
    %v4257 = vld [vmem:[%s8 + $0x250] sm:$0xff]
    %v4258 = vld [vmem:[%s8 + $0x258] sm:$0xff]
    %v4259 = vld [vmem:[%s8 + $0x260] sm:$0xff]
    %v4260 = vld [vmem:[%s8 + $0x268] sm:$0xff]
    %v4261 = vld [vmem:[%s8 + $0x270] sm:$0xff]
    %v4262 = vld [vmem:[%s8 + $0x278] sm:$0xff]
    %v4263 = vld [vmem:[%s8 + $0x280] sm:$0xff]
    %v4264 = vld [vmem:[%s8 + $0x288] sm:$0xff]
    %v4265 = vld [vmem:[%s8 + $0x290] sm:$0xff]
    %v4266 = vld [vmem:[%s8 + $0x298] sm:$0xff]
    %v4267 = vld [vmem:[%s8 + $0x2a0] sm:$0xff]
    %v4268 = vld [vmem:[%s8 + $0x2a8] sm:$0xff]
    %v4269 = vld [vmem:[%s8 + $0x2b0] sm:$0xff]
    %v4270 = vld [vmem:[%s8 + $0x2b8] sm:$0xff]
    %v4271 = vld [vmem:[%s8 + $0x2c0] sm:$0xff]
    %v4272 = vld [vmem:[%s8 + $0x2c8] sm:$0xff]
    %v4273 = vld [vmem:[%s8 + $0x2d0] sm:$0xff]
    %v4274 = vld [vmem:[%s8 + $0x2d8] sm:$0xff]
    %v4275 = vld [vmem:[%s8 + $0x2e0] sm:$0xff]
    %v4276 = vld [vmem:[%s8 + $0x2e8] sm:$0xff]
    %v4277 = vld [vmem:[%s8 + $0x2f0] sm:$0xff]
    %v4278 = vld [vmem:[%s8 + $0x2f8] sm:$0xff]
    %v4279 = vld [vmem:[%s8 + $0x300] sm:$0xff]
    %v4280 = vld [vmem:[%s8 + $0x308] sm:$0xff]
    %v4281 = vld [vmem:[%s8 + $0x310] sm:$0xff]
    %v4282 = vld [vmem:[%s8 + $0x318] sm:$0xff]
    %v4283 = vld [vmem:[%s8 + $0x320] sm:$0xff]
    %v4284 = vld [vmem:[%s8 + $0x328] sm:$0xff]
    %v4285 = vld [vmem:[%s8 + $0x330] sm:$0xff]
    %v4286 = vld [vmem:[%s8 + $0x338] sm:$0xff]
    %v4287 = vld [vmem:[%s8 + $0x340] sm:$0xff]
    %v4288 = vld [vmem:[%s8 + $0x348] sm:$0xff]
    %v4289 = vld [vmem:[%s8 + $0x350] sm:$0xff]
    %v4290 = vld [vmem:[%s8 + $0x358] sm:$0xff]
    %v4291 = vld [vmem:[%s8 + $0x360] sm:$0xff]
    %v4292 = vld [vmem:[%s8 + $0x368] sm:$0xff]
    %v4293 = vld [vmem:[%s8 + $0x370] sm:$0xff]
    %v4294 = vld [vmem:[%s8 + $0x378] sm:$0xff]
    %v4295 = vld [vmem:[%s8 + $0x380] sm:$0xff]
    %v4296 = vld [vmem:[%s8 + $0x388] sm:$0xff]
    %v4297 = vld [vmem:[%s8 + $0x390] sm:$0xff]
    %v4298 = vld [vmem:[%s8 + $0x398] sm:$0xff]
    %v4299 = vld [vmem:[%s8 + $0x3a0] sm:$0xff]
    %v4300 = vld [vmem:[%s8 + $0x3a8] sm:$0xff]
    %v4301 = vld [vmem:[%s8 + $0x3b0] sm:$0xff]
    %v4302 = vld [vmem:[%s8 + $0x3b8] sm:$0xff]
    %v4303 = vld [vmem:[%s8 + $0x3c0] sm:$0xff]
    %v4304 = vld [vmem:[%s8 + $0x3c8] sm:$0xff]
    %v4305 = vld [vmem:[%s8 + $0x3d0] sm:$0xff]
    %v4306 = vld [vmem:[%s8 + $0x3d8] sm:$0xff]
    %v4307 = vld [vmem:[%s8 + $0x3e0] sm:$0xff]
    %v4308 = vld [vmem:[%s8 + $0x3e8] sm:$0xff]
    %v4309 = vld [vmem:[%s8 + $0x3f0] sm:$0xff]
    %v4310 = vld [vmem:[%s8 + $0x3f8] sm:$0xff]
    %v4311 = vld [vmem:[%s9] sm:$0x1]
    %v4312 = vmul.f32 %v4175, %v4183
    %v4313 = vmul.f32 %v4176, %v4184
    %v4314 = vmul.f32 %v4177, %v4185
    %v4315 = vmul.f32 %v4178, %v4186
    %v4316 = vmul.f32 %v4175, %v4187
    %v4317 = vmul.f32 %v4176, %v4188
    %v4318 = vmul.f32 %v4177, %v4189
    %v4319 = vmul.f32 %v4178, %v4190
    %v4320 = vmul.f32 %v4175, %v4191
    %v4321 = vmul.f32 %v4176, %v4192
    %v4322 = vmul.f32 %v4177, %v4193
    %v4323 = vmul.f32 %v4178, %v4194
    %v4324 = vmul.f32 %v4175, %v4195
    %v4325 = vmul.f32 %v4176, %v4196
    %v4326 = vmul.f32 %v4177, %v4197
    %v4327 = vmul.f32 %v4178, %v4198
    %v4328 = vmul.f32 %v4175, %v4199
    %v4329 = vmul.f32 %v4176, %v4200
    %v4330 = vmul.f32 %v4177, %v4201
    %v4331 = vmul.f32 %v4178, %v4202
    %v4332 = vmul.f32 %v4175, %v4203
    %v4333 = vmul.f32 %v4176, %v4204
    %v4334 = vmul.f32 %v4177, %v4205
    %v4335 = vmul.f32 %v4178, %v4206
    %v4336 = vmul.f32 %v4175, %v4207
    %v4337 = vmul.f32 %v4176, %v4208
    %v4338 = vmul.f32 %v4177, %v4209
    %v4339 = vmul.f32 %v4178, %v4210
    %v4340 = vmul.f32 %v4175, %v4211
    %v4341 = vmul.f32 %v4176, %v4212
    %v4342 = vmul.f32 %v4177, %v4213
    %v4343 = vmul.f32 %v4178, %v4214
    %v4344 = vmul.f32 %v4175, %v4215
    %v4345 = vmul.f32 %v4176, %v4216
    %v4346 = vmul.f32 %v4177, %v4217
    %v4347 = vmul.f32 %v4178, %v4218
    %v4348 = vmul.f32 %v4175, %v4219
    %v4349 = vmul.f32 %v4176, %v4220
    %v4350 = vmul.f32 %v4177, %v4221
    %v4351 = vmul.f32 %v4178, %v4222
    %v4352 = vmul.f32 %v4175, %v4223
    %v4353 = vmul.f32 %v4176, %v4224
    %v4354 = vmul.f32 %v4177, %v4225
    %v4355 = vmul.f32 %v4178, %v4226
    %v4356 = vmul.f32 %v4175, %v4227
    %v4357 = vmul.f32 %v4176, %v4228
    %v4358 = vmul.f32 %v4177, %v4229
    %v4359 = vmul.f32 %v4178, %v4230
    %v4360 = vmul.f32 %v4175, %v4231
    %v4361 = vmul.f32 %v4176, %v4232
    %v4362 = vmul.f32 %v4177, %v4233
    %v4363 = vmul.f32 %v4178, %v4234
    %v4364 = vmul.f32 %v4175, %v4235
    %v4365 = vmul.f32 %v4176, %v4236
    %v4366 = vmul.f32 %v4177, %v4237
    %v4367 = vmul.f32 %v4178, %v4238
    %v4368 = vmul.f32 %v4175, %v4239
    %v4369 = vmul.f32 %v4176, %v4240
    %v4370 = vmul.f32 %v4177, %v4241
    %v4371 = vmul.f32 %v4178, %v4242
    %v4372 = vmul.f32 %v4175, %v4243
    %v4373 = vmul.f32 %v4176, %v4244
    %v4374 = vmul.f32 %v4177, %v4245
    %v4375 = vmul.f32 %v4178, %v4246
    %v4376 = vmul.f32 %v4175, %v4247
    %v4377 = vmul.f32 %v4176, %v4248
    %v4378 = vmul.f32 %v4177, %v4249
    %v4379 = vmul.f32 %v4178, %v4250
    %v4380 = vmul.f32 %v4175, %v4251
    %v4381 = vmul.f32 %v4176, %v4252
    %v4382 = vmul.f32 %v4177, %v4253
    %v4383 = vmul.f32 %v4178, %v4254
    %v4384 = vmul.f32 %v4175, %v4255
    %v4385 = vmul.f32 %v4176, %v4256
    %v4386 = vmul.f32 %v4177, %v4257
    %v4387 = vmul.f32 %v4178, %v4258
    %v4388 = vmul.f32 %v4175, %v4259
    %v4389 = vmul.f32 %v4176, %v4260
    %v4390 = vmul.f32 %v4177, %v4261
    %v4391 = vmul.f32 %v4178, %v4262
    %v4392 = vmul.f32 %v4175, %v4263
    %v4393 = vmul.f32 %v4176, %v4264
    %v4394 = vmul.f32 %v4177, %v4265
    %v4395 = vmul.f32 %v4178, %v4266
    %v4396 = vmul.f32 %v4175, %v4267
    %v4397 = vmul.f32 %v4176, %v4268
    %v4398 = vmul.f32 %v4177, %v4269
    %v4399 = vmul.f32 %v4178, %v4270
    %v4400 = vmul.f32 %v4175, %v4271
    %v4401 = vmul.f32 %v4176, %v4272
    %v4402 = vmul.f32 %v4177, %v4273
    %v4403 = vmul.f32 %v4178, %v4274
    %v4404 = vmul.f32 %v4175, %v4275
    %v4405 = vmul.f32 %v4176, %v4276
    %v4406 = vmul.f32 %v4177, %v4277
    %v4407 = vmul.f32 %v4178, %v4278
    %v4408 = vmul.f32 %v4175, %v4279
    %v4409 = vmul.f32 %v4176, %v4280
    %v4410 = vmul.f32 %v4177, %v4281
    %v4411 = vmul.f32 %v4178, %v4282
    %v4412 = vmul.f32 %v4175, %v4283
    %v4413 = vmul.f32 %v4176, %v4284
    %v4414 = vmul.f32 %v4177, %v4285
    %v4415 = vmul.f32 %v4178, %v4286
    %v4416 = vmul.f32 %v4175, %v4287
    %v4417 = vmul.f32 %v4176, %v4288
    %v4418 = vmul.f32 %v4177, %v4289
    %v4419 = vmul.f32 %v4178, %v4290
    %v4420 = vmul.f32 %v4175, %v4291
    %v4421 = vmul.f32 %v4176, %v4292
    %v4422 = vmul.f32 %v4177, %v4293
    %v4423 = vmul.f32 %v4178, %v4294
    %v4424 = vmul.f32 %v4175, %v4295
    %v4425 = vmul.f32 %v4176, %v4296
    %v4426 = vmul.f32 %v4177, %v4297
    %v4427 = vmul.f32 %v4178, %v4298
    %v4428 = vmul.f32 %v4175, %v4299
    %v4429 = vmul.f32 %v4176, %v4300
    %v4430 = vmul.f32 %v4177, %v4301
    %v4431 = vmul.f32 %v4178, %v4302
    %v4432 = vmul.f32 %v4175, %v4303
    %v4433 = vmul.f32 %v4176, %v4304
    %v4434 = vmul.f32 %v4177, %v4305
    %v4435 = vmul.f32 %v4178, %v4306
    %v4436 = vmul.f32 %v4175, %v4307
    %v4437 = vmul.f32 %v4176, %v4308
    %v4438 = vmul.f32 %v4177, %v4309
    %v4439 = vmul.f32 %v4178, %v4310
    %vm4440 = vcmask 130048
    %v4441 = vsel %vm4440, %v4312, 0.0
    %4442 = vadd.xlane.f32.xlu0 %v4441
    %v4443 = vpop.xlane.xlu0 %4442
    %v4444 = vsel %vm4440, %v4313, 0.0
    %4445 = vadd.xlane.f32.xlu0 %v4444
    %v4446 = vpop.xlane.xlu0 %4445
    %v4447 = vsel %vm4440, %v4314, 0.0
    %4448 = vadd.xlane.f32.xlu0 %v4447
    %v4449 = vpop.xlane.xlu0 %4448
    %v4450 = vsel %vm4440, %v4315, 0.0
    %4451 = vadd.xlane.f32.xlu0 %v4450
    %v4452 = vpop.xlane.xlu0 %4451
    %v4453 = vsel %vm4440, %v4316, 0.0
    %4454 = vadd.xlane.f32.xlu0 %v4453
    %v4455 = vpop.xlane.xlu0 %4454
    %v4456 = vsel %vm4440, %v4317, 0.0
    %4457 = vadd.xlane.f32.xlu0 %v4456
    %v4458 = vpop.xlane.xlu0 %4457
    %v4459 = vsel %vm4440, %v4318, 0.0
    %4460 = vadd.xlane.f32.xlu0 %v4459
    %v4461 = vpop.xlane.xlu0 %4460
    %v4462 = vsel %vm4440, %v4319, 0.0
    %4463 = vadd.xlane.f32.xlu0 %v4462
    %v4464 = vpop.xlane.xlu0 %4463
    %v4465 = vsel %vm4440, %v4320, 0.0
    %4466 = vadd.xlane.f32.xlu0 %v4465
    %v4467 = vpop.xlane.xlu0 %4466
    %v4468 = vsel %vm4440, %v4321, 0.0
    %4469 = vadd.xlane.f32.xlu0 %v4468
    %v4470 = vpop.xlane.xlu0 %4469
    %v4471 = vsel %vm4440, %v4322, 0.0
    %4472 = vadd.xlane.f32.xlu0 %v4471
    %v4473 = vpop.xlane.xlu0 %4472
    %v4474 = vsel %vm4440, %v4323, 0.0
    %4475 = vadd.xlane.f32.xlu0 %v4474
    %v4476 = vpop.xlane.xlu0 %4475
    %v4477 = vsel %vm4440, %v4324, 0.0
    %4478 = vadd.xlane.f32.xlu0 %v4477
    %v4479 = vpop.xlane.xlu0 %4478
    %v4480 = vsel %vm4440, %v4325, 0.0
    %4481 = vadd.xlane.f32.xlu0 %v4480
    %v4482 = vpop.xlane.xlu0 %4481
    %v4483 = vsel %vm4440, %v4326, 0.0
    %4484 = vadd.xlane.f32.xlu0 %v4483
    %v4485 = vpop.xlane.xlu0 %4484
    %v4486 = vsel %vm4440, %v4327, 0.0
    %4487 = vadd.xlane.f32.xlu0 %v4486
    %v4488 = vpop.xlane.xlu0 %4487
    %v4489 = vsel %vm4440, %v4328, 0.0
    %4490 = vadd.xlane.f32.xlu0 %v4489
    %v4491 = vpop.xlane.xlu0 %4490
    %v4492 = vsel %vm4440, %v4329, 0.0
    %4493 = vadd.xlane.f32.xlu0 %v4492
    %v4494 = vpop.xlane.xlu0 %4493
    %v4495 = vsel %vm4440, %v4330, 0.0
    %4496 = vadd.xlane.f32.xlu0 %v4495
    %v4497 = vpop.xlane.xlu0 %4496
    %v4498 = vsel %vm4440, %v4331, 0.0
    %4499 = vadd.xlane.f32.xlu0 %v4498
    %v4500 = vpop.xlane.xlu0 %4499
    %v4501 = vsel %vm4440, %v4332, 0.0
    %4502 = vadd.xlane.f32.xlu0 %v4501
    %v4503 = vpop.xlane.xlu0 %4502
    %v4504 = vsel %vm4440, %v4333, 0.0
    %4505 = vadd.xlane.f32.xlu0 %v4504
    %v4506 = vpop.xlane.xlu0 %4505
    %v4507 = vsel %vm4440, %v4334, 0.0
    %4508 = vadd.xlane.f32.xlu0 %v4507
    %v4509 = vpop.xlane.xlu0 %4508
    %v4510 = vsel %vm4440, %v4335, 0.0
    %4511 = vadd.xlane.f32.xlu0 %v4510
    %v4512 = vpop.xlane.xlu0 %4511
    %v4513 = vsel %vm4440, %v4336, 0.0
    %4514 = vadd.xlane.f32.xlu0 %v4513
    %v4515 = vpop.xlane.xlu0 %4514
    %v4516 = vsel %vm4440, %v4337, 0.0
    %4517 = vadd.xlane.f32.xlu0 %v4516
    %v4518 = vpop.xlane.xlu0 %4517
    %v4519 = vsel %vm4440, %v4338, 0.0
    %4520 = vadd.xlane.f32.xlu0 %v4519
    %v4521 = vpop.xlane.xlu0 %4520
    %v4522 = vsel %vm4440, %v4339, 0.0
    %4523 = vadd.xlane.f32.xlu0 %v4522
    %v4524 = vpop.xlane.xlu0 %4523
    %v4525 = vsel %vm4440, %v4340, 0.0
    %4526 = vadd.xlane.f32.xlu0 %v4525
    %v4527 = vpop.xlane.xlu0 %4526
    %v4528 = vsel %vm4440, %v4341, 0.0
    %4529 = vadd.xlane.f32.xlu0 %v4528
    %v4530 = vpop.xlane.xlu0 %4529
    %v4531 = vsel %vm4440, %v4342, 0.0
    %4532 = vadd.xlane.f32.xlu0 %v4531
    %v4533 = vpop.xlane.xlu0 %4532
    %v4534 = vsel %vm4440, %v4343, 0.0
    %4535 = vadd.xlane.f32.xlu0 %v4534
    %v4536 = vpop.xlane.xlu0 %4535
    %v4537 = vsel %vm4440, %v4344, 0.0
    %4538 = vadd.xlane.f32.xlu0 %v4537
    %v4539 = vpop.xlane.xlu0 %4538
    %v4540 = vsel %vm4440, %v4345, 0.0
    %4541 = vadd.xlane.f32.xlu0 %v4540
    %v4542 = vpop.xlane.xlu0 %4541
    %v4543 = vsel %vm4440, %v4346, 0.0
    %4544 = vadd.xlane.f32.xlu0 %v4543
    %v4545 = vpop.xlane.xlu0 %4544
    %v4546 = vsel %vm4440, %v4347, 0.0
    %4547 = vadd.xlane.f32.xlu0 %v4546
    %v4548 = vpop.xlane.xlu0 %4547
    %v4549 = vsel %vm4440, %v4348, 0.0
    %4550 = vadd.xlane.f32.xlu0 %v4549
    %v4551 = vpop.xlane.xlu0 %4550
    %v4552 = vsel %vm4440, %v4349, 0.0
    %4553 = vadd.xlane.f32.xlu0 %v4552
    %v4554 = vpop.xlane.xlu0 %4553
    %v4555 = vsel %vm4440, %v4350, 0.0
    %4556 = vadd.xlane.f32.xlu0 %v4555
    %v4557 = vpop.xlane.xlu0 %4556
    %v4558 = vsel %vm4440, %v4351, 0.0
    %4559 = vadd.xlane.f32.xlu0 %v4558
    %v4560 = vpop.xlane.xlu0 %4559
    %v4561 = vsel %vm4440, %v4352, 0.0
    %4562 = vadd.xlane.f32.xlu0 %v4561
    %v4563 = vpop.xlane.xlu0 %4562
    %v4564 = vsel %vm4440, %v4353, 0.0
    %4565 = vadd.xlane.f32.xlu0 %v4564
    %v4566 = vpop.xlane.xlu0 %4565
    %v4567 = vsel %vm4440, %v4354, 0.0
    %4568 = vadd.xlane.f32.xlu0 %v4567
    %v4569 = vpop.xlane.xlu0 %4568
    %v4570 = vsel %vm4440, %v4355, 0.0
    %4571 = vadd.xlane.f32.xlu0 %v4570
    %v4572 = vpop.xlane.xlu0 %4571
    %v4573 = vsel %vm4440, %v4356, 0.0
    %4574 = vadd.xlane.f32.xlu0 %v4573
    %v4575 = vpop.xlane.xlu0 %4574
    %v4576 = vsel %vm4440, %v4357, 0.0
    %4577 = vadd.xlane.f32.xlu0 %v4576
    %v4578 = vpop.xlane.xlu0 %4577
    %v4579 = vsel %vm4440, %v4358, 0.0
    %4580 = vadd.xlane.f32.xlu0 %v4579
    %v4581 = vpop.xlane.xlu0 %4580
    %v4582 = vsel %vm4440, %v4359, 0.0
    %4583 = vadd.xlane.f32.xlu0 %v4582
    %v4584 = vpop.xlane.xlu0 %4583
    %v4585 = vsel %vm4440, %v4360, 0.0
    %4586 = vadd.xlane.f32.xlu0 %v4585
    %v4587 = vpop.xlane.xlu0 %4586
    %v4588 = vsel %vm4440, %v4361, 0.0
    %4589 = vadd.xlane.f32.xlu0 %v4588
    %v4590 = vpop.xlane.xlu0 %4589
    %v4591 = vsel %vm4440, %v4362, 0.0
    %4592 = vadd.xlane.f32.xlu0 %v4591
    %v4593 = vpop.xlane.xlu0 %4592
    %v4594 = vsel %vm4440, %v4363, 0.0
    %4595 = vadd.xlane.f32.xlu0 %v4594
    %v4596 = vpop.xlane.xlu0 %4595
    %v4597 = vsel %vm4440, %v4364, 0.0
    %4598 = vadd.xlane.f32.xlu0 %v4597
    %v4599 = vpop.xlane.xlu0 %4598
    %v4600 = vsel %vm4440, %v4365, 0.0
    %4601 = vadd.xlane.f32.xlu0 %v4600
    %v4602 = vpop.xlane.xlu0 %4601
    %v4603 = vsel %vm4440, %v4366, 0.0
    %4604 = vadd.xlane.f32.xlu0 %v4603
    %v4605 = vpop.xlane.xlu0 %4604
    %v4606 = vsel %vm4440, %v4367, 0.0
    %4607 = vadd.xlane.f32.xlu0 %v4606
    %v4608 = vpop.xlane.xlu0 %4607
    %v4609 = vsel %vm4440, %v4368, 0.0
    %4610 = vadd.xlane.f32.xlu0 %v4609
    %v4611 = vpop.xlane.xlu0 %4610
    %v4612 = vsel %vm4440, %v4369, 0.0
    %4613 = vadd.xlane.f32.xlu0 %v4612
    %v4614 = vpop.xlane.xlu0 %4613
    %v4615 = vsel %vm4440, %v4370, 0.0
    %4616 = vadd.xlane.f32.xlu0 %v4615
    %v4617 = vpop.xlane.xlu0 %4616
    %v4618 = vsel %vm4440, %v4371, 0.0
    %4619 = vadd.xlane.f32.xlu0 %v4618
    %v4620 = vpop.xlane.xlu0 %4619
    %v4621 = vsel %vm4440, %v4372, 0.0
    %4622 = vadd.xlane.f32.xlu0 %v4621
    %v4623 = vpop.xlane.xlu0 %4622
    %v4624 = vsel %vm4440, %v4373, 0.0
    %4625 = vadd.xlane.f32.xlu0 %v4624
    %v4626 = vpop.xlane.xlu0 %4625
    %v4627 = vsel %vm4440, %v4374, 0.0
    %4628 = vadd.xlane.f32.xlu0 %v4627
    %v4629 = vpop.xlane.xlu0 %4628
    %v4630 = vsel %vm4440, %v4375, 0.0
    %4631 = vadd.xlane.f32.xlu0 %v4630
    %v4632 = vpop.xlane.xlu0 %4631
    %v4633 = vsel %vm4440, %v4376, 0.0
    %4634 = vadd.xlane.f32.xlu0 %v4633
    %v4635 = vpop.xlane.xlu0 %4634
    %v4636 = vsel %vm4440, %v4377, 0.0
    %4637 = vadd.xlane.f32.xlu0 %v4636
    %v4638 = vpop.xlane.xlu0 %4637
    %v4639 = vsel %vm4440, %v4378, 0.0
    %4640 = vadd.xlane.f32.xlu0 %v4639
    %v4641 = vpop.xlane.xlu0 %4640
    %v4642 = vsel %vm4440, %v4379, 0.0
    %4643 = vadd.xlane.f32.xlu0 %v4642
    %v4644 = vpop.xlane.xlu0 %4643
    %v4645 = vsel %vm4440, %v4380, 0.0
    %4646 = vadd.xlane.f32.xlu0 %v4645
    %v4647 = vpop.xlane.xlu0 %4646
    %v4648 = vsel %vm4440, %v4381, 0.0
    %4649 = vadd.xlane.f32.xlu0 %v4648
    %v4650 = vpop.xlane.xlu0 %4649
    %v4651 = vsel %vm4440, %v4382, 0.0
    %4652 = vadd.xlane.f32.xlu0 %v4651
    %v4653 = vpop.xlane.xlu0 %4652
    %v4654 = vsel %vm4440, %v4383, 0.0
    %4655 = vadd.xlane.f32.xlu0 %v4654
    %v4656 = vpop.xlane.xlu0 %4655
    %v4657 = vsel %vm4440, %v4384, 0.0
    %4658 = vadd.xlane.f32.xlu0 %v4657
    %v4659 = vpop.xlane.xlu0 %4658
    %v4660 = vsel %vm4440, %v4385, 0.0
    %4661 = vadd.xlane.f32.xlu0 %v4660
    %v4662 = vpop.xlane.xlu0 %4661
    %v4663 = vsel %vm4440, %v4386, 0.0
    %4664 = vadd.xlane.f32.xlu0 %v4663
    %v4665 = vpop.xlane.xlu0 %4664
    %v4666 = vsel %vm4440, %v4387, 0.0
    %4667 = vadd.xlane.f32.xlu0 %v4666
    %v4668 = vpop.xlane.xlu0 %4667
    %v4669 = vsel %vm4440, %v4388, 0.0
    %4670 = vadd.xlane.f32.xlu0 %v4669
    %v4671 = vpop.xlane.xlu0 %4670
    %v4672 = vsel %vm4440, %v4389, 0.0
    %4673 = vadd.xlane.f32.xlu0 %v4672
    %v4674 = vpop.xlane.xlu0 %4673
    %v4675 = vsel %vm4440, %v4390, 0.0
    %4676 = vadd.xlane.f32.xlu0 %v4675
    %v4677 = vpop.xlane.xlu0 %4676
    %v4678 = vsel %vm4440, %v4391, 0.0
    %4679 = vadd.xlane.f32.xlu0 %v4678
    %v4680 = vpop.xlane.xlu0 %4679
    %v4681 = vsel %vm4440, %v4392, 0.0
    %4682 = vadd.xlane.f32.xlu0 %v4681
    %v4683 = vpop.xlane.xlu0 %4682
    %v4684 = vsel %vm4440, %v4393, 0.0
    %4685 = vadd.xlane.f32.xlu0 %v4684
    %v4686 = vpop.xlane.xlu0 %4685
    %v4687 = vsel %vm4440, %v4394, 0.0
    %4688 = vadd.xlane.f32.xlu0 %v4687
    %v4689 = vpop.xlane.xlu0 %4688
    %v4690 = vsel %vm4440, %v4395, 0.0
    %4691 = vadd.xlane.f32.xlu0 %v4690
    %v4692 = vpop.xlane.xlu0 %4691
    %v4693 = vsel %vm4440, %v4396, 0.0
    %4694 = vadd.xlane.f32.xlu0 %v4693
    %v4695 = vpop.xlane.xlu0 %4694
    %v4696 = vsel %vm4440, %v4397, 0.0
    %4697 = vadd.xlane.f32.xlu0 %v4696
    %v4698 = vpop.xlane.xlu0 %4697
    %v4699 = vsel %vm4440, %v4398, 0.0
    %4700 = vadd.xlane.f32.xlu0 %v4699
    %v4701 = vpop.xlane.xlu0 %4700
    %v4702 = vsel %vm4440, %v4399, 0.0
    %4703 = vadd.xlane.f32.xlu0 %v4702
    %v4704 = vpop.xlane.xlu0 %4703
    %v4705 = vsel %vm4440, %v4400, 0.0
    %4706 = vadd.xlane.f32.xlu0 %v4705
    %v4707 = vpop.xlane.xlu0 %4706
    %v4708 = vsel %vm4440, %v4401, 0.0
    %4709 = vadd.xlane.f32.xlu0 %v4708
    %v4710 = vpop.xlane.xlu0 %4709
    %v4711 = vsel %vm4440, %v4402, 0.0
    %4712 = vadd.xlane.f32.xlu0 %v4711
    %v4713 = vpop.xlane.xlu0 %4712
    %v4714 = vsel %vm4440, %v4403, 0.0
    %4715 = vadd.xlane.f32.xlu0 %v4714
    %v4716 = vpop.xlane.xlu0 %4715
    %v4717 = vsel %vm4440, %v4404, 0.0
    %4718 = vadd.xlane.f32.xlu0 %v4717
    %v4719 = vpop.xlane.xlu0 %4718
    %v4720 = vsel %vm4440, %v4405, 0.0
    %4721 = vadd.xlane.f32.xlu0 %v4720
    %v4722 = vpop.xlane.xlu0 %4721
    %v4723 = vsel %vm4440, %v4406, 0.0
    %4724 = vadd.xlane.f32.xlu0 %v4723
    %v4725 = vpop.xlane.xlu0 %4724
    %v4726 = vsel %vm4440, %v4407, 0.0
    %4727 = vadd.xlane.f32.xlu0 %v4726
    %v4728 = vpop.xlane.xlu0 %4727
    %v4729 = vsel %vm4440, %v4408, 0.0
    %4730 = vadd.xlane.f32.xlu0 %v4729
    %v4731 = vpop.xlane.xlu0 %4730
    %v4732 = vsel %vm4440, %v4409, 0.0
    %4733 = vadd.xlane.f32.xlu0 %v4732
    %v4734 = vpop.xlane.xlu0 %4733
    %v4735 = vsel %vm4440, %v4410, 0.0
    %4736 = vadd.xlane.f32.xlu0 %v4735
    %v4737 = vpop.xlane.xlu0 %4736
    %v4738 = vsel %vm4440, %v4411, 0.0
    %4739 = vadd.xlane.f32.xlu0 %v4738
    %v4740 = vpop.xlane.xlu0 %4739
    %v4741 = vsel %vm4440, %v4412, 0.0
    %4742 = vadd.xlane.f32.xlu0 %v4741
    %v4743 = vpop.xlane.xlu0 %4742
    %v4744 = vsel %vm4440, %v4413, 0.0
    %4745 = vadd.xlane.f32.xlu0 %v4744
    %v4746 = vpop.xlane.xlu0 %4745
    %v4747 = vsel %vm4440, %v4414, 0.0
    %4748 = vadd.xlane.f32.xlu0 %v4747
    %v4749 = vpop.xlane.xlu0 %4748
    %v4750 = vsel %vm4440, %v4415, 0.0
    %4751 = vadd.xlane.f32.xlu0 %v4750
    %v4752 = vpop.xlane.xlu0 %4751
    %v4753 = vsel %vm4440, %v4416, 0.0
    %4754 = vadd.xlane.f32.xlu0 %v4753
    %v4755 = vpop.xlane.xlu0 %4754
    %v4756 = vsel %vm4440, %v4417, 0.0
    %4757 = vadd.xlane.f32.xlu0 %v4756
    %v4758 = vpop.xlane.xlu0 %4757
    %v4759 = vsel %vm4440, %v4418, 0.0
    %4760 = vadd.xlane.f32.xlu0 %v4759
    %v4761 = vpop.xlane.xlu0 %4760
    %v4762 = vsel %vm4440, %v4419, 0.0
    %4763 = vadd.xlane.f32.xlu0 %v4762
    %v4764 = vpop.xlane.xlu0 %4763
    %v4765 = vsel %vm4440, %v4420, 0.0
    %4766 = vadd.xlane.f32.xlu0 %v4765
    %v4767 = vpop.xlane.xlu0 %4766
    %v4768 = vsel %vm4440, %v4421, 0.0
    %4769 = vadd.xlane.f32.xlu0 %v4768
    %v4770 = vpop.xlane.xlu0 %4769
    %v4771 = vsel %vm4440, %v4422, 0.0
    %4772 = vadd.xlane.f32.xlu0 %v4771
    %v4773 = vpop.xlane.xlu0 %4772
    %v4774 = vsel %vm4440, %v4423, 0.0
    %4775 = vadd.xlane.f32.xlu0 %v4774
    %v4776 = vpop.xlane.xlu0 %4775
    %v4777 = vsel %vm4440, %v4424, 0.0
    %4778 = vadd.xlane.f32.xlu0 %v4777
    %v4779 = vpop.xlane.xlu0 %4778
    %v4780 = vsel %vm4440, %v4425, 0.0
    %4781 = vadd.xlane.f32.xlu0 %v4780
    %v4782 = vpop.xlane.xlu0 %4781
    %v4783 = vsel %vm4440, %v4426, 0.0
    %4784 = vadd.xlane.f32.xlu0 %v4783
    %v4785 = vpop.xlane.xlu0 %4784
    %v4786 = vsel %vm4440, %v4427, 0.0
    %4787 = vadd.xlane.f32.xlu0 %v4786
    %v4788 = vpop.xlane.xlu0 %4787
    %v4789 = vsel %vm4440, %v4428, 0.0
    %4790 = vadd.xlane.f32.xlu0 %v4789
    %v4791 = vpop.xlane.xlu0 %4790
    %v4792 = vsel %vm4440, %v4429, 0.0
    %4793 = vadd.xlane.f32.xlu0 %v4792
    %v4794 = vpop.xlane.xlu0 %4793
    %v4795 = vsel %vm4440, %v4430, 0.0
    %4796 = vadd.xlane.f32.xlu0 %v4795
    %v4797 = vpop.xlane.xlu0 %4796
    %v4798 = vsel %vm4440, %v4431, 0.0
    %4799 = vadd.xlane.f32.xlu0 %v4798
    %v4800 = vpop.xlane.xlu0 %4799
    %v4801 = vsel %vm4440, %v4432, 0.0
    %4802 = vadd.xlane.f32.xlu0 %v4801
    %v4803 = vpop.xlane.xlu0 %4802
    %v4804 = vsel %vm4440, %v4433, 0.0
    %4805 = vadd.xlane.f32.xlu0 %v4804
    %v4806 = vpop.xlane.xlu0 %4805
    %v4807 = vsel %vm4440, %v4434, 0.0
    %4808 = vadd.xlane.f32.xlu0 %v4807
    %v4809 = vpop.xlane.xlu0 %4808
    %v4810 = vsel %vm4440, %v4435, 0.0
    %4811 = vadd.xlane.f32.xlu0 %v4810
    %v4812 = vpop.xlane.xlu0 %4811
    %v4813 = vsel %vm4440, %v4436, 0.0
    %4814 = vadd.xlane.f32.xlu0 %v4813
    %v4815 = vpop.xlane.xlu0 %4814
    %v4816 = vsel %vm4440, %v4437, 0.0
    %4817 = vadd.xlane.f32.xlu0 %v4816
    %v4818 = vpop.xlane.xlu0 %4817
    %v4819 = vsel %vm4440, %v4438, 0.0
    %4820 = vadd.xlane.f32.xlu0 %v4819
    %v4821 = vpop.xlane.xlu0 %4820
    %v4822 = vsel %vm4440, %v4439, 0.0
    %4823 = vadd.xlane.f32.xlu0 %v4822
    %v4824 = vpop.xlane.xlu0 %4823
    %v4953 = vlaneseq
    %v4954 = vand.u32 %v4953, 127
    %v4955 = vlaneseq
    %v4956 = vshrl.u32 %v4955, 7
    %v4957 = vsub.s32 %v4954, %v4956
    %v4958 = vrot.slane %v4443, %v4957
    %v4959 = vadd.s32 %v4954, 4294967288
    %v4960 = vlaneseq
    %v4961 = vshrl.u32 %v4960, 7
    %v4962 = vsub.s32 %v4959, %v4961
    %v4963 = vrot.slane %v4446, %v4962
    %vm4964 = vcmask 130112
    %v4965 = vsel %vm4964, %v4963, %v4958
    %v4966 = vadd.s32 %v4954, 4294967280
    %v4967 = vlaneseq
    %v4968 = vshrl.u32 %v4967, 7
    %v4969 = vsub.s32 %v4966, %v4968
    %v4970 = vrot.slane %v4449, %v4969
    %vm4971 = vcmask 195712
    %v4972 = vsel %vm4971, %v4970, %v4965
    %v4973 = vadd.s32 %v4954, 4294967272
    %v4974 = vlaneseq
    %v4975 = vshrl.u32 %v4974, 7
    %v4976 = vsub.s32 %v4973, %v4975
    %v4977 = vrot.slane %v4452, %v4976
    %vm4978 = vcmask 261312
    %v4979 = vsel %vm4978, %v4977, %v4972
    %v4980 = vlaneseq
    %v4981 = vshrl.u32 %v4980, 7
    %v4982 = vsub.s32 %v4954, %v4981
    %v4983 = vrot.slane %v4455, %v4982
    %v4984 = vlaneseq
    %v4985 = vshrl.u32 %v4984, 7
    %v4986 = vsub.s32 %v4959, %v4985
    %v4987 = vrot.slane %v4458, %v4986
    %v4988 = vsel %vm4964, %v4987, %v4983
    %v4989 = vlaneseq
    %v4990 = vshrl.u32 %v4989, 7
    %v4991 = vsub.s32 %v4966, %v4990
    %v4992 = vrot.slane %v4461, %v4991
    %v4993 = vsel %vm4971, %v4992, %v4988
    %v4994 = vlaneseq
    %v4995 = vshrl.u32 %v4994, 7
    %v4996 = vsub.s32 %v4973, %v4995
    %v4997 = vrot.slane %v4464, %v4996
    %v4998 = vsel %vm4978, %v4997, %v4993
    %v4999 = vlaneseq
    %v5000 = vshrl.u32 %v4999, 7
    %v5001 = vsub.s32 %v4954, %v5000
    %v5002 = vrot.slane %v4467, %v5001
    %v5003 = vlaneseq
    %v5004 = vshrl.u32 %v5003, 7
    %v5005 = vsub.s32 %v4959, %v5004
    %v5006 = vrot.slane %v4470, %v5005
    %v5007 = vsel %vm4964, %v5006, %v5002
    %v5008 = vlaneseq
    %v5009 = vshrl.u32 %v5008, 7
    %v5010 = vsub.s32 %v4966, %v5009
    %v5011 = vrot.slane %v4473, %v5010
    %v5012 = vsel %vm4971, %v5011, %v5007
    %v5013 = vlaneseq
    %v5014 = vshrl.u32 %v5013, 7
    %v5015 = vsub.s32 %v4973, %v5014
    %v5016 = vrot.slane %v4476, %v5015
    %v5017 = vsel %vm4978, %v5016, %v5012
    %v5018 = vlaneseq
    %v5019 = vshrl.u32 %v5018, 7
    %v5020 = vsub.s32 %v4954, %v5019
    %v5021 = vrot.slane %v4479, %v5020
    %v5022 = vlaneseq
    %v5023 = vshrl.u32 %v5022, 7
    %v5024 = vsub.s32 %v4959, %v5023
    %v5025 = vrot.slane %v4482, %v5024
    %v5026 = vsel %vm4964, %v5025, %v5021
    %v5027 = vlaneseq
    %v5028 = vshrl.u32 %v5027, 7
    %v5029 = vsub.s32 %v4966, %v5028
    %v5030 = vrot.slane %v4485, %v5029
    %v5031 = vsel %vm4971, %v5030, %v5026
    %v5032 = vlaneseq
    %v5033 = vshrl.u32 %v5032, 7
    %v5034 = vsub.s32 %v4973, %v5033
    %v5035 = vrot.slane %v4488, %v5034
    %v5036 = vsel %vm4978, %v5035, %v5031
    %v5037 = vlaneseq
    %v5038 = vshrl.u32 %v5037, 7
    %v5039 = vsub.s32 %v4954, %v5038
    %v5040 = vrot.slane %v4491, %v5039
    %v5041 = vlaneseq
    %v5042 = vshrl.u32 %v5041, 7
    %v5043 = vsub.s32 %v4959, %v5042
    %v5044 = vrot.slane %v4494, %v5043
    %v5045 = vsel %vm4964, %v5044, %v5040
    %v5046 = vlaneseq
    %v5047 = vshrl.u32 %v5046, 7
    %v5048 = vsub.s32 %v4966, %v5047
    %v5049 = vrot.slane %v4497, %v5048
    %v5050 = vsel %vm4971, %v5049, %v5045
    %v5051 = vlaneseq
    %v5052 = vshrl.u32 %v5051, 7
    %v5053 = vsub.s32 %v4973, %v5052
    %v5054 = vrot.slane %v4500, %v5053
    %v5055 = vsel %vm4978, %v5054, %v5050
    %v5056 = vlaneseq
    %v5057 = vshrl.u32 %v5056, 7
    %v5058 = vsub.s32 %v4954, %v5057
    %v5059 = vrot.slane %v4503, %v5058
    %v5060 = vlaneseq
    %v5061 = vshrl.u32 %v5060, 7
    %v5062 = vsub.s32 %v4959, %v5061
    %v5063 = vrot.slane %v4506, %v5062
    %v5064 = vsel %vm4964, %v5063, %v5059
    %v5065 = vlaneseq
    %v5066 = vshrl.u32 %v5065, 7
    %v5067 = vsub.s32 %v4966, %v5066
    %v5068 = vrot.slane %v4509, %v5067
    %v5069 = vsel %vm4971, %v5068, %v5064
    %v5070 = vlaneseq
    %v5071 = vshrl.u32 %v5070, 7
    %v5072 = vsub.s32 %v4973, %v5071
    %v5073 = vrot.slane %v4512, %v5072
    %v5074 = vsel %vm4978, %v5073, %v5069
    %v5075 = vlaneseq
    %v5076 = vshrl.u32 %v5075, 7
    %v5077 = vsub.s32 %v4954, %v5076
    %v5078 = vrot.slane %v4515, %v5077
    %v5079 = vlaneseq
    %v5080 = vshrl.u32 %v5079, 7
    %v5081 = vsub.s32 %v4959, %v5080
    %v5082 = vrot.slane %v4518, %v5081
    %v5083 = vsel %vm4964, %v5082, %v5078
    %v5084 = vlaneseq
    %v5085 = vshrl.u32 %v5084, 7
    %v5086 = vsub.s32 %v4966, %v5085
    %v5087 = vrot.slane %v4521, %v5086
    %v5088 = vsel %vm4971, %v5087, %v5083
    %v5089 = vlaneseq
    %v5090 = vshrl.u32 %v5089, 7
    %v5091 = vsub.s32 %v4973, %v5090
    %v5092 = vrot.slane %v4524, %v5091
    %v5093 = vsel %vm4978, %v5092, %v5088
    %v5094 = vlaneseq
    %v5095 = vshrl.u32 %v5094, 7
    %v5096 = vsub.s32 %v4954, %v5095
    %v5097 = vrot.slane %v4527, %v5096
    %v5098 = vlaneseq
    %v5099 = vshrl.u32 %v5098, 7
    %v5100 = vsub.s32 %v4959, %v5099
    %v5101 = vrot.slane %v4530, %v5100
    %v5102 = vsel %vm4964, %v5101, %v5097
    %v5103 = vlaneseq
    %v5104 = vshrl.u32 %v5103, 7
    %v5105 = vsub.s32 %v4966, %v5104
    %v5106 = vrot.slane %v4533, %v5105
    %v5107 = vsel %vm4971, %v5106, %v5102
    %v5108 = vlaneseq
    %v5109 = vshrl.u32 %v5108, 7
    %v5110 = vsub.s32 %v4973, %v5109
    %v5111 = vrot.slane %v4536, %v5110
    %v5112 = vsel %vm4978, %v5111, %v5107
    %v5113 = vlaneseq
    %v5114 = vshrl.u32 %v5113, 7
    %v5115 = vsub.s32 %v4954, %v5114
    %v5116 = vrot.slane %v4539, %v5115
    %v5117 = vlaneseq
    %v5118 = vshrl.u32 %v5117, 7
    %v5119 = vsub.s32 %v4959, %v5118
    %v5120 = vrot.slane %v4542, %v5119
    %v5121 = vsel %vm4964, %v5120, %v5116
    %v5122 = vlaneseq
    %v5123 = vshrl.u32 %v5122, 7
    %v5124 = vsub.s32 %v4966, %v5123
    %v5125 = vrot.slane %v4545, %v5124
    %v5126 = vsel %vm4971, %v5125, %v5121
    %v5127 = vlaneseq
    %v5128 = vshrl.u32 %v5127, 7
    %v5129 = vsub.s32 %v4973, %v5128
    %v5130 = vrot.slane %v4548, %v5129
    %v5131 = vsel %vm4978, %v5130, %v5126
    %v5132 = vlaneseq
    %v5133 = vshrl.u32 %v5132, 7
    %v5134 = vsub.s32 %v4954, %v5133
    %v5135 = vrot.slane %v4551, %v5134
    %v5136 = vlaneseq
    %v5137 = vshrl.u32 %v5136, 7
    %v5138 = vsub.s32 %v4959, %v5137
    %v5139 = vrot.slane %v4554, %v5138
    %v5140 = vsel %vm4964, %v5139, %v5135
    %v5141 = vlaneseq
    %v5142 = vshrl.u32 %v5141, 7
    %v5143 = vsub.s32 %v4966, %v5142
    %v5144 = vrot.slane %v4557, %v5143
    %v5145 = vsel %vm4971, %v5144, %v5140
    %v5146 = vlaneseq
    %v5147 = vshrl.u32 %v5146, 7
    %v5148 = vsub.s32 %v4973, %v5147
    %v5149 = vrot.slane %v4560, %v5148
    %v5150 = vsel %vm4978, %v5149, %v5145
    %v5151 = vlaneseq
    %v5152 = vshrl.u32 %v5151, 7
    %v5153 = vsub.s32 %v4954, %v5152
    %v5154 = vrot.slane %v4563, %v5153
    %v5155 = vlaneseq
    %v5156 = vshrl.u32 %v5155, 7
    %v5157 = vsub.s32 %v4959, %v5156
    %v5158 = vrot.slane %v4566, %v5157
    %v5159 = vsel %vm4964, %v5158, %v5154
    %v5160 = vlaneseq
    %v5161 = vshrl.u32 %v5160, 7
    %v5162 = vsub.s32 %v4966, %v5161
    %v5163 = vrot.slane %v4569, %v5162
    %v5164 = vsel %vm4971, %v5163, %v5159
    %v5165 = vlaneseq
    %v5166 = vshrl.u32 %v5165, 7
    %v5167 = vsub.s32 %v4973, %v5166
    %v5168 = vrot.slane %v4572, %v5167
    %v5169 = vsel %vm4978, %v5168, %v5164
    %v5170 = vlaneseq
    %v5171 = vshrl.u32 %v5170, 7
    %v5172 = vsub.s32 %v4954, %v5171
    %v5173 = vrot.slane %v4575, %v5172
    %v5174 = vlaneseq
    %v5175 = vshrl.u32 %v5174, 7
    %v5176 = vsub.s32 %v4959, %v5175
    %v5177 = vrot.slane %v4578, %v5176
    %v5178 = vsel %vm4964, %v5177, %v5173
    %v5179 = vlaneseq
    %v5180 = vshrl.u32 %v5179, 7
    %v5181 = vsub.s32 %v4966, %v5180
    %v5182 = vrot.slane %v4581, %v5181
    %v5183 = vsel %vm4971, %v5182, %v5178
    %v5184 = vlaneseq
    %v5185 = vshrl.u32 %v5184, 7
    %v5186 = vsub.s32 %v4973, %v5185
    %v5187 = vrot.slane %v4584, %v5186
    %v5188 = vsel %vm4978, %v5187, %v5183
    %v5189 = vlaneseq
    %v5190 = vshrl.u32 %v5189, 7
    %v5191 = vsub.s32 %v4954, %v5190
    %v5192 = vrot.slane %v4587, %v5191
    %v5193 = vlaneseq
    %v5194 = vshrl.u32 %v5193, 7
    %v5195 = vsub.s32 %v4959, %v5194
    %v5196 = vrot.slane %v4590, %v5195
    %v5197 = vsel %vm4964, %v5196, %v5192
    %v5198 = vlaneseq
    %v5199 = vshrl.u32 %v5198, 7
    %v5200 = vsub.s32 %v4966, %v5199
    %v5201 = vrot.slane %v4593, %v5200
    %v5202 = vsel %vm4971, %v5201, %v5197
    %v5203 = vlaneseq
    %v5204 = vshrl.u32 %v5203, 7
    %v5205 = vsub.s32 %v4973, %v5204
    %v5206 = vrot.slane %v4596, %v5205
    %v5207 = vsel %vm4978, %v5206, %v5202
    %v5208 = vlaneseq
    %v5209 = vshrl.u32 %v5208, 7
    %v5210 = vsub.s32 %v4954, %v5209
    %v5211 = vrot.slane %v4599, %v5210
    %v5212 = vlaneseq
    %v5213 = vshrl.u32 %v5212, 7
    %v5214 = vsub.s32 %v4959, %v5213
    %v5215 = vrot.slane %v4602, %v5214
    %v5216 = vsel %vm4964, %v5215, %v5211
    %v5217 = vlaneseq
    %v5218 = vshrl.u32 %v5217, 7
    %v5219 = vsub.s32 %v4966, %v5218
    %v5220 = vrot.slane %v4605, %v5219
    %v5221 = vsel %vm4971, %v5220, %v5216
    %v5222 = vlaneseq
    %v5223 = vshrl.u32 %v5222, 7
    %v5224 = vsub.s32 %v4973, %v5223
    %v5225 = vrot.slane %v4608, %v5224
    %v5226 = vsel %vm4978, %v5225, %v5221
    %v5227 = vlaneseq
    %v5228 = vshrl.u32 %v5227, 7
    %v5229 = vsub.s32 %v4954, %v5228
    %v5230 = vrot.slane %v4611, %v5229
    %v5231 = vlaneseq
    %v5232 = vshrl.u32 %v5231, 7
    %v5233 = vsub.s32 %v4959, %v5232
    %v5234 = vrot.slane %v4614, %v5233
    %v5235 = vsel %vm4964, %v5234, %v5230
    %v5236 = vlaneseq
    %v5237 = vshrl.u32 %v5236, 7
    %v5238 = vsub.s32 %v4966, %v5237
    %v5239 = vrot.slane %v4617, %v5238
    %v5240 = vsel %vm4971, %v5239, %v5235
    %v5241 = vlaneseq
    %v5242 = vshrl.u32 %v5241, 7
    %v5243 = vsub.s32 %v4973, %v5242
    %v5244 = vrot.slane %v4620, %v5243
    %v5245 = vsel %vm4978, %v5244, %v5240
    %v5246 = vlaneseq
    %v5247 = vshrl.u32 %v5246, 7
    %v5248 = vsub.s32 %v4954, %v5247
    %v5249 = vrot.slane %v4623, %v5248
    %v5250 = vlaneseq
    %v5251 = vshrl.u32 %v5250, 7
    %v5252 = vsub.s32 %v4959, %v5251
    %v5253 = vrot.slane %v4626, %v5252
    %v5254 = vsel %vm4964, %v5253, %v5249
    %v5255 = vlaneseq
    %v5256 = vshrl.u32 %v5255, 7
    %v5257 = vsub.s32 %v4966, %v5256
    %v5258 = vrot.slane %v4629, %v5257
    %v5259 = vsel %vm4971, %v5258, %v5254
    %v5260 = vlaneseq
    %v5261 = vshrl.u32 %v5260, 7
    %v5262 = vsub.s32 %v4973, %v5261
    %v5263 = vrot.slane %v4632, %v5262
    %v5264 = vsel %vm4978, %v5263, %v5259
    %v5265 = vlaneseq
    %v5266 = vshrl.u32 %v5265, 7
    %v5267 = vsub.s32 %v4954, %v5266
    %v5268 = vrot.slane %v4635, %v5267
    %v5269 = vlaneseq
    %v5270 = vshrl.u32 %v5269, 7
    %v5271 = vsub.s32 %v4959, %v5270
    %v5272 = vrot.slane %v4638, %v5271
    %v5273 = vsel %vm4964, %v5272, %v5268
    %v5274 = vlaneseq
    %v5275 = vshrl.u32 %v5274, 7
    %v5276 = vsub.s32 %v4966, %v5275
    %v5277 = vrot.slane %v4641, %v5276
    %v5278 = vsel %vm4971, %v5277, %v5273
    %v5279 = vlaneseq
    %v5280 = vshrl.u32 %v5279, 7
    %v5281 = vsub.s32 %v4973, %v5280
    %v5282 = vrot.slane %v4644, %v5281
    %v5283 = vsel %vm4978, %v5282, %v5278
    %v5284 = vlaneseq
    %v5285 = vshrl.u32 %v5284, 7
    %v5286 = vsub.s32 %v4954, %v5285
    %v5287 = vrot.slane %v4647, %v5286
    %v5288 = vlaneseq
    %v5289 = vshrl.u32 %v5288, 7
    %v5290 = vsub.s32 %v4959, %v5289
    %v5291 = vrot.slane %v4650, %v5290
    %v5292 = vsel %vm4964, %v5291, %v5287
    %v5293 = vlaneseq
    %v5294 = vshrl.u32 %v5293, 7
    %v5295 = vsub.s32 %v4966, %v5294
    %v5296 = vrot.slane %v4653, %v5295
    %v5297 = vsel %vm4971, %v5296, %v5292
    %v5298 = vlaneseq
    %v5299 = vshrl.u32 %v5298, 7
    %v5300 = vsub.s32 %v4973, %v5299
    %v5301 = vrot.slane %v4656, %v5300
    %v5302 = vsel %vm4978, %v5301, %v5297
    %v5303 = vlaneseq
    %v5304 = vshrl.u32 %v5303, 7
    %v5305 = vsub.s32 %v4954, %v5304
    %v5306 = vrot.slane %v4659, %v5305
    %v5307 = vlaneseq
    %v5308 = vshrl.u32 %v5307, 7
    %v5309 = vsub.s32 %v4959, %v5308
    %v5310 = vrot.slane %v4662, %v5309
    %v5311 = vsel %vm4964, %v5310, %v5306
    %v5312 = vlaneseq
    %v5313 = vshrl.u32 %v5312, 7
    %v5314 = vsub.s32 %v4966, %v5313
    %v5315 = vrot.slane %v4665, %v5314
    %v5316 = vsel %vm4971, %v5315, %v5311
    %v5317 = vlaneseq
    %v5318 = vshrl.u32 %v5317, 7
    %v5319 = vsub.s32 %v4973, %v5318
    %v5320 = vrot.slane %v4668, %v5319
    %v5321 = vsel %vm4978, %v5320, %v5316
    %v5322 = vlaneseq
    %v5323 = vshrl.u32 %v5322, 7
    %v5324 = vsub.s32 %v4954, %v5323
    %v5325 = vrot.slane %v4671, %v5324
    %v5326 = vlaneseq
    %v5327 = vshrl.u32 %v5326, 7
    %v5328 = vsub.s32 %v4959, %v5327
    %v5329 = vrot.slane %v4674, %v5328
    %v5330 = vsel %vm4964, %v5329, %v5325
    %v5331 = vlaneseq
    %v5332 = vshrl.u32 %v5331, 7
    %v5333 = vsub.s32 %v4966, %v5332
    %v5334 = vrot.slane %v4677, %v5333
    %v5335 = vsel %vm4971, %v5334, %v5330
    %v5336 = vlaneseq
    %v5337 = vshrl.u32 %v5336, 7
    %v5338 = vsub.s32 %v4973, %v5337
    %v5339 = vrot.slane %v4680, %v5338
    %v5340 = vsel %vm4978, %v5339, %v5335
    %v5341 = vlaneseq
    %v5342 = vshrl.u32 %v5341, 7
    %v5343 = vsub.s32 %v4954, %v5342
    %v5344 = vrot.slane %v4683, %v5343
    %v5345 = vlaneseq
    %v5346 = vshrl.u32 %v5345, 7
    %v5347 = vsub.s32 %v4959, %v5346
    %v5348 = vrot.slane %v4686, %v5347
    %v5349 = vsel %vm4964, %v5348, %v5344
    %v5350 = vlaneseq
    %v5351 = vshrl.u32 %v5350, 7
    %v5352 = vsub.s32 %v4966, %v5351
    %v5353 = vrot.slane %v4689, %v5352
    %v5354 = vsel %vm4971, %v5353, %v5349
    %v5355 = vlaneseq
    %v5356 = vshrl.u32 %v5355, 7
    %v5357 = vsub.s32 %v4973, %v5356
    %v5358 = vrot.slane %v4692, %v5357
    %v5359 = vsel %vm4978, %v5358, %v5354
    %v5360 = vlaneseq
    %v5361 = vshrl.u32 %v5360, 7
    %v5362 = vsub.s32 %v4954, %v5361
    %v5363 = vrot.slane %v4695, %v5362
    %v5364 = vlaneseq
    %v5365 = vshrl.u32 %v5364, 7
    %v5366 = vsub.s32 %v4959, %v5365
    %v5367 = vrot.slane %v4698, %v5366
    %v5368 = vsel %vm4964, %v5367, %v5363
    %v5369 = vlaneseq
    %v5370 = vshrl.u32 %v5369, 7
    %v5371 = vsub.s32 %v4966, %v5370
    %v5372 = vrot.slane %v4701, %v5371
    %v5373 = vsel %vm4971, %v5372, %v5368
    %v5374 = vlaneseq
    %v5375 = vshrl.u32 %v5374, 7
    %v5376 = vsub.s32 %v4973, %v5375
    %v5377 = vrot.slane %v4704, %v5376
    %v5378 = vsel %vm4978, %v5377, %v5373
    %v5379 = vlaneseq
    %v5380 = vshrl.u32 %v5379, 7
    %v5381 = vsub.s32 %v4954, %v5380
    %v5382 = vrot.slane %v4707, %v5381
    %v5383 = vlaneseq
    %v5384 = vshrl.u32 %v5383, 7
    %v5385 = vsub.s32 %v4959, %v5384
    %v5386 = vrot.slane %v4710, %v5385
    %v5387 = vsel %vm4964, %v5386, %v5382
    %v5388 = vlaneseq
    %v5389 = vshrl.u32 %v5388, 7
    %v5390 = vsub.s32 %v4966, %v5389
    %v5391 = vrot.slane %v4713, %v5390
    %v5392 = vsel %vm4971, %v5391, %v5387
    %v5393 = vlaneseq
    %v5394 = vshrl.u32 %v5393, 7
    %v5395 = vsub.s32 %v4973, %v5394
    %v5396 = vrot.slane %v4716, %v5395
    %v5397 = vsel %vm4978, %v5396, %v5392
    %v5398 = vlaneseq
    %v5399 = vshrl.u32 %v5398, 7
    %v5400 = vsub.s32 %v4954, %v5399
    %v5401 = vrot.slane %v4719, %v5400
    %v5402 = vlaneseq
    %v5403 = vshrl.u32 %v5402, 7
    %v5404 = vsub.s32 %v4959, %v5403
    %v5405 = vrot.slane %v4722, %v5404
    %v5406 = vsel %vm4964, %v5405, %v5401
    %v5407 = vlaneseq
    %v5408 = vshrl.u32 %v5407, 7
    %v5409 = vsub.s32 %v4966, %v5408
    %v5410 = vrot.slane %v4725, %v5409
    %v5411 = vsel %vm4971, %v5410, %v5406
    %v5412 = vlaneseq
    %v5413 = vshrl.u32 %v5412, 7
    %v5414 = vsub.s32 %v4973, %v5413
    %v5415 = vrot.slane %v4728, %v5414
    %v5416 = vsel %vm4978, %v5415, %v5411
    %v5417 = vlaneseq
    %v5418 = vshrl.u32 %v5417, 7
    %v5419 = vsub.s32 %v4954, %v5418
    %v5420 = vrot.slane %v4731, %v5419
    %v5421 = vlaneseq
    %v5422 = vshrl.u32 %v5421, 7
    %v5423 = vsub.s32 %v4959, %v5422
    %v5424 = vrot.slane %v4734, %v5423
    %v5425 = vsel %vm4964, %v5424, %v5420
    %v5426 = vlaneseq
    %v5427 = vshrl.u32 %v5426, 7
    %v5428 = vsub.s32 %v4966, %v5427
    %v5429 = vrot.slane %v4737, %v5428
    %v5430 = vsel %vm4971, %v5429, %v5425
    %v5431 = vlaneseq
    %v5432 = vshrl.u32 %v5431, 7
    %v5433 = vsub.s32 %v4973, %v5432
    %v5434 = vrot.slane %v4740, %v5433
    %v5435 = vsel %vm4978, %v5434, %v5430
    %v5436 = vlaneseq
    %v5437 = vshrl.u32 %v5436, 7
    %v5438 = vsub.s32 %v4954, %v5437
    %v5439 = vrot.slane %v4743, %v5438
    %v5440 = vlaneseq
    %v5441 = vshrl.u32 %v5440, 7
    %v5442 = vsub.s32 %v4959, %v5441
    %v5443 = vrot.slane %v4746, %v5442
    %v5444 = vsel %vm4964, %v5443, %v5439
    %v5445 = vlaneseq
    %v5446 = vshrl.u32 %v5445, 7
    %v5447 = vsub.s32 %v4966, %v5446
    %v5448 = vrot.slane %v4749, %v5447
    %v5449 = vsel %vm4971, %v5448, %v5444
    %v5450 = vlaneseq
    %v5451 = vshrl.u32 %v5450, 7
    %v5452 = vsub.s32 %v4973, %v5451
    %v5453 = vrot.slane %v4752, %v5452
    %v5454 = vsel %vm4978, %v5453, %v5449
    %v5455 = vlaneseq
    %v5456 = vshrl.u32 %v5455, 7
    %v5457 = vsub.s32 %v4954, %v5456
    %v5458 = vrot.slane %v4755, %v5457
    %v5459 = vlaneseq
    %v5460 = vshrl.u32 %v5459, 7
    %v5461 = vsub.s32 %v4959, %v5460
    %v5462 = vrot.slane %v4758, %v5461
    %v5463 = vsel %vm4964, %v5462, %v5458
    %v5464 = vlaneseq
    %v5465 = vshrl.u32 %v5464, 7
    %v5466 = vsub.s32 %v4966, %v5465
    %v5467 = vrot.slane %v4761, %v5466
    %v5468 = vsel %vm4971, %v5467, %v5463
    %v5469 = vlaneseq
    %v5470 = vshrl.u32 %v5469, 7
    %v5471 = vsub.s32 %v4973, %v5470
    %v5472 = vrot.slane %v4764, %v5471
    %v5473 = vsel %vm4978, %v5472, %v5468
    %v5474 = vlaneseq
    %v5475 = vshrl.u32 %v5474, 7
    %v5476 = vsub.s32 %v4954, %v5475
    %v5477 = vrot.slane %v4767, %v5476
    %v5478 = vlaneseq
    %v5479 = vshrl.u32 %v5478, 7
    %v5480 = vsub.s32 %v4959, %v5479
    %v5481 = vrot.slane %v4770, %v5480
    %v5482 = vsel %vm4964, %v5481, %v5477
    %v5483 = vlaneseq
    %v5484 = vshrl.u32 %v5483, 7
    %v5485 = vsub.s32 %v4966, %v5484
    %v5486 = vrot.slane %v4773, %v5485
    %v5487 = vsel %vm4971, %v5486, %v5482
    %v5488 = vlaneseq
    %v5489 = vshrl.u32 %v5488, 7
    %v5490 = vsub.s32 %v4973, %v5489
    %v5491 = vrot.slane %v4776, %v5490
    %v5492 = vsel %vm4978, %v5491, %v5487
    %v5493 = vlaneseq
    %v5494 = vshrl.u32 %v5493, 7
    %v5495 = vsub.s32 %v4954, %v5494
    %v5496 = vrot.slane %v4779, %v5495
    %v5497 = vlaneseq
    %v5498 = vshrl.u32 %v5497, 7
    %v5499 = vsub.s32 %v4959, %v5498
    %v5500 = vrot.slane %v4782, %v5499
    %v5501 = vsel %vm4964, %v5500, %v5496
    %v5502 = vlaneseq
    %v5503 = vshrl.u32 %v5502, 7
    %v5504 = vsub.s32 %v4966, %v5503
    %v5505 = vrot.slane %v4785, %v5504
    %v5506 = vsel %vm4971, %v5505, %v5501
    %v5507 = vlaneseq
    %v5508 = vshrl.u32 %v5507, 7
    %v5509 = vsub.s32 %v4973, %v5508
    %v5510 = vrot.slane %v4788, %v5509
    %v5511 = vsel %vm4978, %v5510, %v5506
    %v5512 = vlaneseq
    %v5513 = vshrl.u32 %v5512, 7
    %v5514 = vsub.s32 %v4954, %v5513
    %v5515 = vrot.slane %v4791, %v5514
    %v5516 = vlaneseq
    %v5517 = vshrl.u32 %v5516, 7
    %v5518 = vsub.s32 %v4959, %v5517
    %v5519 = vrot.slane %v4794, %v5518
    %v5520 = vsel %vm4964, %v5519, %v5515
    %v5521 = vlaneseq
    %v5522 = vshrl.u32 %v5521, 7
    %v5523 = vsub.s32 %v4966, %v5522
    %v5524 = vrot.slane %v4797, %v5523
    %v5525 = vsel %vm4971, %v5524, %v5520
    %v5526 = vlaneseq
    %v5527 = vshrl.u32 %v5526, 7
    %v5528 = vsub.s32 %v4973, %v5527
    %v5529 = vrot.slane %v4800, %v5528
    %v5530 = vsel %vm4978, %v5529, %v5525
    %v5531 = vlaneseq
    %v5532 = vshrl.u32 %v5531, 7
    %v5533 = vsub.s32 %v4954, %v5532
    %v5534 = vrot.slane %v4803, %v5533
    %v5535 = vlaneseq
    %v5536 = vshrl.u32 %v5535, 7
    %v5537 = vsub.s32 %v4959, %v5536
    %v5538 = vrot.slane %v4806, %v5537
    %v5539 = vsel %vm4964, %v5538, %v5534
    %v5540 = vlaneseq
    %v5541 = vshrl.u32 %v5540, 7
    %v5542 = vsub.s32 %v4966, %v5541
    %v5543 = vrot.slane %v4809, %v5542
    %v5544 = vsel %vm4971, %v5543, %v5539
    %v5545 = vlaneseq
    %v5546 = vshrl.u32 %v5545, 7
    %v5547 = vsub.s32 %v4973, %v5546
    %v5548 = vrot.slane %v4812, %v5547
    %v5549 = vsel %vm4978, %v5548, %v5544
    %v5550 = vlaneseq
    %v5551 = vshrl.u32 %v5550, 7
    %v5552 = vsub.s32 %v4954, %v5551
    %v5553 = vrot.slane %v4815, %v5552
    %v5554 = vlaneseq
    %v5555 = vshrl.u32 %v5554, 7
    %v5556 = vsub.s32 %v4959, %v5555
    %v5557 = vrot.slane %v4818, %v5556
    %v5558 = vsel %vm4964, %v5557, %v5553
    %v5559 = vlaneseq
    %v5560 = vshrl.u32 %v5559, 7
    %v5561 = vsub.s32 %v4966, %v5560
    %v5562 = vrot.slane %v4821, %v5561
    %v5563 = vsel %vm4971, %v5562, %v5558
    %v5564 = vlaneseq
    %v5565 = vshrl.u32 %v5564, 7
    %v5566 = vsub.s32 %v4973, %v5565
    %v5567 = vrot.slane %v4824, %v5566
    %v5568 = vsel %vm4978, %v5567, %v5563
    %vm5569 = vcmask 1041409
    %v5570 = vsel %vm5569, %v4998, %v4979
    %vm5571 = vcmask 1042434
    %v5572 = vsel %vm5571, %v5017, %v5570
    %vm5573 = vcmask 1043459
    %v5574 = vsel %vm5573, %v5036, %v5572
    %vm5575 = vcmask 1044484
    %v5576 = vsel %vm5575, %v5055, %v5574
    %vm5577 = vcmask 1045509
    %v5578 = vsel %vm5577, %v5074, %v5576
    %vm5579 = vcmask 1046534
    %v5580 = vsel %vm5579, %v5093, %v5578
    %vm5581 = vcmask 1047559
    %v5582 = vsel %vm5581, %v5112, %v5580
    %v5583 = vsel %vm5569, %v5150, %v5131
    %v5584 = vsel %vm5571, %v5169, %v5583
    %v5585 = vsel %vm5573, %v5188, %v5584
    %v5586 = vsel %vm5575, %v5207, %v5585
    %v5587 = vsel %vm5577, %v5226, %v5586
    %v5588 = vsel %vm5579, %v5245, %v5587
    %v5589 = vsel %vm5581, %v5264, %v5588
    %v5590 = vsel %vm5569, %v5302, %v5283
    %v5591 = vsel %vm5571, %v5321, %v5590
    %v5592 = vsel %vm5573, %v5340, %v5591
    %v5593 = vsel %vm5575, %v5359, %v5592
    %v5594 = vsel %vm5577, %v5378, %v5593
    %v5595 = vsel %vm5579, %v5397, %v5594
    %v5596 = vsel %vm5581, %v5416, %v5595
    %v5597 = vsel %vm5569, %v5454, %v5435
    %v5598 = vsel %vm5571, %v5473, %v5597
    %v5599 = vsel %vm5573, %v5492, %v5598
    %v5600 = vsel %vm5575, %v5511, %v5599
    %v5601 = vsel %vm5577, %v5530, %v5600
    %v5602 = vsel %vm5579, %v5549, %v5601
    %v5603 = vsel %vm5581, %v5568, %v5602
    %v5608 = vsel %vm2180, %v5582, 0.0
    %5609 = vadd.xlane.f32.xlu0 %v5608
    %v5610 = vpop.xlane.xlu0 %5609
    %v5611 = vsel %vm2180, %v5589, 0.0
    %5612 = vadd.xlane.f32.xlu0 %v5611
    %v5613 = vpop.xlane.xlu0 %5612
    %v5614 = vsel %vm2180, %v5596, 0.0
    %5615 = vadd.xlane.f32.xlu0 %v5614
    %v5616 = vpop.xlane.xlu0 %5615
    %v5617 = vsel %vm2180, %v5603, 0.0
    %5618 = vadd.xlane.f32.xlu0 %v5617
    %v5619 = vpop.xlane.xlu0 %5618
    %v5621 = vlaneseq
    %v5622 = vshrl.u32 %v5621, 7
    %v5623 = vsub.s32 0, %v5622
    %v5624 = vrot.slane %v4311, %v5623
    %5626 = vbcast.lane.b32.xlu0 %v5624, 256
    %v5627 = vpop.permute.xlu0 %5626
    %s5629 = sor.u32 256, 8
    %5630 = vbcast.lane.b32.xlu0 %v5624, %s5629
    %v5631 = vpop.permute.xlu0 %5630
    %s5633 = sor.u32 256, 16
    %5634 = vbcast.lane.b32.xlu0 %v5624, %s5633
    %v5635 = vpop.permute.xlu0 %5634
    %s5637 = sor.u32 256, 24
    %5638 = vbcast.lane.b32.xlu0 %v5624, %s5637
    %v5639 = vpop.permute.xlu0 %5638
    %v5644 = vadd.f32 %v5610, %v5627
    %v5645 = vadd.f32 %v5613, %v5631
    %v5646 = vadd.f32 %v5616, %v5635
    %v5647 = vadd.f32 %v5619, %v5639
    %5652 = vset.pattern.permute.xlu0 0
    %5653 = vperm.xlu0 %5652, %v5644
    %v5654 = vpop.permute.xlu0 %5653
    %5655 = vset.pattern.permute.xlu0 0
    %5656 = vperm.xlu0 %5655, %v5645
    %v5657 = vpop.permute.xlu0 %5656
    %5658 = vset.pattern.permute.xlu0 0
    %5659 = vperm.xlu0 %5658, %v5646
    %v5660 = vpop.permute.xlu0 %5659
    %5661 = vset.pattern.permute.xlu0 0
    %5662 = vperm.xlu0 %5661, %v5647
    %v5663 = vpop.permute.xlu0 %5662
    %v5664 = vlaneseq
    %v5665 = vshrl.u32 %v5664, 7
    %v5666 = vsub.s32 %v4954, %v5665
    %v5667 = vrot.slane %v5654, %v5666
    %v5668 = vlaneseq
    %v5669 = vshrl.u32 %v5668, 7
    %v5670 = vsub.s32 %v4959, %v5669
    %v5671 = vrot.slane %v5657, %v5670
    %v5672 = vsel %vm4964, %v5671, %v5667
    %v5673 = vlaneseq
    %v5674 = vshrl.u32 %v5673, 7
    %v5675 = vsub.s32 %v4966, %v5674
    %v5676 = vrot.slane %v5660, %v5675
    %v5677 = vsel %vm4971, %v5676, %v5672
    %v5678 = vlaneseq
    %v5679 = vshrl.u32 %v5678, 7
    %v5680 = vsub.s32 %v4973, %v5679
    %v5681 = vrot.slane %v5663, %v5680
    %v5682 = vsel %vm4978, %v5681, %v5677
    %vm5684 = vcmask 253952
    %5685 = vst.msk [vmem:[#allocation2] sm:$0x1] %vm5684, %v5682
    %v5686 = vmul.f32 %v4179, %v4183
    %v5687 = vmul.f32 %v4180, %v4184
    %v5688 = vmul.f32 %v4181, %v4185
    %v5689 = vmul.f32 %v4182, %v4186
    %v5690 = vmul.f32 %v4179, %v4187
    %v5691 = vmul.f32 %v4180, %v4188
    %v5692 = vmul.f32 %v4181, %v4189
    %v5693 = vmul.f32 %v4182, %v4190
    %v5694 = vmul.f32 %v4179, %v4191
    %v5695 = vmul.f32 %v4180, %v4192
    %v5696 = vmul.f32 %v4181, %v4193
    %v5697 = vmul.f32 %v4182, %v4194
    %v5698 = vmul.f32 %v4179, %v4195
    %v5699 = vmul.f32 %v4180, %v4196
    %v5700 = vmul.f32 %v4181, %v4197
    %v5701 = vmul.f32 %v4182, %v4198
    %v5702 = vmul.f32 %v4179, %v4199
    %v5703 = vmul.f32 %v4180, %v4200
    %v5704 = vmul.f32 %v4181, %v4201
    %v5705 = vmul.f32 %v4182, %v4202
    %v5706 = vmul.f32 %v4179, %v4203
    %v5707 = vmul.f32 %v4180, %v4204
    %v5708 = vmul.f32 %v4181, %v4205
    %v5709 = vmul.f32 %v4182, %v4206
    %v5710 = vmul.f32 %v4179, %v4207
    %v5711 = vmul.f32 %v4180, %v4208
    %v5712 = vmul.f32 %v4181, %v4209
    %v5713 = vmul.f32 %v4182, %v4210
    %v5714 = vmul.f32 %v4179, %v4211
    %v5715 = vmul.f32 %v4180, %v4212
    %v5716 = vmul.f32 %v4181, %v4213
    %v5717 = vmul.f32 %v4182, %v4214
    %v5718 = vmul.f32 %v4179, %v4215
    %v5719 = vmul.f32 %v4180, %v4216
    %v5720 = vmul.f32 %v4181, %v4217
    %v5721 = vmul.f32 %v4182, %v4218
    %v5722 = vmul.f32 %v4179, %v4219
    %v5723 = vmul.f32 %v4180, %v4220
    %v5724 = vmul.f32 %v4181, %v4221
    %v5725 = vmul.f32 %v4182, %v4222
    %v5726 = vmul.f32 %v4179, %v4223
    %v5727 = vmul.f32 %v4180, %v4224
    %v5728 = vmul.f32 %v4181, %v4225
    %v5729 = vmul.f32 %v4182, %v4226
    %v5730 = vmul.f32 %v4179, %v4227
    %v5731 = vmul.f32 %v4180, %v4228
    %v5732 = vmul.f32 %v4181, %v4229
    %v5733 = vmul.f32 %v4182, %v4230
    %v5734 = vmul.f32 %v4179, %v4231
    %v5735 = vmul.f32 %v4180, %v4232
    %v5736 = vmul.f32 %v4181, %v4233
    %v5737 = vmul.f32 %v4182, %v4234
    %v5738 = vmul.f32 %v4179, %v4235
    %v5739 = vmul.f32 %v4180, %v4236
    %v5740 = vmul.f32 %v4181, %v4237
    %v5741 = vmul.f32 %v4182, %v4238
    %v5742 = vmul.f32 %v4179, %v4239
    %v5743 = vmul.f32 %v4180, %v4240
    %v5744 = vmul.f32 %v4181, %v4241
    %v5745 = vmul.f32 %v4182, %v4242
    %v5746 = vmul.f32 %v4179, %v4243
    %v5747 = vmul.f32 %v4180, %v4244
    %v5748 = vmul.f32 %v4181, %v4245
    %v5749 = vmul.f32 %v4182, %v4246
    %v5750 = vmul.f32 %v4179, %v4247
    %v5751 = vmul.f32 %v4180, %v4248
    %v5752 = vmul.f32 %v4181, %v4249
    %v5753 = vmul.f32 %v4182, %v4250
    %v5754 = vmul.f32 %v4179, %v4251
    %v5755 = vmul.f32 %v4180, %v4252
    %v5756 = vmul.f32 %v4181, %v4253
    %v5757 = vmul.f32 %v4182, %v4254
    %v5758 = vmul.f32 %v4179, %v4255
    %v5759 = vmul.f32 %v4180, %v4256
    %v5760 = vmul.f32 %v4181, %v4257
    %v5761 = vmul.f32 %v4182, %v4258
    %v5762 = vmul.f32 %v4179, %v4259
    %v5763 = vmul.f32 %v4180, %v4260
    %v5764 = vmul.f32 %v4181, %v4261
    %v5765 = vmul.f32 %v4182, %v4262
    %v5766 = vmul.f32 %v4179, %v4263
    %v5767 = vmul.f32 %v4180, %v4264
    %v5768 = vmul.f32 %v4181, %v4265
    %v5769 = vmul.f32 %v4182, %v4266
    %v5770 = vmul.f32 %v4179, %v4267
    %v5771 = vmul.f32 %v4180, %v4268
    %v5772 = vmul.f32 %v4181, %v4269
    %v5773 = vmul.f32 %v4182, %v4270
    %v5774 = vmul.f32 %v4179, %v4271
    %v5775 = vmul.f32 %v4180, %v4272
    %v5776 = vmul.f32 %v4181, %v4273
    %v5777 = vmul.f32 %v4182, %v4274
    %v5778 = vmul.f32 %v4179, %v4275
    %v5779 = vmul.f32 %v4180, %v4276
    %v5780 = vmul.f32 %v4181, %v4277
    %v5781 = vmul.f32 %v4182, %v4278
    %v5782 = vmul.f32 %v4179, %v4279
    %v5783 = vmul.f32 %v4180, %v4280
    %v5784 = vmul.f32 %v4181, %v4281
    %v5785 = vmul.f32 %v4182, %v4282
    %v5786 = vmul.f32 %v4179, %v4283
    %v5787 = vmul.f32 %v4180, %v4284
    %v5788 = vmul.f32 %v4181, %v4285
    %v5789 = vmul.f32 %v4182, %v4286
    %v5790 = vmul.f32 %v4179, %v4287
    %v5791 = vmul.f32 %v4180, %v4288
    %v5792 = vmul.f32 %v4181, %v4289
    %v5793 = vmul.f32 %v4182, %v4290
    %v5794 = vmul.f32 %v4179, %v4291
    %v5795 = vmul.f32 %v4180, %v4292
    %v5796 = vmul.f32 %v4181, %v4293
    %v5797 = vmul.f32 %v4182, %v4294
    %v5798 = vmul.f32 %v4179, %v4295
    %v5799 = vmul.f32 %v4180, %v4296
    %v5800 = vmul.f32 %v4181, %v4297
    %v5801 = vmul.f32 %v4182, %v4298
    %v5802 = vmul.f32 %v4179, %v4299
    %v5803 = vmul.f32 %v4180, %v4300
    %v5804 = vmul.f32 %v4181, %v4301
    %v5805 = vmul.f32 %v4182, %v4302
    %v5806 = vmul.f32 %v4179, %v4303
    %v5807 = vmul.f32 %v4180, %v4304
    %v5808 = vmul.f32 %v4181, %v4305
    %v5809 = vmul.f32 %v4182, %v4306
    %v5810 = vmul.f32 %v4179, %v4307
    %v5811 = vmul.f32 %v4180, %v4308
    %v5812 = vmul.f32 %v4181, %v4309
    %v5813 = vmul.f32 %v4182, %v4310
    %v5814 = vsel %vm4440, %v5686, 0.0
    %5815 = vadd.xlane.f32.xlu0 %v5814
    %v5816 = vpop.xlane.xlu0 %5815
    %v5817 = vsel %vm4440, %v5687, 0.0
    %5818 = vadd.xlane.f32.xlu0 %v5817
    %v5819 = vpop.xlane.xlu0 %5818
    %v5820 = vsel %vm4440, %v5688, 0.0
    %5821 = vadd.xlane.f32.xlu0 %v5820
    %v5822 = vpop.xlane.xlu0 %5821
    %v5823 = vsel %vm4440, %v5689, 0.0
    %5824 = vadd.xlane.f32.xlu0 %v5823
    %v5825 = vpop.xlane.xlu0 %5824
    %v5826 = vsel %vm4440, %v5690, 0.0
    %5827 = vadd.xlane.f32.xlu0 %v5826
    %v5828 = vpop.xlane.xlu0 %5827
    %v5829 = vsel %vm4440, %v5691, 0.0
    %5830 = vadd.xlane.f32.xlu0 %v5829
    %v5831 = vpop.xlane.xlu0 %5830
    %v5832 = vsel %vm4440, %v5692, 0.0
    %5833 = vadd.xlane.f32.xlu0 %v5832
    %v5834 = vpop.xlane.xlu0 %5833
    %v5835 = vsel %vm4440, %v5693, 0.0
    %5836 = vadd.xlane.f32.xlu0 %v5835
    %v5837 = vpop.xlane.xlu0 %5836
    %v5838 = vsel %vm4440, %v5694, 0.0
    %5839 = vadd.xlane.f32.xlu0 %v5838
    %v5840 = vpop.xlane.xlu0 %5839
    %v5841 = vsel %vm4440, %v5695, 0.0
    %5842 = vadd.xlane.f32.xlu0 %v5841
    %v5843 = vpop.xlane.xlu0 %5842
    %v5844 = vsel %vm4440, %v5696, 0.0
    %5845 = vadd.xlane.f32.xlu0 %v5844
    %v5846 = vpop.xlane.xlu0 %5845
    %v5847 = vsel %vm4440, %v5697, 0.0
    %5848 = vadd.xlane.f32.xlu0 %v5847
    %v5849 = vpop.xlane.xlu0 %5848
    %v5850 = vsel %vm4440, %v5698, 0.0
    %5851 = vadd.xlane.f32.xlu0 %v5850
    %v5852 = vpop.xlane.xlu0 %5851
    %v5853 = vsel %vm4440, %v5699, 0.0
    %5854 = vadd.xlane.f32.xlu0 %v5853
    %v5855 = vpop.xlane.xlu0 %5854
    %v5856 = vsel %vm4440, %v5700, 0.0
    %5857 = vadd.xlane.f32.xlu0 %v5856
    %v5858 = vpop.xlane.xlu0 %5857
    %v5859 = vsel %vm4440, %v5701, 0.0
    %5860 = vadd.xlane.f32.xlu0 %v5859
    %v5861 = vpop.xlane.xlu0 %5860
    %v5862 = vsel %vm4440, %v5702, 0.0
    %5863 = vadd.xlane.f32.xlu0 %v5862
    %v5864 = vpop.xlane.xlu0 %5863
    %v5865 = vsel %vm4440, %v5703, 0.0
    %5866 = vadd.xlane.f32.xlu0 %v5865
    %v5867 = vpop.xlane.xlu0 %5866
    %v5868 = vsel %vm4440, %v5704, 0.0
    %5869 = vadd.xlane.f32.xlu0 %v5868
    %v5870 = vpop.xlane.xlu0 %5869
    %v5871 = vsel %vm4440, %v5705, 0.0
    %5872 = vadd.xlane.f32.xlu0 %v5871
    %v5873 = vpop.xlane.xlu0 %5872
    %v5874 = vsel %vm4440, %v5706, 0.0
    %5875 = vadd.xlane.f32.xlu0 %v5874
    %v5876 = vpop.xlane.xlu0 %5875
    %v5877 = vsel %vm4440, %v5707, 0.0
    %5878 = vadd.xlane.f32.xlu0 %v5877
    %v5879 = vpop.xlane.xlu0 %5878
    %v5880 = vsel %vm4440, %v5708, 0.0
    %5881 = vadd.xlane.f32.xlu0 %v5880
    %v5882 = vpop.xlane.xlu0 %5881
    %v5883 = vsel %vm4440, %v5709, 0.0
    %5884 = vadd.xlane.f32.xlu0 %v5883
    %v5885 = vpop.xlane.xlu0 %5884
    %v5886 = vsel %vm4440, %v5710, 0.0
    %5887 = vadd.xlane.f32.xlu0 %v5886
    %v5888 = vpop.xlane.xlu0 %5887
    %v5889 = vsel %vm4440, %v5711, 0.0
    %5890 = vadd.xlane.f32.xlu0 %v5889
    %v5891 = vpop.xlane.xlu0 %5890
    %v5892 = vsel %vm4440, %v5712, 0.0
    %5893 = vadd.xlane.f32.xlu0 %v5892
    %v5894 = vpop.xlane.xlu0 %5893
    %v5895 = vsel %vm4440, %v5713, 0.0
    %5896 = vadd.xlane.f32.xlu0 %v5895
    %v5897 = vpop.xlane.xlu0 %5896
    %v5898 = vsel %vm4440, %v5714, 0.0
    %5899 = vadd.xlane.f32.xlu0 %v5898
    %v5900 = vpop.xlane.xlu0 %5899
    %v5901 = vsel %vm4440, %v5715, 0.0
    %5902 = vadd.xlane.f32.xlu0 %v5901
    %v5903 = vpop.xlane.xlu0 %5902
    %v5904 = vsel %vm4440, %v5716, 0.0
    %5905 = vadd.xlane.f32.xlu0 %v5904
    %v5906 = vpop.xlane.xlu0 %5905
    %v5907 = vsel %vm4440, %v5717, 0.0
    %5908 = vadd.xlane.f32.xlu0 %v5907
    %v5909 = vpop.xlane.xlu0 %5908
    %v5910 = vsel %vm4440, %v5718, 0.0
    %5911 = vadd.xlane.f32.xlu0 %v5910
    %v5912 = vpop.xlane.xlu0 %5911
    %v5913 = vsel %vm4440, %v5719, 0.0
    %5914 = vadd.xlane.f32.xlu0 %v5913
    %v5915 = vpop.xlane.xlu0 %5914
    %v5916 = vsel %vm4440, %v5720, 0.0
    %5917 = vadd.xlane.f32.xlu0 %v5916
    %v5918 = vpop.xlane.xlu0 %5917
    %v5919 = vsel %vm4440, %v5721, 0.0
    %5920 = vadd.xlane.f32.xlu0 %v5919
    %v5921 = vpop.xlane.xlu0 %5920
    %v5922 = vsel %vm4440, %v5722, 0.0
    %5923 = vadd.xlane.f32.xlu0 %v5922
    %v5924 = vpop.xlane.xlu0 %5923
    %v5925 = vsel %vm4440, %v5723, 0.0
    %5926 = vadd.xlane.f32.xlu0 %v5925
    %v5927 = vpop.xlane.xlu0 %5926
    %v5928 = vsel %vm4440, %v5724, 0.0
    %5929 = vadd.xlane.f32.xlu0 %v5928
    %v5930 = vpop.xlane.xlu0 %5929
    %v5931 = vsel %vm4440, %v5725, 0.0
    %5932 = vadd.xlane.f32.xlu0 %v5931
    %v5933 = vpop.xlane.xlu0 %5932
    %v5934 = vsel %vm4440, %v5726, 0.0
    %5935 = vadd.xlane.f32.xlu0 %v5934
    %v5936 = vpop.xlane.xlu0 %5935
    %v5937 = vsel %vm4440, %v5727, 0.0
    %5938 = vadd.xlane.f32.xlu0 %v5937
    %v5939 = vpop.xlane.xlu0 %5938
    %v5940 = vsel %vm4440, %v5728, 0.0
    %5941 = vadd.xlane.f32.xlu0 %v5940
    %v5942 = vpop.xlane.xlu0 %5941
    %v5943 = vsel %vm4440, %v5729, 0.0
    %5944 = vadd.xlane.f32.xlu0 %v5943
    %v5945 = vpop.xlane.xlu0 %5944
    %v5946 = vsel %vm4440, %v5730, 0.0
    %5947 = vadd.xlane.f32.xlu0 %v5946
    %v5948 = vpop.xlane.xlu0 %5947
    %v5949 = vsel %vm4440, %v5731, 0.0
    %5950 = vadd.xlane.f32.xlu0 %v5949
    %v5951 = vpop.xlane.xlu0 %5950
    %v5952 = vsel %vm4440, %v5732, 0.0
    %5953 = vadd.xlane.f32.xlu0 %v5952
    %v5954 = vpop.xlane.xlu0 %5953
    %v5955 = vsel %vm4440, %v5733, 0.0
    %5956 = vadd.xlane.f32.xlu0 %v5955
    %v5957 = vpop.xlane.xlu0 %5956
    %v5958 = vsel %vm4440, %v5734, 0.0
    %5959 = vadd.xlane.f32.xlu0 %v5958
    %v5960 = vpop.xlane.xlu0 %5959
    %v5961 = vsel %vm4440, %v5735, 0.0
    %5962 = vadd.xlane.f32.xlu0 %v5961
    %v5963 = vpop.xlane.xlu0 %5962
    %v5964 = vsel %vm4440, %v5736, 0.0
    %5965 = vadd.xlane.f32.xlu0 %v5964
    %v5966 = vpop.xlane.xlu0 %5965
    %v5967 = vsel %vm4440, %v5737, 0.0
    %5968 = vadd.xlane.f32.xlu0 %v5967
    %v5969 = vpop.xlane.xlu0 %5968
    %v5970 = vsel %vm4440, %v5738, 0.0
    %5971 = vadd.xlane.f32.xlu0 %v5970
    %v5972 = vpop.xlane.xlu0 %5971
    %v5973 = vsel %vm4440, %v5739, 0.0
    %5974 = vadd.xlane.f32.xlu0 %v5973
    %v5975 = vpop.xlane.xlu0 %5974
    %v5976 = vsel %vm4440, %v5740, 0.0
    %5977 = vadd.xlane.f32.xlu0 %v5976
    %v5978 = vpop.xlane.xlu0 %5977
    %v5979 = vsel %vm4440, %v5741, 0.0
    %5980 = vadd.xlane.f32.xlu0 %v5979
    %v5981 = vpop.xlane.xlu0 %5980
    %v5982 = vsel %vm4440, %v5742, 0.0
    %5983 = vadd.xlane.f32.xlu0 %v5982
    %v5984 = vpop.xlane.xlu0 %5983
    %v5985 = vsel %vm4440, %v5743, 0.0
    %5986 = vadd.xlane.f32.xlu0 %v5985
    %v5987 = vpop.xlane.xlu0 %5986
    %v5988 = vsel %vm4440, %v5744, 0.0
    %5989 = vadd.xlane.f32.xlu0 %v5988
    %v5990 = vpop.xlane.xlu0 %5989
    %v5991 = vsel %vm4440, %v5745, 0.0
    %5992 = vadd.xlane.f32.xlu0 %v5991
    %v5993 = vpop.xlane.xlu0 %5992
    %v5994 = vsel %vm4440, %v5746, 0.0
    %5995 = vadd.xlane.f32.xlu0 %v5994
    %v5996 = vpop.xlane.xlu0 %5995
    %v5997 = vsel %vm4440, %v5747, 0.0
    %5998 = vadd.xlane.f32.xlu0 %v5997
    %v5999 = vpop.xlane.xlu0 %5998
    %v6000 = vsel %vm4440, %v5748, 0.0
    %6001 = vadd.xlane.f32.xlu0 %v6000
    %v6002 = vpop.xlane.xlu0 %6001
    %v6003 = vsel %vm4440, %v5749, 0.0
    %6004 = vadd.xlane.f32.xlu0 %v6003
    %v6005 = vpop.xlane.xlu0 %6004
    %v6006 = vsel %vm4440, %v5750, 0.0
    %6007 = vadd.xlane.f32.xlu0 %v6006
    %v6008 = vpop.xlane.xlu0 %6007
    %v6009 = vsel %vm4440, %v5751, 0.0
    %6010 = vadd.xlane.f32.xlu0 %v6009
    %v6011 = vpop.xlane.xlu0 %6010
    %v6012 = vsel %vm4440, %v5752, 0.0
    %6013 = vadd.xlane.f32.xlu0 %v6012
    %v6014 = vpop.xlane.xlu0 %6013
    %v6015 = vsel %vm4440, %v5753, 0.0
    %6016 = vadd.xlane.f32.xlu0 %v6015
    %v6017 = vpop.xlane.xlu0 %6016
    %v6018 = vsel %vm4440, %v5754, 0.0
    %6019 = vadd.xlane.f32.xlu0 %v6018
    %v6020 = vpop.xlane.xlu0 %6019
    %v6021 = vsel %vm4440, %v5755, 0.0
    %6022 = vadd.xlane.f32.xlu0 %v6021
    %v6023 = vpop.xlane.xlu0 %6022
    %v6024 = vsel %vm4440, %v5756, 0.0
    %6025 = vadd.xlane.f32.xlu0 %v6024
    %v6026 = vpop.xlane.xlu0 %6025
    %v6027 = vsel %vm4440, %v5757, 0.0
    %6028 = vadd.xlane.f32.xlu0 %v6027
    %v6029 = vpop.xlane.xlu0 %6028
    %v6030 = vsel %vm4440, %v5758, 0.0
    %6031 = vadd.xlane.f32.xlu0 %v6030
    %v6032 = vpop.xlane.xlu0 %6031
    %v6033 = vsel %vm4440, %v5759, 0.0
    %6034 = vadd.xlane.f32.xlu0 %v6033
    %v6035 = vpop.xlane.xlu0 %6034
    %v6036 = vsel %vm4440, %v5760, 0.0
    %6037 = vadd.xlane.f32.xlu0 %v6036
    %v6038 = vpop.xlane.xlu0 %6037
    %v6039 = vsel %vm4440, %v5761, 0.0
    %6040 = vadd.xlane.f32.xlu0 %v6039
    %v6041 = vpop.xlane.xlu0 %6040
    %v6042 = vsel %vm4440, %v5762, 0.0
    %6043 = vadd.xlane.f32.xlu0 %v6042
    %v6044 = vpop.xlane.xlu0 %6043
    %v6045 = vsel %vm4440, %v5763, 0.0
    %6046 = vadd.xlane.f32.xlu0 %v6045
    %v6047 = vpop.xlane.xlu0 %6046
    %v6048 = vsel %vm4440, %v5764, 0.0
    %6049 = vadd.xlane.f32.xlu0 %v6048
    %v6050 = vpop.xlane.xlu0 %6049
    %v6051 = vsel %vm4440, %v5765, 0.0
    %6052 = vadd.xlane.f32.xlu0 %v6051
    %v6053 = vpop.xlane.xlu0 %6052
    %v6054 = vsel %vm4440, %v5766, 0.0
    %6055 = vadd.xlane.f32.xlu0 %v6054
    %v6056 = vpop.xlane.xlu0 %6055
    %v6057 = vsel %vm4440, %v5767, 0.0
    %6058 = vadd.xlane.f32.xlu0 %v6057
    %v6059 = vpop.xlane.xlu0 %6058
    %v6060 = vsel %vm4440, %v5768, 0.0
    %6061 = vadd.xlane.f32.xlu0 %v6060
    %v6062 = vpop.xlane.xlu0 %6061
    %v6063 = vsel %vm4440, %v5769, 0.0
    %6064 = vadd.xlane.f32.xlu0 %v6063
    %v6065 = vpop.xlane.xlu0 %6064
    %v6066 = vsel %vm4440, %v5770, 0.0
    %6067 = vadd.xlane.f32.xlu0 %v6066
    %v6068 = vpop.xlane.xlu0 %6067
    %v6069 = vsel %vm4440, %v5771, 0.0
    %6070 = vadd.xlane.f32.xlu0 %v6069
    %v6071 = vpop.xlane.xlu0 %6070
    %v6072 = vsel %vm4440, %v5772, 0.0
    %6073 = vadd.xlane.f32.xlu0 %v6072
    %v6074 = vpop.xlane.xlu0 %6073
    %v6075 = vsel %vm4440, %v5773, 0.0
    %6076 = vadd.xlane.f32.xlu0 %v6075
    %v6077 = vpop.xlane.xlu0 %6076
    %v6078 = vsel %vm4440, %v5774, 0.0
    %6079 = vadd.xlane.f32.xlu0 %v6078
    %v6080 = vpop.xlane.xlu0 %6079
    %v6081 = vsel %vm4440, %v5775, 0.0
    %6082 = vadd.xlane.f32.xlu0 %v6081
    %v6083 = vpop.xlane.xlu0 %6082
    %v6084 = vsel %vm4440, %v5776, 0.0
    %6085 = vadd.xlane.f32.xlu0 %v6084
    %v6086 = vpop.xlane.xlu0 %6085
    %v6087 = vsel %vm4440, %v5777, 0.0
    %6088 = vadd.xlane.f32.xlu0 %v6087
    %v6089 = vpop.xlane.xlu0 %6088
    %v6090 = vsel %vm4440, %v5778, 0.0
    %6091 = vadd.xlane.f32.xlu0 %v6090
    %v6092 = vpop.xlane.xlu0 %6091
    %v6093 = vsel %vm4440, %v5779, 0.0
    %6094 = vadd.xlane.f32.xlu0 %v6093
    %v6095 = vpop.xlane.xlu0 %6094
    %v6096 = vsel %vm4440, %v5780, 0.0
    %6097 = vadd.xlane.f32.xlu0 %v6096
    %v6098 = vpop.xlane.xlu0 %6097
    %v6099 = vsel %vm4440, %v5781, 0.0
    %6100 = vadd.xlane.f32.xlu0 %v6099
    %v6101 = vpop.xlane.xlu0 %6100
    %v6102 = vsel %vm4440, %v5782, 0.0
    %6103 = vadd.xlane.f32.xlu0 %v6102
    %v6104 = vpop.xlane.xlu0 %6103
    %v6105 = vsel %vm4440, %v5783, 0.0
    %6106 = vadd.xlane.f32.xlu0 %v6105
    %v6107 = vpop.xlane.xlu0 %6106
    %v6108 = vsel %vm4440, %v5784, 0.0
    %6109 = vadd.xlane.f32.xlu0 %v6108
    %v6110 = vpop.xlane.xlu0 %6109
    %v6111 = vsel %vm4440, %v5785, 0.0
    %6112 = vadd.xlane.f32.xlu0 %v6111
    %v6113 = vpop.xlane.xlu0 %6112
    %v6114 = vsel %vm4440, %v5786, 0.0
    %6115 = vadd.xlane.f32.xlu0 %v6114
    %v6116 = vpop.xlane.xlu0 %6115
    %v6117 = vsel %vm4440, %v5787, 0.0
    %6118 = vadd.xlane.f32.xlu0 %v6117
    %v6119 = vpop.xlane.xlu0 %6118
    %v6120 = vsel %vm4440, %v5788, 0.0
    %6121 = vadd.xlane.f32.xlu0 %v6120
    %v6122 = vpop.xlane.xlu0 %6121
    %v6123 = vsel %vm4440, %v5789, 0.0
    %6124 = vadd.xlane.f32.xlu0 %v6123
    %v6125 = vpop.xlane.xlu0 %6124
    %v6126 = vsel %vm4440, %v5790, 0.0
    %6127 = vadd.xlane.f32.xlu0 %v6126
    %v6128 = vpop.xlane.xlu0 %6127
    %v6129 = vsel %vm4440, %v5791, 0.0
    %6130 = vadd.xlane.f32.xlu0 %v6129
    %v6131 = vpop.xlane.xlu0 %6130
    %v6132 = vsel %vm4440, %v5792, 0.0
    %6133 = vadd.xlane.f32.xlu0 %v6132
    %v6134 = vpop.xlane.xlu0 %6133
    %v6135 = vsel %vm4440, %v5793, 0.0
    %6136 = vadd.xlane.f32.xlu0 %v6135
    %v6137 = vpop.xlane.xlu0 %6136
    %v6138 = vsel %vm4440, %v5794, 0.0
    %6139 = vadd.xlane.f32.xlu0 %v6138
    %v6140 = vpop.xlane.xlu0 %6139
    %v6141 = vsel %vm4440, %v5795, 0.0
    %6142 = vadd.xlane.f32.xlu0 %v6141
    %v6143 = vpop.xlane.xlu0 %6142
    %v6144 = vsel %vm4440, %v5796, 0.0
    %6145 = vadd.xlane.f32.xlu0 %v6144
    %v6146 = vpop.xlane.xlu0 %6145
    %v6147 = vsel %vm4440, %v5797, 0.0
    %6148 = vadd.xlane.f32.xlu0 %v6147
    %v6149 = vpop.xlane.xlu0 %6148
    %v6150 = vsel %vm4440, %v5798, 0.0
    %6151 = vadd.xlane.f32.xlu0 %v6150
    %v6152 = vpop.xlane.xlu0 %6151
    %v6153 = vsel %vm4440, %v5799, 0.0
    %6154 = vadd.xlane.f32.xlu0 %v6153
    %v6155 = vpop.xlane.xlu0 %6154
    %v6156 = vsel %vm4440, %v5800, 0.0
    %6157 = vadd.xlane.f32.xlu0 %v6156
    %v6158 = vpop.xlane.xlu0 %6157
    %v6159 = vsel %vm4440, %v5801, 0.0
    %6160 = vadd.xlane.f32.xlu0 %v6159
    %v6161 = vpop.xlane.xlu0 %6160
    %v6162 = vsel %vm4440, %v5802, 0.0
    %6163 = vadd.xlane.f32.xlu0 %v6162
    %v6164 = vpop.xlane.xlu0 %6163
    %v6165 = vsel %vm4440, %v5803, 0.0
    %6166 = vadd.xlane.f32.xlu0 %v6165
    %v6167 = vpop.xlane.xlu0 %6166
    %v6168 = vsel %vm4440, %v5804, 0.0
    %6169 = vadd.xlane.f32.xlu0 %v6168
    %v6170 = vpop.xlane.xlu0 %6169
    %v6171 = vsel %vm4440, %v5805, 0.0
    %6172 = vadd.xlane.f32.xlu0 %v6171
    %v6173 = vpop.xlane.xlu0 %6172
    %v6174 = vsel %vm4440, %v5806, 0.0
    %6175 = vadd.xlane.f32.xlu0 %v6174
    %v6176 = vpop.xlane.xlu0 %6175
    %v6177 = vsel %vm4440, %v5807, 0.0
    %6178 = vadd.xlane.f32.xlu0 %v6177
    %v6179 = vpop.xlane.xlu0 %6178
    %v6180 = vsel %vm4440, %v5808, 0.0
    %6181 = vadd.xlane.f32.xlu0 %v6180
    %v6182 = vpop.xlane.xlu0 %6181
    %v6183 = vsel %vm4440, %v5809, 0.0
    %6184 = vadd.xlane.f32.xlu0 %v6183
    %v6185 = vpop.xlane.xlu0 %6184
    %v6186 = vsel %vm4440, %v5810, 0.0
    %6187 = vadd.xlane.f32.xlu0 %v6186
    %v6188 = vpop.xlane.xlu0 %6187
    %v6189 = vsel %vm4440, %v5811, 0.0
    %6190 = vadd.xlane.f32.xlu0 %v6189
    %v6191 = vpop.xlane.xlu0 %6190
    %v6192 = vsel %vm4440, %v5812, 0.0
    %6193 = vadd.xlane.f32.xlu0 %v6192
    %v6194 = vpop.xlane.xlu0 %6193
    %v6195 = vsel %vm4440, %v5813, 0.0
    %6196 = vadd.xlane.f32.xlu0 %v6195
    %v6197 = vpop.xlane.xlu0 %6196
    %v6326 = vlaneseq
    %v6327 = vshrl.u32 %v6326, 7
    %v6328 = vsub.s32 %v4954, %v6327
    %v6329 = vrot.slane %v5816, %v6328
    %v6330 = vlaneseq
    %v6331 = vshrl.u32 %v6330, 7
    %v6332 = vsub.s32 %v4959, %v6331
    %v6333 = vrot.slane %v5819, %v6332
    %v6334 = vsel %vm4964, %v6333, %v6329
    %v6335 = vlaneseq
    %v6336 = vshrl.u32 %v6335, 7
    %v6337 = vsub.s32 %v4966, %v6336
    %v6338 = vrot.slane %v5822, %v6337
    %v6339 = vsel %vm4971, %v6338, %v6334
    %v6340 = vlaneseq
    %v6341 = vshrl.u32 %v6340, 7
    %v6342 = vsub.s32 %v4973, %v6341
    %v6343 = vrot.slane %v5825, %v6342
    %v6344 = vsel %vm4978, %v6343, %v6339
    %v6345 = vlaneseq
    %v6346 = vshrl.u32 %v6345, 7
    %v6347 = vsub.s32 %v4954, %v6346
    %v6348 = vrot.slane %v5828, %v6347
    %v6349 = vlaneseq
    %v6350 = vshrl.u32 %v6349, 7
    %v6351 = vsub.s32 %v4959, %v6350
    %v6352 = vrot.slane %v5831, %v6351
    %v6353 = vsel %vm4964, %v6352, %v6348
    %v6354 = vlaneseq
    %v6355 = vshrl.u32 %v6354, 7
    %v6356 = vsub.s32 %v4966, %v6355
    %v6357 = vrot.slane %v5834, %v6356
    %v6358 = vsel %vm4971, %v6357, %v6353
    %v6359 = vlaneseq
    %v6360 = vshrl.u32 %v6359, 7
    %v6361 = vsub.s32 %v4973, %v6360
    %v6362 = vrot.slane %v5837, %v6361
    %v6363 = vsel %vm4978, %v6362, %v6358
    %v6364 = vlaneseq
    %v6365 = vshrl.u32 %v6364, 7
    %v6366 = vsub.s32 %v4954, %v6365
    %v6367 = vrot.slane %v5840, %v6366
    %v6368 = vlaneseq
    %v6369 = vshrl.u32 %v6368, 7
    %v6370 = vsub.s32 %v4959, %v6369
    %v6371 = vrot.slane %v5843, %v6370
    %v6372 = vsel %vm4964, %v6371, %v6367
    %v6373 = vlaneseq
    %v6374 = vshrl.u32 %v6373, 7
    %v6375 = vsub.s32 %v4966, %v6374
    %v6376 = vrot.slane %v5846, %v6375
    %v6377 = vsel %vm4971, %v6376, %v6372
    %v6378 = vlaneseq
    %v6379 = vshrl.u32 %v6378, 7
    %v6380 = vsub.s32 %v4973, %v6379
    %v6381 = vrot.slane %v5849, %v6380
    %v6382 = vsel %vm4978, %v6381, %v6377
    %v6383 = vlaneseq
    %v6384 = vshrl.u32 %v6383, 7
    %v6385 = vsub.s32 %v4954, %v6384
    %v6386 = vrot.slane %v5852, %v6385
    %v6387 = vlaneseq
    %v6388 = vshrl.u32 %v6387, 7
    %v6389 = vsub.s32 %v4959, %v6388
    %v6390 = vrot.slane %v5855, %v6389
    %v6391 = vsel %vm4964, %v6390, %v6386
    %v6392 = vlaneseq
    %v6393 = vshrl.u32 %v6392, 7
    %v6394 = vsub.s32 %v4966, %v6393
    %v6395 = vrot.slane %v5858, %v6394
    %v6396 = vsel %vm4971, %v6395, %v6391
    %v6397 = vlaneseq
    %v6398 = vshrl.u32 %v6397, 7
    %v6399 = vsub.s32 %v4973, %v6398
    %v6400 = vrot.slane %v5861, %v6399
    %v6401 = vsel %vm4978, %v6400, %v6396
    %v6402 = vlaneseq
    %v6403 = vshrl.u32 %v6402, 7
    %v6404 = vsub.s32 %v4954, %v6403
    %v6405 = vrot.slane %v5864, %v6404
    %v6406 = vlaneseq
    %v6407 = vshrl.u32 %v6406, 7
    %v6408 = vsub.s32 %v4959, %v6407
    %v6409 = vrot.slane %v5867, %v6408
    %v6410 = vsel %vm4964, %v6409, %v6405
    %v6411 = vlaneseq
    %v6412 = vshrl.u32 %v6411, 7
    %v6413 = vsub.s32 %v4966, %v6412
    %v6414 = vrot.slane %v5870, %v6413
    %v6415 = vsel %vm4971, %v6414, %v6410
    %v6416 = vlaneseq
    %v6417 = vshrl.u32 %v6416, 7
    %v6418 = vsub.s32 %v4973, %v6417
    %v6419 = vrot.slane %v5873, %v6418
    %v6420 = vsel %vm4978, %v6419, %v6415
    %v6421 = vlaneseq
    %v6422 = vshrl.u32 %v6421, 7
    %v6423 = vsub.s32 %v4954, %v6422
    %v6424 = vrot.slane %v5876, %v6423
    %v6425 = vlaneseq
    %v6426 = vshrl.u32 %v6425, 7
    %v6427 = vsub.s32 %v4959, %v6426
    %v6428 = vrot.slane %v5879, %v6427
    %v6429 = vsel %vm4964, %v6428, %v6424
    %v6430 = vlaneseq
    %v6431 = vshrl.u32 %v6430, 7
    %v6432 = vsub.s32 %v4966, %v6431
    %v6433 = vrot.slane %v5882, %v6432
    %v6434 = vsel %vm4971, %v6433, %v6429
    %v6435 = vlaneseq
    %v6436 = vshrl.u32 %v6435, 7
    %v6437 = vsub.s32 %v4973, %v6436
    %v6438 = vrot.slane %v5885, %v6437
    %v6439 = vsel %vm4978, %v6438, %v6434
    %v6440 = vlaneseq
    %v6441 = vshrl.u32 %v6440, 7
    %v6442 = vsub.s32 %v4954, %v6441
    %v6443 = vrot.slane %v5888, %v6442
    %v6444 = vlaneseq
    %v6445 = vshrl.u32 %v6444, 7
    %v6446 = vsub.s32 %v4959, %v6445
    %v6447 = vrot.slane %v5891, %v6446
    %v6448 = vsel %vm4964, %v6447, %v6443
    %v6449 = vlaneseq
    %v6450 = vshrl.u32 %v6449, 7
    %v6451 = vsub.s32 %v4966, %v6450
    %v6452 = vrot.slane %v5894, %v6451
    %v6453 = vsel %vm4971, %v6452, %v6448
    %v6454 = vlaneseq
    %v6455 = vshrl.u32 %v6454, 7
    %v6456 = vsub.s32 %v4973, %v6455
    %v6457 = vrot.slane %v5897, %v6456
    %v6458 = vsel %vm4978, %v6457, %v6453
    %v6459 = vlaneseq
    %v6460 = vshrl.u32 %v6459, 7
    %v6461 = vsub.s32 %v4954, %v6460
    %v6462 = vrot.slane %v5900, %v6461
    %v6463 = vlaneseq
    %v6464 = vshrl.u32 %v6463, 7
    %v6465 = vsub.s32 %v4959, %v6464
    %v6466 = vrot.slane %v5903, %v6465
    %v6467 = vsel %vm4964, %v6466, %v6462
    %v6468 = vlaneseq
    %v6469 = vshrl.u32 %v6468, 7
    %v6470 = vsub.s32 %v4966, %v6469
    %v6471 = vrot.slane %v5906, %v6470
    %v6472 = vsel %vm4971, %v6471, %v6467
    %v6473 = vlaneseq
    %v6474 = vshrl.u32 %v6473, 7
    %v6475 = vsub.s32 %v4973, %v6474
    %v6476 = vrot.slane %v5909, %v6475
    %v6477 = vsel %vm4978, %v6476, %v6472
    %v6478 = vlaneseq
    %v6479 = vshrl.u32 %v6478, 7
    %v6480 = vsub.s32 %v4954, %v6479
    %v6481 = vrot.slane %v5912, %v6480
    %v6482 = vlaneseq
    %v6483 = vshrl.u32 %v6482, 7
    %v6484 = vsub.s32 %v4959, %v6483
    %v6485 = vrot.slane %v5915, %v6484
    %v6486 = vsel %vm4964, %v6485, %v6481
    %v6487 = vlaneseq
    %v6488 = vshrl.u32 %v6487, 7
    %v6489 = vsub.s32 %v4966, %v6488
    %v6490 = vrot.slane %v5918, %v6489
    %v6491 = vsel %vm4971, %v6490, %v6486
    %v6492 = vlaneseq
    %v6493 = vshrl.u32 %v6492, 7
    %v6494 = vsub.s32 %v4973, %v6493
    %v6495 = vrot.slane %v5921, %v6494
    %v6496 = vsel %vm4978, %v6495, %v6491
    %v6497 = vlaneseq
    %v6498 = vshrl.u32 %v6497, 7
    %v6499 = vsub.s32 %v4954, %v6498
    %v6500 = vrot.slane %v5924, %v6499
    %v6501 = vlaneseq
    %v6502 = vshrl.u32 %v6501, 7
    %v6503 = vsub.s32 %v4959, %v6502
    %v6504 = vrot.slane %v5927, %v6503
    %v6505 = vsel %vm4964, %v6504, %v6500
    %v6506 = vlaneseq
    %v6507 = vshrl.u32 %v6506, 7
    %v6508 = vsub.s32 %v4966, %v6507
    %v6509 = vrot.slane %v5930, %v6508
    %v6510 = vsel %vm4971, %v6509, %v6505
    %v6511 = vlaneseq
    %v6512 = vshrl.u32 %v6511, 7
    %v6513 = vsub.s32 %v4973, %v6512
    %v6514 = vrot.slane %v5933, %v6513
    %v6515 = vsel %vm4978, %v6514, %v6510
    %v6516 = vlaneseq
    %v6517 = vshrl.u32 %v6516, 7
    %v6518 = vsub.s32 %v4954, %v6517
    %v6519 = vrot.slane %v5936, %v6518
    %v6520 = vlaneseq
    %v6521 = vshrl.u32 %v6520, 7
    %v6522 = vsub.s32 %v4959, %v6521
    %v6523 = vrot.slane %v5939, %v6522
    %v6524 = vsel %vm4964, %v6523, %v6519
    %v6525 = vlaneseq
    %v6526 = vshrl.u32 %v6525, 7
    %v6527 = vsub.s32 %v4966, %v6526
    %v6528 = vrot.slane %v5942, %v6527
    %v6529 = vsel %vm4971, %v6528, %v6524
    %v6530 = vlaneseq
    %v6531 = vshrl.u32 %v6530, 7
    %v6532 = vsub.s32 %v4973, %v6531
    %v6533 = vrot.slane %v5945, %v6532
    %v6534 = vsel %vm4978, %v6533, %v6529
    %v6535 = vlaneseq
    %v6536 = vshrl.u32 %v6535, 7
    %v6537 = vsub.s32 %v4954, %v6536
    %v6538 = vrot.slane %v5948, %v6537
    %v6539 = vlaneseq
    %v6540 = vshrl.u32 %v6539, 7
    %v6541 = vsub.s32 %v4959, %v6540
    %v6542 = vrot.slane %v5951, %v6541
    %v6543 = vsel %vm4964, %v6542, %v6538
    %v6544 = vlaneseq
    %v6545 = vshrl.u32 %v6544, 7
    %v6546 = vsub.s32 %v4966, %v6545
    %v6547 = vrot.slane %v5954, %v6546
    %v6548 = vsel %vm4971, %v6547, %v6543
    %v6549 = vlaneseq
    %v6550 = vshrl.u32 %v6549, 7
    %v6551 = vsub.s32 %v4973, %v6550
    %v6552 = vrot.slane %v5957, %v6551
    %v6553 = vsel %vm4978, %v6552, %v6548
    %v6554 = vlaneseq
    %v6555 = vshrl.u32 %v6554, 7
    %v6556 = vsub.s32 %v4954, %v6555
    %v6557 = vrot.slane %v5960, %v6556
    %v6558 = vlaneseq
    %v6559 = vshrl.u32 %v6558, 7
    %v6560 = vsub.s32 %v4959, %v6559
    %v6561 = vrot.slane %v5963, %v6560
    %v6562 = vsel %vm4964, %v6561, %v6557
    %v6563 = vlaneseq
    %v6564 = vshrl.u32 %v6563, 7
    %v6565 = vsub.s32 %v4966, %v6564
    %v6566 = vrot.slane %v5966, %v6565
    %v6567 = vsel %vm4971, %v6566, %v6562
    %v6568 = vlaneseq
    %v6569 = vshrl.u32 %v6568, 7
    %v6570 = vsub.s32 %v4973, %v6569
    %v6571 = vrot.slane %v5969, %v6570
    %v6572 = vsel %vm4978, %v6571, %v6567
    %v6573 = vlaneseq
    %v6574 = vshrl.u32 %v6573, 7
    %v6575 = vsub.s32 %v4954, %v6574
    %v6576 = vrot.slane %v5972, %v6575
    %v6577 = vlaneseq
    %v6578 = vshrl.u32 %v6577, 7
    %v6579 = vsub.s32 %v4959, %v6578
    %v6580 = vrot.slane %v5975, %v6579
    %v6581 = vsel %vm4964, %v6580, %v6576
    %v6582 = vlaneseq
    %v6583 = vshrl.u32 %v6582, 7
    %v6584 = vsub.s32 %v4966, %v6583
    %v6585 = vrot.slane %v5978, %v6584
    %v6586 = vsel %vm4971, %v6585, %v6581
    %v6587 = vlaneseq
    %v6588 = vshrl.u32 %v6587, 7
    %v6589 = vsub.s32 %v4973, %v6588
    %v6590 = vrot.slane %v5981, %v6589
    %v6591 = vsel %vm4978, %v6590, %v6586
    %v6592 = vlaneseq
    %v6593 = vshrl.u32 %v6592, 7
    %v6594 = vsub.s32 %v4954, %v6593
    %v6595 = vrot.slane %v5984, %v6594
    %v6596 = vlaneseq
    %v6597 = vshrl.u32 %v6596, 7
    %v6598 = vsub.s32 %v4959, %v6597
    %v6599 = vrot.slane %v5987, %v6598
    %v6600 = vsel %vm4964, %v6599, %v6595
    %v6601 = vlaneseq
    %v6602 = vshrl.u32 %v6601, 7
    %v6603 = vsub.s32 %v4966, %v6602
    %v6604 = vrot.slane %v5990, %v6603
    %v6605 = vsel %vm4971, %v6604, %v6600
    %v6606 = vlaneseq
    %v6607 = vshrl.u32 %v6606, 7
    %v6608 = vsub.s32 %v4973, %v6607
    %v6609 = vrot.slane %v5993, %v6608
    %v6610 = vsel %vm4978, %v6609, %v6605
    %v6611 = vlaneseq
    %v6612 = vshrl.u32 %v6611, 7
    %v6613 = vsub.s32 %v4954, %v6612
    %v6614 = vrot.slane %v5996, %v6613
    %v6615 = vlaneseq
    %v6616 = vshrl.u32 %v6615, 7
    %v6617 = vsub.s32 %v4959, %v6616
    %v6618 = vrot.slane %v5999, %v6617
    %v6619 = vsel %vm4964, %v6618, %v6614
    %v6620 = vlaneseq
    %v6621 = vshrl.u32 %v6620, 7
    %v6622 = vsub.s32 %v4966, %v6621
    %v6623 = vrot.slane %v6002, %v6622
    %v6624 = vsel %vm4971, %v6623, %v6619
    %v6625 = vlaneseq
    %v6626 = vshrl.u32 %v6625, 7
    %v6627 = vsub.s32 %v4973, %v6626
    %v6628 = vrot.slane %v6005, %v6627
    %v6629 = vsel %vm4978, %v6628, %v6624
    %v6630 = vlaneseq
    %v6631 = vshrl.u32 %v6630, 7
    %v6632 = vsub.s32 %v4954, %v6631
    %v6633 = vrot.slane %v6008, %v6632
    %v6634 = vlaneseq
    %v6635 = vshrl.u32 %v6634, 7
    %v6636 = vsub.s32 %v4959, %v6635
    %v6637 = vrot.slane %v6011, %v6636
    %v6638 = vsel %vm4964, %v6637, %v6633
    %v6639 = vlaneseq
    %v6640 = vshrl.u32 %v6639, 7
    %v6641 = vsub.s32 %v4966, %v6640
    %v6642 = vrot.slane %v6014, %v6641
    %v6643 = vsel %vm4971, %v6642, %v6638
    %v6644 = vlaneseq
    %v6645 = vshrl.u32 %v6644, 7
    %v6646 = vsub.s32 %v4973, %v6645
    %v6647 = vrot.slane %v6017, %v6646
    %v6648 = vsel %vm4978, %v6647, %v6643
    %v6649 = vlaneseq
    %v6650 = vshrl.u32 %v6649, 7
    %v6651 = vsub.s32 %v4954, %v6650
    %v6652 = vrot.slane %v6020, %v6651
    %v6653 = vlaneseq
    %v6654 = vshrl.u32 %v6653, 7
    %v6655 = vsub.s32 %v4959, %v6654
    %v6656 = vrot.slane %v6023, %v6655
    %v6657 = vsel %vm4964, %v6656, %v6652
    %v6658 = vlaneseq
    %v6659 = vshrl.u32 %v6658, 7
    %v6660 = vsub.s32 %v4966, %v6659
    %v6661 = vrot.slane %v6026, %v6660
    %v6662 = vsel %vm4971, %v6661, %v6657
    %v6663 = vlaneseq
    %v6664 = vshrl.u32 %v6663, 7
    %v6665 = vsub.s32 %v4973, %v6664
    %v6666 = vrot.slane %v6029, %v6665
    %v6667 = vsel %vm4978, %v6666, %v6662
    %v6668 = vlaneseq
    %v6669 = vshrl.u32 %v6668, 7
    %v6670 = vsub.s32 %v4954, %v6669
    %v6671 = vrot.slane %v6032, %v6670
    %v6672 = vlaneseq
    %v6673 = vshrl.u32 %v6672, 7
    %v6674 = vsub.s32 %v4959, %v6673
    %v6675 = vrot.slane %v6035, %v6674
    %v6676 = vsel %vm4964, %v6675, %v6671
    %v6677 = vlaneseq
    %v6678 = vshrl.u32 %v6677, 7
    %v6679 = vsub.s32 %v4966, %v6678
    %v6680 = vrot.slane %v6038, %v6679
    %v6681 = vsel %vm4971, %v6680, %v6676
    %v6682 = vlaneseq
    %v6683 = vshrl.u32 %v6682, 7
    %v6684 = vsub.s32 %v4973, %v6683
    %v6685 = vrot.slane %v6041, %v6684
    %v6686 = vsel %vm4978, %v6685, %v6681
    %v6687 = vlaneseq
    %v6688 = vshrl.u32 %v6687, 7
    %v6689 = vsub.s32 %v4954, %v6688
    %v6690 = vrot.slane %v6044, %v6689
    %v6691 = vlaneseq
    %v6692 = vshrl.u32 %v6691, 7
    %v6693 = vsub.s32 %v4959, %v6692
    %v6694 = vrot.slane %v6047, %v6693
    %v6695 = vsel %vm4964, %v6694, %v6690
    %v6696 = vlaneseq
    %v6697 = vshrl.u32 %v6696, 7
    %v6698 = vsub.s32 %v4966, %v6697
    %v6699 = vrot.slane %v6050, %v6698
    %v6700 = vsel %vm4971, %v6699, %v6695
    %v6701 = vlaneseq
    %v6702 = vshrl.u32 %v6701, 7
    %v6703 = vsub.s32 %v4973, %v6702
    %v6704 = vrot.slane %v6053, %v6703
    %v6705 = vsel %vm4978, %v6704, %v6700
    %v6706 = vlaneseq
    %v6707 = vshrl.u32 %v6706, 7
    %v6708 = vsub.s32 %v4954, %v6707
    %v6709 = vrot.slane %v6056, %v6708
    %v6710 = vlaneseq
    %v6711 = vshrl.u32 %v6710, 7
    %v6712 = vsub.s32 %v4959, %v6711
    %v6713 = vrot.slane %v6059, %v6712
    %v6714 = vsel %vm4964, %v6713, %v6709
    %v6715 = vlaneseq
    %v6716 = vshrl.u32 %v6715, 7
    %v6717 = vsub.s32 %v4966, %v6716
    %v6718 = vrot.slane %v6062, %v6717
    %v6719 = vsel %vm4971, %v6718, %v6714
    %v6720 = vlaneseq
    %v6721 = vshrl.u32 %v6720, 7
    %v6722 = vsub.s32 %v4973, %v6721
    %v6723 = vrot.slane %v6065, %v6722
    %v6724 = vsel %vm4978, %v6723, %v6719
    %v6725 = vlaneseq
    %v6726 = vshrl.u32 %v6725, 7
    %v6727 = vsub.s32 %v4954, %v6726
    %v6728 = vrot.slane %v6068, %v6727
    %v6729 = vlaneseq
    %v6730 = vshrl.u32 %v6729, 7
    %v6731 = vsub.s32 %v4959, %v6730
    %v6732 = vrot.slane %v6071, %v6731
    %v6733 = vsel %vm4964, %v6732, %v6728
    %v6734 = vlaneseq
    %v6735 = vshrl.u32 %v6734, 7
    %v6736 = vsub.s32 %v4966, %v6735
    %v6737 = vrot.slane %v6074, %v6736
    %v6738 = vsel %vm4971, %v6737, %v6733
    %v6739 = vlaneseq
    %v6740 = vshrl.u32 %v6739, 7
    %v6741 = vsub.s32 %v4973, %v6740
    %v6742 = vrot.slane %v6077, %v6741
    %v6743 = vsel %vm4978, %v6742, %v6738
    %v6744 = vlaneseq
    %v6745 = vshrl.u32 %v6744, 7
    %v6746 = vsub.s32 %v4954, %v6745
    %v6747 = vrot.slane %v6080, %v6746
    %v6748 = vlaneseq
    %v6749 = vshrl.u32 %v6748, 7
    %v6750 = vsub.s32 %v4959, %v6749
    %v6751 = vrot.slane %v6083, %v6750
    %v6752 = vsel %vm4964, %v6751, %v6747
    %v6753 = vlaneseq
    %v6754 = vshrl.u32 %v6753, 7
    %v6755 = vsub.s32 %v4966, %v6754
    %v6756 = vrot.slane %v6086, %v6755
    %v6757 = vsel %vm4971, %v6756, %v6752
    %v6758 = vlaneseq
    %v6759 = vshrl.u32 %v6758, 7
    %v6760 = vsub.s32 %v4973, %v6759
    %v6761 = vrot.slane %v6089, %v6760
    %v6762 = vsel %vm4978, %v6761, %v6757
    %v6763 = vlaneseq
    %v6764 = vshrl.u32 %v6763, 7
    %v6765 = vsub.s32 %v4954, %v6764
    %v6766 = vrot.slane %v6092, %v6765
    %v6767 = vlaneseq
    %v6768 = vshrl.u32 %v6767, 7
    %v6769 = vsub.s32 %v4959, %v6768
    %v6770 = vrot.slane %v6095, %v6769
    %v6771 = vsel %vm4964, %v6770, %v6766
    %v6772 = vlaneseq
    %v6773 = vshrl.u32 %v6772, 7
    %v6774 = vsub.s32 %v4966, %v6773
    %v6775 = vrot.slane %v6098, %v6774
    %v6776 = vsel %vm4971, %v6775, %v6771
    %v6777 = vlaneseq
    %v6778 = vshrl.u32 %v6777, 7
    %v6779 = vsub.s32 %v4973, %v6778
    %v6780 = vrot.slane %v6101, %v6779
    %v6781 = vsel %vm4978, %v6780, %v6776
    %v6782 = vlaneseq
    %v6783 = vshrl.u32 %v6782, 7
    %v6784 = vsub.s32 %v4954, %v6783
    %v6785 = vrot.slane %v6104, %v6784
    %v6786 = vlaneseq
    %v6787 = vshrl.u32 %v6786, 7
    %v6788 = vsub.s32 %v4959, %v6787
    %v6789 = vrot.slane %v6107, %v6788
    %v6790 = vsel %vm4964, %v6789, %v6785
    %v6791 = vlaneseq
    %v6792 = vshrl.u32 %v6791, 7
    %v6793 = vsub.s32 %v4966, %v6792
    %v6794 = vrot.slane %v6110, %v6793
    %v6795 = vsel %vm4971, %v6794, %v6790
    %v6796 = vlaneseq
    %v6797 = vshrl.u32 %v6796, 7
    %v6798 = vsub.s32 %v4973, %v6797
    %v6799 = vrot.slane %v6113, %v6798
    %v6800 = vsel %vm4978, %v6799, %v6795
    %v6801 = vlaneseq
    %v6802 = vshrl.u32 %v6801, 7
    %v6803 = vsub.s32 %v4954, %v6802
    %v6804 = vrot.slane %v6116, %v6803
    %v6805 = vlaneseq
    %v6806 = vshrl.u32 %v6805, 7
    %v6807 = vsub.s32 %v4959, %v6806
    %v6808 = vrot.slane %v6119, %v6807
    %v6809 = vsel %vm4964, %v6808, %v6804
    %v6810 = vlaneseq
    %v6811 = vshrl.u32 %v6810, 7
    %v6812 = vsub.s32 %v4966, %v6811
    %v6813 = vrot.slane %v6122, %v6812
    %v6814 = vsel %vm4971, %v6813, %v6809
    %v6815 = vlaneseq
    %v6816 = vshrl.u32 %v6815, 7
    %v6817 = vsub.s32 %v4973, %v6816
    %v6818 = vrot.slane %v6125, %v6817
    %v6819 = vsel %vm4978, %v6818, %v6814
    %v6820 = vlaneseq
    %v6821 = vshrl.u32 %v6820, 7
    %v6822 = vsub.s32 %v4954, %v6821
    %v6823 = vrot.slane %v6128, %v6822
    %v6824 = vlaneseq
    %v6825 = vshrl.u32 %v6824, 7
    %v6826 = vsub.s32 %v4959, %v6825
    %v6827 = vrot.slane %v6131, %v6826
    %v6828 = vsel %vm4964, %v6827, %v6823
    %v6829 = vlaneseq
    %v6830 = vshrl.u32 %v6829, 7
    %v6831 = vsub.s32 %v4966, %v6830
    %v6832 = vrot.slane %v6134, %v6831
    %v6833 = vsel %vm4971, %v6832, %v6828
    %v6834 = vlaneseq
    %v6835 = vshrl.u32 %v6834, 7
    %v6836 = vsub.s32 %v4973, %v6835
    %v6837 = vrot.slane %v6137, %v6836
    %v6838 = vsel %vm4978, %v6837, %v6833
    %v6839 = vlaneseq
    %v6840 = vshrl.u32 %v6839, 7
    %v6841 = vsub.s32 %v4954, %v6840
    %v6842 = vrot.slane %v6140, %v6841
    %v6843 = vlaneseq
    %v6844 = vshrl.u32 %v6843, 7
    %v6845 = vsub.s32 %v4959, %v6844
    %v6846 = vrot.slane %v6143, %v6845
    %v6847 = vsel %vm4964, %v6846, %v6842
    %v6848 = vlaneseq
    %v6849 = vshrl.u32 %v6848, 7
    %v6850 = vsub.s32 %v4966, %v6849
    %v6851 = vrot.slane %v6146, %v6850
    %v6852 = vsel %vm4971, %v6851, %v6847
    %v6853 = vlaneseq
    %v6854 = vshrl.u32 %v6853, 7
    %v6855 = vsub.s32 %v4973, %v6854
    %v6856 = vrot.slane %v6149, %v6855
    %v6857 = vsel %vm4978, %v6856, %v6852
    %v6858 = vlaneseq
    %v6859 = vshrl.u32 %v6858, 7
    %v6860 = vsub.s32 %v4954, %v6859
    %v6861 = vrot.slane %v6152, %v6860
    %v6862 = vlaneseq
    %v6863 = vshrl.u32 %v6862, 7
    %v6864 = vsub.s32 %v4959, %v6863
    %v6865 = vrot.slane %v6155, %v6864
    %v6866 = vsel %vm4964, %v6865, %v6861
    %v6867 = vlaneseq
    %v6868 = vshrl.u32 %v6867, 7
    %v6869 = vsub.s32 %v4966, %v6868
    %v6870 = vrot.slane %v6158, %v6869
    %v6871 = vsel %vm4971, %v6870, %v6866
    %v6872 = vlaneseq
    %v6873 = vshrl.u32 %v6872, 7
    %v6874 = vsub.s32 %v4973, %v6873
    %v6875 = vrot.slane %v6161, %v6874
    %v6876 = vsel %vm4978, %v6875, %v6871
    %v6877 = vlaneseq
    %v6878 = vshrl.u32 %v6877, 7
    %v6879 = vsub.s32 %v4954, %v6878
    %v6880 = vrot.slane %v6164, %v6879
    %v6881 = vlaneseq
    %v6882 = vshrl.u32 %v6881, 7
    %v6883 = vsub.s32 %v4959, %v6882
    %v6884 = vrot.slane %v6167, %v6883
    %v6885 = vsel %vm4964, %v6884, %v6880
    %v6886 = vlaneseq
    %v6887 = vshrl.u32 %v6886, 7
    %v6888 = vsub.s32 %v4966, %v6887
    %v6889 = vrot.slane %v6170, %v6888
    %v6890 = vsel %vm4971, %v6889, %v6885
    %v6891 = vlaneseq
    %v6892 = vshrl.u32 %v6891, 7
    %v6893 = vsub.s32 %v4973, %v6892
    %v6894 = vrot.slane %v6173, %v6893
    %v6895 = vsel %vm4978, %v6894, %v6890
    %v6896 = vlaneseq
    %v6897 = vshrl.u32 %v6896, 7
    %v6898 = vsub.s32 %v4954, %v6897
    %v6899 = vrot.slane %v6176, %v6898
    %v6900 = vlaneseq
    %v6901 = vshrl.u32 %v6900, 7
    %v6902 = vsub.s32 %v4959, %v6901
    %v6903 = vrot.slane %v6179, %v6902
    %v6904 = vsel %vm4964, %v6903, %v6899
    %v6905 = vlaneseq
    %v6906 = vshrl.u32 %v6905, 7
    %v6907 = vsub.s32 %v4966, %v6906
    %v6908 = vrot.slane %v6182, %v6907
    %v6909 = vsel %vm4971, %v6908, %v6904
    %v6910 = vlaneseq
    %v6911 = vshrl.u32 %v6910, 7
    %v6912 = vsub.s32 %v4973, %v6911
    %v6913 = vrot.slane %v6185, %v6912
    %v6914 = vsel %vm4978, %v6913, %v6909
    %v6915 = vlaneseq
    %v6916 = vshrl.u32 %v6915, 7
    %v6917 = vsub.s32 %v4954, %v6916
    %v6918 = vrot.slane %v6188, %v6917
    %v6919 = vlaneseq
    %v6920 = vshrl.u32 %v6919, 7
    %v6921 = vsub.s32 %v4959, %v6920
    %v6922 = vrot.slane %v6191, %v6921
    %v6923 = vsel %vm4964, %v6922, %v6918
    %v6924 = vlaneseq
    %v6925 = vshrl.u32 %v6924, 7
    %v6926 = vsub.s32 %v4966, %v6925
    %v6927 = vrot.slane %v6194, %v6926
    %v6928 = vsel %vm4971, %v6927, %v6923
    %v6929 = vlaneseq
    %v6930 = vshrl.u32 %v6929, 7
    %v6931 = vsub.s32 %v4973, %v6930
    %v6932 = vrot.slane %v6197, %v6931
    %v6933 = vsel %vm4978, %v6932, %v6928
    %v6934 = vsel %vm5569, %v6363, %v6344
    %v6935 = vsel %vm5571, %v6382, %v6934
    %v6936 = vsel %vm5573, %v6401, %v6935
    %v6937 = vsel %vm5575, %v6420, %v6936
    %v6938 = vsel %vm5577, %v6439, %v6937
    %v6939 = vsel %vm5579, %v6458, %v6938
    %v6940 = vsel %vm5581, %v6477, %v6939
    %v6941 = vsel %vm5569, %v6515, %v6496
    %v6942 = vsel %vm5571, %v6534, %v6941
    %v6943 = vsel %vm5573, %v6553, %v6942
    %v6944 = vsel %vm5575, %v6572, %v6943
    %v6945 = vsel %vm5577, %v6591, %v6944
    %v6946 = vsel %vm5579, %v6610, %v6945
    %v6947 = vsel %vm5581, %v6629, %v6946
    %v6948 = vsel %vm5569, %v6667, %v6648
    %v6949 = vsel %vm5571, %v6686, %v6948
    %v6950 = vsel %vm5573, %v6705, %v6949
    %v6951 = vsel %vm5575, %v6724, %v6950
    %v6952 = vsel %vm5577, %v6743, %v6951
    %v6953 = vsel %vm5579, %v6762, %v6952
    %v6954 = vsel %vm5581, %v6781, %v6953
    %v6955 = vsel %vm5569, %v6819, %v6800
    %v6956 = vsel %vm5571, %v6838, %v6955
    %v6957 = vsel %vm5573, %v6857, %v6956
    %v6958 = vsel %vm5575, %v6876, %v6957
    %v6959 = vsel %vm5577, %v6895, %v6958
    %v6960 = vsel %vm5579, %v6914, %v6959
    %v6961 = vsel %vm5581, %v6933, %v6960
    %v6966 = vsel %vm2180, %v6940, 0.0
    %6967 = vadd.xlane.f32.xlu0 %v6966
    %v6968 = vpop.xlane.xlu0 %6967
    %v6969 = vsel %vm2180, %v6947, 0.0
    %6970 = vadd.xlane.f32.xlu0 %v6969
    %v6971 = vpop.xlane.xlu0 %6970
    %v6972 = vsel %vm2180, %v6954, 0.0
    %6973 = vadd.xlane.f32.xlu0 %v6972
    %v6974 = vpop.xlane.xlu0 %6973
    %v6975 = vsel %vm2180, %v6961, 0.0
    %6976 = vadd.xlane.f32.xlu0 %v6975
    %v6977 = vpop.xlane.xlu0 %6976
    %v6978 = vadd.f32 %v6968, %v5627
    %v6979 = vadd.f32 %v6971, %v5631
    %v6980 = vadd.f32 %v6974, %v5635
    %v6981 = vadd.f32 %v6977, %v5639
    %6986 = vset.pattern.permute.xlu0 0
    %6987 = vperm.xlu0 %6986, %v6978
    %v6988 = vpop.permute.xlu0 %6987
    %6989 = vset.pattern.permute.xlu0 0
    %6990 = vperm.xlu0 %6989, %v6979
    %v6991 = vpop.permute.xlu0 %6990
    %6992 = vset.pattern.permute.xlu0 0
    %6993 = vperm.xlu0 %6992, %v6980
    %v6994 = vpop.permute.xlu0 %6993
    %6995 = vset.pattern.permute.xlu0 0
    %6996 = vperm.xlu0 %6995, %v6981
    %v6997 = vpop.permute.xlu0 %6996
    %v6998 = vlaneseq
    %v6999 = vshrl.u32 %v6998, 7
    %v7000 = vsub.s32 %v4954, %v6999
    %v7001 = vrot.slane %v6988, %v7000
    %v7002 = vlaneseq
    %v7003 = vshrl.u32 %v7002, 7
    %v7004 = vsub.s32 %v4959, %v7003
    %v7005 = vrot.slane %v6991, %v7004
    %v7006 = vsel %vm4964, %v7005, %v7001
    %v7007 = vlaneseq
    %v7008 = vshrl.u32 %v7007, 7
    %v7009 = vsub.s32 %v4966, %v7008
    %v7010 = vrot.slane %v6994, %v7009
    %v7011 = vsel %vm4971, %v7010, %v7006
    %v7012 = vlaneseq
    %v7013 = vshrl.u32 %v7012, 7
    %v7014 = vsub.s32 %v4973, %v7013
    %v7015 = vrot.slane %v6997, %v7014
    %v7016 = vsel %vm4978, %v7015, %v7011
    %7018 = vst.msk [vmem:[#allocation2 + $0x1] sm:$0x1] %vm5684, %v7016
    %v7019 = vld [vmem:[#allocation2] sm:$0x3]
    %v7020 = vld [vmem:[%s1] sm:$0x3]
    %v7021 = vld [vmem:[%s10] sm:$0xff]
    %v7022 = vld [vmem:[%s10 + $0x8] sm:$0xf]
    %v7023 = vld [vmem:[%s11] sm:$0xff]
    %v7024 = vld [vmem:[%s11 + $0x8] sm:$0xff]
    %v7025 = vld [vmem:[%s11 + $0x10] sm:$0xff]
    %v7026 = vld [vmem:[%s11 + $0x18] sm:$0xff]
    %v7028 = vsel %vm2180, %v7019, 0
    %7030 = vmatprep.subr.mxu0 0.0
    %7031 = vmatpush1.msra.mxu0 %v7023
    %7032 = vmatprep.subr.mxu0 0.0
    %7033 = vmatpush1.msra.mxu0 %v7024
    %7034 = vmatprep.subr.mxu0 0.0
    %7035 = vmatpush1.msra.mxu0 %v7025
    %7036 = vmatprep.subr.mxu0 0.0
    %7037 = vmatpush1.msra.mxu0 %v7026
    %7038 = vmatprep.subr.mxu0 0.0
    %7039 = vmatpush1.msra.mxu0 0.0
    %7040 = vmatprep.subr.mxu0 0.0
    %7041 = vmatpush1.msra.mxu0 0.0
    %7042 = vmatprep.subr.mxu0 0.0
    %7043 = vmatpush1.msra.mxu0 0.0
    %7044 = vmatprep.subr.mxu0 0.0
    %7045 = vmatpush1.msra.mxu0 0.0
    %7046 = vmatprep.subr.mxu0 0.0
    %7047 = vmatpush1.msra.mxu0 0.0
    %7048 = vmatprep.subr.mxu0 0.0
    %7049 = vmatpush1.msra.mxu0 0.0
    %7050 = vmatprep.subr.mxu0 0.0
    %7051 = vmatpush1.msra.mxu0 0.0
    %7052 = vmatprep.subr.mxu0 0.0
    %7053 = vmatpush1.msra.mxu0 0.0
    %7054 = vmatprep.subr.mxu0 0.0
    %7055 = vmatpush1.msra.mxu0 0.0
    %7056 = vmatprep.subr.mxu0 0.0
    %7057 = vmatpush1.msra.mxu0 0.0
    %7058 = vmatprep.subr.mxu0 0.0
    %7059 = vmatpush1.msra.mxu0 0.0
    %7060 = vmatprep.subr.mxu0 0.0
    %7061 = vmatpush1.msra.mxu0 0.0
    %7062 = vmatprep.subr.mxu0 0.0
    %7063 = vmatpush1.msra.mxu0 0.0
    %7064 = vmatprep.subr.mxu0 0.0
    %7065 = vmatpush1.msra.mxu0 0.0
    %7066 = vmatprep.subr.mxu0 0.0
    %7067 = vmatpush1.msra.mxu0 0.0
    %7068 = vmatprep.subr.mxu0 0.0
    %7069 = vmatpush1.msra.mxu0 0.0
    %7070 = vmatprep.subr.mxu0 0.0
    %7071 = vmatpush1.msra.mxu0 0.0
    %7072 = vmatprep.subr.mxu0 0.0
    %7073 = vmatpush1.msra.mxu0 0.0
    %7074 = vmatprep.subr.mxu0 0.0
    %7075 = vmatpush1.msra.mxu0 0.0
    %7076 = vmatprep.subr.mxu0 0.0
    %7077 = vmatpush1.msra.mxu0 0.0
    %7078 = vmatprep.subr.mxu0 0.0
    %7079 = vmatpush1.msra.mxu0 0.0
    %7080 = vmatprep.subr.mxu0 0.0
    %7081 = vmatpush1.msra.mxu0 0.0
    %7082 = vmatprep.subr.mxu0 0.0
    %7083 = vmatpush1.msra.mxu0 0.0
    %7084 = vmatprep.subr.mxu0 0.0
    %7085 = vmatpush1.msra.mxu0 0.0
    %7086 = vmatprep.subr.mxu0 0.0
    %7087 = vmatpush1.msra.mxu0 0.0
    %7088 = vmatprep.subr.mxu0 0.0
    %7089 = vmatpush1.msra.mxu0 0.0
    %7090 = vmatprep.subr.mxu0 0.0
    %7091 = vmatpush1.msra.mxu0 0.0
    %7092 = vmatprep.subr.mxu0 0.0
    %7093 = vmatpush1.msra.mxu0 0.0
    %7094 = vmatprep.mubr.f32.mxu0 0.0
    %7095 = vmatmul.mubr.f32.gmra.mrb[0].mxu0 %v7028
    %v7096 = vpop.f32.mrb[0].mxu0
    %v7097 = vadd.f32 0.0, %v7096
    %v7098 = vpop.f32.mrb[0].mxu0
    %7099 = vdwg.mxu0
    %vm7100 = vcmask 97280
    %v7102 = vsel %vm7100, %v7020, 0
    %vm7104 = vcmask 1043456
    %v7106 = vsel %vm7104, %v7022, 0
    %7108 = vmatprep.subr.mxu0 0.0
    %7109 = vmatpush1.msra.mxu0 %v7021
    %7110 = vmatprep.subr.mxu0 0.0
    %7111 = vmatpush1.msra.mxu0 %v7106
    %7112 = vmatprep.subr.mxu0 0.0
    %7113 = vmatpush1.msra.mxu0 0.0
    %7114 = vmatprep.subr.mxu0 0.0
    %7115 = vmatpush1.msra.mxu0 0.0
    %7116 = vmatprep.subr.mxu0 0.0
    %7117 = vmatpush1.msra.mxu0 0.0
    %7118 = vmatprep.subr.mxu0 0.0
    %7119 = vmatpush1.msra.mxu0 0.0
    %7120 = vmatprep.subr.mxu0 0.0
    %7121 = vmatpush1.msra.mxu0 0.0
    %7122 = vmatprep.subr.mxu0 0.0
    %7123 = vmatpush1.msra.mxu0 0.0
    %7124 = vmatprep.subr.mxu0 0.0
    %7125 = vmatpush1.msra.mxu0 0.0
    %7126 = vmatprep.subr.mxu0 0.0
    %7127 = vmatpush1.msra.mxu0 0.0
    %7128 = vmatprep.subr.mxu0 0.0
    %7129 = vmatpush1.msra.mxu0 0.0
    %7130 = vmatprep.subr.mxu0 0.0
    %7131 = vmatpush1.msra.mxu0 0.0
    %7132 = vmatprep.subr.mxu0 0.0
    %7133 = vmatpush1.msra.mxu0 0.0
    %7134 = vmatprep.subr.mxu0 0.0
    %7135 = vmatpush1.msra.mxu0 0.0
    %7136 = vmatprep.subr.mxu0 0.0
    %7137 = vmatpush1.msra.mxu0 0.0
    %7138 = vmatprep.subr.mxu0 0.0
    %7139 = vmatpush1.msra.mxu0 0.0
    %7140 = vmatprep.subr.mxu0 0.0
    %7141 = vmatpush1.msra.mxu0 0.0
    %7142 = vmatprep.subr.mxu0 0.0
    %7143 = vmatpush1.msra.mxu0 0.0
    %7144 = vmatprep.subr.mxu0 0.0
    %7145 = vmatpush1.msra.mxu0 0.0
    %7146 = vmatprep.subr.mxu0 0.0
    %7147 = vmatpush1.msra.mxu0 0.0
    %7148 = vmatprep.subr.mxu0 0.0
    %7149 = vmatpush1.msra.mxu0 0.0
    %7150 = vmatprep.subr.mxu0 0.0
    %7151 = vmatpush1.msra.mxu0 0.0
    %7152 = vmatprep.subr.mxu0 0.0
    %7153 = vmatpush1.msra.mxu0 0.0
    %7154 = vmatprep.subr.mxu0 0.0
    %7155 = vmatpush1.msra.mxu0 0.0
    %7156 = vmatprep.subr.mxu0 0.0
    %7157 = vmatpush1.msra.mxu0 0.0
    %7158 = vmatprep.subr.mxu0 0.0
    %7159 = vmatpush1.msra.mxu0 0.0
    %7160 = vmatprep.subr.mxu0 0.0
    %7161 = vmatpush1.msra.mxu0 0.0
    %7162 = vmatprep.subr.mxu0 0.0
    %7163 = vmatpush1.msra.mxu0 0.0
    %7164 = vmatprep.subr.mxu0 0.0
    %7165 = vmatpush1.msra.mxu0 0.0
    %7166 = vmatprep.subr.mxu0 0.0
    %7167 = vmatpush1.msra.mxu0 0.0
    %7168 = vmatprep.subr.mxu0 0.0
    %7169 = vmatpush1.msra.mxu0 0.0
    %7170 = vmatprep.subr.mxu0 0.0
    %7171 = vmatpush1.msra.mxu0 0.0
    %7172 = vmatprep.mubr.f32.mxu0 0.0
    %7173 = vmatmul.mubr.f32.gmra.mrb[0].mxu0 %v7102
    %v7174 = vpop.f32.mrb[0].mxu0
    %v7175 = vadd.f32 %v7097, %v7174
    %v7176 = vpop.f32.mrb[0].mxu0
    %7177 = vdwg.mxu0
    %v7178 = vld [vmem:[%s12] sm:$0x1]
    %v7180 = vlaneseq
    %v7181 = vshrl.u32 %v7180, 7
    %v7182 = vsub.s32 0, %v7181
    %v7183 = vrot.slane %v7178, %v7182
    %v7185 = vadd.f32 %v7175, %v7183
    %v7186 = vmax.f32 %v7185, 0.0
    %v7187 = vld [vmem:[%s13] sm:$0xff]
    %v7188 = vld [vmem:[%s13 + $0x8] sm:$0xff]
    %v7189 = vld [vmem:[%s13 + $0x10] sm:$0xff]
    %v7190 = vld [vmem:[%s13 + $0x18] sm:$0xff]
    %v7191 = vld [vmem:[%s14] sm:$0x1]
    %v7193 = vlaneseq
    %v7194 = vshrl.u32 %v7193, 7
    %v7195 = vsub.s32 0, %v7194
    %v7196 = vrot.slane %v7191, %v7195
    %v7199 = vsel %vm2180, %v7186, 0
    %7201 = vmatprep.subr.mxu0 0.0
    %7202 = vmatpush1.msra.mxu0 %v7187
    %7203 = vmatprep.subr.mxu0 0.0
    %7204 = vmatpush1.msra.mxu0 %v7188
    %7205 = vmatprep.subr.mxu0 0.0
    %7206 = vmatpush1.msra.mxu0 %v7189
    %7207 = vmatprep.subr.mxu0 0.0
    %7208 = vmatpush1.msra.mxu0 %v7190
    %7209 = vmatprep.subr.mxu0 0.0
    %7210 = vmatpush1.msra.mxu0 0.0
    %7211 = vmatprep.subr.mxu0 0.0
    %7212 = vmatpush1.msra.mxu0 0.0
    %7213 = vmatprep.subr.mxu0 0.0
    %7214 = vmatpush1.msra.mxu0 0.0
    %7215 = vmatprep.subr.mxu0 0.0
    %7216 = vmatpush1.msra.mxu0 0.0
    %7217 = vmatprep.subr.mxu0 0.0
    %7218 = vmatpush1.msra.mxu0 0.0
    %7219 = vmatprep.subr.mxu0 0.0
    %7220 = vmatpush1.msra.mxu0 0.0
    %7221 = vmatprep.subr.mxu0 0.0
    %7222 = vmatpush1.msra.mxu0 0.0
    %7223 = vmatprep.subr.mxu0 0.0
    %7224 = vmatpush1.msra.mxu0 0.0
    %7225 = vmatprep.subr.mxu0 0.0
    %7226 = vmatpush1.msra.mxu0 0.0
    %7227 = vmatprep.subr.mxu0 0.0
    %7228 = vmatpush1.msra.mxu0 0.0
    %7229 = vmatprep.subr.mxu0 0.0
    %7230 = vmatpush1.msra.mxu0 0.0
    %7231 = vmatprep.subr.mxu0 0.0
    %7232 = vmatpush1.msra.mxu0 0.0
    %7233 = vmatprep.subr.mxu0 0.0
    %7234 = vmatpush1.msra.mxu0 0.0
    %7235 = vmatprep.subr.mxu0 0.0
    %7236 = vmatpush1.msra.mxu0 0.0
    %7237 = vmatprep.subr.mxu0 0.0
    %7238 = vmatpush1.msra.mxu0 0.0
    %7239 = vmatprep.subr.mxu0 0.0
    %7240 = vmatpush1.msra.mxu0 0.0
    %7241 = vmatprep.subr.mxu0 0.0
    %7242 = vmatpush1.msra.mxu0 0.0
    %7243 = vmatprep.subr.mxu0 0.0
    %7244 = vmatpush1.msra.mxu0 0.0
    %7245 = vmatprep.subr.mxu0 0.0
    %7246 = vmatpush1.msra.mxu0 0.0
    %7247 = vmatprep.subr.mxu0 0.0
    %7248 = vmatpush1.msra.mxu0 0.0
    %7249 = vmatprep.subr.mxu0 0.0
    %7250 = vmatpush1.msra.mxu0 0.0
    %7251 = vmatprep.subr.mxu0 0.0
    %7252 = vmatpush1.msra.mxu0 0.0
    %7253 = vmatprep.subr.mxu0 0.0
    %7254 = vmatpush1.msra.mxu0 0.0
    %7255 = vmatprep.subr.mxu0 0.0
    %7256 = vmatpush1.msra.mxu0 0.0
    %7257 = vmatprep.subr.mxu0 0.0
    %7258 = vmatpush1.msra.mxu0 0.0
    %7259 = vmatprep.subr.mxu0 0.0
    %7260 = vmatpush1.msra.mxu0 0.0
    %7261 = vmatprep.subr.mxu0 0.0
    %7262 = vmatpush1.msra.mxu0 0.0
    %7263 = vmatprep.subr.mxu0 0.0
    %7264 = vmatpush1.msra.mxu0 0.0
    %7265 = vmatprep.mubr.f32.mxu0 0.0
    %7266 = vmatmul.mubr.f32.gmra.mrb[0].mxu0 %v7199
    %v7267 = vpop.f32.mrb[0].mxu0
    %v7268 = vadd.f32 %v7196, %v7267
    %v7269 = vpop.f32.mrb[0].mxu0
    %7270 = vdwg.mxu0
    %v7271 = vmax.f32 %v7268, 0.0
    %v7272 = vld [vmem:[%s15] sm:$0xff]
    %v7273 = vld [vmem:[%s15 + $0x8] sm:$0xff]
    %v7274 = vld [vmem:[%s15 + $0x10] sm:$0xff]
    %v7275 = vld [vmem:[%s15 + $0x18] sm:$0xff]
    %v7276 = vld [vmem:[%s16] sm:$0x1]
    %v7278 = vlaneseq
    %v7279 = vshrl.u32 %v7278, 7
    %v7280 = vsub.s32 0, %v7279
    %v7281 = vrot.slane %v7276, %v7280
    %v7284 = vsel %vm2180, %v7271, 0
    %7286 = vmatprep.subr.mxu0 0.0
    %7287 = vmatpush1.msra.mxu0 %v7272
    %7288 = vmatprep.subr.mxu0 0.0
    %7289 = vmatpush1.msra.mxu0 %v7273
    %7290 = vmatprep.subr.mxu0 0.0
    %7291 = vmatpush1.msra.mxu0 %v7274
    %7292 = vmatprep.subr.mxu0 0.0
    %7293 = vmatpush1.msra.mxu0 %v7275
    %7294 = vmatprep.subr.mxu0 0.0
    %7295 = vmatpush1.msra.mxu0 0.0
    %7296 = vmatprep.subr.mxu0 0.0
    %7297 = vmatpush1.msra.mxu0 0.0
    %7298 = vmatprep.subr.mxu0 0.0
    %7299 = vmatpush1.msra.mxu0 0.0
    %7300 = vmatprep.subr.mxu0 0.0
    %7301 = vmatpush1.msra.mxu0 0.0
    %7302 = vmatprep.subr.mxu0 0.0
    %7303 = vmatpush1.msra.mxu0 0.0
    %7304 = vmatprep.subr.mxu0 0.0
    %7305 = vmatpush1.msra.mxu0 0.0
    %7306 = vmatprep.subr.mxu0 0.0
    %7307 = vmatpush1.msra.mxu0 0.0
    %7308 = vmatprep.subr.mxu0 0.0
    %7309 = vmatpush1.msra.mxu0 0.0
    %7310 = vmatprep.subr.mxu0 0.0
    %7311 = vmatpush1.msra.mxu0 0.0
    %7312 = vmatprep.subr.mxu0 0.0
    %7313 = vmatpush1.msra.mxu0 0.0
    %7314 = vmatprep.subr.mxu0 0.0
    %7315 = vmatpush1.msra.mxu0 0.0
    %7316 = vmatprep.subr.mxu0 0.0
    %7317 = vmatpush1.msra.mxu0 0.0
    %7318 = vmatprep.subr.mxu0 0.0
    %7319 = vmatpush1.msra.mxu0 0.0
    %7320 = vmatprep.subr.mxu0 0.0
    %7321 = vmatpush1.msra.mxu0 0.0
    %7322 = vmatprep.subr.mxu0 0.0
    %7323 = vmatpush1.msra.mxu0 0.0
    %7324 = vmatprep.subr.mxu0 0.0
    %7325 = vmatpush1.msra.mxu0 0.0
    %7326 = vmatprep.subr.mxu0 0.0
    %7327 = vmatpush1.msra.mxu0 0.0
    %7328 = vmatprep.subr.mxu0 0.0
    %7329 = vmatpush1.msra.mxu0 0.0
    %7330 = vmatprep.subr.mxu0 0.0
    %7331 = vmatpush1.msra.mxu0 0.0
    %7332 = vmatprep.subr.mxu0 0.0
    %7333 = vmatpush1.msra.mxu0 0.0
    %7334 = vmatprep.subr.mxu0 0.0
    %7335 = vmatpush1.msra.mxu0 0.0
    %7336 = vmatprep.subr.mxu0 0.0
    %7337 = vmatpush1.msra.mxu0 0.0
    %7338 = vmatprep.subr.mxu0 0.0
    %7339 = vmatpush1.msra.mxu0 0.0
    %7340 = vmatprep.subr.mxu0 0.0
    %7341 = vmatpush1.msra.mxu0 0.0
    %7342 = vmatprep.subr.mxu0 0.0
    %7343 = vmatpush1.msra.mxu0 0.0
    %7344 = vmatprep.subr.mxu0 0.0
    %7345 = vmatpush1.msra.mxu0 0.0
    %7346 = vmatprep.subr.mxu0 0.0
    %7347 = vmatpush1.msra.mxu0 0.0
    %7348 = vmatprep.subr.mxu0 0.0
    %7349 = vmatpush1.msra.mxu0 0.0
    %7350 = vmatprep.mubr.f32.mxu0 0.0
    %7351 = vmatmul.mubr.f32.gmra.mrb[0].mxu0 %v7284
    %v7352 = vpop.f32.mrb[0].mxu0
    %v7353 = vadd.f32 %v7281, %v7352
    %v7354 = vpop.f32.mrb[0].mxu0
    %7355 = vdwg.mxu0
    %v7356 = vtanh.pop %v7353
    %vm7357 = vcmask 9216
    %7358 = vst.msk [vmem:[#allocation3] sm:$0x3] %vm7357, %v7356
    // Predicated region
    $region70: #{policy_forward.1} parent=1 // pred_check
      _
    $region71: #{policy_forward.1} parent=1 // pred_check_branch
      %7360 = sbr.rel (0) target = $region73
    $region72: #{policy_forward.1} parent=1 // pred_region
      %s7362 = ssub.s32 32, 32
      %7363 = vsyncadd [#allocation4], %s7362
      %s7365 = sshll.u32 [#allocation3], 4
      %s7366 = int_to_ptr.vmem [resolvable:$true] %s7365
      %7368 = dma.vmem_to_hbm [thread:$0]  %s7366, 32, %s17, [#allocation4]
    $region73: #{policy_forward.1} parent=1 // pred_fallthru
      _
    // Predicated region
    $region74: #{policy_forward.1} parent=1 // pred_check
      _
    $region75: #{policy_forward.1} parent=1 // pred_check_branch
      %7370 = sbr.rel (0) target = $region77
    $region76: #{policy_forward.1} parent=1 // pred_region
      %7371 = dma.done [#allocation4], 32
    $region77: #{policy_forward.1} parent=1 // pred_fallthru
      _
    %7372 = vsyncpa [#allocation4], 1

</llo_original>
